<compile_context>
chip_gen: v5e
topology: v5e:2x2
jax: 0.10.0
libtpu: 0.0.40
codegen_flags: <defaults>
</compile_context>

<pallas_src>
import functools

import jax
import jax.numpy as jnp
import numpy as np
from jax.experimental import pallas as pl
from jax.experimental.pallas import tpu as pltpu


def _round_up(x, m):
    return (x + m - 1) // m * m


# ------------------------------ Pallas kernel ------------------------------ #
def _fused_embed_kernel(x_ref, wf_ref, bf_ref, w2_ref, b2_ref, w3_ref, b3_ref,
                        out_ref, pad2_ref, pad3_ref, *, H, W, cmid):
    # x_ref   : (Mp, Cin)         flat zero-padded image (row m = y*Wp + x)
    # wf_ref  : (9, Cin, 4*cmid)  fused layer-1 weights, cols [y1|y3|z5|z7]
    #                             (w1 folded into the centre tap, t = 4)
    # w2_ref  : (9, 2c, 2c)       block-diagonal branch-5/7 layer-2 weights
    # w3_ref  : (9, c, c)         branch-7 layer-3 weights
    # b*_ref  : (1, Cout) f32     biases
    # out_ref : (H*W, 4*cmid)     one image's embedding rows
    # pad2/3  : (Mp, 2c)/(Mp, c)  flat padded VMEM scratch for chained convs
    Wp = W + 2
    Mout = H * Wp                       # padded-column rows (garbage at x >= W)
    Mp = pad2_ref.shape[0]
    N = H * W
    emb = out_ref.shape[-1]
    cdt = pad2_ref.dtype                # compute dtype (f32 / bf16)

    # Row m = y*Wp + x is a valid conv output iff x < W.
    row = jax.lax.broadcasted_iota(jnp.int32, (Mout, 1), 0)
    valid = (row % Wp) < W

    def conv3x3(src_ref, w9_ref, b_ref):
        """'same' 3x3 conv over a flat padded ref -> (Mout, Cout) f32."""
        acc = None
        for dy in range(3):
            for dx in range(3):
                off = dy * Wp + dx                       # static -> contiguous slice
                lhs = src_ref[off:off + Mout, :]
                term = jnp.dot(lhs, w9_ref[dy * 3 + dx],
                               preferred_element_type=jnp.float32)
                acc = term if acc is None else acc + term
        return acc + b_ref[...]                          # f32 bias add

    def repad(dst_ref, vals_f32):
        """Write a masked intermediate into a flat zero-padded scratch."""
        C = dst_ref.shape[1]
        head = Wp + 1                    # top border row + left border of row 1
        tail = head + Mout               # rest of bottom border row + spare rows
        # Only these small ranges are never written below; zero them every step
        # (cheap, and safe under megacore grid sharding).
        dst_ref[0:head, :] = jnp.zeros((head, C), cdt)
        dst_ref[tail:Mp, :] = jnp.zeros((Mp - tail, C), cdt)
        # Garbage rows (x in {W, W+1}) land exactly on the border columns of the
        # padded layout, so masking them to zero re-establishes the zero border.
        dst_ref[head:tail, :] = jnp.where(valid, vals_f32, 0.0).astype(cdt)

    # --- layer 1: all four branches fused, columns = [y1 | y3 | z5 | z7] ---- #
    l1 = conv3x3(x_ref, wf_ref, bf_ref)                  # (Mout, 4c) f32

    # --- layer 2: branches 5 & 7 fused block-diagonally, cols = [y5 | t7] --- #
    repad(pad2_ref, l1[:, 2 * cmid:4 * cmid])
    l2 = conv3x3(pad2_ref, w2_ref, b2_ref)               # (Mout, 2c) f32

    # --- layer 3: branch 7 final conv ---------------------------------------#
    repad(pad3_ref, l2[:, cmid:2 * cmid])
    y7 = conv3x3(pad3_ref, w3_ref, b3_ref)               # (Mout, c) f32

    # --- strip the Wp-W garbage columns once and store lane-dense ----------- #
    res = jnp.concatenate([l1[:, :2 * cmid], l2[:, :cmid], y7], axis=-1)
    res = res.reshape(H, Wp, emb)[:, :W, :].reshape(N, emb)
    out_ref[...] = res.astype(out_ref.dtype)


# -------------------------------- wrapper ---------------------------------- #
def multi_patch_embed(x_nchw, params, *, compute_dtype=jnp.bfloat16,
                      out_dtype=None):
    """Multi_PatchEmbed forward: (B, Cin, H, W) -> (B, H*W, embed_dim)."""
    if out_dtype is None:
        out_dtype = x_nchw.dtype        # pass jnp.bfloat16 to halve HBM writeback
    x = jnp.transpose(x_nchw, (0, 2, 3, 1))              # NCHW -> NHWC
    B, H, W, Cin = x.shape
    Hp, Wp = H + 2, W + 2
    N = H * W
    # Flat padded rows; +2 spare rows so the (dy=2, dx=2) tap slice stays in bounds.
    Mp = _round_up(Hp * Wp + 2, 8)

    xp = jnp.pad(x, ((0, 0), (1, 1), (1, 1), (0, 0)))
    xflat = xp.reshape(B, Hp * Wp, Cin)
    xflat = jnp.pad(xflat, ((0, 0), (0, Mp - Hp * Wp), (0, 0))).astype(compute_dtype)

    (w1_, b1_), = params["b1"]
    (w3_, b3_), = params["b3"]
    (w51_, b51_), (w52_, b52_) = params["b5"]
    (w71_, b71_), (w72_, b72_), (w73_, b73_) = params["b7"]
    cmid = w1_.shape[0]
    emb = 4 * cmid

    def w9(w_oihw):
        # PyTorch (Cout, Cin, 3, 3) -> (9, Cin, Cout); tap index t = dy*3 + dx.
        co, ci = w_oihw.shape[:2]
        return jnp.transpose(w_oihw, (2, 3, 1, 0)).reshape(9, ci, co)

    # Layer-1 fused weights: output columns [y1 | y3 | z5 | z7]; the 1x1 branch
    # lives only in the centre tap (t = 4), all other taps zero for its columns.
    wf = jnp.zeros((9, Cin, emb), jnp.float32)
    wf = wf.at[:, :, cmid:].set(w9(jnp.concatenate([w3_, w51_, w71_], axis=0)))
    wf = wf.at[4, :, :cmid].set(jnp.transpose(w1_[:, :, 0, 0], (1, 0)))
    bf = jnp.concatenate([b1_, b3_, b51_, b71_]).reshape(1, -1).astype(jnp.float32)

    # Block-diagonal layer-2 weights: [z5 | z7] -> [y5 | t7].
    w2 = jnp.zeros((9, 2 * cmid, 2 * cmid), jnp.float32)
    w2 = w2.at[:, :cmid, :cmid].set(w9(w52_))
    w2 = w2.at[:, cmid:, cmid:].set(w9(w72_))
    b2 = jnp.concatenate([b52_, b72_]).reshape(1, -1).astype(jnp.float32)

    w3L = w9(w73_)
    b3L = b73_.reshape(1, -1).astype(jnp.float32)

    wf = wf.astype(compute_dtype)
    w2 = w2.astype(compute_dtype)
    w3L = w3L.astype(compute_dtype)

    def _rep(a):
        zeros = (0,) * a.ndim
        return pl.BlockSpec(a.shape, lambda b: zeros)

    kernel = functools.partial(_fused_embed_kernel, H=H, W=W, cmid=cmid)

    flops = 2 * B * (H * Wp) * 9 * (Cin * emb + (2 * cmid) ** 2 + cmid ** 2)
    weight_bytes = sum(int(np.prod(a.shape)) * a.dtype.itemsize
                       for a in (wf, bf, w2, b2, w3L, b3L))
    bytes_accessed = int(B * (Mp * Cin * jnp.dtype(compute_dtype).itemsize
                              + N * emb * jnp.dtype(out_dtype).itemsize)
                         + weight_bytes)

    return pl.pallas_call(
        kernel,
        out_shape=jax.ShapeDtypeStruct((B, N, emb), out_dtype),
        grid=(B,),
        in_specs=[
            pl.BlockSpec((pl.Squeezed(), Mp, Cin), lambda b: (b, 0, 0)),
            _rep(wf), _rep(bf), _rep(w2), _rep(b2), _rep(w3L), _rep(b3L),
        ],
        out_specs=pl.BlockSpec((pl.Squeezed(), N, emb), lambda b: (b, 0, 0)),
        scratch_shapes=[pltpu.VMEM((Mp, 2 * cmid), compute_dtype),
                        pltpu.VMEM((Mp, cmid), compute_dtype)],
        compiler_params=pltpu.CompilerParams(
            dimension_semantics=("parallel",),
            vmem_limit_bytes=32 * 1024 * 1024),
        cost_estimate=pl.CostEstimate(
            flops=flops, transcendentals=0, bytes_accessed=bytes_accessed),
    )(xflat, wf, bf, w2, b2, w3L, b3L)


# ----------------------------- parameter init ------------------------------ #
def init_params(key, in_chans, embed_dim):
    cmid = embed_dim // 4

    def conv_params(k, cin, cout, ksize):
        kw, kb = jax.random.split(k)
        fan_in = cin * ksize * ksize
        bound = 1.0 / np.sqrt(fan_in)          # nn.Conv2d default init range
        w = jax.random.uniform(kw, (cout, cin, ksize, ksize), jnp.float32, -bound, bound)
        b = jax.random.uniform(kb, (cout,), jnp.float32, -bound, bound)
        return w, b

    keys = jax.random.split(key, 7)
    return {
        "b1": [conv_params(keys[0], in_chans, cmid, 1)],
        "b3": [conv_params(keys[1], in_chans, cmid, 3)],
        "b5": [conv_params(keys[2], in_chans, cmid, 3),
               conv_params(keys[3], cmid, cmid, 3)],
        "b7": [conv_params(keys[4], in_chans, cmid, 3),
               conv_params(keys[5], cmid, cmid, 3),
               conv_params(keys[6], cmid, cmid, 3)],
    }


# --------------------------- reference (lax conv) --------------------------- #
def _ref_conv(x_nchw, w, b, pad):
    y = jax.lax.conv_general_dilated(
        x_nchw, w, (1, 1), [(pad, pad), (pad, pad)],
        dimension_numbers=("NCHW", "OIHW", "NCHW"))
    return y + b[None, :, None, None]


def reference(x_nchw, params):
    outs = []
    for name in ["b1", "b3", "b5", "b7"]:
        t = x_nchw
        for (w, b) in params[name]:
            pad = 0 if name == "b1" else 1
            t = _ref_conv(t, w, b, pad)
        outs.append(t)
    cat = jnp.concatenate(outs, axis=1)          # (B, C, H, W)
    B, C, H, W = cat.shape
    return jnp.transpose(cat, (0, 2, 3, 1)).reshape(B, H * W, C)


# ----------------------------------- main ----------------------------------- #
if __name__ == "__main__":
    key = jax.random.PRNGKey(0)
    kx, kp = jax.random.split(key)

    B, in_chans, H, W = 2, 16, 16, 16   # small shapes; module default is 64 ch, 48x48
    embed_dim = 32                      # module default 128; embed_dim//4 per branch

    x = jax.random.normal(kx, (B, in_chans, H, W), jnp.float32)  # NCHW like PyTorch
    params = init_params(kp, in_chans, embed_dim)

    ref = jax.block_until_ready(reference(x, params))

    # f32 path: tight check against the lax reference.
    out_f32 = jax.block_until_ready(
        multi_patch_embed(x, params, compute_dtype=jnp.float32))
    assert out_f32.shape == (B, H * W, embed_dim), out_f32.shape
    np.testing.assert_allclose(np.asarray(out_f32), np.asarray(ref),
                               atol=1e-4, rtol=1e-4)

    # bf16 path (perf config): f32 accumulation + f32 bias, loose tolerance.
    out_bf16 = jax.block_until_ready(
        multi_patch_embed(x, params, compute_dtype=jnp.bfloat16))
    assert out_bf16.shape == (B, H * W, embed_dim), out_bf16.shape
    np.testing.assert_allclose(np.asarray(out_bf16), np.asarray(ref),
                               atol=1e-1, rtol=1e-1)

    print("KERNEL_OK")
</pallas_src>

<mosaic_0001>
module attributes {stable_mosaic.version = 11 : i64} {
  func.func @_fused_embed_kernel(%arg0: i32, %arg1: memref<1x328x16xf32, #tpu.memory_space<vmem>>, %arg2: memref<9x16x32xf32, #tpu.memory_space<vmem>>, %arg3: memref<1x32xf32, #tpu.memory_space<vmem>>, %arg4: memref<9x16x16xf32, #tpu.memory_space<vmem>>, %arg5: memref<1x16xf32, #tpu.memory_space<vmem>>, %arg6: memref<9x8x8xf32, #tpu.memory_space<vmem>>, %arg7: memref<1x8xf32, #tpu.memory_space<vmem>>, %arg8: memref<1x256x32xf32, #tpu.memory_space<vmem>>, %arg9: memref<328x16xf32, #tpu.memory_space<vmem>>, %arg10: memref<328x8xf32, #tpu.memory_space<vmem>>) attributes {dimension_semantics = [#tpu.dimension_semantics<parallel>], iteration_bounds = array<i64: 2>, scalar_prefetch = 0 : i64, scratch_operands = 2 : i64, tpu.core_type = #tpu.core_type<tc>, window_params = [{transform_indices = @transform_0, window_bounds = array<i64: 1, 328, 16>}, {pipeline_mode = #tpu.pipeline_mode<synchronous>, transform_indices = @transform_1, window_bounds = array<i64: 9, 16, 32>}, {pipeline_mode = #tpu.pipeline_mode<synchronous>, transform_indices = @transform_2, window_bounds = array<i64: 1, 32>}, {pipeline_mode = #tpu.pipeline_mode<synchronous>, transform_indices = @transform_3, window_bounds = array<i64: 9, 16, 16>}, {pipeline_mode = #tpu.pipeline_mode<synchronous>, transform_indices = @transform_4, window_bounds = array<i64: 1, 16>}, {pipeline_mode = #tpu.pipeline_mode<synchronous>, transform_indices = @transform_5, window_bounds = array<i64: 9, 8, 8>}, {pipeline_mode = #tpu.pipeline_mode<synchronous>, transform_indices = @transform_6, window_bounds = array<i64: 1, 8>}, {transform_indices = @transform_7, window_bounds = array<i64: 1, 256, 32>}]} {
    %0 = tpu.iota {dimensions = array<i32: 0>} : vector<288x1xi32>
    %c18_i32 = arith.constant 18 : i32
    %c0_i32 = arith.constant 0 : i32
    %1 = arith.cmpi eq, %c18_i32, %c0_i32 : i32
    %c1_i32 = arith.constant 1 : i32
    %2 = arith.select %1, %c1_i32, %c18_i32 : i32
    %3 = vector.broadcast %2 : i32 to vector<288x1xi32>
    %4 = arith.remsi %0, %3 : vector<288x1xi32>
    %c0_i32_0 = arith.constant 0 : i32
    %5 = vector.broadcast %c0_i32_0 : i32 to vector<288x1xi32>
    %6 = arith.cmpi ne, %4, %5 : vector<288x1xi32>
    %c0_i32_1 = arith.constant 0 : i32
    %7 = vector.broadcast %c0_i32_1 : i32 to vector<288x1xi32>
    %8 = arith.cmpi slt, %4, %7 : vector<288x1xi32>
    %c0_i32_2 = arith.constant 0 : i32
    %9 = arith.cmpi slt, %2, %c0_i32_2 : i32
    %10 = vector.broadcast %9 : i1 to vector<288x1xi1>
    %11 = vector.broadcast %10 : vector<288x1xi1> to vector<288x1xi1>
    %12 = arith.xori %8, %11 : vector<288x1xi1>
    %13 = arith.andi %12, %6 : vector<288x1xi1>
    %14 = vector.broadcast %2 : i32 to vector<288x1xi32>
    %15 = arith.addi %4, %14 : vector<288x1xi32>
    %16 = arith.select %13, %15, %4 : vector<288x1xi1>, vector<288x1xi32>
    %c16_i32 = arith.constant 16 : i32
    %17 = vector.broadcast %c16_i32 : i32 to vector<288x1xi32>
    %18 = arith.cmpi slt, %16, %17 : vector<288x1xi32>
    %c0 = arith.constant 0 : index
    %c0_3 = arith.constant 0 : index
    %c0_4 = arith.constant 0 : index
    %19 = vector.load %arg1[%c0, %c0_3, %c0_4] : memref<1x328x16xf32, #tpu.memory_space<vmem>>, vector<1x288x16xf32>
    %20 = vector.shape_cast %19 : vector<1x288x16xf32> to vector<288x16xf32>
    %c0_5 = arith.constant 0 : index
    %c0_6 = arith.constant 0 : index
    %c0_7 = arith.constant 0 : index
    %21 = vector.load %arg2[%c0_5, %c0_6, %c0_7] : memref<9x16x32xf32, #tpu.memory_space<vmem>>, vector<1x16x32xf32>
    %22 = vector.shape_cast %21 : vector<1x16x32xf32> to vector<16x32xf32>
    %cst = arith.constant dense<0.000000e+00> : vector<288x32xf32>
    %23 = tpu.matmul %20, %22, %cst {dimension_numbers = #tpu.dot_dimension_numbers<[1], [0], [0], [1], [0, 0, 1, 1], [], []>} : vector<288x16xf32>, vector<16x32xf32>, vector<288x32xf32> -> vector<288x32xf32>
    %c0_8 = arith.constant 0 : index
    %c1 = arith.constant 1 : index
    %c0_9 = arith.constant 0 : index
    %24 = vector.load %arg1[%c0_8, %c1, %c0_9] : memref<1x328x16xf32, #tpu.memory_space<vmem>>, vector<1x288x16xf32>
    %25 = vector.shape_cast %24 : vector<1x288x16xf32> to vector<288x16xf32>
    %c1_10 = arith.constant 1 : index
    %c0_11 = arith.constant 0 : index
    %c0_12 = arith.constant 0 : index
    %26 = vector.load %arg2[%c1_10, %c0_11, %c0_12] : memref<9x16x32xf32, #tpu.memory_space<vmem>>, vector<1x16x32xf32>
    %27 = vector.shape_cast %26 : vector<1x16x32xf32> to vector<16x32xf32>
    %cst_13 = arith.constant dense<0.000000e+00> : vector<288x32xf32>
    %28 = tpu.matmul %25, %27, %cst_13 {dimension_numbers = #tpu.dot_dimension_numbers<[1], [0], [0], [1], [0, 0, 1, 1], [], []>} : vector<288x16xf32>, vector<16x32xf32>, vector<288x32xf32> -> vector<288x32xf32>
    %29 = arith.addf %23, %28 : vector<288x32xf32>
    %c0_14 = arith.constant 0 : index
    %c2 = arith.constant 2 : index
    %c0_15 = arith.constant 0 : index
    %30 = vector.load %arg1[%c0_14, %c2, %c0_15] : memref<1x328x16xf32, #tpu.memory_space<vmem>>, vector<1x288x16xf32>
    %31 = vector.shape_cast %30 : vector<1x288x16xf32> to vector<288x16xf32>
    %c2_16 = arith.constant 2 : index
    %c0_17 = arith.constant 0 : index
    %c0_18 = arith.constant 0 : index
    %32 = vector.load %arg2[%c2_16, %c0_17, %c0_18] : memref<9x16x32xf32, #tpu.memory_space<vmem>>, vector<1x16x32xf32>
    %33 = vector.shape_cast %32 : vector<1x16x32xf32> to vector<16x32xf32>
    %cst_19 = arith.constant dense<0.000000e+00> : vector<288x32xf32>
    %34 = tpu.matmul %31, %33, %cst_19 {dimension_numbers = #tpu.dot_dimension_numbers<[1], [0], [0], [1], [0, 0, 1, 1], [], []>} : vector<288x16xf32>, vector<16x32xf32>, vector<288x32xf32> -> vector<288x32xf32>
    %35 = arith.addf %29, %34 : vector<288x32xf32>
    %c0_20 = arith.constant 0 : index
    %c18 = arith.constant 18 : index
    %c0_21 = arith.constant 0 : index
    %36 = vector.load %arg1[%c0_20, %c18, %c0_21] : memref<1x328x16xf32, #tpu.memory_space<vmem>>, vector<1x288x16xf32>
    %37 = vector.shape_cast %36 : vector<1x288x16xf32> to vector<288x16xf32>
    %c3 = arith.constant 3 : index
    %c0_22 = arith.constant 0 : index
    %c0_23 = arith.constant 0 : index
    %38 = vector.load %arg2[%c3, %c0_22, %c0_23] : memref<9x16x32xf32, #tpu.memory_space<vmem>>, vector<1x16x32xf32>
    %39 = vector.shape_cast %38 : vector<1x16x32xf32> to vector<16x32xf32>
    %cst_24 = arith.constant dense<0.000000e+00> : vector<288x32xf32>
    %40 = tpu.matmul %37, %39, %cst_24 {dimension_numbers = #tpu.dot_dimension_numbers<[1], [0], [0], [1], [0, 0, 1, 1], [], []>} : vector<288x16xf32>, vector<16x32xf32>, vector<288x32xf32> -> vector<288x32xf32>
    %41 = arith.addf %35, %40 : vector<288x32xf32>
    %c0_25 = arith.constant 0 : index
    %c19 = arith.constant 19 : index
    %c0_26 = arith.constant 0 : index
    %42 = vector.load %arg1[%c0_25, %c19, %c0_26] : memref<1x328x16xf32, #tpu.memory_space<vmem>>, vector<1x288x16xf32>
    %43 = vector.shape_cast %42 : vector<1x288x16xf32> to vector<288x16xf32>
    %c4 = arith.constant 4 : index
    %c0_27 = arith.constant 0 : index
    %c0_28 = arith.constant 0 : index
    %44 = vector.load %arg2[%c4, %c0_27, %c0_28] : memref<9x16x32xf32, #tpu.memory_space<vmem>>, vector<1x16x32xf32>
    %45 = vector.shape_cast %44 : vector<1x16x32xf32> to vector<16x32xf32>
    %cst_29 = arith.constant dense<0.000000e+00> : vector<288x32xf32>
    %46 = tpu.matmul %43, %45, %cst_29 {dimension_numbers = #tpu.dot_dimension_numbers<[1], [0], [0], [1], [0, 0, 1, 1], [], []>} : vector<288x16xf32>, vector<16x32xf32>, vector<288x32xf32> -> vector<288x32xf32>
    %47 = arith.addf %41, %46 : vector<288x32xf32>
    %c0_30 = arith.constant 0 : index
    %c20 = arith.constant 20 : index
    %c0_31 = arith.constant 0 : index
    %48 = vector.load %arg1[%c0_30, %c20, %c0_31] : memref<1x328x16xf32, #tpu.memory_space<vmem>>, vector<1x288x16xf32>
    %49 = vector.shape_cast %48 : vector<1x288x16xf32> to vector<288x16xf32>
    %c5 = arith.constant 5 : index
    %c0_32 = arith.constant 0 : index
    %c0_33 = arith.constant 0 : index
    %50 = vector.load %arg2[%c5, %c0_32, %c0_33] : memref<9x16x32xf32, #tpu.memory_space<vmem>>, vector<1x16x32xf32>
    %51 = vector.shape_cast %50 : vector<1x16x32xf32> to vector<16x32xf32>
    %cst_34 = arith.constant dense<0.000000e+00> : vector<288x32xf32>
    %52 = tpu.matmul %49, %51, %cst_34 {dimension_numbers = #tpu.dot_dimension_numbers<[1], [0], [0], [1], [0, 0, 1, 1], [], []>} : vector<288x16xf32>, vector<16x32xf32>, vector<288x32xf32> -> vector<288x32xf32>
    %53 = arith.addf %47, %52 : vector<288x32xf32>
    %c0_35 = arith.constant 0 : index
    %c36 = arith.constant 36 : index
    %c0_36 = arith.constant 0 : index
    %54 = vector.load %arg1[%c0_35, %c36, %c0_36] : memref<1x328x16xf32, #tpu.memory_space<vmem>>, vector<1x288x16xf32>
    %55 = vector.shape_cast %54 : vector<1x288x16xf32> to vector<288x16xf32>
    %c6 = arith.constant 6 : index
    %c0_37 = arith.constant 0 : index
    %c0_38 = arith.constant 0 : index
    %56 = vector.load %arg2[%c6, %c0_37, %c0_38] : memref<9x16x32xf32, #tpu.memory_space<vmem>>, vector<1x16x32xf32>
    %57 = vector.shape_cast %56 : vector<1x16x32xf32> to vector<16x32xf32>
    %cst_39 = arith.constant dense<0.000000e+00> : vector<288x32xf32>
    %58 = tpu.matmul %55, %57, %cst_39 {dimension_numbers = #tpu.dot_dimension_numbers<[1], [0], [0], [1], [0, 0, 1, 1], [], []>} : vector<288x16xf32>, vector<16x32xf32>, vector<288x32xf32> -> vector<288x32xf32>
    %59 = arith.addf %53, %58 : vector<288x32xf32>
    %c0_40 = arith.constant 0 : index
    %c37 = arith.constant 37 : index
    %c0_41 = arith.constant 0 : index
    %60 = vector.load %arg1[%c0_40, %c37, %c0_41] : memref<1x328x16xf32, #tpu.memory_space<vmem>>, vector<1x288x16xf32>
    %61 = vector.shape_cast %60 : vector<1x288x16xf32> to vector<288x16xf32>
    %c7 = arith.constant 7 : index
    %c0_42 = arith.constant 0 : index
    %c0_43 = arith.constant 0 : index
    %62 = vector.load %arg2[%c7, %c0_42, %c0_43] : memref<9x16x32xf32, #tpu.memory_space<vmem>>, vector<1x16x32xf32>
    %63 = vector.shape_cast %62 : vector<1x16x32xf32> to vector<16x32xf32>
    %cst_44 = arith.constant dense<0.000000e+00> : vector<288x32xf32>
    %64 = tpu.matmul %61, %63, %cst_44 {dimension_numbers = #tpu.dot_dimension_numbers<[1], [0], [0], [1], [0, 0, 1, 1], [], []>} : vector<288x16xf32>, vector<16x32xf32>, vector<288x32xf32> -> vector<288x32xf32>
    %65 = arith.addf %59, %64 : vector<288x32xf32>
    %c0_45 = arith.constant 0 : index
    %c38 = arith.constant 38 : index
    %c0_46 = arith.constant 0 : index
    %66 = vector.load %arg1[%c0_45, %c38, %c0_46] : memref<1x328x16xf32, #tpu.memory_space<vmem>>, vector<1x288x16xf32>
    %67 = vector.shape_cast %66 : vector<1x288x16xf32> to vector<288x16xf32>
    %c8 = arith.constant 8 : index
    %c0_47 = arith.constant 0 : index
    %c0_48 = arith.constant 0 : index
    %68 = vector.load %arg2[%c8, %c0_47, %c0_48] : memref<9x16x32xf32, #tpu.memory_space<vmem>>, vector<1x16x32xf32>
    %69 = vector.shape_cast %68 : vector<1x16x32xf32> to vector<16x32xf32>
    %cst_49 = arith.constant dense<0.000000e+00> : vector<288x32xf32>
    %70 = tpu.matmul %67, %69, %cst_49 {dimension_numbers = #tpu.dot_dimension_numbers<[1], [0], [0], [1], [0, 0, 1, 1], [], []>} : vector<288x16xf32>, vector<16x32xf32>, vector<288x32xf32> -> vector<288x32xf32>
    %71 = arith.addf %65, %70 : vector<288x32xf32>
    %c0_50 = arith.constant 0 : index
    %c0_51 = arith.constant 0 : index
    %72 = vector.load %arg3[%c0_50, %c0_51] : memref<1x32xf32, #tpu.memory_space<vmem>>, vector<1x32xf32>
    %73 = vector.broadcast %72 : vector<1x32xf32> to vector<288x32xf32>
    %74 = arith.addf %71, %73 : vector<288x32xf32>
    %75 = vector.extract_strided_slice %74 {offsets = [0, 16], sizes = [288, 16], strides = [1, 1]} : vector<288x32xf32> to vector<288x16xf32>
    %cst_52 = arith.constant 0.000000e+00 : f32
    %76 = vector.broadcast %cst_52 : f32 to vector<19x16xf32>
    %c0_53 = arith.constant 0 : index
    %c0_54 = arith.constant 0 : index
    %77 = vector.load %arg9[%c0_53, %c0_54] : memref<328x16xf32, #tpu.memory_space<vmem>>, vector<19x16xf32>
    tpu.vector_store %arg9[%c0_53, %c0_54], %76 {strides = array<i32>} : memref<328x16xf32, #tpu.memory_space<vmem>>, vector<19x16xf32>,
    %cst_55 = arith.constant 0.000000e+00 : f32
    %78 = vector.broadcast %cst_55 : f32 to vector<21x16xf32>
    %c307 = arith.constant 307 : index
    %c0_56 = arith.constant 0 : index
    %79 = vector.load %arg9[%c307, %c0_56] : memref<328x16xf32, #tpu.memory_space<vmem>>, vector<21x16xf32>
    tpu.vector_store %arg9[%c307, %c0_56], %78 {strides = array<i32>} : memref<328x16xf32, #tpu.memory_space<vmem>>, vector<21x16xf32>,
    %cst_57 = arith.constant 0.000000e+00 : f32
    %80 = vector.shape_cast %18 : vector<288x1xi1> to vector<288x1xi1>
    %81 = vector.broadcast %80 : vector<288x1xi1> to vector<288x16xi1>
    %82 = vector.broadcast %cst_57 : f32 to vector<288x16xf32>
    %83 = arith.select %81, %75, %82 : vector<288x16xi1>, vector<288x16xf32>
    %c19_58 = arith.constant 19 : index
    %c0_59 = arith.constant 0 : index
    %84 = vector.load %arg9[%c19_58, %c0_59] : memref<328x16xf32, #tpu.memory_space<vmem>>, vector<288x16xf32>
    tpu.vector_store %arg9[%c19_58, %c0_59], %83 {strides = array<i32>} : memref<328x16xf32, #tpu.memory_space<vmem>>, vector<288x16xf32>,
    %c0_60 = arith.constant 0 : index
    %c0_61 = arith.constant 0 : index
    %85 = vector.load %arg9[%c0_60, %c0_61] : memref<328x16xf32, #tpu.memory_space<vmem>>, vector<288x16xf32>
    %c0_62 = arith.constant 0 : index
    %c0_63 = arith.constant 0 : index
    %c0_64 = arith.constant 0 : index
    %86 = vector.load %arg4[%c0_62, %c0_63, %c0_64] : memref<9x16x16xf32, #tpu.memory_space<vmem>>, vector<1x16x16xf32>
    %87 = vector.shape_cast %86 : vector<1x16x16xf32> to vector<16x16xf32>
    %cst_65 = arith.constant dense<0.000000e+00> : vector<288x16xf32>
    %88 = tpu.matmul %85, %87, %cst_65 {dimension_numbers = #tpu.dot_dimension_numbers<[1], [0], [0], [1], [0, 0, 1, 1], [], []>} : vector<288x16xf32>, vector<16x16xf32>, vector<288x16xf32> -> vector<288x16xf32>
    %c1_66 = arith.constant 1 : index
    %c0_67 = arith.constant 0 : index
    %89 = vector.load %arg9[%c1_66, %c0_67] : memref<328x16xf32, #tpu.memory_space<vmem>>, vector<288x16xf32>
    %c1_68 = arith.constant 1 : index
    %c0_69 = arith.constant 0 : index
    %c0_70 = arith.constant 0 : index
    %90 = vector.load %arg4[%c1_68, %c0_69, %c0_70] : memref<9x16x16xf32, #tpu.memory_space<vmem>>, vector<1x16x16xf32>
    %91 = vector.shape_cast %90 : vector<1x16x16xf32> to vector<16x16xf32>
    %cst_71 = arith.constant dense<0.000000e+00> : vector<288x16xf32>
    %92 = tpu.matmul %89, %91, %cst_71 {dimension_numbers = #tpu.dot_dimension_numbers<[1], [0], [0], [1], [0, 0, 1, 1], [], []>} : vector<288x16xf32>, vector<16x16xf32>, vector<288x16xf32> -> vector<288x16xf32>
    %93 = arith.addf %88, %92 : vector<288x16xf32>
    %c2_72 = arith.constant 2 : index
    %c0_73 = arith.constant 0 : index
    %94 = vector.load %arg9[%c2_72, %c0_73] : memref<328x16xf32, #tpu.memory_space<vmem>>, vector<288x16xf32>
    %c2_74 = arith.constant 2 : index
    %c0_75 = arith.constant 0 : index
    %c0_76 = arith.constant 0 : index
    %95 = vector.load %arg4[%c2_74, %c0_75, %c0_76] : memref<9x16x16xf32, #tpu.memory_space<vmem>>, vector<1x16x16xf32>
    %96 = vector.shape_cast %95 : vector<1x16x16xf32> to vector<16x16xf32>
    %cst_77 = arith.constant dense<0.000000e+00> : vector<288x16xf32>
    %97 = tpu.matmul %94, %96, %cst_77 {dimension_numbers = #tpu.dot_dimension_numbers<[1], [0], [0], [1], [0, 0, 1, 1], [], []>} : vector<288x16xf32>, vector<16x16xf32>, vector<288x16xf32> -> vector<288x16xf32>
    %98 = arith.addf %93, %97 : vector<288x16xf32>
    %c18_78 = arith.constant 18 : index
    %c0_79 = arith.constant 0 : index
    %99 = vector.load %arg9[%c18_78, %c0_79] : memref<328x16xf32, #tpu.memory_space<vmem>>, vector<288x16xf32>
    %c3_80 = arith.constant 3 : index
    %c0_81 = arith.constant 0 : index
    %c0_82 = arith.constant 0 : index
    %100 = vector.load %arg4[%c3_80, %c0_81, %c0_82] : memref<9x16x16xf32, #tpu.memory_space<vmem>>, vector<1x16x16xf32>
    %101 = vector.shape_cast %100 : vector<1x16x16xf32> to vector<16x16xf32>
    %cst_83 = arith.constant dense<0.000000e+00> : vector<288x16xf32>
    %102 = tpu.matmul %99, %101, %cst_83 {dimension_numbers = #tpu.dot_dimension_numbers<[1], [0], [0], [1], [0, 0, 1, 1], [], []>} : vector<288x16xf32>, vector<16x16xf32>, vector<288x16xf32> -> vector<288x16xf32>
    %103 = arith.addf %98, %102 : vector<288x16xf32>
    %c19_84 = arith.constant 19 : index
    %c0_85 = arith.constant 0 : index
    %104 = vector.load %arg9[%c19_84, %c0_85] : memref<328x16xf32, #tpu.memory_space<vmem>>, vector<288x16xf32>
    %c4_86 = arith.constant 4 : index
    %c0_87 = arith.constant 0 : index
    %c0_88 = arith.constant 0 : index
    %105 = vector.load %arg4[%c4_86, %c0_87, %c0_88] : memref<9x16x16xf32, #tpu.memory_space<vmem>>, vector<1x16x16xf32>
    %106 = vector.shape_cast %105 : vector<1x16x16xf32> to vector<16x16xf32>
    %cst_89 = arith.constant dense<0.000000e+00> : vector<288x16xf32>
    %107 = tpu.matmul %104, %106, %cst_89 {dimension_numbers = #tpu.dot_dimension_numbers<[1], [0], [0], [1], [0, 0, 1, 1], [], []>} : vector<288x16xf32>, vector<16x16xf32>, vector<288x16xf32> -> vector<288x16xf32>
    %108 = arith.addf %103, %107 : vector<288x16xf32>
    %c20_90 = arith.constant 20 : index
    %c0_91 = arith.constant 0 : index
    %109 = vector.load %arg9[%c20_90, %c0_91] : memref<328x16xf32, #tpu.memory_space<vmem>>, vector<288x16xf32>
    %c5_92 = arith.constant 5 : index
    %c0_93 = arith.constant 0 : index
    %c0_94 = arith.constant 0 : index
    %110 = vector.load %arg4[%c5_92, %c0_93, %c0_94] : memref<9x16x16xf32, #tpu.memory_space<vmem>>, vector<1x16x16xf32>
    %111 = vector.shape_cast %110 : vector<1x16x16xf32> to vector<16x16xf32>
    %cst_95 = arith.constant dense<0.000000e+00> : vector<288x16xf32>
    %112 = tpu.matmul %109, %111, %cst_95 {dimension_numbers = #tpu.dot_dimension_numbers<[1], [0], [0], [1], [0, 0, 1, 1], [], []>} : vector<288x16xf32>, vector<16x16xf32>, vector<288x16xf32> -> vector<288x16xf32>
    %113 = arith.addf %108, %112 : vector<288x16xf32>
    %c36_96 = arith.constant 36 : index
    %c0_97 = arith.constant 0 : index
    %114 = vector.load %arg9[%c36_96, %c0_97] : memref<328x16xf32, #tpu.memory_space<vmem>>, vector<288x16xf32>
    %c6_98 = arith.constant 6 : index
    %c0_99 = arith.constant 0 : index
    %c0_100 = arith.constant 0 : index
    %115 = vector.load %arg4[%c6_98, %c0_99, %c0_100] : memref<9x16x16xf32, #tpu.memory_space<vmem>>, vector<1x16x16xf32>
    %116 = vector.shape_cast %115 : vector<1x16x16xf32> to vector<16x16xf32>
    %cst_101 = arith.constant dense<0.000000e+00> : vector<288x16xf32>
    %117 = tpu.matmul %114, %116, %cst_101 {dimension_numbers = #tpu.dot_dimension_numbers<[1], [0], [0], [1], [0, 0, 1, 1], [], []>} : vector<288x16xf32>, vector<16x16xf32>, vector<288x16xf32> -> vector<288x16xf32>
    %118 = arith.addf %113, %117 : vector<288x16xf32>
    %c37_102 = arith.constant 37 : index
    %c0_103 = arith.constant 0 : index
    %119 = vector.load %arg9[%c37_102, %c0_103] : memref<328x16xf32, #tpu.memory_space<vmem>>, vector<288x16xf32>
    %c7_104 = arith.constant 7 : index
    %c0_105 = arith.constant 0 : index
    %c0_106 = arith.constant 0 : index
    %120 = vector.load %arg4[%c7_104, %c0_105, %c0_106] : memref<9x16x16xf32, #tpu.memory_space<vmem>>, vector<1x16x16xf32>
    %121 = vector.shape_cast %120 : vector<1x16x16xf32> to vector<16x16xf32>
    %cst_107 = arith.constant dense<0.000000e+00> : vector<288x16xf32>
    %122 = tpu.matmul %119, %121, %cst_107 {dimension_numbers = #tpu.dot_dimension_numbers<[1], [0], [0], [1], [0, 0, 1, 1], [], []>} : vector<288x16xf32>, vector<16x16xf32>, vector<288x16xf32> -> vector<288x16xf32>
    %123 = arith.addf %118, %122 : vector<288x16xf32>
    %c38_108 = arith.constant 38 : index
    %c0_109 = arith.constant 0 : index
    %124 = vector.load %arg9[%c38_108, %c0_109] : memref<328x16xf32, #tpu.memory_space<vmem>>, vector<288x16xf32>
    %c8_110 = arith.constant 8 : index
    %c0_111 = arith.constant 0 : index
    %c0_112 = arith.constant 0 : index
    %125 = vector.load %arg4[%c8_110, %c0_111, %c0_112] : memref<9x16x16xf32, #tpu.memory_space<vmem>>, vector<1x16x16xf32>
    %126 = vector.shape_cast %125 : vector<1x16x16xf32> to vector<16x16xf32>
    %cst_113 = arith.constant dense<0.000000e+00> : vector<288x16xf32>
    %127 = tpu.matmul %124, %126, %cst_113 {dimension_numbers = #tpu.dot_dimension_numbers<[1], [0], [0], [1], [0, 0, 1, 1], [], []>} : vector<288x16xf32>, vector<16x16xf32>, vector<288x16xf32> -> vector<288x16xf32>
    %128 = arith.addf %123, %127 : vector<288x16xf32>
    %c0_114 = arith.constant 0 : index
    %c0_115 = arith.constant 0 : index
    %129 = vector.load %arg5[%c0_114, %c0_115] : memref<1x16xf32, #tpu.memory_space<vmem>>, vector<1x16xf32>
    %130 = vector.broadcast %129 : vector<1x16xf32> to vector<288x16xf32>
    %131 = arith.addf %128, %130 : vector<288x16xf32>
    %132 = vector.extract_strided_slice %131 {offsets = [0, 8], sizes = [288, 8], strides = [1, 1]} : vector<288x16xf32> to vector<288x8xf32>
    %cst_116 = arith.constant 0.000000e+00 : f32
    %133 = vector.broadcast %cst_116 : f32 to vector<19x8xf32>
    %c0_117 = arith.constant 0 : index
    %c0_118 = arith.constant 0 : index
    %134 = vector.load %arg10[%c0_117, %c0_118] : memref<328x8xf32, #tpu.memory_space<vmem>>, vector<19x8xf32>
    tpu.vector_store %arg10[%c0_117, %c0_118], %133 {strides = array<i32>} : memref<328x8xf32, #tpu.memory_space<vmem>>, vector<19x8xf32>,
    %cst_119 = arith.constant 0.000000e+00 : f32
    %135 = vector.broadcast %cst_119 : f32 to vector<21x8xf32>
    %c307_120 = arith.constant 307 : index
    %c0_121 = arith.constant 0 : index
    %136 = vector.load %arg10[%c307_120, %c0_121] : memref<328x8xf32, #tpu.memory_space<vmem>>, vector<21x8xf32>
    tpu.vector_store %arg10[%c307_120, %c0_121], %135 {strides = array<i32>} : memref<328x8xf32, #tpu.memory_space<vmem>>, vector<21x8xf32>,
    %cst_122 = arith.constant 0.000000e+00 : f32
    %137 = vector.shape_cast %18 : vector<288x1xi1> to vector<288x1xi1>
    %138 = vector.broadcast %137 : vector<288x1xi1> to vector<288x8xi1>
    %139 = vector.broadcast %cst_122 : f32 to vector<288x8xf32>
    %140 = arith.select %138, %132, %139 : vector<288x8xi1>, vector<288x8xf32>
    %c19_123 = arith.constant 19 : index
    %c0_124 = arith.constant 0 : index
    %141 = vector.load %arg10[%c19_123, %c0_124] : memref<328x8xf32, #tpu.memory_space<vmem>>, vector<288x8xf32>
    tpu.vector_store %arg10[%c19_123, %c0_124], %140 {strides = array<i32>} : memref<328x8xf32, #tpu.memory_space<vmem>>, vector<288x8xf32>,
    %c0_125 = arith.constant 0 : index
    %c0_126 = arith.constant 0 : index
    %142 = vector.load %arg10[%c0_125, %c0_126] : memref<328x8xf32, #tpu.memory_space<vmem>>, vector<288x8xf32>
    %c0_127 = arith.constant 0 : index
    %c0_128 = arith.constant 0 : index
    %c0_129 = arith.constant 0 : index
    %143 = vector.load %arg6[%c0_127, %c0_128, %c0_129] : memref<9x8x8xf32, #tpu.memory_space<vmem>>, vector<1x8x8xf32>
    %144 = vector.shape_cast %143 : vector<1x8x8xf32> to vector<8x8xf32>
    %cst_130 = arith.constant dense<0.000000e+00> : vector<288x8xf32>
    %145 = tpu.matmul %142, %144, %cst_130 {dimension_numbers = #tpu.dot_dimension_numbers<[1], [0], [0], [1], [0, 0, 1, 1], [], []>} : vector<288x8xf32>, vector<8x8xf32>, vector<288x8xf32> -> vector<288x8xf32>
    %c1_131 = arith.constant 1 : index
    %c0_132 = arith.constant 0 : index
    %146 = vector.load %arg10[%c1_131, %c0_132] : memref<328x8xf32, #tpu.memory_space<vmem>>, vector<288x8xf32>
    %c1_133 = arith.constant 1 : index
    %c0_134 = arith.constant 0 : index
    %c0_135 = arith.constant 0 : index
    %147 = vector.load %arg6[%c1_133, %c0_134, %c0_135] : memref<9x8x8xf32, #tpu.memory_space<vmem>>, vector<1x8x8xf32>
    %148 = vector.shape_cast %147 : vector<1x8x8xf32> to vector<8x8xf32>
    %cst_136 = arith.constant dense<0.000000e+00> : vector<288x8xf32>
    %149 = tpu.matmul %146, %148, %cst_136 {dimension_numbers = #tpu.dot_dimension_numbers<[1], [0], [0], [1], [0, 0, 1, 1], [], []>} : vector<288x8xf32>, vector<8x8xf32>, vector<288x8xf32> -> vector<288x8xf32>
    %150 = arith.addf %145, %149 : vector<288x8xf32>
    %c2_137 = arith.constant 2 : index
    %c0_138 = arith.constant 0 : index
    %151 = vector.load %arg10[%c2_137, %c0_138] : memref<328x8xf32, #tpu.memory_space<vmem>>, vector<288x8xf32>
    %c2_139 = arith.constant 2 : index
    %c0_140 = arith.constant 0 : index
    %c0_141 = arith.constant 0 : index
    %152 = vector.load %arg6[%c2_139, %c0_140, %c0_141] : memref<9x8x8xf32, #tpu.memory_space<vmem>>, vector<1x8x8xf32>
    %153 = vector.shape_cast %152 : vector<1x8x8xf32> to vector<8x8xf32>
    %cst_142 = arith.constant dense<0.000000e+00> : vector<288x8xf32>
    %154 = tpu.matmul %151, %153, %cst_142 {dimension_numbers = #tpu.dot_dimension_numbers<[1], [0], [0], [1], [0, 0, 1, 1], [], []>} : vector<288x8xf32>, vector<8x8xf32>, vector<288x8xf32> -> vector<288x8xf32>
    %155 = arith.addf %150, %154 : vector<288x8xf32>
    %c18_143 = arith.constant 18 : index
    %c0_144 = arith.constant 0 : index
    %156 = vector.load %arg10[%c18_143, %c0_144] : memref<328x8xf32, #tpu.memory_space<vmem>>, vector<288x8xf32>
    %c3_145 = arith.constant 3 : index
    %c0_146 = arith.constant 0 : index
    %c0_147 = arith.constant 0 : index
    %157 = vector.load %arg6[%c3_145, %c0_146, %c0_147] : memref<9x8x8xf32, #tpu.memory_space<vmem>>, vector<1x8x8xf32>
    %158 = vector.shape_cast %157 : vector<1x8x8xf32> to vector<8x8xf32>
    %cst_148 = arith.constant dense<0.000000e+00> : vector<288x8xf32>
    %159 = tpu.matmul %156, %158, %cst_148 {dimension_numbers = #tpu.dot_dimension_numbers<[1], [0], [0], [1], [0, 0, 1, 1], [], []>} : vector<288x8xf32>, vector<8x8xf32>, vector<288x8xf32> -> vector<288x8xf32>
    %160 = arith.addf %155, %159 : vector<288x8xf32>
    %c19_149 = arith.constant 19 : index
    %c0_150 = arith.constant 0 : index
    %161 = vector.load %arg10[%c19_149, %c0_150] : memref<328x8xf32, #tpu.memory_space<vmem>>, vector<288x8xf32>
    %c4_151 = arith.constant 4 : index
    %c0_152 = arith.constant 0 : index
    %c0_153 = arith.constant 0 : index
    %162 = vector.load %arg6[%c4_151, %c0_152, %c0_153] : memref<9x8x8xf32, #tpu.memory_space<vmem>>, vector<1x8x8xf32>
    %163 = vector.shape_cast %162 : vector<1x8x8xf32> to vector<8x8xf32>
    %cst_154 = arith.constant dense<0.000000e+00> : vector<288x8xf32>
    %164 = tpu.matmul %161, %163, %cst_154 {dimension_numbers = #tpu.dot_dimension_numbers<[1], [0], [0], [1], [0, 0, 1, 1], [], []>} : vector<288x8xf32>, vector<8x8xf32>, vector<288x8xf32> -> vector<288x8xf32>
    %165 = arith.addf %160, %164 : vector<288x8xf32>
    %c20_155 = arith.constant 20 : index
    %c0_156 = arith.constant 0 : index
    %166 = vector.load %arg10[%c20_155, %c0_156] : memref<328x8xf32, #tpu.memory_space<vmem>>, vector<288x8xf32>
    %c5_157 = arith.constant 5 : index
    %c0_158 = arith.constant 0 : index
    %c0_159 = arith.constant 0 : index
    %167 = vector.load %arg6[%c5_157, %c0_158, %c0_159] : memref<9x8x8xf32, #tpu.memory_space<vmem>>, vector<1x8x8xf32>
    %168 = vector.shape_cast %167 : vector<1x8x8xf32> to vector<8x8xf32>
    %cst_160 = arith.constant dense<0.000000e+00> : vector<288x8xf32>
    %169 = tpu.matmul %166, %168, %cst_160 {dimension_numbers = #tpu.dot_dimension_numbers<[1], [0], [0], [1], [0, 0, 1, 1], [], []>} : vector<288x8xf32>, vector<8x8xf32>, vector<288x8xf32> -> vector<288x8xf32>
    %170 = arith.addf %165, %169 : vector<288x8xf32>
    %c36_161 = arith.constant 36 : index
    %c0_162 = arith.constant 0 : index
    %171 = vector.load %arg10[%c36_161, %c0_162] : memref<328x8xf32, #tpu.memory_space<vmem>>, vector<288x8xf32>
    %c6_163 = arith.constant 6 : index
    %c0_164 = arith.constant 0 : index
    %c0_165 = arith.constant 0 : index
    %172 = vector.load %arg6[%c6_163, %c0_164, %c0_165] : memref<9x8x8xf32, #tpu.memory_space<vmem>>, vector<1x8x8xf32>
    %173 = vector.shape_cast %172 : vector<1x8x8xf32> to vector<8x8xf32>
    %cst_166 = arith.constant dense<0.000000e+00> : vector<288x8xf32>
    %174 = tpu.matmul %171, %173, %cst_166 {dimension_numbers = #tpu.dot_dimension_numbers<[1], [0], [0], [1], [0, 0, 1, 1], [], []>} : vector<288x8xf32>, vector<8x8xf32>, vector<288x8xf32> -> vector<288x8xf32>
    %175 = arith.addf %170, %174 : vector<288x8xf32>
    %c37_167 = arith.constant 37 : index
    %c0_168 = arith.constant 0 : index
    %176 = vector.load %arg10[%c37_167, %c0_168] : memref<328x8xf32, #tpu.memory_space<vmem>>, vector<288x8xf32>
    %c7_169 = arith.constant 7 : index
    %c0_170 = arith.constant 0 : index
    %c0_171 = arith.constant 0 : index
    %177 = vector.load %arg6[%c7_169, %c0_170, %c0_171] : memref<9x8x8xf32, #tpu.memory_space<vmem>>, vector<1x8x8xf32>
    %178 = vector.shape_cast %177 : vector<1x8x8xf32> to vector<8x8xf32>
    %cst_172 = arith.constant dense<0.000000e+00> : vector<288x8xf32>
    %179 = tpu.matmul %176, %178, %cst_172 {dimension_numbers = #tpu.dot_dimension_numbers<[1], [0], [0], [1], [0, 0, 1, 1], [], []>} : vector<288x8xf32>, vector<8x8xf32>, vector<288x8xf32> -> vector<288x8xf32>
    %180 = arith.addf %175, %179 : vector<288x8xf32>
    %c38_173 = arith.constant 38 : index
    %c0_174 = arith.constant 0 : index
    %181 = vector.load %arg10[%c38_173, %c0_174] : memref<328x8xf32, #tpu.memory_space<vmem>>, vector<288x8xf32>
    %c8_175 = arith.constant 8 : index
    %c0_176 = arith.constant 0 : index
    %c0_177 = arith.constant 0 : index
    %182 = vector.load %arg6[%c8_175, %c0_176, %c0_177] : memref<9x8x8xf32, #tpu.memory_space<vmem>>, vector<1x8x8xf32>
    %183 = vector.shape_cast %182 : vector<1x8x8xf32> to vector<8x8xf32>
    %cst_178 = arith.constant dense<0.000000e+00> : vector<288x8xf32>
    %184 = tpu.matmul %181, %183, %cst_178 {dimension_numbers = #tpu.dot_dimension_numbers<[1], [0], [0], [1], [0, 0, 1, 1], [], []>} : vector<288x8xf32>, vector<8x8xf32>, vector<288x8xf32> -> vector<288x8xf32>
    %185 = arith.addf %180, %184 : vector<288x8xf32>
    %c0_179 = arith.constant 0 : index
    %c0_180 = arith.constant 0 : index
    %186 = vector.load %arg7[%c0_179, %c0_180] : memref<1x8xf32, #tpu.memory_space<vmem>>, vector<1x8xf32>
    %187 = vector.broadcast %186 : vector<1x8xf32> to vector<288x8xf32>
    %188 = arith.addf %185, %187 : vector<288x8xf32>
    %189 = vector.extract_strided_slice %74 {offsets = [0, 0], sizes = [288, 16], strides = [1, 1]} : vector<288x32xf32> to vector<288x16xf32>
    %190 = vector.extract_strided_slice %131 {offsets = [0, 0], sizes = [288, 8], strides = [1, 1]} : vector<288x16xf32> to vector<288x8xf32>
    %191 = tpu.concatenate %189, %190, %188 in 1 : vector<288x16xf32>, vector<288x8xf32>, vector<288x8xf32> -> vector<288x32xf32>
    %192 = vector.shape_cast %191 : vector<288x32xf32> to vector<16x18x32xf32>
    %193 = vector.extract_strided_slice %192 {offsets = [0, 0, 0], sizes = [16, 16, 32], strides = [1, 1, 1]} : vector<16x18x32xf32> to vector<16x16x32xf32>
    %194 = vector.shape_cast %193 : vector<16x16x32xf32> to vector<256x32xf32>
    %c0_181 = arith.constant 0 : index
    %c0_182 = arith.constant 0 : index
    %c0_183 = arith.constant 0 : index
    %195 = vector.load %arg8[%c0_181, %c0_182, %c0_183] : memref<1x256x32xf32, #tpu.memory_space<vmem>>, vector<1x256x32xf32>
    %196 = vector.shape_cast %195 : vector<1x256x32xf32> to vector<256x32xf32>
    %197 = vector.shape_cast %194 : vector<256x32xf32> to vector<1x256x32xf32>
    tpu.vector_store %arg8[%c0_181, %c0_182, %c0_183], %197 {strides = array<i32>} : memref<1x256x32xf32, #tpu.memory_space<vmem>>, vector<1x256x32xf32>,
    return
  }
  func.func @transform_0(%arg0: i32) -> (i32, i32, i32) {
    %c0_i32 = arith.constant 0 : i32
    %c0_i32_0 = arith.constant 0 : i32
    %c0_i32_1 = arith.constant 0 : i32
    return %arg0, %c0_i32, %c0_i32_0 : i32, i32, i32
  }
  func.func @transform_1(%arg0: i32) -> (i32, i32, i32) {
    %c0_i32 = arith.constant 0 : i32
    %c0_i32_0 = arith.constant 0 : i32
    %c0_i32_1 = arith.constant 0 : i32
    %c0_i32_2 = arith.constant 0 : i32
    return %c0_i32, %c0_i32_0, %c0_i32_1 : i32, i32, i32
  }
  func.func @transform_2(%arg0: i32) -> (i32, i32) {
    %c0_i32 = arith.constant 0 : i32
    %c0_i32_0 = arith.constant 0 : i32
    %c0_i32_1 = arith.constant 0 : i32
    return %c0_i32, %c0_i32_0 : i32, i32
  }
  func.func @transform_3(%arg0: i32) -> (i32, i32, i32) {
    %c0_i32 = arith.constant 0 : i32
    %c0_i32_0 = arith.constant 0 : i32
    %c0_i32_1 = arith.constant 0 : i32
    %c0_i32_2 = arith.constant 0 : i32
    return %c0_i32, %c0_i32_0, %c0_i32_1 : i32, i32, i32
  }
  func.func @transform_4(%arg0: i32) -> (i32, i32) {
    %c0_i32 = arith.constant 0 : i32
    %c0_i32_0 = arith.constant 0 : i32
    %c0_i32_1 = arith.constant 0 : i32
    return %c0_i32, %c0_i32_0 : i32, i32
  }
  func.func @transform_5(%arg0: i32) -> (i32, i32, i32) {
    %c0_i32 = arith.constant 0 : i32
    %c0_i32_0 = arith.constant 0 : i32
    %c0_i32_1 = arith.constant 0 : i32
    %c0_i32_2 = arith.constant 0 : i32
    return %c0_i32, %c0_i32_0, %c0_i32_1 : i32, i32, i32
  }
  func.func @transform_6(%arg0: i32) -> (i32, i32) {
    %c0_i32 = arith.constant 0 : i32
    %c0_i32_0 = arith.constant 0 : i32
    %c0_i32_1 = arith.constant 0 : i32
    return %c0_i32, %c0_i32_0 : i32, i32
  }
  func.func @transform_7(%arg0: i32) -> (i32, i32, i32) {
    %c0_i32 = arith.constant 0 : i32
    %c0_i32_0 = arith.constant 0 : i32
    %c0_i32_1 = arith.constant 0 : i32
    return %arg0, %c0_i32, %c0_i32_0 : i32, i32, i32
  }
}

</mosaic_0001>

<llo_original>
// kernel: tpu_custom_call.1
$region0: #{tpu_custom_call.1}
  #allocation0 [shape = 'u32[]', space=smem, size = 0x4, offset = 0x4, fixed_abs, tag = 'smem constant byte address 0x4 - core index']
  #allocation1 [shape = 'u32[72,128]{1,0:T(1,128)}', space=vmem, size = 0x9000, scoped, tag = 'internal scratch']
  #allocation2 [shape = 'f32[328,16]{1,0:T(8,128)}', space=vmem, size = 0x29000, scoped, tag = 'scratch operand']
  #allocation3 [shape = 'f32[328,8]{1,0:T(8,128)}', space=vmem, size = 0x29000, scoped, tag = 'scratch operand']
  %s0 = inlined_call_operand.vmem [shape: f32[2,328,16], index: 0, kind: input, shape index: {}]
  %s1 = inlined_call_operand.vmem [shape: f32[9,16,32], index: 1, kind: input, shape index: {}]
  %s2 = inlined_call_operand.vmem [shape: f32[1,32], index: 2, kind: input, shape index: {}]
  %s3 = inlined_call_operand.vmem [shape: f32[9,16,16], index: 3, kind: input, shape index: {}]
  %s4 = inlined_call_operand.vmem [shape: f32[1,16], index: 4, kind: input, shape index: {}]
  %s5 = inlined_call_operand.vmem [shape: f32[9,8,8], index: 5, kind: input, shape index: {}]
  %s6 = inlined_call_operand.vmem [shape: f32[1,8], index: 6, kind: input, shape index: {}]
  %s7 = inlined_call_operand.vmem [shape: f32[2,256,32], index: 7, kind: output, shape index: {}]
  %s8 = sld [smem:[#allocation0]]
  $region61: #{tpu_custom_call.1} parent=0
    _
  %s10 = ssub.s32 1, %s8
  %s11 = scalar_select 0, %s10, %s8
  loop: start=0, step=1, limit=4
  $region2: #{tpu_custom_call.1} parent=0 // loop_pre_header
    _
  $region3: #{tpu_custom_call.1} parent=0 // loop_header
    %s13 = sphi 0, %s17
    %p14 = scmp.ge.s32.totalorder %s13, 4
    %s23 = sphi 0, %s25
    %s26 = sphi 0, %s23
    %s27 = sphi 0, %s26
    %s43 = sphi 0, %s27
    %s47 = sphi 0, %s47
    %s49 = sphi 0, %s47
    %s50 = sphi 0, %s49
    %s64 = sphi 0, %s50
    %s68 = sphi 0, %s68
    %s70 = sphi 0, %s68
    %s71 = sphi 0, %s70
    %s85 = sphi 0, %s71
    %s89 = sphi 0, %s89
    %s91 = sphi 0, %s89
    %s92 = sphi 0, %s91
    %s106 = sphi 0, %s92
    %s110 = sphi 0, %s110
    %s112 = sphi 0, %s110
    %s113 = sphi 0, %s112
    %s127 = sphi 0, %s113
    %s131 = sphi 0, %s131
    %s133 = sphi 0, %s131
    %s134 = sphi 0, %s133
    %s148 = sphi 0, %s134
    %s152 = sphi 0, %s152
    %s154 = sphi 0, %s152
    %s155 = sphi 0, %s154
    %s169 = sphi 0, %s155
    %s175 = sphi 0, %s177
    %s178 = sphi 0, %s175
    %s179 = sphi 0, %s178
    %s195 = sphi 0, %s179
  $region4: #{tpu_custom_call.1} parent=0 // loop_header_branch
    %16 = sbr.rel (%p14) target = $region8
  $region5: #{tpu_custom_call.1} parent=0 // loop_body
    %s18 = ssub.s32 %s13, 1
    %s19 = ssub.s32 %s13, 2
    %s20 = sadd.s32 %s13, 1
    %s21 = ssub.s32 %s13, %s20
    %p22 = scmp.eq.s32.totalorder %s21, 0
    %s24 = sadd.s32 %s23, 1
    %s25 = scalar_select %p22, %s23, %s24
    %p28 = pneg %p22
    %p29 = scmp.eq.s32.totalorder %s13, 1
    %p30 = por %p28, %p29
    %p31 = scmp.ne.s32.totalorder %s23, %s26
    %p32 = scmp.eq.s32.totalorder %s13, 0
    %p33 = por %p31, %p32
    %p34 = scmp.ne.s32.totalorder %s23, %s26
    %p35 = scmp.eq.s32.totalorder %s18, 1
    %p36 = por %p34, %p35
    %p37 = scmp.ne.s32.totalorder %s26, %s27
    %p38 = scmp.eq.s32.totalorder %s18, 0
    %p39 = por %p37, %p38
    %p40 = scmp.ne.s32.totalorder %s26, %s27
    %p41 = scmp.eq.s32.totalorder %s19, 1
    %p42 = por %p40, %p41
    %p44 = scmp.ne.s32.totalorder %s27, %s43
    %p45 = scmp.eq.s32.totalorder %s19, 0
    %p46 = por %p44, %p45
    %s48 = sadd.s32 %s47, 1
    %p51 = scmp.eq.s32.totalorder %s13, 1
    %p52 = scmp.ne.s32.totalorder %s47, %s49
    %p53 = scmp.eq.s32.totalorder %s13, 0
    %p54 = por %p52, %p53
    %p55 = scmp.ne.s32.totalorder %s47, %s49
    %p56 = scmp.eq.s32.totalorder %s18, 1
    %p57 = por %p55, %p56
    %p58 = scmp.ne.s32.totalorder %s49, %s50
    %p59 = scmp.eq.s32.totalorder %s18, 0
    %p60 = por %p58, %p59
    %p61 = scmp.ne.s32.totalorder %s49, %s50
    %p62 = scmp.eq.s32.totalorder %s19, 1
    %p63 = por %p61, %p62
    %p65 = scmp.ne.s32.totalorder %s50, %s64
    %p66 = scmp.eq.s32.totalorder %s19, 0
    %p67 = por %p65, %p66
    %s69 = sadd.s32 %s68, 1
    %p72 = scmp.eq.s32.totalorder %s13, 1
    %p73 = scmp.ne.s32.totalorder %s68, %s70
    %p74 = scmp.eq.s32.totalorder %s13, 0
    %p75 = por %p73, %p74
    %p76 = scmp.ne.s32.totalorder %s68, %s70
    %p77 = scmp.eq.s32.totalorder %s18, 1
    %p78 = por %p76, %p77
    %p79 = scmp.ne.s32.totalorder %s70, %s71
    %p80 = scmp.eq.s32.totalorder %s18, 0
    %p81 = por %p79, %p80
    %p82 = scmp.ne.s32.totalorder %s70, %s71
    %p83 = scmp.eq.s32.totalorder %s19, 1
    %p84 = por %p82, %p83
    %p86 = scmp.ne.s32.totalorder %s71, %s85
    %p87 = scmp.eq.s32.totalorder %s19, 0
    %p88 = por %p86, %p87
    %s90 = sadd.s32 %s89, 1
    %p93 = scmp.eq.s32.totalorder %s13, 1
    %p94 = scmp.ne.s32.totalorder %s89, %s91
    %p95 = scmp.eq.s32.totalorder %s13, 0
    %p96 = por %p94, %p95
    %p97 = scmp.ne.s32.totalorder %s89, %s91
    %p98 = scmp.eq.s32.totalorder %s18, 1
    %p99 = por %p97, %p98
    %p100 = scmp.ne.s32.totalorder %s91, %s92
    %p101 = scmp.eq.s32.totalorder %s18, 0
    %p102 = por %p100, %p101
    %p103 = scmp.ne.s32.totalorder %s91, %s92
    %p104 = scmp.eq.s32.totalorder %s19, 1
    %p105 = por %p103, %p104
    %p107 = scmp.ne.s32.totalorder %s92, %s106
    %p108 = scmp.eq.s32.totalorder %s19, 0
    %p109 = por %p107, %p108
    %s111 = sadd.s32 %s110, 1
    %p114 = scmp.eq.s32.totalorder %s13, 1
    %p115 = scmp.ne.s32.totalorder %s110, %s112
    %p116 = scmp.eq.s32.totalorder %s13, 0
    %p117 = por %p115, %p116
    %p118 = scmp.ne.s32.totalorder %s110, %s112
    %p119 = scmp.eq.s32.totalorder %s18, 1
    %p120 = por %p118, %p119
    %p121 = scmp.ne.s32.totalorder %s112, %s113
    %p122 = scmp.eq.s32.totalorder %s18, 0
    %p123 = por %p121, %p122
    %p124 = scmp.ne.s32.totalorder %s112, %s113
    %p125 = scmp.eq.s32.totalorder %s19, 1
    %p126 = por %p124, %p125
    %p128 = scmp.ne.s32.totalorder %s113, %s127
    %p129 = scmp.eq.s32.totalorder %s19, 0
    %p130 = por %p128, %p129
    %s132 = sadd.s32 %s131, 1
    %p135 = scmp.eq.s32.totalorder %s13, 1
    %p136 = scmp.ne.s32.totalorder %s131, %s133
    %p137 = scmp.eq.s32.totalorder %s13, 0
    %p138 = por %p136, %p137
    %p139 = scmp.ne.s32.totalorder %s131, %s133
    %p140 = scmp.eq.s32.totalorder %s18, 1
    %p141 = por %p139, %p140
    %p142 = scmp.ne.s32.totalorder %s133, %s134
    %p143 = scmp.eq.s32.totalorder %s18, 0
    %p144 = por %p142, %p143
    %p145 = scmp.ne.s32.totalorder %s133, %s134
    %p146 = scmp.eq.s32.totalorder %s19, 1
    %p147 = por %p145, %p146
    %p149 = scmp.ne.s32.totalorder %s134, %s148
    %p150 = scmp.eq.s32.totalorder %s19, 0
    %p151 = por %p149, %p150
    %s153 = sadd.s32 %s152, 1
    %p156 = scmp.eq.s32.totalorder %s13, 1
    %p157 = scmp.ne.s32.totalorder %s152, %s154
    %p158 = scmp.eq.s32.totalorder %s13, 0
    %p159 = por %p157, %p158
    %p160 = scmp.ne.s32.totalorder %s152, %s154
    %p161 = scmp.eq.s32.totalorder %s18, 1
    %p162 = por %p160, %p161
    %p163 = scmp.ne.s32.totalorder %s154, %s155
    %p164 = scmp.eq.s32.totalorder %s18, 0
    %p165 = por %p163, %p164
    %p166 = scmp.ne.s32.totalorder %s154, %s155
    %p167 = scmp.eq.s32.totalorder %s19, 1
    %p168 = por %p166, %p167
    %p170 = scmp.ne.s32.totalorder %s155, %s169
    %p171 = scmp.eq.s32.totalorder %s19, 0
    %p172 = por %p170, %p171
    %s173 = ssub.s32 %s13, %s20
    %p174 = scmp.eq.s32.totalorder %s173, 0
    %s176 = sadd.s32 %s175, 1
    %s177 = scalar_select %p174, %s175, %s176
    %p180 = pneg %p174
    %p181 = scmp.eq.s32.totalorder %s13, 1
    %p182 = por %p180, %p181
    %p183 = scmp.ne.s32.totalorder %s175, %s178
    %p184 = scmp.eq.s32.totalorder %s13, 0
    %p185 = por %p183, %p184
    %p186 = scmp.ne.s32.totalorder %s175, %s178
    %p187 = scmp.eq.s32.totalorder %s18, 1
    %p188 = por %p186, %p187
    %p189 = scmp.ne.s32.totalorder %s178, %s179
    %p190 = scmp.eq.s32.totalorder %s18, 0
    %p191 = por %p189, %p190
    %p192 = scmp.ne.s32.totalorder %s178, %s179
    %p193 = scmp.eq.s32.totalorder %s19, 1
    %p194 = por %p192, %p193
    %p196 = scmp.ne.s32.totalorder %s179, %s195
    %p197 = scmp.eq.s32.totalorder %s19, 0
    %p198 = por %p196, %p197
    %p199 = scmp.le.s32.totalorder 1, %s13
    %p200 = scmp.lt.s32.totalorder %s13, 3
    %p201 = pnand %p199, %p200
    %p202 = pneg %p201
    // Predicated region
    $region9: #{tpu_custom_call.1} parent=5 // pred_check
      _
    $region10: #{tpu_custom_call.1} parent=5 // pred_check_branch
      %204 = sbr.rel (%p201) target = $region12
    $region11: #{tpu_custom_call.1} parent=5 // pred_region
      %s205 = ssub.s32 %s13, 1
      // Predicated region
      $region13: #{tpu_custom_call.1} parent=11 // pred_check
        %p206 = pneg %p60
      $region14: #{tpu_custom_call.1} parent=11 // pred_check_branch
        %208 = sbr.rel (%p206) target = $region16
      $region15: #{tpu_custom_call.1} parent=11 // pred_region
        _
      $region16: #{tpu_custom_call.1} parent=11 // pred_fallthru
        _
      // Predicated region
      $region17: #{tpu_custom_call.1} parent=11 // pred_check
        %p209 = pneg %p81
      $region18: #{tpu_custom_call.1} parent=11 // pred_check_branch
        %211 = sbr.rel (%p209) target = $region20
      $region19: #{tpu_custom_call.1} parent=11 // pred_region
        _
      $region20: #{tpu_custom_call.1} parent=11 // pred_fallthru
        _
      // Predicated region
      $region21: #{tpu_custom_call.1} parent=11 // pred_check
        %p212 = pneg %p102
      $region22: #{tpu_custom_call.1} parent=11 // pred_check_branch
        %214 = sbr.rel (%p212) target = $region24
      $region23: #{tpu_custom_call.1} parent=11 // pred_region
        _
      $region24: #{tpu_custom_call.1} parent=11 // pred_fallthru
        _
      // Predicated region
      $region25: #{tpu_custom_call.1} parent=11 // pred_check
        %p215 = pneg %p123
      $region26: #{tpu_custom_call.1} parent=11 // pred_check_branch
        %217 = sbr.rel (%p215) target = $region28
      $region27: #{tpu_custom_call.1} parent=11 // pred_region
        _
      $region28: #{tpu_custom_call.1} parent=11 // pred_fallthru
        _
      // Predicated region
      $region29: #{tpu_custom_call.1} parent=11 // pred_check
        %p218 = pneg %p144
      $region30: #{tpu_custom_call.1} parent=11 // pred_check_branch
        %220 = sbr.rel (%p218) target = $region32
      $region31: #{tpu_custom_call.1} parent=11 // pred_region
        _
      $region32: #{tpu_custom_call.1} parent=11 // pred_fallthru
        _
      // Predicated region
      $region33: #{tpu_custom_call.1} parent=11 // pred_check
        %p221 = pneg %p165
      $region34: #{tpu_custom_call.1} parent=11 // pred_check_branch
        %223 = sbr.rel (%p221) target = $region36
      $region35: #{tpu_custom_call.1} parent=11 // pred_region
        _
      $region36: #{tpu_custom_call.1} parent=11 // pred_fallthru
        _
    $region12: #{tpu_custom_call.1} parent=5 // pred_fallthru
      _
    %p224 = scmp.lt.s32.totalorder %s13, 2
    // Predicated region
    $region37: #{tpu_custom_call.1} parent=5 // pred_check
      %p225 = pneg %p224
    $region38: #{tpu_custom_call.1} parent=5 // pred_check_branch
      %227 = sbr.rel (%p225) target = $region40
    $region39: #{tpu_custom_call.1} parent=5 // pred_region
      // Predicated region
      $region41: #{tpu_custom_call.1} parent=39 // pred_check
        %p228 = pneg %p33
      $region42: #{tpu_custom_call.1} parent=39 // pred_check_branch
        %230 = sbr.rel (%p228) target = $region44
      $region43: #{tpu_custom_call.1} parent=39 // pred_region
        %p231 = scmp.lt.s32.totalorder %s13, 1
        %s232 = scalar_select %p231, %s13, 1
        %s233 = smul.addr %s232, 41
        %s234 = smul.addr %s233, 8
        %s235 = scalar_lea.vmem %s0, %s234
      $region44: #{tpu_custom_call.1} parent=39 // pred_fallthru
        _
    $region40: #{tpu_custom_call.1} parent=5 // pred_fallthru
      _
    %p236 = scmp.le.s32.totalorder 1, %s13
    %p237 = scmp.lt.s32.totalorder %s13, 3
    %p238 = pnand %p236, %p237
    %p239 = pneg %p238
    // Predicated region
    $region45: #{tpu_custom_call.1} parent=5 // pred_check
      _
    $region46: #{tpu_custom_call.1} parent=5 // pred_check_branch
      %241 = sbr.rel (%p238) target = $region48
    $region47: #{tpu_custom_call.1} parent=5 // pred_region
      %s242 = ssub.s32 %s13, 1
      %p243 = scmp.lt.s32.totalorder %s18, 1
      %s244 = scalar_select %p243, %s18, 1
      %s245 = smul.addr %s244, 41
      %s246 = smul.addr %s245, 8
      %s247 = scalar_lea.vmem %s0, %s246
      %p248 = pneg %p39
      %p249 = pneg %p36
      %p250 = pneg %p60
      %p251 = pneg %p57
      %p252 = pneg %p81
      %p253 = pneg %p78
      %p254 = pneg %p102
      %p255 = pneg %p99
      %p256 = pneg %p123
      %p257 = pneg %p120
      %p258 = pneg %p144
      %p259 = pneg %p141
      %p260 = pneg %p165
      %p261 = pneg %p162
      %p262 = pneg %p191
      %p263 = pneg %p188
      %p264 = scmp.lt.s32.totalorder %s18, 1
      %s265 = scalar_select %p264, %s18, 1
      %s266 = smul.addr %s265, 32
      %s267 = smul.addr %s266, 8
      %s268 = scalar_lea.vmem %s7, %s267
      %p269 = scmp.lt.s32.totalorder %s18, 1
      %s270 = scalar_select %p269, %s18, 1
      %s271 = smul.addr %s270, 41
      %s272 = smul.addr %s271, 8
      %s273 = scalar_lea.vmem %s0, %s272
      %p274 = scmp.lt.s32.totalorder %s18, 1
      %s275 = scalar_select %p274, %s18, 1
      %s276 = smul.addr %s275, 32
      %s277 = smul.addr %s276, 8
      %s278 = scalar_lea.vmem %s7, %s277
      %v279 = vlaneseq
      %v280 = vshrl.u32 %v279, 7
      %v281 = vadd.s32 %v280, 8
      %v282 = vadd.s32 %v280, 16
      %v283 = vadd.s32 %v280, 24
      %v284 = vadd.s32 %v280, 32
      %v285 = vadd.s32 %v280, 40
      %v286 = vadd.s32 %v280, 48
      %v287 = vadd.s32 %v280, 56
      %v288 = vadd.s32 %v280, 64
      %v289 = vadd.s32 %v280, 72
      %v290 = vadd.s32 %v280, 80
      %v291 = vadd.s32 %v280, 88
      %v292 = vadd.s32 %v280, 96
      %v293 = vadd.s32 %v280, 104
      %v294 = vadd.s32 %v280, 112
      %v295 = vadd.s32 %v280, 120
      %v296 = vadd.s32 %v280, 128
      %v297 = vadd.s32 %v280, 136
      %v298 = vadd.s32 %v280, 144
      %v299 = vadd.s32 %v280, 152
      %v300 = vadd.s32 %v280, 160
      %v301 = vadd.s32 %v280, 168
      %v302 = vadd.s32 %v280, 176
      %v303 = vadd.s32 %v280, 184
      %v304 = vadd.s32 %v280, 192
      %v305 = vadd.s32 %v280, 200
      %v306 = vadd.s32 %v280, 208
      %v307 = vadd.s32 %v280, 216
      %v308 = vadd.s32 %v280, 224
      %v309 = vadd.s32 %v280, 232
      %v310 = vadd.s32 %v280, 240
      %v311 = vadd.s32 %v280, 248
      %v312 = vadd.s32 %v280, 256
      %v313 = vadd.s32 %v280, 264
      %v314 = vadd.s32 %v280, 272
      %v315 = vadd.s32 %v280, 280
      %vm316 = vcmp.lt.s32.totalorder %v280, 0
      %v317 = vsub.s32 0, %v280
      %v318 = vsel %vm316, %v317, %v280
      %v319 = vand.u32 %v318, 65535
      %v320 = vshrl.u32 %v318, 16
      %v322 = vmul.u32 %v319, 14564
      %v323 = vmul.u32 %v319, 58254
      %v324 = vmul.u32 %v320, 14564
      %v325 = vmul.u32 %v320, 58254
      %v326 = vshll.u32 %v323, 16
      %v327 = vshrl.u32 %v323, 16
      %v328 = vshll.u32 %v324, 16
      %v329 = vshrl.u32 %v324, 16
      %vm330 = vc.u32 %v322, %v326
      %v331 = vsel %vm330, 1, 0
      %v332 = vadd.s32 %v322, %v326
      %v333 = vadd.s32 %v325, %v331
      %vm334 = vc.u32 %v332, %v328
      %v335 = vsel %vm334, 1, 0
      %v336 = vadd.s32 %v332, %v328
      %v337 = vadd.s32 %v333, %v335
      %v338 = vadd.s32 %v337, %v327
      %v339 = vadd.s32 %v338, %v329
      %v340 = vshrl.u32 %v339, 4
      %v341 = vmul.u32 %v340, 18
      %v342 = vsub.s32 %v318, %v341
      %v343 = vsub.s32 0, %v342
      %v344 = vsel %vm316, %v343, %v342
      %vm345 = vcmp.lt.s32.totalorder %v281, 0
      %v346 = vsub.s32 0, %v281
      %v347 = vsel %vm345, %v346, %v281
      %v348 = vand.u32 %v347, 65535
      %v349 = vshrl.u32 %v347, 16
      %v351 = vmul.u32 %v348, 14564
      %v352 = vmul.u32 %v348, 58254
      %v353 = vmul.u32 %v349, 14564
      %v354 = vmul.u32 %v349, 58254
      %v355 = vshll.u32 %v352, 16
      %v356 = vshrl.u32 %v352, 16
      %v357 = vshll.u32 %v353, 16
      %v358 = vshrl.u32 %v353, 16
      %vm359 = vc.u32 %v351, %v355
      %v360 = vsel %vm359, 1, 0
      %v361 = vadd.s32 %v351, %v355
      %v362 = vadd.s32 %v354, %v360
      %vm363 = vc.u32 %v361, %v357
      %v364 = vsel %vm363, 1, 0
      %v365 = vadd.s32 %v361, %v357
      %v366 = vadd.s32 %v362, %v364
      %v367 = vadd.s32 %v366, %v356
      %v368 = vadd.s32 %v367, %v358
      %v369 = vshrl.u32 %v368, 4
      %v370 = vmul.u32 %v369, 18
      %v371 = vsub.s32 %v347, %v370
      %v372 = vsub.s32 0, %v371
      %v373 = vsel %vm345, %v372, %v371
      %vm374 = vcmp.lt.s32.totalorder %v282, 0
      %v375 = vsub.s32 0, %v282
      %v376 = vsel %vm374, %v375, %v282
      %v377 = vand.u32 %v376, 65535
      %v378 = vshrl.u32 %v376, 16
      %v380 = vmul.u32 %v377, 14564
      %v381 = vmul.u32 %v377, 58254
      %v382 = vmul.u32 %v378, 14564
      %v383 = vmul.u32 %v378, 58254
      %v384 = vshll.u32 %v381, 16
      %v385 = vshrl.u32 %v381, 16
      %v386 = vshll.u32 %v382, 16
      %v387 = vshrl.u32 %v382, 16
      %vm388 = vc.u32 %v380, %v384
      %v389 = vsel %vm388, 1, 0
      %v390 = vadd.s32 %v380, %v384
      %v391 = vadd.s32 %v383, %v389
      %vm392 = vc.u32 %v390, %v386
      %v393 = vsel %vm392, 1, 0
      %v394 = vadd.s32 %v390, %v386
      %v395 = vadd.s32 %v391, %v393
      %v396 = vadd.s32 %v395, %v385
      %v397 = vadd.s32 %v396, %v387
      %v398 = vshrl.u32 %v397, 4
      %v399 = vmul.u32 %v398, 18
      %v400 = vsub.s32 %v376, %v399
      %v401 = vsub.s32 0, %v400
      %v402 = vsel %vm374, %v401, %v400
      %vm403 = vcmp.lt.s32.totalorder %v283, 0
      %v404 = vsub.s32 0, %v283
      %v405 = vsel %vm403, %v404, %v283
      %v406 = vand.u32 %v405, 65535
      %v407 = vshrl.u32 %v405, 16
      %v409 = vmul.u32 %v406, 14564
      %v410 = vmul.u32 %v406, 58254
      %v411 = vmul.u32 %v407, 14564
      %v412 = vmul.u32 %v407, 58254
      %v413 = vshll.u32 %v410, 16
      %v414 = vshrl.u32 %v410, 16
      %v415 = vshll.u32 %v411, 16
      %v416 = vshrl.u32 %v411, 16
      %vm417 = vc.u32 %v409, %v413
      %v418 = vsel %vm417, 1, 0
      %v419 = vadd.s32 %v409, %v413
      %v420 = vadd.s32 %v412, %v418
      %vm421 = vc.u32 %v419, %v415
      %v422 = vsel %vm421, 1, 0
      %v423 = vadd.s32 %v419, %v415
      %v424 = vadd.s32 %v420, %v422
      %v425 = vadd.s32 %v424, %v414
      %v426 = vadd.s32 %v425, %v416
      %v427 = vshrl.u32 %v426, 4
      %v428 = vmul.u32 %v427, 18
      %v429 = vsub.s32 %v405, %v428
      %v430 = vsub.s32 0, %v429
      %v431 = vsel %vm403, %v430, %v429
      %vm432 = vcmp.lt.s32.totalorder %v284, 0
      %v433 = vsub.s32 0, %v284
      %v434 = vsel %vm432, %v433, %v284
      %v435 = vand.u32 %v434, 65535
      %v436 = vshrl.u32 %v434, 16
      %v438 = vmul.u32 %v435, 14564
      %v439 = vmul.u32 %v435, 58254
      %v440 = vmul.u32 %v436, 14564
      %v441 = vmul.u32 %v436, 58254
      %v442 = vshll.u32 %v439, 16
      %v443 = vshrl.u32 %v439, 16
      %v444 = vshll.u32 %v440, 16
      %v445 = vshrl.u32 %v440, 16
      %vm446 = vc.u32 %v438, %v442
      %v447 = vsel %vm446, 1, 0
      %v448 = vadd.s32 %v438, %v442
      %v449 = vadd.s32 %v441, %v447
      %vm450 = vc.u32 %v448, %v444
      %v451 = vsel %vm450, 1, 0
      %v452 = vadd.s32 %v448, %v444
      %v453 = vadd.s32 %v449, %v451
      %v454 = vadd.s32 %v453, %v443
      %v455 = vadd.s32 %v454, %v445
      %v456 = vshrl.u32 %v455, 4
      %v457 = vmul.u32 %v456, 18
      %v458 = vsub.s32 %v434, %v457
      %v459 = vsub.s32 0, %v458
      %v460 = vsel %vm432, %v459, %v458
      %vm461 = vcmp.lt.s32.totalorder %v285, 0
      %v462 = vsub.s32 0, %v285
      %v463 = vsel %vm461, %v462, %v285
      %v464 = vand.u32 %v463, 65535
      %v465 = vshrl.u32 %v463, 16
      %v467 = vmul.u32 %v464, 14564
      %v468 = vmul.u32 %v464, 58254
      %v469 = vmul.u32 %v465, 14564
      %v470 = vmul.u32 %v465, 58254
      %v471 = vshll.u32 %v468, 16
      %v472 = vshrl.u32 %v468, 16
      %v473 = vshll.u32 %v469, 16
      %v474 = vshrl.u32 %v469, 16
      %vm475 = vc.u32 %v467, %v471
      %v476 = vsel %vm475, 1, 0
      %v477 = vadd.s32 %v467, %v471
      %v478 = vadd.s32 %v470, %v476
      %vm479 = vc.u32 %v477, %v473
      %v480 = vsel %vm479, 1, 0
      %v481 = vadd.s32 %v477, %v473
      %v482 = vadd.s32 %v478, %v480
      %v483 = vadd.s32 %v482, %v472
      %v484 = vadd.s32 %v483, %v474
      %v485 = vshrl.u32 %v484, 4
      %v486 = vmul.u32 %v485, 18
      %v487 = vsub.s32 %v463, %v486
      %v488 = vsub.s32 0, %v487
      %v489 = vsel %vm461, %v488, %v487
      %vm490 = vcmp.lt.s32.totalorder %v286, 0
      %v491 = vsub.s32 0, %v286
      %v492 = vsel %vm490, %v491, %v286
      %v493 = vand.u32 %v492, 65535
      %v494 = vshrl.u32 %v492, 16
      %v496 = vmul.u32 %v493, 14564
      %v497 = vmul.u32 %v493, 58254
      %v498 = vmul.u32 %v494, 14564
      %v499 = vmul.u32 %v494, 58254
      %v500 = vshll.u32 %v497, 16
      %v501 = vshrl.u32 %v497, 16
      %v502 = vshll.u32 %v498, 16
      %v503 = vshrl.u32 %v498, 16
      %vm504 = vc.u32 %v496, %v500
      %v505 = vsel %vm504, 1, 0
      %v506 = vadd.s32 %v496, %v500
      %v507 = vadd.s32 %v499, %v505
      %vm508 = vc.u32 %v506, %v502
      %v509 = vsel %vm508, 1, 0
      %v510 = vadd.s32 %v506, %v502
      %v511 = vadd.s32 %v507, %v509
      %v512 = vadd.s32 %v511, %v501
      %v513 = vadd.s32 %v512, %v503
      %v514 = vshrl.u32 %v513, 4
      %v515 = vmul.u32 %v514, 18
      %v516 = vsub.s32 %v492, %v515
      %v517 = vsub.s32 0, %v516
      %v518 = vsel %vm490, %v517, %v516
      %vm519 = vcmp.lt.s32.totalorder %v287, 0
      %v520 = vsub.s32 0, %v287
      %v521 = vsel %vm519, %v520, %v287
      %v522 = vand.u32 %v521, 65535
      %v523 = vshrl.u32 %v521, 16
      %v525 = vmul.u32 %v522, 14564
      %v526 = vmul.u32 %v522, 58254
      %v527 = vmul.u32 %v523, 14564
      %v528 = vmul.u32 %v523, 58254
      %v529 = vshll.u32 %v526, 16
      %v530 = vshrl.u32 %v526, 16
      %v531 = vshll.u32 %v527, 16
      %v532 = vshrl.u32 %v527, 16
      %vm533 = vc.u32 %v525, %v529
      %v534 = vsel %vm533, 1, 0
      %v535 = vadd.s32 %v525, %v529
      %v536 = vadd.s32 %v528, %v534
      %vm537 = vc.u32 %v535, %v531
      %v538 = vsel %vm537, 1, 0
      %v539 = vadd.s32 %v535, %v531
      %v540 = vadd.s32 %v536, %v538
      %v541 = vadd.s32 %v540, %v530
      %v542 = vadd.s32 %v541, %v532
      %v543 = vshrl.u32 %v542, 4
      %v544 = vmul.u32 %v543, 18
      %v545 = vsub.s32 %v521, %v544
      %v546 = vsub.s32 0, %v545
      %v547 = vsel %vm519, %v546, %v545
      %vm548 = vcmp.lt.s32.totalorder %v288, 0
      %v549 = vsub.s32 0, %v288
      %v550 = vsel %vm548, %v549, %v288
      %v551 = vand.u32 %v550, 65535
      %v552 = vshrl.u32 %v550, 16
      %v554 = vmul.u32 %v551, 14564
      %v555 = vmul.u32 %v551, 58254
      %v556 = vmul.u32 %v552, 14564
      %v557 = vmul.u32 %v552, 58254
      %v558 = vshll.u32 %v555, 16
      %v559 = vshrl.u32 %v555, 16
      %v560 = vshll.u32 %v556, 16
      %v561 = vshrl.u32 %v556, 16
      %vm562 = vc.u32 %v554, %v558
      %v563 = vsel %vm562, 1, 0
      %v564 = vadd.s32 %v554, %v558
      %v565 = vadd.s32 %v557, %v563
      %vm566 = vc.u32 %v564, %v560
      %v567 = vsel %vm566, 1, 0
      %v568 = vadd.s32 %v564, %v560
      %v569 = vadd.s32 %v565, %v567
      %v570 = vadd.s32 %v569, %v559
      %v571 = vadd.s32 %v570, %v561
      %v572 = vshrl.u32 %v571, 4
      %v573 = vmul.u32 %v572, 18
      %v574 = vsub.s32 %v550, %v573
      %v575 = vsub.s32 0, %v574
      %v576 = vsel %vm548, %v575, %v574
      %vm577 = vcmp.lt.s32.totalorder %v289, 0
      %v578 = vsub.s32 0, %v289
      %v579 = vsel %vm577, %v578, %v289
      %v580 = vand.u32 %v579, 65535
      %v581 = vshrl.u32 %v579, 16
      %v583 = vmul.u32 %v580, 14564
      %v584 = vmul.u32 %v580, 58254
      %v585 = vmul.u32 %v581, 14564
      %v586 = vmul.u32 %v581, 58254
      %v587 = vshll.u32 %v584, 16
      %v588 = vshrl.u32 %v584, 16
      %v589 = vshll.u32 %v585, 16
      %v590 = vshrl.u32 %v585, 16
      %vm591 = vc.u32 %v583, %v587
      %v592 = vsel %vm591, 1, 0
      %v593 = vadd.s32 %v583, %v587
      %v594 = vadd.s32 %v586, %v592
      %vm595 = vc.u32 %v593, %v589
      %v596 = vsel %vm595, 1, 0
      %v597 = vadd.s32 %v593, %v589
      %v598 = vadd.s32 %v594, %v596
      %v599 = vadd.s32 %v598, %v588
      %v600 = vadd.s32 %v599, %v590
      %v601 = vshrl.u32 %v600, 4
      %v602 = vmul.u32 %v601, 18
      %v603 = vsub.s32 %v579, %v602
      %v604 = vsub.s32 0, %v603
      %v605 = vsel %vm577, %v604, %v603
      %vm606 = vcmp.lt.s32.totalorder %v290, 0
      %v607 = vsub.s32 0, %v290
      %v608 = vsel %vm606, %v607, %v290
      %v609 = vand.u32 %v608, 65535
      %v610 = vshrl.u32 %v608, 16
      %v612 = vmul.u32 %v609, 14564
      %v613 = vmul.u32 %v609, 58254
      %v614 = vmul.u32 %v610, 14564
      %v615 = vmul.u32 %v610, 58254
      %v616 = vshll.u32 %v613, 16
      %v617 = vshrl.u32 %v613, 16
      %v618 = vshll.u32 %v614, 16
      %v619 = vshrl.u32 %v614, 16
      %vm620 = vc.u32 %v612, %v616
      %v621 = vsel %vm620, 1, 0
      %v622 = vadd.s32 %v612, %v616
      %v623 = vadd.s32 %v615, %v621
      %vm624 = vc.u32 %v622, %v618
      %v625 = vsel %vm624, 1, 0
      %v626 = vadd.s32 %v622, %v618
      %v627 = vadd.s32 %v623, %v625
      %v628 = vadd.s32 %v627, %v617
      %v629 = vadd.s32 %v628, %v619
      %v630 = vshrl.u32 %v629, 4
      %v631 = vmul.u32 %v630, 18
      %v632 = vsub.s32 %v608, %v631
      %v633 = vsub.s32 0, %v632
      %v634 = vsel %vm606, %v633, %v632
      %vm635 = vcmp.lt.s32.totalorder %v291, 0
      %v636 = vsub.s32 0, %v291
      %v637 = vsel %vm635, %v636, %v291
      %v638 = vand.u32 %v637, 65535
      %v639 = vshrl.u32 %v637, 16
      %v641 = vmul.u32 %v638, 14564
      %v642 = vmul.u32 %v638, 58254
      %v643 = vmul.u32 %v639, 14564
      %v644 = vmul.u32 %v639, 58254
      %v645 = vshll.u32 %v642, 16
      %v646 = vshrl.u32 %v642, 16
      %v647 = vshll.u32 %v643, 16
      %v648 = vshrl.u32 %v643, 16
      %vm649 = vc.u32 %v641, %v645
      %v650 = vsel %vm649, 1, 0
      %v651 = vadd.s32 %v641, %v645
      %v652 = vadd.s32 %v644, %v650
      %vm653 = vc.u32 %v651, %v647
      %v654 = vsel %vm653, 1, 0
      %v655 = vadd.s32 %v651, %v647
      %v656 = vadd.s32 %v652, %v654
      %v657 = vadd.s32 %v656, %v646
      %v658 = vadd.s32 %v657, %v648
      %v659 = vshrl.u32 %v658, 4
      %v660 = vmul.u32 %v659, 18
      %v661 = vsub.s32 %v637, %v660
      %v662 = vsub.s32 0, %v661
      %v663 = vsel %vm635, %v662, %v661
      %vm664 = vcmp.lt.s32.totalorder %v292, 0
      %v665 = vsub.s32 0, %v292
      %v666 = vsel %vm664, %v665, %v292
      %v667 = vand.u32 %v666, 65535
      %v668 = vshrl.u32 %v666, 16
      %v670 = vmul.u32 %v667, 14564
      %v671 = vmul.u32 %v667, 58254
      %v672 = vmul.u32 %v668, 14564
      %v673 = vmul.u32 %v668, 58254
      %v674 = vshll.u32 %v671, 16
      %v675 = vshrl.u32 %v671, 16
      %v676 = vshll.u32 %v672, 16
      %v677 = vshrl.u32 %v672, 16
      %vm678 = vc.u32 %v670, %v674
      %v679 = vsel %vm678, 1, 0
      %v680 = vadd.s32 %v670, %v674
      %v681 = vadd.s32 %v673, %v679
      %vm682 = vc.u32 %v680, %v676
      %v683 = vsel %vm682, 1, 0
      %v684 = vadd.s32 %v680, %v676
      %v685 = vadd.s32 %v681, %v683
      %v686 = vadd.s32 %v685, %v675
      %v687 = vadd.s32 %v686, %v677
      %v688 = vshrl.u32 %v687, 4
      %v689 = vmul.u32 %v688, 18
      %v690 = vsub.s32 %v666, %v689
      %v691 = vsub.s32 0, %v690
      %v692 = vsel %vm664, %v691, %v690
      %vm693 = vcmp.lt.s32.totalorder %v293, 0
      %v694 = vsub.s32 0, %v293
      %v695 = vsel %vm693, %v694, %v293
      %v696 = vand.u32 %v695, 65535
      %v697 = vshrl.u32 %v695, 16
      %v699 = vmul.u32 %v696, 14564
      %v700 = vmul.u32 %v696, 58254
      %v701 = vmul.u32 %v697, 14564
      %v702 = vmul.u32 %v697, 58254
      %v703 = vshll.u32 %v700, 16
      %v704 = vshrl.u32 %v700, 16
      %v705 = vshll.u32 %v701, 16
      %v706 = vshrl.u32 %v701, 16
      %vm707 = vc.u32 %v699, %v703
      %v708 = vsel %vm707, 1, 0
      %v709 = vadd.s32 %v699, %v703
      %v710 = vadd.s32 %v702, %v708
      %vm711 = vc.u32 %v709, %v705
      %v712 = vsel %vm711, 1, 0
      %v713 = vadd.s32 %v709, %v705
      %v714 = vadd.s32 %v710, %v712
      %v715 = vadd.s32 %v714, %v704
      %v716 = vadd.s32 %v715, %v706
      %v717 = vshrl.u32 %v716, 4
      %v718 = vmul.u32 %v717, 18
      %v719 = vsub.s32 %v695, %v718
      %v720 = vsub.s32 0, %v719
      %v721 = vsel %vm693, %v720, %v719
      %vm722 = vcmp.lt.s32.totalorder %v294, 0
      %v723 = vsub.s32 0, %v294
      %v724 = vsel %vm722, %v723, %v294
      %v725 = vand.u32 %v724, 65535
      %v726 = vshrl.u32 %v724, 16
      %v728 = vmul.u32 %v725, 14564
      %v729 = vmul.u32 %v725, 58254
      %v730 = vmul.u32 %v726, 14564
      %v731 = vmul.u32 %v726, 58254
      %v732 = vshll.u32 %v729, 16
      %v733 = vshrl.u32 %v729, 16
      %v734 = vshll.u32 %v730, 16
      %v735 = vshrl.u32 %v730, 16
      %vm736 = vc.u32 %v728, %v732
      %v737 = vsel %vm736, 1, 0
      %v738 = vadd.s32 %v728, %v732
      %v739 = vadd.s32 %v731, %v737
      %vm740 = vc.u32 %v738, %v734
      %v741 = vsel %vm740, 1, 0
      %v742 = vadd.s32 %v738, %v734
      %v743 = vadd.s32 %v739, %v741
      %v744 = vadd.s32 %v743, %v733
      %v745 = vadd.s32 %v744, %v735
      %v746 = vshrl.u32 %v745, 4
      %v747 = vmul.u32 %v746, 18
      %v748 = vsub.s32 %v724, %v747
      %v749 = vsub.s32 0, %v748
      %v750 = vsel %vm722, %v749, %v748
      %vm751 = vcmp.lt.s32.totalorder %v295, 0
      %v752 = vsub.s32 0, %v295
      %v753 = vsel %vm751, %v752, %v295
      %v754 = vand.u32 %v753, 65535
      %v755 = vshrl.u32 %v753, 16
      %v757 = vmul.u32 %v754, 14564
      %v758 = vmul.u32 %v754, 58254
      %v759 = vmul.u32 %v755, 14564
      %v760 = vmul.u32 %v755, 58254
      %v761 = vshll.u32 %v758, 16
      %v762 = vshrl.u32 %v758, 16
      %v763 = vshll.u32 %v759, 16
      %v764 = vshrl.u32 %v759, 16
      %vm765 = vc.u32 %v757, %v761
      %v766 = vsel %vm765, 1, 0
      %v767 = vadd.s32 %v757, %v761
      %v768 = vadd.s32 %v760, %v766
      %vm769 = vc.u32 %v767, %v763
      %v770 = vsel %vm769, 1, 0
      %v771 = vadd.s32 %v767, %v763
      %v772 = vadd.s32 %v768, %v770
      %v773 = vadd.s32 %v772, %v762
      %v774 = vadd.s32 %v773, %v764
      %v775 = vshrl.u32 %v774, 4
      %v776 = vmul.u32 %v775, 18
      %v777 = vsub.s32 %v753, %v776
      %v778 = vsub.s32 0, %v777
      %v779 = vsel %vm751, %v778, %v777
      %vm780 = vcmp.lt.s32.totalorder %v296, 0
      %v781 = vsub.s32 0, %v296
      %v782 = vsel %vm780, %v781, %v296
      %v783 = vand.u32 %v782, 65535
      %v784 = vshrl.u32 %v782, 16
      %v786 = vmul.u32 %v783, 14564
      %v787 = vmul.u32 %v783, 58254
      %v788 = vmul.u32 %v784, 14564
      %v789 = vmul.u32 %v784, 58254
      %v790 = vshll.u32 %v787, 16
      %v791 = vshrl.u32 %v787, 16
      %v792 = vshll.u32 %v788, 16
      %v793 = vshrl.u32 %v788, 16
      %vm794 = vc.u32 %v786, %v790
      %v795 = vsel %vm794, 1, 0
      %v796 = vadd.s32 %v786, %v790
      %v797 = vadd.s32 %v789, %v795
      %vm798 = vc.u32 %v796, %v792
      %v799 = vsel %vm798, 1, 0
      %v800 = vadd.s32 %v796, %v792
      %v801 = vadd.s32 %v797, %v799
      %v802 = vadd.s32 %v801, %v791
      %v803 = vadd.s32 %v802, %v793
      %v804 = vshrl.u32 %v803, 4
      %v805 = vmul.u32 %v804, 18
      %v806 = vsub.s32 %v782, %v805
      %v807 = vsub.s32 0, %v806
      %v808 = vsel %vm780, %v807, %v806
      %vm809 = vcmp.lt.s32.totalorder %v297, 0
      %v810 = vsub.s32 0, %v297
      %v811 = vsel %vm809, %v810, %v297
      %v812 = vand.u32 %v811, 65535
      %v813 = vshrl.u32 %v811, 16
      %v815 = vmul.u32 %v812, 14564
      %v816 = vmul.u32 %v812, 58254
      %v817 = vmul.u32 %v813, 14564
      %v818 = vmul.u32 %v813, 58254
      %v819 = vshll.u32 %v816, 16
      %v820 = vshrl.u32 %v816, 16
      %v821 = vshll.u32 %v817, 16
      %v822 = vshrl.u32 %v817, 16
      %vm823 = vc.u32 %v815, %v819
      %v824 = vsel %vm823, 1, 0
      %v825 = vadd.s32 %v815, %v819
      %v826 = vadd.s32 %v818, %v824
      %vm827 = vc.u32 %v825, %v821
      %v828 = vsel %vm827, 1, 0
      %v829 = vadd.s32 %v825, %v821
      %v830 = vadd.s32 %v826, %v828
      %v831 = vadd.s32 %v830, %v820
      %v832 = vadd.s32 %v831, %v822
      %v833 = vshrl.u32 %v832, 4
      %v834 = vmul.u32 %v833, 18
      %v835 = vsub.s32 %v811, %v834
      %v836 = vsub.s32 0, %v835
      %v837 = vsel %vm809, %v836, %v835
      %vm838 = vcmp.lt.s32.totalorder %v298, 0
      %v839 = vsub.s32 0, %v298
      %v840 = vsel %vm838, %v839, %v298
      %v841 = vand.u32 %v840, 65535
      %v842 = vshrl.u32 %v840, 16
      %v844 = vmul.u32 %v841, 14564
      %v845 = vmul.u32 %v841, 58254
      %v846 = vmul.u32 %v842, 14564
      %v847 = vmul.u32 %v842, 58254
      %v848 = vshll.u32 %v845, 16
      %v849 = vshrl.u32 %v845, 16
      %v850 = vshll.u32 %v846, 16
      %v851 = vshrl.u32 %v846, 16
      %vm852 = vc.u32 %v844, %v848
      %v853 = vsel %vm852, 1, 0
      %v854 = vadd.s32 %v844, %v848
      %v855 = vadd.s32 %v847, %v853
      %vm856 = vc.u32 %v854, %v850
      %v857 = vsel %vm856, 1, 0
      %v858 = vadd.s32 %v854, %v850
      %v859 = vadd.s32 %v855, %v857
      %v860 = vadd.s32 %v859, %v849
      %v861 = vadd.s32 %v860, %v851
      %v862 = vshrl.u32 %v861, 4
      %v863 = vmul.u32 %v862, 18
      %v864 = vsub.s32 %v840, %v863
      %v865 = vsub.s32 0, %v864
      %v866 = vsel %vm838, %v865, %v864
      %vm867 = vcmp.lt.s32.totalorder %v299, 0
      %v868 = vsub.s32 0, %v299
      %v869 = vsel %vm867, %v868, %v299
      %v870 = vand.u32 %v869, 65535
      %v871 = vshrl.u32 %v869, 16
      %v873 = vmul.u32 %v870, 14564
      %v874 = vmul.u32 %v870, 58254
      %v875 = vmul.u32 %v871, 14564
      %v876 = vmul.u32 %v871, 58254
      %v877 = vshll.u32 %v874, 16
      %v878 = vshrl.u32 %v874, 16
      %v879 = vshll.u32 %v875, 16
      %v880 = vshrl.u32 %v875, 16
      %vm881 = vc.u32 %v873, %v877
      %v882 = vsel %vm881, 1, 0
      %v883 = vadd.s32 %v873, %v877
      %v884 = vadd.s32 %v876, %v882
      %vm885 = vc.u32 %v883, %v879
      %v886 = vsel %vm885, 1, 0
      %v887 = vadd.s32 %v883, %v879
      %v888 = vadd.s32 %v884, %v886
      %v889 = vadd.s32 %v888, %v878
      %v890 = vadd.s32 %v889, %v880
      %v891 = vshrl.u32 %v890, 4
      %v892 = vmul.u32 %v891, 18
      %v893 = vsub.s32 %v869, %v892
      %v894 = vsub.s32 0, %v893
      %v895 = vsel %vm867, %v894, %v893
      %vm896 = vcmp.lt.s32.totalorder %v300, 0
      %v897 = vsub.s32 0, %v300
      %v898 = vsel %vm896, %v897, %v300
      %v899 = vand.u32 %v898, 65535
      %v900 = vshrl.u32 %v898, 16
      %v902 = vmul.u32 %v899, 14564
      %v903 = vmul.u32 %v899, 58254
      %v904 = vmul.u32 %v900, 14564
      %v905 = vmul.u32 %v900, 58254
      %v906 = vshll.u32 %v903, 16
      %v907 = vshrl.u32 %v903, 16
      %v908 = vshll.u32 %v904, 16
      %v909 = vshrl.u32 %v904, 16
      %vm910 = vc.u32 %v902, %v906
      %v911 = vsel %vm910, 1, 0
      %v912 = vadd.s32 %v902, %v906
      %v913 = vadd.s32 %v905, %v911
      %vm914 = vc.u32 %v912, %v908
      %v915 = vsel %vm914, 1, 0
      %v916 = vadd.s32 %v912, %v908
      %v917 = vadd.s32 %v913, %v915
      %v918 = vadd.s32 %v917, %v907
      %v919 = vadd.s32 %v918, %v909
      %v920 = vshrl.u32 %v919, 4
      %v921 = vmul.u32 %v920, 18
      %v922 = vsub.s32 %v898, %v921
      %v923 = vsub.s32 0, %v922
      %v924 = vsel %vm896, %v923, %v922
      %vm925 = vcmp.lt.s32.totalorder %v301, 0
      %v926 = vsub.s32 0, %v301
      %v927 = vsel %vm925, %v926, %v301
      %v928 = vand.u32 %v927, 65535
      %v929 = vshrl.u32 %v927, 16
      %v931 = vmul.u32 %v928, 14564
      %v932 = vmul.u32 %v928, 58254
      %v933 = vmul.u32 %v929, 14564
      %v934 = vmul.u32 %v929, 58254
      %v935 = vshll.u32 %v932, 16
      %v936 = vshrl.u32 %v932, 16
      %v937 = vshll.u32 %v933, 16
      %v938 = vshrl.u32 %v933, 16
      %vm939 = vc.u32 %v931, %v935
      %v940 = vsel %vm939, 1, 0
      %v941 = vadd.s32 %v931, %v935
      %v942 = vadd.s32 %v934, %v940
      %vm943 = vc.u32 %v941, %v937
      %v944 = vsel %vm943, 1, 0
      %v945 = vadd.s32 %v941, %v937
      %v946 = vadd.s32 %v942, %v944
      %v947 = vadd.s32 %v946, %v936
      %v948 = vadd.s32 %v947, %v938
      %v949 = vshrl.u32 %v948, 4
      %v950 = vmul.u32 %v949, 18
      %v951 = vsub.s32 %v927, %v950
      %v952 = vsub.s32 0, %v951
      %v953 = vsel %vm925, %v952, %v951
      %vm954 = vcmp.lt.s32.totalorder %v302, 0
      %v955 = vsub.s32 0, %v302
      %v956 = vsel %vm954, %v955, %v302
      %v957 = vand.u32 %v956, 65535
      %v958 = vshrl.u32 %v956, 16
      %v960 = vmul.u32 %v957, 14564
      %v961 = vmul.u32 %v957, 58254
      %v962 = vmul.u32 %v958, 14564
      %v963 = vmul.u32 %v958, 58254
      %v964 = vshll.u32 %v961, 16
      %v965 = vshrl.u32 %v961, 16
      %v966 = vshll.u32 %v962, 16
      %v967 = vshrl.u32 %v962, 16
      %vm968 = vc.u32 %v960, %v964
      %v969 = vsel %vm968, 1, 0
      %v970 = vadd.s32 %v960, %v964
      %v971 = vadd.s32 %v963, %v969
      %vm972 = vc.u32 %v970, %v966
      %v973 = vsel %vm972, 1, 0
      %v974 = vadd.s32 %v970, %v966
      %v975 = vadd.s32 %v971, %v973
      %v976 = vadd.s32 %v975, %v965
      %v977 = vadd.s32 %v976, %v967
      %v978 = vshrl.u32 %v977, 4
      %v979 = vmul.u32 %v978, 18
      %v980 = vsub.s32 %v956, %v979
      %v981 = vsub.s32 0, %v980
      %v982 = vsel %vm954, %v981, %v980
      %vm983 = vcmp.lt.s32.totalorder %v303, 0
      %v984 = vsub.s32 0, %v303
      %v985 = vsel %vm983, %v984, %v303
      %v986 = vand.u32 %v985, 65535
      %v987 = vshrl.u32 %v985, 16
      %v989 = vmul.u32 %v986, 14564
      %v990 = vmul.u32 %v986, 58254
      %v991 = vmul.u32 %v987, 14564
      %v992 = vmul.u32 %v987, 58254
      %v993 = vshll.u32 %v990, 16
      %v994 = vshrl.u32 %v990, 16
      %v995 = vshll.u32 %v991, 16
      %v996 = vshrl.u32 %v991, 16
      %vm997 = vc.u32 %v989, %v993
      %v998 = vsel %vm997, 1, 0
      %v999 = vadd.s32 %v989, %v993
      %v1000 = vadd.s32 %v992, %v998
      %vm1001 = vc.u32 %v999, %v995
      %v1002 = vsel %vm1001, 1, 0
      %v1003 = vadd.s32 %v999, %v995
      %v1004 = vadd.s32 %v1000, %v1002
      %v1005 = vadd.s32 %v1004, %v994
      %v1006 = vadd.s32 %v1005, %v996
      %v1007 = vshrl.u32 %v1006, 4
      %v1008 = vmul.u32 %v1007, 18
      %v1009 = vsub.s32 %v985, %v1008
      %v1010 = vsub.s32 0, %v1009
      %v1011 = vsel %vm983, %v1010, %v1009
      %vm1012 = vcmp.lt.s32.totalorder %v304, 0
      %v1013 = vsub.s32 0, %v304
      %v1014 = vsel %vm1012, %v1013, %v304
      %v1015 = vand.u32 %v1014, 65535
      %v1016 = vshrl.u32 %v1014, 16
      %v1018 = vmul.u32 %v1015, 14564
      %v1019 = vmul.u32 %v1015, 58254
      %v1020 = vmul.u32 %v1016, 14564
      %v1021 = vmul.u32 %v1016, 58254
      %v1022 = vshll.u32 %v1019, 16
      %v1023 = vshrl.u32 %v1019, 16
      %v1024 = vshll.u32 %v1020, 16
      %v1025 = vshrl.u32 %v1020, 16
      %vm1026 = vc.u32 %v1018, %v1022
      %v1027 = vsel %vm1026, 1, 0
      %v1028 = vadd.s32 %v1018, %v1022
      %v1029 = vadd.s32 %v1021, %v1027
      %vm1030 = vc.u32 %v1028, %v1024
      %v1031 = vsel %vm1030, 1, 0
      %v1032 = vadd.s32 %v1028, %v1024
      %v1033 = vadd.s32 %v1029, %v1031
      %v1034 = vadd.s32 %v1033, %v1023
      %v1035 = vadd.s32 %v1034, %v1025
      %v1036 = vshrl.u32 %v1035, 4
      %v1037 = vmul.u32 %v1036, 18
      %v1038 = vsub.s32 %v1014, %v1037
      %v1039 = vsub.s32 0, %v1038
      %v1040 = vsel %vm1012, %v1039, %v1038
      %vm1041 = vcmp.lt.s32.totalorder %v305, 0
      %v1042 = vsub.s32 0, %v305
      %v1043 = vsel %vm1041, %v1042, %v305
      %v1044 = vand.u32 %v1043, 65535
      %v1045 = vshrl.u32 %v1043, 16
      %v1047 = vmul.u32 %v1044, 14564
      %v1048 = vmul.u32 %v1044, 58254
      %v1049 = vmul.u32 %v1045, 14564
      %v1050 = vmul.u32 %v1045, 58254
      %v1051 = vshll.u32 %v1048, 16
      %v1052 = vshrl.u32 %v1048, 16
      %v1053 = vshll.u32 %v1049, 16
      %v1054 = vshrl.u32 %v1049, 16
      %vm1055 = vc.u32 %v1047, %v1051
      %v1056 = vsel %vm1055, 1, 0
      %v1057 = vadd.s32 %v1047, %v1051
      %v1058 = vadd.s32 %v1050, %v1056
      %vm1059 = vc.u32 %v1057, %v1053
      %v1060 = vsel %vm1059, 1, 0
      %v1061 = vadd.s32 %v1057, %v1053
      %v1062 = vadd.s32 %v1058, %v1060
      %v1063 = vadd.s32 %v1062, %v1052
      %v1064 = vadd.s32 %v1063, %v1054
      %v1065 = vshrl.u32 %v1064, 4
      %v1066 = vmul.u32 %v1065, 18
      %v1067 = vsub.s32 %v1043, %v1066
      %v1068 = vsub.s32 0, %v1067
      %v1069 = vsel %vm1041, %v1068, %v1067
      %vm1070 = vcmp.lt.s32.totalorder %v306, 0
      %v1071 = vsub.s32 0, %v306
      %v1072 = vsel %vm1070, %v1071, %v306
      %v1073 = vand.u32 %v1072, 65535
      %v1074 = vshrl.u32 %v1072, 16
      %v1076 = vmul.u32 %v1073, 14564
      %v1077 = vmul.u32 %v1073, 58254
      %v1078 = vmul.u32 %v1074, 14564
      %v1079 = vmul.u32 %v1074, 58254
      %v1080 = vshll.u32 %v1077, 16
      %v1081 = vshrl.u32 %v1077, 16
      %v1082 = vshll.u32 %v1078, 16
      %v1083 = vshrl.u32 %v1078, 16
      %vm1084 = vc.u32 %v1076, %v1080
      %v1085 = vsel %vm1084, 1, 0
      %v1086 = vadd.s32 %v1076, %v1080
      %v1087 = vadd.s32 %v1079, %v1085
      %vm1088 = vc.u32 %v1086, %v1082
      %v1089 = vsel %vm1088, 1, 0
      %v1090 = vadd.s32 %v1086, %v1082
      %v1091 = vadd.s32 %v1087, %v1089
      %v1092 = vadd.s32 %v1091, %v1081
      %v1093 = vadd.s32 %v1092, %v1083
      %v1094 = vshrl.u32 %v1093, 4
      %v1095 = vmul.u32 %v1094, 18
      %v1096 = vsub.s32 %v1072, %v1095
      %v1097 = vsub.s32 0, %v1096
      %v1098 = vsel %vm1070, %v1097, %v1096
      %vm1099 = vcmp.lt.s32.totalorder %v307, 0
      %v1100 = vsub.s32 0, %v307
      %v1101 = vsel %vm1099, %v1100, %v307
      %v1102 = vand.u32 %v1101, 65535
      %v1103 = vshrl.u32 %v1101, 16
      %v1105 = vmul.u32 %v1102, 14564
      %v1106 = vmul.u32 %v1102, 58254
      %v1107 = vmul.u32 %v1103, 14564
      %v1108 = vmul.u32 %v1103, 58254
      %v1109 = vshll.u32 %v1106, 16
      %v1110 = vshrl.u32 %v1106, 16
      %v1111 = vshll.u32 %v1107, 16
      %v1112 = vshrl.u32 %v1107, 16
      %vm1113 = vc.u32 %v1105, %v1109
      %v1114 = vsel %vm1113, 1, 0
      %v1115 = vadd.s32 %v1105, %v1109
      %v1116 = vadd.s32 %v1108, %v1114
      %vm1117 = vc.u32 %v1115, %v1111
      %v1118 = vsel %vm1117, 1, 0
      %v1119 = vadd.s32 %v1115, %v1111
      %v1120 = vadd.s32 %v1116, %v1118
      %v1121 = vadd.s32 %v1120, %v1110
      %v1122 = vadd.s32 %v1121, %v1112
      %v1123 = vshrl.u32 %v1122, 4
      %v1124 = vmul.u32 %v1123, 18
      %v1125 = vsub.s32 %v1101, %v1124
      %v1126 = vsub.s32 0, %v1125
      %v1127 = vsel %vm1099, %v1126, %v1125
      %vm1128 = vcmp.lt.s32.totalorder %v308, 0
      %v1129 = vsub.s32 0, %v308
      %v1130 = vsel %vm1128, %v1129, %v308
      %v1131 = vand.u32 %v1130, 65535
      %v1132 = vshrl.u32 %v1130, 16
      %v1134 = vmul.u32 %v1131, 14564
      %v1135 = vmul.u32 %v1131, 58254
      %v1136 = vmul.u32 %v1132, 14564
      %v1137 = vmul.u32 %v1132, 58254
      %v1138 = vshll.u32 %v1135, 16
      %v1139 = vshrl.u32 %v1135, 16
      %v1140 = vshll.u32 %v1136, 16
      %v1141 = vshrl.u32 %v1136, 16
      %vm1142 = vc.u32 %v1134, %v1138
      %v1143 = vsel %vm1142, 1, 0
      %v1144 = vadd.s32 %v1134, %v1138
      %v1145 = vadd.s32 %v1137, %v1143
      %vm1146 = vc.u32 %v1144, %v1140
      %v1147 = vsel %vm1146, 1, 0
      %v1148 = vadd.s32 %v1144, %v1140
      %v1149 = vadd.s32 %v1145, %v1147
      %v1150 = vadd.s32 %v1149, %v1139
      %v1151 = vadd.s32 %v1150, %v1141
      %v1152 = vshrl.u32 %v1151, 4
      %v1153 = vmul.u32 %v1152, 18
      %v1154 = vsub.s32 %v1130, %v1153
      %v1155 = vsub.s32 0, %v1154
      %v1156 = vsel %vm1128, %v1155, %v1154
      %vm1157 = vcmp.lt.s32.totalorder %v309, 0
      %v1158 = vsub.s32 0, %v309
      %v1159 = vsel %vm1157, %v1158, %v309
      %v1160 = vand.u32 %v1159, 65535
      %v1161 = vshrl.u32 %v1159, 16
      %v1163 = vmul.u32 %v1160, 14564
      %v1164 = vmul.u32 %v1160, 58254
      %v1165 = vmul.u32 %v1161, 14564
      %v1166 = vmul.u32 %v1161, 58254
      %v1167 = vshll.u32 %v1164, 16
      %v1168 = vshrl.u32 %v1164, 16
      %v1169 = vshll.u32 %v1165, 16
      %v1170 = vshrl.u32 %v1165, 16
      %vm1171 = vc.u32 %v1163, %v1167
      %v1172 = vsel %vm1171, 1, 0
      %v1173 = vadd.s32 %v1163, %v1167
      %v1174 = vadd.s32 %v1166, %v1172
      %vm1175 = vc.u32 %v1173, %v1169
      %v1176 = vsel %vm1175, 1, 0
      %v1177 = vadd.s32 %v1173, %v1169
      %v1178 = vadd.s32 %v1174, %v1176
      %v1179 = vadd.s32 %v1178, %v1168
      %v1180 = vadd.s32 %v1179, %v1170
      %v1181 = vshrl.u32 %v1180, 4
      %v1182 = vmul.u32 %v1181, 18
      %v1183 = vsub.s32 %v1159, %v1182
      %v1184 = vsub.s32 0, %v1183
      %v1185 = vsel %vm1157, %v1184, %v1183
      %vm1186 = vcmp.lt.s32.totalorder %v310, 0
      %v1187 = vsub.s32 0, %v310
      %v1188 = vsel %vm1186, %v1187, %v310
      %v1189 = vand.u32 %v1188, 65535
      %v1190 = vshrl.u32 %v1188, 16
      %v1192 = vmul.u32 %v1189, 14564
      %v1193 = vmul.u32 %v1189, 58254
      %v1194 = vmul.u32 %v1190, 14564
      %v1195 = vmul.u32 %v1190, 58254
      %v1196 = vshll.u32 %v1193, 16
      %v1197 = vshrl.u32 %v1193, 16
      %v1198 = vshll.u32 %v1194, 16
      %v1199 = vshrl.u32 %v1194, 16
      %vm1200 = vc.u32 %v1192, %v1196
      %v1201 = vsel %vm1200, 1, 0
      %v1202 = vadd.s32 %v1192, %v1196
      %v1203 = vadd.s32 %v1195, %v1201
      %vm1204 = vc.u32 %v1202, %v1198
      %v1205 = vsel %vm1204, 1, 0
      %v1206 = vadd.s32 %v1202, %v1198
      %v1207 = vadd.s32 %v1203, %v1205
      %v1208 = vadd.s32 %v1207, %v1197
      %v1209 = vadd.s32 %v1208, %v1199
      %v1210 = vshrl.u32 %v1209, 4
      %v1211 = vmul.u32 %v1210, 18
      %v1212 = vsub.s32 %v1188, %v1211
      %v1213 = vsub.s32 0, %v1212
      %v1214 = vsel %vm1186, %v1213, %v1212
      %vm1215 = vcmp.lt.s32.totalorder %v311, 0
      %v1216 = vsub.s32 0, %v311
      %v1217 = vsel %vm1215, %v1216, %v311
      %v1218 = vand.u32 %v1217, 65535
      %v1219 = vshrl.u32 %v1217, 16
      %v1221 = vmul.u32 %v1218, 14564
      %v1222 = vmul.u32 %v1218, 58254
      %v1223 = vmul.u32 %v1219, 14564
      %v1224 = vmul.u32 %v1219, 58254
      %v1225 = vshll.u32 %v1222, 16
      %v1226 = vshrl.u32 %v1222, 16
      %v1227 = vshll.u32 %v1223, 16
      %v1228 = vshrl.u32 %v1223, 16
      %vm1229 = vc.u32 %v1221, %v1225
      %v1230 = vsel %vm1229, 1, 0
      %v1231 = vadd.s32 %v1221, %v1225
      %v1232 = vadd.s32 %v1224, %v1230
      %vm1233 = vc.u32 %v1231, %v1227
      %v1234 = vsel %vm1233, 1, 0
      %v1235 = vadd.s32 %v1231, %v1227
      %v1236 = vadd.s32 %v1232, %v1234
      %v1237 = vadd.s32 %v1236, %v1226
      %v1238 = vadd.s32 %v1237, %v1228
      %v1239 = vshrl.u32 %v1238, 4
      %v1240 = vmul.u32 %v1239, 18
      %v1241 = vsub.s32 %v1217, %v1240
      %v1242 = vsub.s32 0, %v1241
      %v1243 = vsel %vm1215, %v1242, %v1241
      %vm1244 = vcmp.lt.s32.totalorder %v312, 0
      %v1245 = vsub.s32 0, %v312
      %v1246 = vsel %vm1244, %v1245, %v312
      %v1247 = vand.u32 %v1246, 65535
      %v1248 = vshrl.u32 %v1246, 16
      %v1250 = vmul.u32 %v1247, 14564
      %v1251 = vmul.u32 %v1247, 58254
      %v1252 = vmul.u32 %v1248, 14564
      %v1253 = vmul.u32 %v1248, 58254
      %v1254 = vshll.u32 %v1251, 16
      %v1255 = vshrl.u32 %v1251, 16
      %v1256 = vshll.u32 %v1252, 16
      %v1257 = vshrl.u32 %v1252, 16
      %vm1258 = vc.u32 %v1250, %v1254
      %v1259 = vsel %vm1258, 1, 0
      %v1260 = vadd.s32 %v1250, %v1254
      %v1261 = vadd.s32 %v1253, %v1259
      %vm1262 = vc.u32 %v1260, %v1256
      %v1263 = vsel %vm1262, 1, 0
      %v1264 = vadd.s32 %v1260, %v1256
      %v1265 = vadd.s32 %v1261, %v1263
      %v1266 = vadd.s32 %v1265, %v1255
      %v1267 = vadd.s32 %v1266, %v1257
      %v1268 = vshrl.u32 %v1267, 4
      %v1269 = vmul.u32 %v1268, 18
      %v1270 = vsub.s32 %v1246, %v1269
      %v1271 = vsub.s32 0, %v1270
      %v1272 = vsel %vm1244, %v1271, %v1270
      %vm1273 = vcmp.lt.s32.totalorder %v313, 0
      %v1274 = vsub.s32 0, %v313
      %v1275 = vsel %vm1273, %v1274, %v313
      %v1276 = vand.u32 %v1275, 65535
      %v1277 = vshrl.u32 %v1275, 16
      %v1279 = vmul.u32 %v1276, 14564
      %v1280 = vmul.u32 %v1276, 58254
      %v1281 = vmul.u32 %v1277, 14564
      %v1282 = vmul.u32 %v1277, 58254
      %v1283 = vshll.u32 %v1280, 16
      %v1284 = vshrl.u32 %v1280, 16
      %v1285 = vshll.u32 %v1281, 16
      %v1286 = vshrl.u32 %v1281, 16
      %vm1287 = vc.u32 %v1279, %v1283
      %v1288 = vsel %vm1287, 1, 0
      %v1289 = vadd.s32 %v1279, %v1283
      %v1290 = vadd.s32 %v1282, %v1288
      %vm1291 = vc.u32 %v1289, %v1285
      %v1292 = vsel %vm1291, 1, 0
      %v1293 = vadd.s32 %v1289, %v1285
      %v1294 = vadd.s32 %v1290, %v1292
      %v1295 = vadd.s32 %v1294, %v1284
      %v1296 = vadd.s32 %v1295, %v1286
      %v1297 = vshrl.u32 %v1296, 4
      %v1298 = vmul.u32 %v1297, 18
      %v1299 = vsub.s32 %v1275, %v1298
      %v1300 = vsub.s32 0, %v1299
      %v1301 = vsel %vm1273, %v1300, %v1299
      %vm1302 = vcmp.lt.s32.totalorder %v314, 0
      %v1303 = vsub.s32 0, %v314
      %v1304 = vsel %vm1302, %v1303, %v314
      %v1305 = vand.u32 %v1304, 65535
      %v1306 = vshrl.u32 %v1304, 16
      %v1308 = vmul.u32 %v1305, 14564
      %v1309 = vmul.u32 %v1305, 58254
      %v1310 = vmul.u32 %v1306, 14564
      %v1311 = vmul.u32 %v1306, 58254
      %v1312 = vshll.u32 %v1309, 16
      %v1313 = vshrl.u32 %v1309, 16
      %v1314 = vshll.u32 %v1310, 16
      %v1315 = vshrl.u32 %v1310, 16
      %vm1316 = vc.u32 %v1308, %v1312
      %v1317 = vsel %vm1316, 1, 0
      %v1318 = vadd.s32 %v1308, %v1312
      %v1319 = vadd.s32 %v1311, %v1317
      %vm1320 = vc.u32 %v1318, %v1314
      %v1321 = vsel %vm1320, 1, 0
      %v1322 = vadd.s32 %v1318, %v1314
      %v1323 = vadd.s32 %v1319, %v1321
      %v1324 = vadd.s32 %v1323, %v1313
      %v1325 = vadd.s32 %v1324, %v1315
      %v1326 = vshrl.u32 %v1325, 4
      %v1327 = vmul.u32 %v1326, 18
      %v1328 = vsub.s32 %v1304, %v1327
      %v1329 = vsub.s32 0, %v1328
      %v1330 = vsel %vm1302, %v1329, %v1328
      %vm1331 = vcmp.lt.s32.totalorder %v315, 0
      %v1332 = vsub.s32 0, %v315
      %v1333 = vsel %vm1331, %v1332, %v315
      %v1334 = vand.u32 %v1333, 65535
      %v1335 = vshrl.u32 %v1333, 16
      %v1337 = vmul.u32 %v1334, 14564
      %v1338 = vmul.u32 %v1334, 58254
      %v1339 = vmul.u32 %v1335, 14564
      %v1340 = vmul.u32 %v1335, 58254
      %v1341 = vshll.u32 %v1338, 16
      %v1342 = vshrl.u32 %v1338, 16
      %v1343 = vshll.u32 %v1339, 16
      %v1344 = vshrl.u32 %v1339, 16
      %vm1345 = vc.u32 %v1337, %v1341
      %v1346 = vsel %vm1345, 1, 0
      %v1347 = vadd.s32 %v1337, %v1341
      %v1348 = vadd.s32 %v1340, %v1346
      %vm1349 = vc.u32 %v1347, %v1343
      %v1350 = vsel %vm1349, 1, 0
      %v1351 = vadd.s32 %v1347, %v1343
      %v1352 = vadd.s32 %v1348, %v1350
      %v1353 = vadd.s32 %v1352, %v1342
      %v1354 = vadd.s32 %v1353, %v1344
      %v1355 = vshrl.u32 %v1354, 4
      %v1356 = vmul.u32 %v1355, 18
      %v1357 = vsub.s32 %v1333, %v1356
      %v1358 = vsub.s32 0, %v1357
      %v1359 = vsel %vm1331, %v1358, %v1357
      %vm1360 = vcmp.ne.s32.totalorder %v344, 0
      %vm1361 = vcmp.ne.s32.totalorder %v373, 0
      %vm1362 = vcmp.ne.s32.totalorder %v402, 0
      %vm1363 = vcmp.ne.s32.totalorder %v431, 0
      %vm1364 = vcmp.ne.s32.totalorder %v460, 0
      %vm1365 = vcmp.ne.s32.totalorder %v489, 0
      %vm1366 = vcmp.ne.s32.totalorder %v518, 0
      %vm1367 = vcmp.ne.s32.totalorder %v547, 0
      %vm1368 = vcmp.ne.s32.totalorder %v576, 0
      %vm1369 = vcmp.ne.s32.totalorder %v605, 0
      %vm1370 = vcmp.ne.s32.totalorder %v634, 0
      %vm1371 = vcmp.ne.s32.totalorder %v663, 0
      %vm1372 = vcmp.ne.s32.totalorder %v692, 0
      %vm1373 = vcmp.ne.s32.totalorder %v721, 0
      %vm1374 = vcmp.ne.s32.totalorder %v750, 0
      %vm1375 = vcmp.ne.s32.totalorder %v779, 0
      %vm1376 = vcmp.ne.s32.totalorder %v808, 0
      %vm1377 = vcmp.ne.s32.totalorder %v837, 0
      %vm1378 = vcmp.ne.s32.totalorder %v866, 0
      %vm1379 = vcmp.ne.s32.totalorder %v895, 0
      %vm1380 = vcmp.ne.s32.totalorder %v924, 0
      %vm1381 = vcmp.ne.s32.totalorder %v953, 0
      %vm1382 = vcmp.ne.s32.totalorder %v982, 0
      %vm1383 = vcmp.ne.s32.totalorder %v1011, 0
      %vm1384 = vcmp.ne.s32.totalorder %v1040, 0
      %vm1385 = vcmp.ne.s32.totalorder %v1069, 0
      %vm1386 = vcmp.ne.s32.totalorder %v1098, 0
      %vm1387 = vcmp.ne.s32.totalorder %v1127, 0
      %vm1388 = vcmp.ne.s32.totalorder %v1156, 0
      %vm1389 = vcmp.ne.s32.totalorder %v1185, 0
      %vm1390 = vcmp.ne.s32.totalorder %v1214, 0
      %vm1391 = vcmp.ne.s32.totalorder %v1243, 0
      %vm1392 = vcmp.ne.s32.totalorder %v1272, 0
      %vm1393 = vcmp.ne.s32.totalorder %v1301, 0
      %vm1394 = vcmp.ne.s32.totalorder %v1330, 0
      %vm1395 = vcmp.ne.s32.totalorder %v1359, 0
      %vm1396 = vcmp.lt.s32.totalorder %v344, 0
      %vm1397 = vcmp.lt.s32.totalorder %v373, 0
      %vm1398 = vcmp.lt.s32.totalorder %v402, 0
      %vm1399 = vcmp.lt.s32.totalorder %v431, 0
      %vm1400 = vcmp.lt.s32.totalorder %v460, 0
      %vm1401 = vcmp.lt.s32.totalorder %v489, 0
      %vm1402 = vcmp.lt.s32.totalorder %v518, 0
      %vm1403 = vcmp.lt.s32.totalorder %v547, 0
      %vm1404 = vcmp.lt.s32.totalorder %v576, 0
      %vm1405 = vcmp.lt.s32.totalorder %v605, 0
      %vm1406 = vcmp.lt.s32.totalorder %v634, 0
      %vm1407 = vcmp.lt.s32.totalorder %v663, 0
      %vm1408 = vcmp.lt.s32.totalorder %v692, 0
      %vm1409 = vcmp.lt.s32.totalorder %v721, 0
      %vm1410 = vcmp.lt.s32.totalorder %v750, 0
      %vm1411 = vcmp.lt.s32.totalorder %v779, 0
      %vm1412 = vcmp.lt.s32.totalorder %v808, 0
      %vm1413 = vcmp.lt.s32.totalorder %v837, 0
      %vm1414 = vcmp.lt.s32.totalorder %v866, 0
      %vm1415 = vcmp.lt.s32.totalorder %v895, 0
      %vm1416 = vcmp.lt.s32.totalorder %v924, 0
      %vm1417 = vcmp.lt.s32.totalorder %v953, 0
      %vm1418 = vcmp.lt.s32.totalorder %v982, 0
      %vm1419 = vcmp.lt.s32.totalorder %v1011, 0
      %vm1420 = vcmp.lt.s32.totalorder %v1040, 0
      %vm1421 = vcmp.lt.s32.totalorder %v1069, 0
      %vm1422 = vcmp.lt.s32.totalorder %v1098, 0
      %vm1423 = vcmp.lt.s32.totalorder %v1127, 0
      %vm1424 = vcmp.lt.s32.totalorder %v1156, 0
      %vm1425 = vcmp.lt.s32.totalorder %v1185, 0
      %vm1426 = vcmp.lt.s32.totalorder %v1214, 0
      %vm1427 = vcmp.lt.s32.totalorder %v1243, 0
      %vm1428 = vcmp.lt.s32.totalorder %v1272, 0
      %vm1429 = vcmp.lt.s32.totalorder %v1301, 0
      %vm1430 = vcmp.lt.s32.totalorder %v1330, 0
      %vm1431 = vcmp.lt.s32.totalorder %v1359, 0
      %vm1432 = vmand %vm1396, %vm1360
      %vm1433 = vmand %vm1397, %vm1361
      %vm1434 = vmand %vm1398, %vm1362
      %vm1435 = vmand %vm1399, %vm1363
      %vm1436 = vmand %vm1400, %vm1364
      %vm1437 = vmand %vm1401, %vm1365
      %vm1438 = vmand %vm1402, %vm1366
      %vm1439 = vmand %vm1403, %vm1367
      %vm1440 = vmand %vm1404, %vm1368
      %vm1441 = vmand %vm1405, %vm1369
      %vm1442 = vmand %vm1406, %vm1370
      %vm1443 = vmand %vm1407, %vm1371
      %vm1444 = vmand %vm1408, %vm1372
      %vm1445 = vmand %vm1409, %vm1373
      %vm1446 = vmand %vm1410, %vm1374
      %vm1447 = vmand %vm1411, %vm1375
      %vm1448 = vmand %vm1412, %vm1376
      %vm1449 = vmand %vm1413, %vm1377
      %vm1450 = vmand %vm1414, %vm1378
      %vm1451 = vmand %vm1415, %vm1379
      %vm1452 = vmand %vm1416, %vm1380
      %vm1453 = vmand %vm1417, %vm1381
      %vm1454 = vmand %vm1418, %vm1382
      %vm1455 = vmand %vm1419, %vm1383
      %vm1456 = vmand %vm1420, %vm1384
      %vm1457 = vmand %vm1421, %vm1385
      %vm1458 = vmand %vm1422, %vm1386
      %vm1459 = vmand %vm1423, %vm1387
      %vm1460 = vmand %vm1424, %vm1388
      %vm1461 = vmand %vm1425, %vm1389
      %vm1462 = vmand %vm1426, %vm1390
      %vm1463 = vmand %vm1427, %vm1391
      %vm1464 = vmand %vm1428, %vm1392
      %vm1465 = vmand %vm1429, %vm1393
      %vm1466 = vmand %vm1430, %vm1394
      %vm1467 = vmand %vm1431, %vm1395
      %v1468 = vadd.s32 %v344, 18
      %v1469 = vadd.s32 %v373, 18
      %v1470 = vadd.s32 %v402, 18
      %v1471 = vadd.s32 %v431, 18
      %v1472 = vadd.s32 %v460, 18
      %v1473 = vadd.s32 %v489, 18
      %v1474 = vadd.s32 %v518, 18
      %v1475 = vadd.s32 %v547, 18
      %v1476 = vadd.s32 %v576, 18
      %v1477 = vadd.s32 %v605, 18
      %v1478 = vadd.s32 %v634, 18
      %v1479 = vadd.s32 %v663, 18
      %v1480 = vadd.s32 %v692, 18
      %v1481 = vadd.s32 %v721, 18
      %v1482 = vadd.s32 %v750, 18
      %v1483 = vadd.s32 %v779, 18
      %v1484 = vadd.s32 %v808, 18
      %v1485 = vadd.s32 %v837, 18
      %v1486 = vadd.s32 %v866, 18
      %v1487 = vadd.s32 %v895, 18
      %v1488 = vadd.s32 %v924, 18
      %v1489 = vadd.s32 %v953, 18
      %v1490 = vadd.s32 %v982, 18
      %v1491 = vadd.s32 %v1011, 18
      %v1492 = vadd.s32 %v1040, 18
      %v1493 = vadd.s32 %v1069, 18
      %v1494 = vadd.s32 %v1098, 18
      %v1495 = vadd.s32 %v1127, 18
      %v1496 = vadd.s32 %v1156, 18
      %v1497 = vadd.s32 %v1185, 18
      %v1498 = vadd.s32 %v1214, 18
      %v1499 = vadd.s32 %v1243, 18
      %v1500 = vadd.s32 %v1272, 18
      %v1501 = vadd.s32 %v1301, 18
      %v1502 = vadd.s32 %v1330, 18
      %v1503 = vadd.s32 %v1359, 18
      %v1504 = vsel %vm1432, %v1468, %v344
      %v1505 = vsel %vm1433, %v1469, %v373
      %v1506 = vsel %vm1434, %v1470, %v402
      %v1507 = vsel %vm1435, %v1471, %v431
      %v1508 = vsel %vm1436, %v1472, %v460
      %v1509 = vsel %vm1437, %v1473, %v489
      %v1510 = vsel %vm1438, %v1474, %v518
      %v1511 = vsel %vm1439, %v1475, %v547
      %v1512 = vsel %vm1440, %v1476, %v576
      %v1513 = vsel %vm1441, %v1477, %v605
      %v1514 = vsel %vm1442, %v1478, %v634
      %v1515 = vsel %vm1443, %v1479, %v663
      %v1516 = vsel %vm1444, %v1480, %v692
      %v1517 = vsel %vm1445, %v1481, %v721
      %v1518 = vsel %vm1446, %v1482, %v750
      %v1519 = vsel %vm1447, %v1483, %v779
      %v1520 = vsel %vm1448, %v1484, %v808
      %v1521 = vsel %vm1449, %v1485, %v837
      %v1522 = vsel %vm1450, %v1486, %v866
      %v1523 = vsel %vm1451, %v1487, %v895
      %v1524 = vsel %vm1452, %v1488, %v924
      %v1525 = vsel %vm1453, %v1489, %v953
      %v1526 = vsel %vm1454, %v1490, %v982
      %v1527 = vsel %vm1455, %v1491, %v1011
      %v1528 = vsel %vm1456, %v1492, %v1040
      %v1529 = vsel %vm1457, %v1493, %v1069
      %v1530 = vsel %vm1458, %v1494, %v1098
      %v1531 = vsel %vm1459, %v1495, %v1127
      %v1532 = vsel %vm1460, %v1496, %v1156
      %v1533 = vsel %vm1461, %v1497, %v1185
      %v1534 = vsel %vm1462, %v1498, %v1214
      %v1535 = vsel %vm1463, %v1499, %v1243
      %v1536 = vsel %vm1464, %v1500, %v1272
      %v1537 = vsel %vm1465, %v1501, %v1301
      %v1538 = vsel %vm1466, %v1502, %v1330
      %v1539 = vsel %vm1467, %v1503, %v1359
      %vm1540 = vcmp.lt.s32.totalorder %v1504, 16
      %vm1541 = vcmp.lt.s32.totalorder %v1505, 16
      %vm1542 = vcmp.lt.s32.totalorder %v1506, 16
      %vm1543 = vcmp.lt.s32.totalorder %v1507, 16
      %vm1544 = vcmp.lt.s32.totalorder %v1508, 16
      %vm1545 = vcmp.lt.s32.totalorder %v1509, 16
      %vm1546 = vcmp.lt.s32.totalorder %v1510, 16
      %vm1547 = vcmp.lt.s32.totalorder %v1511, 16
      %vm1548 = vcmp.lt.s32.totalorder %v1512, 16
      %vm1549 = vcmp.lt.s32.totalorder %v1513, 16
      %vm1550 = vcmp.lt.s32.totalorder %v1514, 16
      %vm1551 = vcmp.lt.s32.totalorder %v1515, 16
      %vm1552 = vcmp.lt.s32.totalorder %v1516, 16
      %vm1553 = vcmp.lt.s32.totalorder %v1517, 16
      %vm1554 = vcmp.lt.s32.totalorder %v1518, 16
      %vm1555 = vcmp.lt.s32.totalorder %v1519, 16
      %vm1556 = vcmp.lt.s32.totalorder %v1520, 16
      %vm1557 = vcmp.lt.s32.totalorder %v1521, 16
      %vm1558 = vcmp.lt.s32.totalorder %v1522, 16
      %vm1559 = vcmp.lt.s32.totalorder %v1523, 16
      %vm1560 = vcmp.lt.s32.totalorder %v1524, 16
      %vm1561 = vcmp.lt.s32.totalorder %v1525, 16
      %vm1562 = vcmp.lt.s32.totalorder %v1526, 16
      %vm1563 = vcmp.lt.s32.totalorder %v1527, 16
      %vm1564 = vcmp.lt.s32.totalorder %v1528, 16
      %vm1565 = vcmp.lt.s32.totalorder %v1529, 16
      %vm1566 = vcmp.lt.s32.totalorder %v1530, 16
      %vm1567 = vcmp.lt.s32.totalorder %v1531, 16
      %vm1568 = vcmp.lt.s32.totalorder %v1532, 16
      %vm1569 = vcmp.lt.s32.totalorder %v1533, 16
      %vm1570 = vcmp.lt.s32.totalorder %v1534, 16
      %vm1571 = vcmp.lt.s32.totalorder %v1535, 16
      %vm1572 = vcmp.lt.s32.totalorder %v1536, 16
      %vm1573 = vcmp.lt.s32.totalorder %v1537, 16
      %vm1574 = vcmp.lt.s32.totalorder %v1538, 16
      %vm1575 = vcmp.lt.s32.totalorder %v1539, 16
      %v1576 = vld [vmem:[%s273] sm:$0xff]
      %v1577 = vld [vmem:[%s273 + $0x8] sm:$0xff]
      %v1578 = vld [vmem:[%s273 + $0x10] sm:$0xff]
      %v1579 = vld [vmem:[%s273 + $0x18] sm:$0xff]
      %v1580 = vld [vmem:[%s273 + $0x20] sm:$0xff]
      %v1581 = vld [vmem:[%s273 + $0x28] sm:$0xff]
      %v1582 = vld [vmem:[%s273 + $0x30] sm:$0xff]
      %v1583 = vld [vmem:[%s273 + $0x38] sm:$0xff]
      %v1584 = vld [vmem:[%s273 + $0x40] sm:$0xff]
      %v1585 = vld [vmem:[%s273 + $0x48] sm:$0xff]
      %v1586 = vld [vmem:[%s273 + $0x50] sm:$0xff]
      %v1587 = vld [vmem:[%s273 + $0x58] sm:$0xff]
      %v1588 = vld [vmem:[%s273 + $0x60] sm:$0xff]
      %v1589 = vld [vmem:[%s273 + $0x68] sm:$0xff]
      %v1590 = vld [vmem:[%s273 + $0x70] sm:$0xff]
      %v1591 = vld [vmem:[%s273 + $0x78] sm:$0xff]
      %v1592 = vld [vmem:[%s273 + $0x80] sm:$0xff]
      %v1593 = vld [vmem:[%s273 + $0x88] sm:$0xff]
      %v1594 = vld [vmem:[%s273 + $0x90] sm:$0xff]
      %v1595 = vld [vmem:[%s273 + $0x98] sm:$0xff]
      %v1596 = vld [vmem:[%s273 + $0xa0] sm:$0xff]
      %v1597 = vld [vmem:[%s273 + $0xa8] sm:$0xff]
      %v1598 = vld [vmem:[%s273 + $0xb0] sm:$0xff]
      %v1599 = vld [vmem:[%s273 + $0xb8] sm:$0xff]
      %v1600 = vld [vmem:[%s273 + $0xc0] sm:$0xff]
      %v1601 = vld [vmem:[%s273 + $0xc8] sm:$0xff]
      %v1602 = vld [vmem:[%s273 + $0xd0] sm:$0xff]
      %v1603 = vld [vmem:[%s273 + $0xd8] sm:$0xff]
      %v1604 = vld [vmem:[%s273 + $0xe0] sm:$0xff]
      %v1605 = vld [vmem:[%s273 + $0xe8] sm:$0xff]
      %v1606 = vld [vmem:[%s273 + $0xf0] sm:$0xff]
      %v1607 = vld [vmem:[%s273 + $0xf8] sm:$0xff]
      %v1608 = vld [vmem:[%s273 + $0x100] sm:$0xff]
      %v1609 = vld [vmem:[%s273 + $0x108] sm:$0xff]
      %v1610 = vld [vmem:[%s273 + $0x110] sm:$0xff]
      %v1611 = vld [vmem:[%s273 + $0x118] sm:$0xff]
      %v1612 = vld [vmem:[%s1] sm:$0xff]
      %v1613 = vld [vmem:[%s1 + $0x8] sm:$0xff]
      %v1614 = vld [vmem:[%s273 + $0x1] sm:$0xff]
      %v1615 = vld [vmem:[%s273 + $0x9] sm:$0xff]
      %v1616 = vld [vmem:[%s273 + $0x11] sm:$0xff]
      %v1617 = vld [vmem:[%s273 + $0x19] sm:$0xff]
      %v1618 = vld [vmem:[%s273 + $0x21] sm:$0xff]
      %v1619 = vld [vmem:[%s273 + $0x29] sm:$0xff]
      %v1620 = vld [vmem:[%s273 + $0x31] sm:$0xff]
      %v1621 = vld [vmem:[%s273 + $0x39] sm:$0xff]
      %v1622 = vld [vmem:[%s273 + $0x41] sm:$0xff]
      %v1623 = vld [vmem:[%s273 + $0x49] sm:$0xff]
      %v1624 = vld [vmem:[%s273 + $0x51] sm:$0xff]
      %v1625 = vld [vmem:[%s273 + $0x59] sm:$0xff]
      %v1626 = vld [vmem:[%s273 + $0x61] sm:$0xff]
      %v1627 = vld [vmem:[%s273 + $0x69] sm:$0xff]
      %v1628 = vld [vmem:[%s273 + $0x71] sm:$0xff]
      %v1629 = vld [vmem:[%s273 + $0x79] sm:$0xff]
      %v1630 = vld [vmem:[%s273 + $0x81] sm:$0xff]
      %v1631 = vld [vmem:[%s273 + $0x89] sm:$0xff]
      %v1632 = vld [vmem:[%s273 + $0x91] sm:$0xff]
      %v1633 = vld [vmem:[%s273 + $0x99] sm:$0xff]
      %v1634 = vld [vmem:[%s273 + $0xa1] sm:$0xff]
      %v1635 = vld [vmem:[%s273 + $0xa9] sm:$0xff]
      %v1636 = vld [vmem:[%s273 + $0xb1] sm:$0xff]
      %v1637 = vld [vmem:[%s273 + $0xb9] sm:$0xff]
      %v1638 = vld [vmem:[%s273 + $0xc1] sm:$0xff]
      %v1639 = vld [vmem:[%s273 + $0xc9] sm:$0xff]
      %v1640 = vld [vmem:[%s273 + $0xd1] sm:$0xff]
      %v1641 = vld [vmem:[%s273 + $0xd9] sm:$0xff]
      %v1642 = vld [vmem:[%s273 + $0xe1] sm:$0xff]
      %v1643 = vld [vmem:[%s273 + $0xe9] sm:$0xff]
      %v1644 = vld [vmem:[%s273 + $0xf1] sm:$0xff]
      %v1645 = vld [vmem:[%s273 + $0xf9] sm:$0xff]
      %v1646 = vld [vmem:[%s273 + $0x101] sm:$0xff]
      %v1647 = vld [vmem:[%s273 + $0x109] sm:$0xff]
      %v1648 = vld [vmem:[%s273 + $0x111] sm:$0xff]
      %v1649 = vld [vmem:[%s273 + $0x119] sm:$0xff]
      %s1650 = scalar_lea.vmem %s1, 16
      %v1651 = vld [vmem:[%s1650] sm:$0xff]
      %v1652 = vld [vmem:[%s1650 + $0x8] sm:$0xff]
      %vm1653 = vcmask 130048
      %v1655 = vsel %vm1653, %v1614, 0
      %v1658 = vsel %vm1653, %v1615, 0
      %v1661 = vsel %vm1653, %v1616, 0
      %v1664 = vsel %vm1653, %v1617, 0
      %v1667 = vsel %vm1653, %v1618, 0
      %v1670 = vsel %vm1653, %v1619, 0
      %v1673 = vsel %vm1653, %v1620, 0
      %v1676 = vsel %vm1653, %v1621, 0
      %v1679 = vsel %vm1653, %v1622, 0
      %v1682 = vsel %vm1653, %v1623, 0
      %v1685 = vsel %vm1653, %v1624, 0
      %v1688 = vsel %vm1653, %v1625, 0
      %v1691 = vsel %vm1653, %v1626, 0
      %v1694 = vsel %vm1653, %v1627, 0
      %v1697 = vsel %vm1653, %v1628, 0
      %v1700 = vsel %vm1653, %v1629, 0
      %v1703 = vsel %vm1653, %v1630, 0
      %v1706 = vsel %vm1653, %v1631, 0
      %v1709 = vsel %vm1653, %v1632, 0
      %v1712 = vsel %vm1653, %v1633, 0
      %v1715 = vsel %vm1653, %v1634, 0
      %v1718 = vsel %vm1653, %v1635, 0
      %v1721 = vsel %vm1653, %v1636, 0
      %v1724 = vsel %vm1653, %v1637, 0
      %v1727 = vsel %vm1653, %v1638, 0
      %v1730 = vsel %vm1653, %v1639, 0
      %v1733 = vsel %vm1653, %v1640, 0
      %v1736 = vsel %vm1653, %v1641, 0
      %v1739 = vsel %vm1653, %v1642, 0
      %v1742 = vsel %vm1653, %v1643, 0
      %v1745 = vsel %vm1653, %v1644, 0
      %v1748 = vsel %vm1653, %v1645, 0
      %v1751 = vsel %vm1653, %v1646, 0
      %v1754 = vsel %vm1653, %v1647, 0
      %v1757 = vsel %vm1653, %v1648, 0
      %v1760 = vsel %vm1653, %v1649, 0
      %1762 = vmatpush.msra.mxu0 0.0
      %1763 = vmatpush.msra.mxu0 0.0
      %1764 = vmatpush.msra.mxu0 0.0
      %1765 = vmatpush.msra.mxu0 0.0
      %1766 = vmatpush.msra.mxu0 0.0
      %1767 = vmatpush.msra.mxu0 0.0
      %1768 = vmatpush.msra.mxu0 0.0
      %1769 = vmatpush.msra.mxu0 0.0
      %1770 = vmatpush.msra.mxu0 0.0
      %1771 = vmatpush.msra.mxu0 0.0
      %1772 = vmatpush.msra.mxu0 0.0
      %1773 = vmatpush.msra.mxu0 0.0
      %1774 = vmatpush.msra.mxu0 0.0
      %1775 = vmatpush.msra.mxu0 0.0
      %1776 = vmatpush.msra.mxu0 %v1652
      %1777 = vmatpush.msra.mxu0 %v1651
      %1778 = vmatmul.f32.gmra.mxu0 %v1655
      %v1779 = vpop.f32.mrf.mxu0
      %v1780 = vadd.f32 0.0, %v1779
      %1781 = vmatmul.f32.gmra.mxu0 %v1658
      %v1782 = vpop.f32.mrf.mxu0
      %v1783 = vadd.f32 0.0, %v1782
      %1784 = vmatmul.f32.gmra.mxu0 %v1661
      %v1785 = vpop.f32.mrf.mxu0
      %v1786 = vadd.f32 0.0, %v1785
      %1787 = vmatmul.f32.gmra.mxu0 %v1664
      %v1788 = vpop.f32.mrf.mxu0
      %v1789 = vadd.f32 0.0, %v1788
      %1790 = vmatmul.f32.gmra.mxu0 %v1667
      %v1791 = vpop.f32.mrf.mxu0
      %v1792 = vadd.f32 0.0, %v1791
      %1793 = vmatmul.f32.gmra.mxu0 %v1670
      %v1794 = vpop.f32.mrf.mxu0
      %v1795 = vadd.f32 0.0, %v1794
      %1796 = vmatmul.f32.gmra.mxu0 %v1673
      %v1797 = vpop.f32.mrf.mxu0
      %v1798 = vadd.f32 0.0, %v1797
      %1799 = vmatmul.f32.gmra.mxu0 %v1676
      %v1800 = vpop.f32.mrf.mxu0
      %v1801 = vadd.f32 0.0, %v1800
      %1802 = vmatmul.f32.gmra.mxu0 %v1679
      %v1803 = vpop.f32.mrf.mxu0
      %v1804 = vadd.f32 0.0, %v1803
      %1805 = vmatmul.f32.gmra.mxu0 %v1682
      %v1806 = vpop.f32.mrf.mxu0
      %v1807 = vadd.f32 0.0, %v1806
      %1808 = vmatmul.f32.gmra.mxu0 %v1685
      %v1809 = vpop.f32.mrf.mxu0
      %v1810 = vadd.f32 0.0, %v1809
      %1811 = vmatmul.f32.gmra.mxu0 %v1688
      %v1812 = vpop.f32.mrf.mxu0
      %v1813 = vadd.f32 0.0, %v1812
      %1814 = vmatmul.f32.gmra.mxu0 %v1691
      %v1815 = vpop.f32.mrf.mxu0
      %v1816 = vadd.f32 0.0, %v1815
      %1817 = vmatmul.f32.gmra.mxu0 %v1694
      %v1818 = vpop.f32.mrf.mxu0
      %v1819 = vadd.f32 0.0, %v1818
      %1820 = vmatmul.f32.gmra.mxu0 %v1697
      %v1821 = vpop.f32.mrf.mxu0
      %v1822 = vadd.f32 0.0, %v1821
      %1823 = vmatmul.f32.gmra.mxu0 %v1700
      %v1824 = vpop.f32.mrf.mxu0
      %v1825 = vadd.f32 0.0, %v1824
      %1826 = vmatmul.f32.gmra.mxu0 %v1703
      %v1827 = vpop.f32.mrf.mxu0
      %v1828 = vadd.f32 0.0, %v1827
      %1829 = vmatmul.f32.gmra.mxu0 %v1706
      %v1830 = vpop.f32.mrf.mxu0
      %v1831 = vadd.f32 0.0, %v1830
      %1832 = vmatmul.f32.gmra.mxu0 %v1709
      %v1833 = vpop.f32.mrf.mxu0
      %v1834 = vadd.f32 0.0, %v1833
      %1835 = vmatmul.f32.gmra.mxu0 %v1712
      %v1836 = vpop.f32.mrf.mxu0
      %v1837 = vadd.f32 0.0, %v1836
      %1838 = vmatmul.f32.gmra.mxu0 %v1715
      %v1839 = vpop.f32.mrf.mxu0
      %v1840 = vadd.f32 0.0, %v1839
      %1841 = vmatmul.f32.gmra.mxu0 %v1718
      %v1842 = vpop.f32.mrf.mxu0
      %v1843 = vadd.f32 0.0, %v1842
      %1844 = vmatmul.f32.gmra.mxu0 %v1721
      %v1845 = vpop.f32.mrf.mxu0
      %v1846 = vadd.f32 0.0, %v1845
      %1847 = vmatmul.f32.gmra.mxu0 %v1724
      %v1848 = vpop.f32.mrf.mxu0
      %v1849 = vadd.f32 0.0, %v1848
      %1850 = vmatmul.f32.gmra.mxu0 %v1727
      %v1851 = vpop.f32.mrf.mxu0
      %v1852 = vadd.f32 0.0, %v1851
      %1853 = vmatmul.f32.gmra.mxu0 %v1730
      %v1854 = vpop.f32.mrf.mxu0
      %v1855 = vadd.f32 0.0, %v1854
      %1856 = vmatmul.f32.gmra.mxu0 %v1733
      %v1857 = vpop.f32.mrf.mxu0
      %v1858 = vadd.f32 0.0, %v1857
      %1859 = vmatmul.f32.gmra.mxu0 %v1736
      %v1860 = vpop.f32.mrf.mxu0
      %v1861 = vadd.f32 0.0, %v1860
      %1862 = vmatmul.f32.gmra.mxu0 %v1739
      %v1863 = vpop.f32.mrf.mxu0
      %v1864 = vadd.f32 0.0, %v1863
      %1865 = vmatmul.f32.gmra.mxu0 %v1742
      %v1866 = vpop.f32.mrf.mxu0
      %v1867 = vadd.f32 0.0, %v1866
      %1868 = vmatmul.f32.gmra.mxu0 %v1745
      %v1869 = vpop.f32.mrf.mxu0
      %v1870 = vadd.f32 0.0, %v1869
      %1871 = vmatmul.f32.gmra.mxu0 %v1748
      %v1872 = vpop.f32.mrf.mxu0
      %v1873 = vadd.f32 0.0, %v1872
      %1874 = vmatmul.f32.gmra.mxu0 %v1751
      %v1875 = vpop.f32.mrf.mxu0
      %v1876 = vadd.f32 0.0, %v1875
      %1877 = vmatmul.f32.gmra.mxu0 %v1754
      %v1878 = vpop.f32.mrf.mxu0
      %v1879 = vadd.f32 0.0, %v1878
      %1880 = vmatmul.f32.gmra.mxu0 %v1757
      %v1881 = vpop.f32.mrf.mxu0
      %v1882 = vadd.f32 0.0, %v1881
      %1883 = vmatmul.f32.gmra.mxu0 %v1760
      %v1884 = vpop.f32.mrf.mxu0
      %v1885 = vadd.f32 0.0, %v1884
      %1886 = vdwg.mxu0
      %v1888 = vsel %vm1653, %v1576, 0
      %v1891 = vsel %vm1653, %v1577, 0
      %v1894 = vsel %vm1653, %v1578, 0
      %v1897 = vsel %vm1653, %v1579, 0
      %v1900 = vsel %vm1653, %v1580, 0
      %v1903 = vsel %vm1653, %v1581, 0
      %v1906 = vsel %vm1653, %v1582, 0
      %v1909 = vsel %vm1653, %v1583, 0
      %v1912 = vsel %vm1653, %v1584, 0
      %v1915 = vsel %vm1653, %v1585, 0
      %v1918 = vsel %vm1653, %v1586, 0
      %v1921 = vsel %vm1653, %v1587, 0
      %v1924 = vsel %vm1653, %v1588, 0
      %v1927 = vsel %vm1653, %v1589, 0
      %v1930 = vsel %vm1653, %v1590, 0
      %v1933 = vsel %vm1653, %v1591, 0
      %v1936 = vsel %vm1653, %v1592, 0
      %v1939 = vsel %vm1653, %v1593, 0
      %v1942 = vsel %vm1653, %v1594, 0
      %v1945 = vsel %vm1653, %v1595, 0
      %v1948 = vsel %vm1653, %v1596, 0
      %v1951 = vsel %vm1653, %v1597, 0
      %v1954 = vsel %vm1653, %v1598, 0
      %v1957 = vsel %vm1653, %v1599, 0
      %v1960 = vsel %vm1653, %v1600, 0
      %v1963 = vsel %vm1653, %v1601, 0
      %v1966 = vsel %vm1653, %v1602, 0
      %v1969 = vsel %vm1653, %v1603, 0
      %v1972 = vsel %vm1653, %v1604, 0
      %v1975 = vsel %vm1653, %v1605, 0
      %v1978 = vsel %vm1653, %v1606, 0
      %v1981 = vsel %vm1653, %v1607, 0
      %v1984 = vsel %vm1653, %v1608, 0
      %v1987 = vsel %vm1653, %v1609, 0
      %v1990 = vsel %vm1653, %v1610, 0
      %v1993 = vsel %vm1653, %v1611, 0
      %1995 = vmatpush.msra.mxu0 0.0
      %1996 = vmatpush.msra.mxu0 0.0
      %1997 = vmatpush.msra.mxu0 0.0
      %1998 = vmatpush.msra.mxu0 0.0
      %1999 = vmatpush.msra.mxu0 0.0
      %2000 = vmatpush.msra.mxu0 0.0
      %2001 = vmatpush.msra.mxu0 0.0
      %2002 = vmatpush.msra.mxu0 0.0
      %2003 = vmatpush.msra.mxu0 0.0
      %2004 = vmatpush.msra.mxu0 0.0
      %2005 = vmatpush.msra.mxu0 0.0
      %2006 = vmatpush.msra.mxu0 0.0
      %2007 = vmatpush.msra.mxu0 0.0
      %2008 = vmatpush.msra.mxu0 0.0
      %2009 = vmatpush.msra.mxu0 %v1613
      %2010 = vmatpush.msra.mxu0 %v1612
      %2011 = vmatmul.f32.gmra.mxu0 %v1888
      %v2012 = vpop.f32.mrf.mxu0
      %v2013 = vadd.f32 %v1780, %v2012
      %2014 = vmatmul.f32.gmra.mxu0 %v1891
      %v2015 = vpop.f32.mrf.mxu0
      %v2016 = vadd.f32 %v1783, %v2015
      %2017 = vmatmul.f32.gmra.mxu0 %v1894
      %v2018 = vpop.f32.mrf.mxu0
      %v2019 = vadd.f32 %v1786, %v2018
      %2020 = vmatmul.f32.gmra.mxu0 %v1897
      %v2021 = vpop.f32.mrf.mxu0
      %v2022 = vadd.f32 %v1789, %v2021
      %2023 = vmatmul.f32.gmra.mxu0 %v1900
      %v2024 = vpop.f32.mrf.mxu0
      %v2025 = vadd.f32 %v1792, %v2024
      %2026 = vmatmul.f32.gmra.mxu0 %v1903
      %v2027 = vpop.f32.mrf.mxu0
      %v2028 = vadd.f32 %v1795, %v2027
      %2029 = vmatmul.f32.gmra.mxu0 %v1906
      %v2030 = vpop.f32.mrf.mxu0
      %v2031 = vadd.f32 %v1798, %v2030
      %2032 = vmatmul.f32.gmra.mxu0 %v1909
      %v2033 = vpop.f32.mrf.mxu0
      %v2034 = vadd.f32 %v1801, %v2033
      %2035 = vmatmul.f32.gmra.mxu0 %v1912
      %v2036 = vpop.f32.mrf.mxu0
      %v2037 = vadd.f32 %v1804, %v2036
      %2038 = vmatmul.f32.gmra.mxu0 %v1915
      %v2039 = vpop.f32.mrf.mxu0
      %v2040 = vadd.f32 %v1807, %v2039
      %2041 = vmatmul.f32.gmra.mxu0 %v1918
      %v2042 = vpop.f32.mrf.mxu0
      %v2043 = vadd.f32 %v1810, %v2042
      %2044 = vmatmul.f32.gmra.mxu0 %v1921
      %v2045 = vpop.f32.mrf.mxu0
      %v2046 = vadd.f32 %v1813, %v2045
      %2047 = vmatmul.f32.gmra.mxu0 %v1924
      %v2048 = vpop.f32.mrf.mxu0
      %v2049 = vadd.f32 %v1816, %v2048
      %2050 = vmatmul.f32.gmra.mxu0 %v1927
      %v2051 = vpop.f32.mrf.mxu0
      %v2052 = vadd.f32 %v1819, %v2051
      %2053 = vmatmul.f32.gmra.mxu0 %v1930
      %v2054 = vpop.f32.mrf.mxu0
      %v2055 = vadd.f32 %v1822, %v2054
      %2056 = vmatmul.f32.gmra.mxu0 %v1933
      %v2057 = vpop.f32.mrf.mxu0
      %v2058 = vadd.f32 %v1825, %v2057
      %2059 = vmatmul.f32.gmra.mxu0 %v1936
      %v2060 = vpop.f32.mrf.mxu0
      %v2061 = vadd.f32 %v1828, %v2060
      %2062 = vmatmul.f32.gmra.mxu0 %v1939
      %v2063 = vpop.f32.mrf.mxu0
      %v2064 = vadd.f32 %v1831, %v2063
      %2065 = vmatmul.f32.gmra.mxu0 %v1942
      %v2066 = vpop.f32.mrf.mxu0
      %v2067 = vadd.f32 %v1834, %v2066
      %2068 = vmatmul.f32.gmra.mxu0 %v1945
      %v2069 = vpop.f32.mrf.mxu0
      %v2070 = vadd.f32 %v1837, %v2069
      %2071 = vmatmul.f32.gmra.mxu0 %v1948
      %v2072 = vpop.f32.mrf.mxu0
      %v2073 = vadd.f32 %v1840, %v2072
      %2074 = vmatmul.f32.gmra.mxu0 %v1951
      %v2075 = vpop.f32.mrf.mxu0
      %v2076 = vadd.f32 %v1843, %v2075
      %2077 = vmatmul.f32.gmra.mxu0 %v1954
      %v2078 = vpop.f32.mrf.mxu0
      %v2079 = vadd.f32 %v1846, %v2078
      %2080 = vmatmul.f32.gmra.mxu0 %v1957
      %v2081 = vpop.f32.mrf.mxu0
      %v2082 = vadd.f32 %v1849, %v2081
      %2083 = vmatmul.f32.gmra.mxu0 %v1960
      %v2084 = vpop.f32.mrf.mxu0
      %v2085 = vadd.f32 %v1852, %v2084
      %2086 = vmatmul.f32.gmra.mxu0 %v1963
      %v2087 = vpop.f32.mrf.mxu0
      %v2088 = vadd.f32 %v1855, %v2087
      %2089 = vmatmul.f32.gmra.mxu0 %v1966
      %v2090 = vpop.f32.mrf.mxu0
      %v2091 = vadd.f32 %v1858, %v2090
      %2092 = vmatmul.f32.gmra.mxu0 %v1969
      %v2093 = vpop.f32.mrf.mxu0
      %v2094 = vadd.f32 %v1861, %v2093
      %2095 = vmatmul.f32.gmra.mxu0 %v1972
      %v2096 = vpop.f32.mrf.mxu0
      %v2097 = vadd.f32 %v1864, %v2096
      %2098 = vmatmul.f32.gmra.mxu0 %v1975
      %v2099 = vpop.f32.mrf.mxu0
      %v2100 = vadd.f32 %v1867, %v2099
      %2101 = vmatmul.f32.gmra.mxu0 %v1978
      %v2102 = vpop.f32.mrf.mxu0
      %v2103 = vadd.f32 %v1870, %v2102
      %2104 = vmatmul.f32.gmra.mxu0 %v1981
      %v2105 = vpop.f32.mrf.mxu0
      %v2106 = vadd.f32 %v1873, %v2105
      %2107 = vmatmul.f32.gmra.mxu0 %v1984
      %v2108 = vpop.f32.mrf.mxu0
      %v2109 = vadd.f32 %v1876, %v2108
      %2110 = vmatmul.f32.gmra.mxu0 %v1987
      %v2111 = vpop.f32.mrf.mxu0
      %v2112 = vadd.f32 %v1879, %v2111
      %2113 = vmatmul.f32.gmra.mxu0 %v1990
      %v2114 = vpop.f32.mrf.mxu0
      %v2115 = vadd.f32 %v1882, %v2114
      %2116 = vmatmul.f32.gmra.mxu0 %v1993
      %v2117 = vpop.f32.mrf.mxu0
      %v2118 = vadd.f32 %v1885, %v2117
      %2119 = vdwg.mxu0
      %v2120 = vld [vmem:[%s273 + $0x2] sm:$0xff]
      %v2121 = vld [vmem:[%s273 + $0xa] sm:$0xff]
      %v2122 = vld [vmem:[%s273 + $0x12] sm:$0xff]
      %v2123 = vld [vmem:[%s273 + $0x1a] sm:$0xff]
      %v2124 = vld [vmem:[%s273 + $0x22] sm:$0xff]
      %v2125 = vld [vmem:[%s273 + $0x2a] sm:$0xff]
      %v2126 = vld [vmem:[%s273 + $0x32] sm:$0xff]
      %v2127 = vld [vmem:[%s273 + $0x3a] sm:$0xff]
      %v2128 = vld [vmem:[%s273 + $0x42] sm:$0xff]
      %v2129 = vld [vmem:[%s273 + $0x4a] sm:$0xff]
      %v2130 = vld [vmem:[%s273 + $0x52] sm:$0xff]
      %v2131 = vld [vmem:[%s273 + $0x5a] sm:$0xff]
      %v2132 = vld [vmem:[%s273 + $0x62] sm:$0xff]
      %v2133 = vld [vmem:[%s273 + $0x6a] sm:$0xff]
      %v2134 = vld [vmem:[%s273 + $0x72] sm:$0xff]
      %v2135 = vld [vmem:[%s273 + $0x7a] sm:$0xff]
      %v2136 = vld [vmem:[%s273 + $0x82] sm:$0xff]
      %v2137 = vld [vmem:[%s273 + $0x8a] sm:$0xff]
      %v2138 = vld [vmem:[%s273 + $0x92] sm:$0xff]
      %v2139 = vld [vmem:[%s273 + $0x9a] sm:$0xff]
      %v2140 = vld [vmem:[%s273 + $0xa2] sm:$0xff]
      %v2141 = vld [vmem:[%s273 + $0xaa] sm:$0xff]
      %v2142 = vld [vmem:[%s273 + $0xb2] sm:$0xff]
      %v2143 = vld [vmem:[%s273 + $0xba] sm:$0xff]
      %v2144 = vld [vmem:[%s273 + $0xc2] sm:$0xff]
      %v2145 = vld [vmem:[%s273 + $0xca] sm:$0xff]
      %v2146 = vld [vmem:[%s273 + $0xd2] sm:$0xff]
      %v2147 = vld [vmem:[%s273 + $0xda] sm:$0xff]
      %v2148 = vld [vmem:[%s273 + $0xe2] sm:$0xff]
      %v2149 = vld [vmem:[%s273 + $0xea] sm:$0xff]
      %v2150 = vld [vmem:[%s273 + $0xf2] sm:$0xff]
      %v2151 = vld [vmem:[%s273 + $0xfa] sm:$0xff]
      %v2152 = vld [vmem:[%s273 + $0x102] sm:$0xff]
      %v2153 = vld [vmem:[%s273 + $0x10a] sm:$0xff]
      %v2154 = vld [vmem:[%s273 + $0x112] sm:$0xff]
      %v2155 = vld [vmem:[%s273 + $0x11a] sm:$0xff]
      %s2156 = scalar_lea.vmem %s1, 32
      %v2157 = vld [vmem:[%s2156] sm:$0xff]
      %v2158 = vld [vmem:[%s2156 + $0x8] sm:$0xff]
      %v2160 = vsel %vm1653, %v2120, 0
      %v2163 = vsel %vm1653, %v2121, 0
      %v2166 = vsel %vm1653, %v2122, 0
      %v2169 = vsel %vm1653, %v2123, 0
      %v2172 = vsel %vm1653, %v2124, 0
      %v2175 = vsel %vm1653, %v2125, 0
      %v2178 = vsel %vm1653, %v2126, 0
      %v2181 = vsel %vm1653, %v2127, 0
      %v2184 = vsel %vm1653, %v2128, 0
      %v2187 = vsel %vm1653, %v2129, 0
      %v2190 = vsel %vm1653, %v2130, 0
      %v2193 = vsel %vm1653, %v2131, 0
      %v2196 = vsel %vm1653, %v2132, 0
      %v2199 = vsel %vm1653, %v2133, 0
      %v2202 = vsel %vm1653, %v2134, 0
      %v2205 = vsel %vm1653, %v2135, 0
      %v2208 = vsel %vm1653, %v2136, 0
      %v2211 = vsel %vm1653, %v2137, 0
      %v2214 = vsel %vm1653, %v2138, 0
      %v2217 = vsel %vm1653, %v2139, 0
      %v2220 = vsel %vm1653, %v2140, 0
      %v2223 = vsel %vm1653, %v2141, 0
      %v2226 = vsel %vm1653, %v2142, 0
      %v2229 = vsel %vm1653, %v2143, 0
      %v2232 = vsel %vm1653, %v2144, 0
      %v2235 = vsel %vm1653, %v2145, 0
      %v2238 = vsel %vm1653, %v2146, 0
      %v2241 = vsel %vm1653, %v2147, 0
      %v2244 = vsel %vm1653, %v2148, 0
      %v2247 = vsel %vm1653, %v2149, 0
      %v2250 = vsel %vm1653, %v2150, 0
      %v2253 = vsel %vm1653, %v2151, 0
      %v2256 = vsel %vm1653, %v2152, 0
      %v2259 = vsel %vm1653, %v2153, 0
      %v2262 = vsel %vm1653, %v2154, 0
      %v2265 = vsel %vm1653, %v2155, 0
      %2267 = vmatpush.msra.mxu0 0.0
      %2268 = vmatpush.msra.mxu0 0.0
      %2269 = vmatpush.msra.mxu0 0.0
      %2270 = vmatpush.msra.mxu0 0.0
      %2271 = vmatpush.msra.mxu0 0.0
      %2272 = vmatpush.msra.mxu0 0.0
      %2273 = vmatpush.msra.mxu0 0.0
      %2274 = vmatpush.msra.mxu0 0.0
      %2275 = vmatpush.msra.mxu0 0.0
      %2276 = vmatpush.msra.mxu0 0.0
      %2277 = vmatpush.msra.mxu0 0.0
      %2278 = vmatpush.msra.mxu0 0.0
      %2279 = vmatpush.msra.mxu0 0.0
      %2280 = vmatpush.msra.mxu0 0.0
      %2281 = vmatpush.msra.mxu0 %v2158
      %2282 = vmatpush.msra.mxu0 %v2157
      %2283 = vmatmul.f32.gmra.mxu0 %v2160
      %v2284 = vpop.f32.mrf.mxu0
      %v2285 = vadd.f32 0.0, %v2284
      %2286 = vmatmul.f32.gmra.mxu0 %v2163
      %v2287 = vpop.f32.mrf.mxu0
      %v2288 = vadd.f32 0.0, %v2287
      %2289 = vmatmul.f32.gmra.mxu0 %v2166
      %v2290 = vpop.f32.mrf.mxu0
      %v2291 = vadd.f32 0.0, %v2290
      %2292 = vmatmul.f32.gmra.mxu0 %v2169
      %v2293 = vpop.f32.mrf.mxu0
      %v2294 = vadd.f32 0.0, %v2293
      %2295 = vmatmul.f32.gmra.mxu0 %v2172
      %v2296 = vpop.f32.mrf.mxu0
      %v2297 = vadd.f32 0.0, %v2296
      %2298 = vmatmul.f32.gmra.mxu0 %v2175
      %v2299 = vpop.f32.mrf.mxu0
      %v2300 = vadd.f32 0.0, %v2299
      %2301 = vmatmul.f32.gmra.mxu0 %v2178
      %v2302 = vpop.f32.mrf.mxu0
      %v2303 = vadd.f32 0.0, %v2302
      %2304 = vmatmul.f32.gmra.mxu0 %v2181
      %v2305 = vpop.f32.mrf.mxu0
      %v2306 = vadd.f32 0.0, %v2305
      %2307 = vmatmul.f32.gmra.mxu0 %v2184
      %v2308 = vpop.f32.mrf.mxu0
      %v2309 = vadd.f32 0.0, %v2308
      %2310 = vmatmul.f32.gmra.mxu0 %v2187
      %v2311 = vpop.f32.mrf.mxu0
      %v2312 = vadd.f32 0.0, %v2311
      %2313 = vmatmul.f32.gmra.mxu0 %v2190
      %v2314 = vpop.f32.mrf.mxu0
      %v2315 = vadd.f32 0.0, %v2314
      %2316 = vmatmul.f32.gmra.mxu0 %v2193
      %v2317 = vpop.f32.mrf.mxu0
      %v2318 = vadd.f32 0.0, %v2317
      %2319 = vmatmul.f32.gmra.mxu0 %v2196
      %v2320 = vpop.f32.mrf.mxu0
      %v2321 = vadd.f32 0.0, %v2320
      %2322 = vmatmul.f32.gmra.mxu0 %v2199
      %v2323 = vpop.f32.mrf.mxu0
      %v2324 = vadd.f32 0.0, %v2323
      %2325 = vmatmul.f32.gmra.mxu0 %v2202
      %v2326 = vpop.f32.mrf.mxu0
      %v2327 = vadd.f32 0.0, %v2326
      %2328 = vmatmul.f32.gmra.mxu0 %v2205
      %v2329 = vpop.f32.mrf.mxu0
      %v2330 = vadd.f32 0.0, %v2329
      %2331 = vmatmul.f32.gmra.mxu0 %v2208
      %v2332 = vpop.f32.mrf.mxu0
      %v2333 = vadd.f32 0.0, %v2332
      %2334 = vmatmul.f32.gmra.mxu0 %v2211
      %v2335 = vpop.f32.mrf.mxu0
      %v2336 = vadd.f32 0.0, %v2335
      %2337 = vmatmul.f32.gmra.mxu0 %v2214
      %v2338 = vpop.f32.mrf.mxu0
      %v2339 = vadd.f32 0.0, %v2338
      %2340 = vmatmul.f32.gmra.mxu0 %v2217
      %v2341 = vpop.f32.mrf.mxu0
      %v2342 = vadd.f32 0.0, %v2341
      %2343 = vmatmul.f32.gmra.mxu0 %v2220
      %v2344 = vpop.f32.mrf.mxu0
      %v2345 = vadd.f32 0.0, %v2344
      %2346 = vmatmul.f32.gmra.mxu0 %v2223
      %v2347 = vpop.f32.mrf.mxu0
      %v2348 = vadd.f32 0.0, %v2347
      %2349 = vmatmul.f32.gmra.mxu0 %v2226
      %v2350 = vpop.f32.mrf.mxu0
      %v2351 = vadd.f32 0.0, %v2350
      %2352 = vmatmul.f32.gmra.mxu0 %v2229
      %v2353 = vpop.f32.mrf.mxu0
      %v2354 = vadd.f32 0.0, %v2353
      %2355 = vmatmul.f32.gmra.mxu0 %v2232
      %v2356 = vpop.f32.mrf.mxu0
      %v2357 = vadd.f32 0.0, %v2356
      %2358 = vmatmul.f32.gmra.mxu0 %v2235
      %v2359 = vpop.f32.mrf.mxu0
      %v2360 = vadd.f32 0.0, %v2359
      %2361 = vmatmul.f32.gmra.mxu0 %v2238
      %v2362 = vpop.f32.mrf.mxu0
      %v2363 = vadd.f32 0.0, %v2362
      %2364 = vmatmul.f32.gmra.mxu0 %v2241
      %v2365 = vpop.f32.mrf.mxu0
      %v2366 = vadd.f32 0.0, %v2365
      %2367 = vmatmul.f32.gmra.mxu0 %v2244
      %v2368 = vpop.f32.mrf.mxu0
      %v2369 = vadd.f32 0.0, %v2368
      %2370 = vmatmul.f32.gmra.mxu0 %v2247
      %v2371 = vpop.f32.mrf.mxu0
      %v2372 = vadd.f32 0.0, %v2371
      %2373 = vmatmul.f32.gmra.mxu0 %v2250
      %v2374 = vpop.f32.mrf.mxu0
      %v2375 = vadd.f32 0.0, %v2374
      %2376 = vmatmul.f32.gmra.mxu0 %v2253
      %v2377 = vpop.f32.mrf.mxu0
      %v2378 = vadd.f32 0.0, %v2377
      %2379 = vmatmul.f32.gmra.mxu0 %v2256
      %v2380 = vpop.f32.mrf.mxu0
      %v2381 = vadd.f32 0.0, %v2380
      %2382 = vmatmul.f32.gmra.mxu0 %v2259
      %v2383 = vpop.f32.mrf.mxu0
      %v2384 = vadd.f32 0.0, %v2383
      %2385 = vmatmul.f32.gmra.mxu0 %v2262
      %v2386 = vpop.f32.mrf.mxu0
      %v2387 = vadd.f32 0.0, %v2386
      %2388 = vmatmul.f32.gmra.mxu0 %v2265
      %v2389 = vpop.f32.mrf.mxu0
      %v2390 = vadd.f32 0.0, %v2389
      %2391 = vdwg.mxu0
      %v2392 = vadd.f32 %v2013, %v2285
      %v2393 = vadd.f32 %v2016, %v2288
      %v2394 = vadd.f32 %v2019, %v2291
      %v2395 = vadd.f32 %v2022, %v2294
      %v2396 = vadd.f32 %v2025, %v2297
      %v2397 = vadd.f32 %v2028, %v2300
      %v2398 = vadd.f32 %v2031, %v2303
      %v2399 = vadd.f32 %v2034, %v2306
      %v2400 = vadd.f32 %v2037, %v2309
      %v2401 = vadd.f32 %v2040, %v2312
      %v2402 = vadd.f32 %v2043, %v2315
      %v2403 = vadd.f32 %v2046, %v2318
      %v2404 = vadd.f32 %v2049, %v2321
      %v2405 = vadd.f32 %v2052, %v2324
      %v2406 = vadd.f32 %v2055, %v2327
      %v2407 = vadd.f32 %v2058, %v2330
      %v2408 = vadd.f32 %v2061, %v2333
      %v2409 = vadd.f32 %v2064, %v2336
      %v2410 = vadd.f32 %v2067, %v2339
      %v2411 = vadd.f32 %v2070, %v2342
      %v2412 = vadd.f32 %v2073, %v2345
      %v2413 = vadd.f32 %v2076, %v2348
      %v2414 = vadd.f32 %v2079, %v2351
      %v2415 = vadd.f32 %v2082, %v2354
      %v2416 = vadd.f32 %v2085, %v2357
      %v2417 = vadd.f32 %v2088, %v2360
      %v2418 = vadd.f32 %v2091, %v2363
      %v2419 = vadd.f32 %v2094, %v2366
      %v2420 = vadd.f32 %v2097, %v2369
      %v2421 = vadd.f32 %v2100, %v2372
      %v2422 = vadd.f32 %v2103, %v2375
      %v2423 = vadd.f32 %v2106, %v2378
      %v2424 = vadd.f32 %v2109, %v2381
      %v2425 = vadd.f32 %v2112, %v2384
      %v2426 = vadd.f32 %v2115, %v2387
      %v2427 = vadd.f32 %v2118, %v2390
      %v2428 = vld [vmem:[%s273 + $0x12] sm:$0xff]
      %v2429 = vld [vmem:[%s273 + $0x1a] sm:$0xff]
      %v2430 = vld [vmem:[%s273 + $0x22] sm:$0xff]
      %v2431 = vld [vmem:[%s273 + $0x2a] sm:$0xff]
      %v2432 = vld [vmem:[%s273 + $0x32] sm:$0xff]
      %v2433 = vld [vmem:[%s273 + $0x3a] sm:$0xff]
      %v2434 = vld [vmem:[%s273 + $0x42] sm:$0xff]
      %v2435 = vld [vmem:[%s273 + $0x4a] sm:$0xff]
      %v2436 = vld [vmem:[%s273 + $0x52] sm:$0xff]
      %v2437 = vld [vmem:[%s273 + $0x5a] sm:$0xff]
      %v2438 = vld [vmem:[%s273 + $0x62] sm:$0xff]
      %v2439 = vld [vmem:[%s273 + $0x6a] sm:$0xff]
      %v2440 = vld [vmem:[%s273 + $0x72] sm:$0xff]
      %v2441 = vld [vmem:[%s273 + $0x7a] sm:$0xff]
      %v2442 = vld [vmem:[%s273 + $0x82] sm:$0xff]
      %v2443 = vld [vmem:[%s273 + $0x8a] sm:$0xff]
      %v2444 = vld [vmem:[%s273 + $0x92] sm:$0xff]
      %v2445 = vld [vmem:[%s273 + $0x9a] sm:$0xff]
      %v2446 = vld [vmem:[%s273 + $0xa2] sm:$0xff]
      %v2447 = vld [vmem:[%s273 + $0xaa] sm:$0xff]
      %v2448 = vld [vmem:[%s273 + $0xb2] sm:$0xff]
      %v2449 = vld [vmem:[%s273 + $0xba] sm:$0xff]
      %v2450 = vld [vmem:[%s273 + $0xc2] sm:$0xff]
      %v2451 = vld [vmem:[%s273 + $0xca] sm:$0xff]
      %v2452 = vld [vmem:[%s273 + $0xd2] sm:$0xff]
      %v2453 = vld [vmem:[%s273 + $0xda] sm:$0xff]
      %v2454 = vld [vmem:[%s273 + $0xe2] sm:$0xff]
      %v2455 = vld [vmem:[%s273 + $0xea] sm:$0xff]
      %v2456 = vld [vmem:[%s273 + $0xf2] sm:$0xff]
      %v2457 = vld [vmem:[%s273 + $0xfa] sm:$0xff]
      %v2458 = vld [vmem:[%s273 + $0x102] sm:$0xff]
      %v2459 = vld [vmem:[%s273 + $0x10a] sm:$0xff]
      %v2460 = vld [vmem:[%s273 + $0x112] sm:$0xff]
      %v2461 = vld [vmem:[%s273 + $0x11a] sm:$0xff]
      %v2462 = vld [vmem:[%s273 + $0x122] sm:$0xff]
      %v2463 = vld [vmem:[%s273 + $0x12a] sm:$0xff]
      %s2464 = scalar_lea.vmem %s1, 48
      %v2465 = vld [vmem:[%s2464] sm:$0xff]
      %v2466 = vld [vmem:[%s2464 + $0x8] sm:$0xff]
      %v2468 = vsel %vm1653, %v2428, 0
      %v2471 = vsel %vm1653, %v2429, 0
      %v2474 = vsel %vm1653, %v2430, 0
      %v2477 = vsel %vm1653, %v2431, 0
      %v2480 = vsel %vm1653, %v2432, 0
      %v2483 = vsel %vm1653, %v2433, 0
      %v2486 = vsel %vm1653, %v2434, 0
      %v2489 = vsel %vm1653, %v2435, 0
      %v2492 = vsel %vm1653, %v2436, 0
      %v2495 = vsel %vm1653, %v2437, 0
      %v2498 = vsel %vm1653, %v2438, 0
      %v2501 = vsel %vm1653, %v2439, 0
      %v2504 = vsel %vm1653, %v2440, 0
      %v2507 = vsel %vm1653, %v2441, 0
      %v2510 = vsel %vm1653, %v2442, 0
      %v2513 = vsel %vm1653, %v2443, 0
      %v2516 = vsel %vm1653, %v2444, 0
      %v2519 = vsel %vm1653, %v2445, 0
      %v2522 = vsel %vm1653, %v2446, 0
      %v2525 = vsel %vm1653, %v2447, 0
      %v2528 = vsel %vm1653, %v2448, 0
      %v2531 = vsel %vm1653, %v2449, 0
      %v2534 = vsel %vm1653, %v2450, 0
      %v2537 = vsel %vm1653, %v2451, 0
      %v2540 = vsel %vm1653, %v2452, 0
      %v2543 = vsel %vm1653, %v2453, 0
      %v2546 = vsel %vm1653, %v2454, 0
      %v2549 = vsel %vm1653, %v2455, 0
      %v2552 = vsel %vm1653, %v2456, 0
      %v2555 = vsel %vm1653, %v2457, 0
      %v2558 = vsel %vm1653, %v2458, 0
      %v2561 = vsel %vm1653, %v2459, 0
      %v2564 = vsel %vm1653, %v2460, 0
      %v2567 = vsel %vm1653, %v2461, 0
      %v2570 = vsel %vm1653, %v2462, 0
      %v2573 = vsel %vm1653, %v2463, 0
      %2575 = vmatpush.msra.mxu0 0.0
      %2576 = vmatpush.msra.mxu0 0.0
      %2577 = vmatpush.msra.mxu0 0.0
      %2578 = vmatpush.msra.mxu0 0.0
      %2579 = vmatpush.msra.mxu0 0.0
      %2580 = vmatpush.msra.mxu0 0.0
      %2581 = vmatpush.msra.mxu0 0.0
      %2582 = vmatpush.msra.mxu0 0.0
      %2583 = vmatpush.msra.mxu0 0.0
      %2584 = vmatpush.msra.mxu0 0.0
      %2585 = vmatpush.msra.mxu0 0.0
      %2586 = vmatpush.msra.mxu0 0.0
      %2587 = vmatpush.msra.mxu0 0.0
      %2588 = vmatpush.msra.mxu0 0.0
      %2589 = vmatpush.msra.mxu0 %v2466
      %2590 = vmatpush.msra.mxu0 %v2465
      %2591 = vmatmul.f32.gmra.mxu0 %v2468
      %v2592 = vpop.f32.mrf.mxu0
      %v2593 = vadd.f32 0.0, %v2592
      %2594 = vmatmul.f32.gmra.mxu0 %v2471
      %v2595 = vpop.f32.mrf.mxu0
      %v2596 = vadd.f32 0.0, %v2595
      %2597 = vmatmul.f32.gmra.mxu0 %v2474
      %v2598 = vpop.f32.mrf.mxu0
      %v2599 = vadd.f32 0.0, %v2598
      %2600 = vmatmul.f32.gmra.mxu0 %v2477
      %v2601 = vpop.f32.mrf.mxu0
      %v2602 = vadd.f32 0.0, %v2601
      %2603 = vmatmul.f32.gmra.mxu0 %v2480
      %v2604 = vpop.f32.mrf.mxu0
      %v2605 = vadd.f32 0.0, %v2604
      %2606 = vmatmul.f32.gmra.mxu0 %v2483
      %v2607 = vpop.f32.mrf.mxu0
      %v2608 = vadd.f32 0.0, %v2607
      %2609 = vmatmul.f32.gmra.mxu0 %v2486
      %v2610 = vpop.f32.mrf.mxu0
      %v2611 = vadd.f32 0.0, %v2610
      %2612 = vmatmul.f32.gmra.mxu0 %v2489
      %v2613 = vpop.f32.mrf.mxu0
      %v2614 = vadd.f32 0.0, %v2613
      %2615 = vmatmul.f32.gmra.mxu0 %v2492
      %v2616 = vpop.f32.mrf.mxu0
      %v2617 = vadd.f32 0.0, %v2616
      %2618 = vmatmul.f32.gmra.mxu0 %v2495
      %v2619 = vpop.f32.mrf.mxu0
      %v2620 = vadd.f32 0.0, %v2619
      %2621 = vmatmul.f32.gmra.mxu0 %v2498
      %v2622 = vpop.f32.mrf.mxu0
      %v2623 = vadd.f32 0.0, %v2622
      %2624 = vmatmul.f32.gmra.mxu0 %v2501
      %v2625 = vpop.f32.mrf.mxu0
      %v2626 = vadd.f32 0.0, %v2625
      %2627 = vmatmul.f32.gmra.mxu0 %v2504
      %v2628 = vpop.f32.mrf.mxu0
      %v2629 = vadd.f32 0.0, %v2628
      %2630 = vmatmul.f32.gmra.mxu0 %v2507
      %v2631 = vpop.f32.mrf.mxu0
      %v2632 = vadd.f32 0.0, %v2631
      %2633 = vmatmul.f32.gmra.mxu0 %v2510
      %v2634 = vpop.f32.mrf.mxu0
      %v2635 = vadd.f32 0.0, %v2634
      %2636 = vmatmul.f32.gmra.mxu0 %v2513
      %v2637 = vpop.f32.mrf.mxu0
      %v2638 = vadd.f32 0.0, %v2637
      %2639 = vmatmul.f32.gmra.mxu0 %v2516
      %v2640 = vpop.f32.mrf.mxu0
      %v2641 = vadd.f32 0.0, %v2640
      %2642 = vmatmul.f32.gmra.mxu0 %v2519
      %v2643 = vpop.f32.mrf.mxu0
      %v2644 = vadd.f32 0.0, %v2643
      %2645 = vmatmul.f32.gmra.mxu0 %v2522
      %v2646 = vpop.f32.mrf.mxu0
      %v2647 = vadd.f32 0.0, %v2646
      %2648 = vmatmul.f32.gmra.mxu0 %v2525
      %v2649 = vpop.f32.mrf.mxu0
      %v2650 = vadd.f32 0.0, %v2649
      %2651 = vmatmul.f32.gmra.mxu0 %v2528
      %v2652 = vpop.f32.mrf.mxu0
      %v2653 = vadd.f32 0.0, %v2652
      %2654 = vmatmul.f32.gmra.mxu0 %v2531
      %v2655 = vpop.f32.mrf.mxu0
      %v2656 = vadd.f32 0.0, %v2655
      %2657 = vmatmul.f32.gmra.mxu0 %v2534
      %v2658 = vpop.f32.mrf.mxu0
      %v2659 = vadd.f32 0.0, %v2658
      %2660 = vmatmul.f32.gmra.mxu0 %v2537
      %v2661 = vpop.f32.mrf.mxu0
      %v2662 = vadd.f32 0.0, %v2661
      %2663 = vmatmul.f32.gmra.mxu0 %v2540
      %v2664 = vpop.f32.mrf.mxu0
      %v2665 = vadd.f32 0.0, %v2664
      %2666 = vmatmul.f32.gmra.mxu0 %v2543
      %v2667 = vpop.f32.mrf.mxu0
      %v2668 = vadd.f32 0.0, %v2667
      %2669 = vmatmul.f32.gmra.mxu0 %v2546
      %v2670 = vpop.f32.mrf.mxu0
      %v2671 = vadd.f32 0.0, %v2670
      %2672 = vmatmul.f32.gmra.mxu0 %v2549
      %v2673 = vpop.f32.mrf.mxu0
      %v2674 = vadd.f32 0.0, %v2673
      %2675 = vmatmul.f32.gmra.mxu0 %v2552
      %v2676 = vpop.f32.mrf.mxu0
      %v2677 = vadd.f32 0.0, %v2676
      %2678 = vmatmul.f32.gmra.mxu0 %v2555
      %v2679 = vpop.f32.mrf.mxu0
      %v2680 = vadd.f32 0.0, %v2679
      %2681 = vmatmul.f32.gmra.mxu0 %v2558
      %v2682 = vpop.f32.mrf.mxu0
      %v2683 = vadd.f32 0.0, %v2682
      %2684 = vmatmul.f32.gmra.mxu0 %v2561
      %v2685 = vpop.f32.mrf.mxu0
      %v2686 = vadd.f32 0.0, %v2685
      %2687 = vmatmul.f32.gmra.mxu0 %v2564
      %v2688 = vpop.f32.mrf.mxu0
      %v2689 = vadd.f32 0.0, %v2688
      %2690 = vmatmul.f32.gmra.mxu0 %v2567
      %v2691 = vpop.f32.mrf.mxu0
      %v2692 = vadd.f32 0.0, %v2691
      %2693 = vmatmul.f32.gmra.mxu0 %v2570
      %v2694 = vpop.f32.mrf.mxu0
      %v2695 = vadd.f32 0.0, %v2694
      %2696 = vmatmul.f32.gmra.mxu0 %v2573
      %v2697 = vpop.f32.mrf.mxu0
      %v2698 = vadd.f32 0.0, %v2697
      %2699 = vdwg.mxu0
      %v2700 = vadd.f32 %v2392, %v2593
      %v2701 = vadd.f32 %v2393, %v2596
      %v2702 = vadd.f32 %v2394, %v2599
      %v2703 = vadd.f32 %v2395, %v2602
      %v2704 = vadd.f32 %v2396, %v2605
      %v2705 = vadd.f32 %v2397, %v2608
      %v2706 = vadd.f32 %v2398, %v2611
      %v2707 = vadd.f32 %v2399, %v2614
      %v2708 = vadd.f32 %v2400, %v2617
      %v2709 = vadd.f32 %v2401, %v2620
      %v2710 = vadd.f32 %v2402, %v2623
      %v2711 = vadd.f32 %v2403, %v2626
      %v2712 = vadd.f32 %v2404, %v2629
      %v2713 = vadd.f32 %v2405, %v2632
      %v2714 = vadd.f32 %v2406, %v2635
      %v2715 = vadd.f32 %v2407, %v2638
      %v2716 = vadd.f32 %v2408, %v2641
      %v2717 = vadd.f32 %v2409, %v2644
      %v2718 = vadd.f32 %v2410, %v2647
      %v2719 = vadd.f32 %v2411, %v2650
      %v2720 = vadd.f32 %v2412, %v2653
      %v2721 = vadd.f32 %v2413, %v2656
      %v2722 = vadd.f32 %v2414, %v2659
      %v2723 = vadd.f32 %v2415, %v2662
      %v2724 = vadd.f32 %v2416, %v2665
      %v2725 = vadd.f32 %v2417, %v2668
      %v2726 = vadd.f32 %v2418, %v2671
      %v2727 = vadd.f32 %v2419, %v2674
      %v2728 = vadd.f32 %v2420, %v2677
      %v2729 = vadd.f32 %v2421, %v2680
      %v2730 = vadd.f32 %v2422, %v2683
      %v2731 = vadd.f32 %v2423, %v2686
      %v2732 = vadd.f32 %v2424, %v2689
      %v2733 = vadd.f32 %v2425, %v2692
      %v2734 = vadd.f32 %v2426, %v2695
      %v2735 = vadd.f32 %v2427, %v2698
      %v2736 = vld [vmem:[%s273 + $0x13] sm:$0xff]
      %v2737 = vld [vmem:[%s273 + $0x1b] sm:$0xff]
      %v2738 = vld [vmem:[%s273 + $0x23] sm:$0xff]
      %v2739 = vld [vmem:[%s273 + $0x2b] sm:$0xff]
      %v2740 = vld [vmem:[%s273 + $0x33] sm:$0xff]
      %v2741 = vld [vmem:[%s273 + $0x3b] sm:$0xff]
      %v2742 = vld [vmem:[%s273 + $0x43] sm:$0xff]
      %v2743 = vld [vmem:[%s273 + $0x4b] sm:$0xff]
      %v2744 = vld [vmem:[%s273 + $0x53] sm:$0xff]
      %v2745 = vld [vmem:[%s273 + $0x5b] sm:$0xff]
      %v2746 = vld [vmem:[%s273 + $0x63] sm:$0xff]
      %v2747 = vld [vmem:[%s273 + $0x6b] sm:$0xff]
      %v2748 = vld [vmem:[%s273 + $0x73] sm:$0xff]
      %v2749 = vld [vmem:[%s273 + $0x7b] sm:$0xff]
      %v2750 = vld [vmem:[%s273 + $0x83] sm:$0xff]
      %v2751 = vld [vmem:[%s273 + $0x8b] sm:$0xff]
      %v2752 = vld [vmem:[%s273 + $0x93] sm:$0xff]
      %v2753 = vld [vmem:[%s273 + $0x9b] sm:$0xff]
      %v2754 = vld [vmem:[%s273 + $0xa3] sm:$0xff]
      %v2755 = vld [vmem:[%s273 + $0xab] sm:$0xff]
      %v2756 = vld [vmem:[%s273 + $0xb3] sm:$0xff]
      %v2757 = vld [vmem:[%s273 + $0xbb] sm:$0xff]
      %v2758 = vld [vmem:[%s273 + $0xc3] sm:$0xff]
      %v2759 = vld [vmem:[%s273 + $0xcb] sm:$0xff]
      %v2760 = vld [vmem:[%s273 + $0xd3] sm:$0xff]
      %v2761 = vld [vmem:[%s273 + $0xdb] sm:$0xff]
      %v2762 = vld [vmem:[%s273 + $0xe3] sm:$0xff]
      %v2763 = vld [vmem:[%s273 + $0xeb] sm:$0xff]
      %v2764 = vld [vmem:[%s273 + $0xf3] sm:$0xff]
      %v2765 = vld [vmem:[%s273 + $0xfb] sm:$0xff]
      %v2766 = vld [vmem:[%s273 + $0x103] sm:$0xff]
      %v2767 = vld [vmem:[%s273 + $0x10b] sm:$0xff]
      %v2768 = vld [vmem:[%s273 + $0x113] sm:$0xff]
      %v2769 = vld [vmem:[%s273 + $0x11b] sm:$0xff]
      %v2770 = vld [vmem:[%s273 + $0x123] sm:$0xff]
      %v2771 = vld [vmem:[%s273 + $0x12b] sm:$0xff]
      %s2772 = scalar_lea.vmem %s1, 64
      %v2773 = vld [vmem:[%s2772] sm:$0xff]
      %v2774 = vld [vmem:[%s2772 + $0x8] sm:$0xff]
      %v2776 = vsel %vm1653, %v2736, 0
      %v2779 = vsel %vm1653, %v2737, 0
      %v2782 = vsel %vm1653, %v2738, 0
      %v2785 = vsel %vm1653, %v2739, 0
      %v2788 = vsel %vm1653, %v2740, 0
      %v2791 = vsel %vm1653, %v2741, 0
      %v2794 = vsel %vm1653, %v2742, 0
      %v2797 = vsel %vm1653, %v2743, 0
      %v2800 = vsel %vm1653, %v2744, 0
      %v2803 = vsel %vm1653, %v2745, 0
      %v2806 = vsel %vm1653, %v2746, 0
      %v2809 = vsel %vm1653, %v2747, 0
      %v2812 = vsel %vm1653, %v2748, 0
      %v2815 = vsel %vm1653, %v2749, 0
      %v2818 = vsel %vm1653, %v2750, 0
      %v2821 = vsel %vm1653, %v2751, 0
      %v2824 = vsel %vm1653, %v2752, 0
      %v2827 = vsel %vm1653, %v2753, 0
      %v2830 = vsel %vm1653, %v2754, 0
      %v2833 = vsel %vm1653, %v2755, 0
      %v2836 = vsel %vm1653, %v2756, 0
      %v2839 = vsel %vm1653, %v2757, 0
      %v2842 = vsel %vm1653, %v2758, 0
      %v2845 = vsel %vm1653, %v2759, 0
      %v2848 = vsel %vm1653, %v2760, 0
      %v2851 = vsel %vm1653, %v2761, 0
      %v2854 = vsel %vm1653, %v2762, 0
      %v2857 = vsel %vm1653, %v2763, 0
      %v2860 = vsel %vm1653, %v2764, 0
      %v2863 = vsel %vm1653, %v2765, 0
      %v2866 = vsel %vm1653, %v2766, 0
      %v2869 = vsel %vm1653, %v2767, 0
      %v2872 = vsel %vm1653, %v2768, 0
      %v2875 = vsel %vm1653, %v2769, 0
      %v2878 = vsel %vm1653, %v2770, 0
      %v2881 = vsel %vm1653, %v2771, 0
      %2883 = vmatpush.msra.mxu0 0.0
      %2884 = vmatpush.msra.mxu0 0.0
      %2885 = vmatpush.msra.mxu0 0.0
      %2886 = vmatpush.msra.mxu0 0.0
      %2887 = vmatpush.msra.mxu0 0.0
      %2888 = vmatpush.msra.mxu0 0.0
      %2889 = vmatpush.msra.mxu0 0.0
      %2890 = vmatpush.msra.mxu0 0.0
      %2891 = vmatpush.msra.mxu0 0.0
      %2892 = vmatpush.msra.mxu0 0.0
      %2893 = vmatpush.msra.mxu0 0.0
      %2894 = vmatpush.msra.mxu0 0.0
      %2895 = vmatpush.msra.mxu0 0.0
      %2896 = vmatpush.msra.mxu0 0.0
      %2897 = vmatpush.msra.mxu0 %v2774
      %2898 = vmatpush.msra.mxu0 %v2773
      %2899 = vmatmul.f32.gmra.mxu0 %v2776
      %v2900 = vpop.f32.mrf.mxu0
      %v2901 = vadd.f32 0.0, %v2900
      %2902 = vmatmul.f32.gmra.mxu0 %v2779
      %v2903 = vpop.f32.mrf.mxu0
      %v2904 = vadd.f32 0.0, %v2903
      %2905 = vmatmul.f32.gmra.mxu0 %v2782
      %v2906 = vpop.f32.mrf.mxu0
      %v2907 = vadd.f32 0.0, %v2906
      %2908 = vmatmul.f32.gmra.mxu0 %v2785
      %v2909 = vpop.f32.mrf.mxu0
      %v2910 = vadd.f32 0.0, %v2909
      %2911 = vmatmul.f32.gmra.mxu0 %v2788
      %v2912 = vpop.f32.mrf.mxu0
      %v2913 = vadd.f32 0.0, %v2912
      %2914 = vmatmul.f32.gmra.mxu0 %v2791
      %v2915 = vpop.f32.mrf.mxu0
      %v2916 = vadd.f32 0.0, %v2915
      %2917 = vmatmul.f32.gmra.mxu0 %v2794
      %v2918 = vpop.f32.mrf.mxu0
      %v2919 = vadd.f32 0.0, %v2918
      %2920 = vmatmul.f32.gmra.mxu0 %v2797
      %v2921 = vpop.f32.mrf.mxu0
      %v2922 = vadd.f32 0.0, %v2921
      %2923 = vmatmul.f32.gmra.mxu0 %v2800
      %v2924 = vpop.f32.mrf.mxu0
      %v2925 = vadd.f32 0.0, %v2924
      %2926 = vmatmul.f32.gmra.mxu0 %v2803
      %v2927 = vpop.f32.mrf.mxu0
      %v2928 = vadd.f32 0.0, %v2927
      %2929 = vmatmul.f32.gmra.mxu0 %v2806
      %v2930 = vpop.f32.mrf.mxu0
      %v2931 = vadd.f32 0.0, %v2930
      %2932 = vmatmul.f32.gmra.mxu0 %v2809
      %v2933 = vpop.f32.mrf.mxu0
      %v2934 = vadd.f32 0.0, %v2933
      %2935 = vmatmul.f32.gmra.mxu0 %v2812
      %v2936 = vpop.f32.mrf.mxu0
      %v2937 = vadd.f32 0.0, %v2936
      %2938 = vmatmul.f32.gmra.mxu0 %v2815
      %v2939 = vpop.f32.mrf.mxu0
      %v2940 = vadd.f32 0.0, %v2939
      %2941 = vmatmul.f32.gmra.mxu0 %v2818
      %v2942 = vpop.f32.mrf.mxu0
      %v2943 = vadd.f32 0.0, %v2942
      %2944 = vmatmul.f32.gmra.mxu0 %v2821
      %v2945 = vpop.f32.mrf.mxu0
      %v2946 = vadd.f32 0.0, %v2945
      %2947 = vmatmul.f32.gmra.mxu0 %v2824
      %v2948 = vpop.f32.mrf.mxu0
      %v2949 = vadd.f32 0.0, %v2948
      %2950 = vmatmul.f32.gmra.mxu0 %v2827
      %v2951 = vpop.f32.mrf.mxu0
      %v2952 = vadd.f32 0.0, %v2951
      %2953 = vmatmul.f32.gmra.mxu0 %v2830
      %v2954 = vpop.f32.mrf.mxu0
      %v2955 = vadd.f32 0.0, %v2954
      %2956 = vmatmul.f32.gmra.mxu0 %v2833
      %v2957 = vpop.f32.mrf.mxu0
      %v2958 = vadd.f32 0.0, %v2957
      %2959 = vmatmul.f32.gmra.mxu0 %v2836
      %v2960 = vpop.f32.mrf.mxu0
      %v2961 = vadd.f32 0.0, %v2960
      %2962 = vmatmul.f32.gmra.mxu0 %v2839
      %v2963 = vpop.f32.mrf.mxu0
      %v2964 = vadd.f32 0.0, %v2963
      %2965 = vmatmul.f32.gmra.mxu0 %v2842
      %v2966 = vpop.f32.mrf.mxu0
      %v2967 = vadd.f32 0.0, %v2966
      %2968 = vmatmul.f32.gmra.mxu0 %v2845
      %v2969 = vpop.f32.mrf.mxu0
      %v2970 = vadd.f32 0.0, %v2969
      %2971 = vmatmul.f32.gmra.mxu0 %v2848
      %v2972 = vpop.f32.mrf.mxu0
      %v2973 = vadd.f32 0.0, %v2972
      %2974 = vmatmul.f32.gmra.mxu0 %v2851
      %v2975 = vpop.f32.mrf.mxu0
      %v2976 = vadd.f32 0.0, %v2975
      %2977 = vmatmul.f32.gmra.mxu0 %v2854
      %v2978 = vpop.f32.mrf.mxu0
      %v2979 = vadd.f32 0.0, %v2978
      %2980 = vmatmul.f32.gmra.mxu0 %v2857
      %v2981 = vpop.f32.mrf.mxu0
      %v2982 = vadd.f32 0.0, %v2981
      %2983 = vmatmul.f32.gmra.mxu0 %v2860
      %v2984 = vpop.f32.mrf.mxu0
      %v2985 = vadd.f32 0.0, %v2984
      %2986 = vmatmul.f32.gmra.mxu0 %v2863
      %v2987 = vpop.f32.mrf.mxu0
      %v2988 = vadd.f32 0.0, %v2987
      %2989 = vmatmul.f32.gmra.mxu0 %v2866
      %v2990 = vpop.f32.mrf.mxu0
      %v2991 = vadd.f32 0.0, %v2990
      %2992 = vmatmul.f32.gmra.mxu0 %v2869
      %v2993 = vpop.f32.mrf.mxu0
      %v2994 = vadd.f32 0.0, %v2993
      %2995 = vmatmul.f32.gmra.mxu0 %v2872
      %v2996 = vpop.f32.mrf.mxu0
      %v2997 = vadd.f32 0.0, %v2996
      %2998 = vmatmul.f32.gmra.mxu0 %v2875
      %v2999 = vpop.f32.mrf.mxu0
      %v3000 = vadd.f32 0.0, %v2999
      %3001 = vmatmul.f32.gmra.mxu0 %v2878
      %v3002 = vpop.f32.mrf.mxu0
      %v3003 = vadd.f32 0.0, %v3002
      %3004 = vmatmul.f32.gmra.mxu0 %v2881
      %v3005 = vpop.f32.mrf.mxu0
      %v3006 = vadd.f32 0.0, %v3005
      %3007 = vdwg.mxu0
      %v3008 = vadd.f32 %v2700, %v2901
      %v3009 = vadd.f32 %v2701, %v2904
      %v3010 = vadd.f32 %v2702, %v2907
      %v3011 = vadd.f32 %v2703, %v2910
      %v3012 = vadd.f32 %v2704, %v2913
      %v3013 = vadd.f32 %v2705, %v2916
      %v3014 = vadd.f32 %v2706, %v2919
      %v3015 = vadd.f32 %v2707, %v2922
      %v3016 = vadd.f32 %v2708, %v2925
      %v3017 = vadd.f32 %v2709, %v2928
      %v3018 = vadd.f32 %v2710, %v2931
      %v3019 = vadd.f32 %v2711, %v2934
      %v3020 = vadd.f32 %v2712, %v2937
      %v3021 = vadd.f32 %v2713, %v2940
      %v3022 = vadd.f32 %v2714, %v2943
      %v3023 = vadd.f32 %v2715, %v2946
      %v3024 = vadd.f32 %v2716, %v2949
      %v3025 = vadd.f32 %v2717, %v2952
      %v3026 = vadd.f32 %v2718, %v2955
      %v3027 = vadd.f32 %v2719, %v2958
      %v3028 = vadd.f32 %v2720, %v2961
      %v3029 = vadd.f32 %v2721, %v2964
      %v3030 = vadd.f32 %v2722, %v2967
      %v3031 = vadd.f32 %v2723, %v2970
      %v3032 = vadd.f32 %v2724, %v2973
      %v3033 = vadd.f32 %v2725, %v2976
      %v3034 = vadd.f32 %v2726, %v2979
      %v3035 = vadd.f32 %v2727, %v2982
      %v3036 = vadd.f32 %v2728, %v2985
      %v3037 = vadd.f32 %v2729, %v2988
      %v3038 = vadd.f32 %v2730, %v2991
      %v3039 = vadd.f32 %v2731, %v2994
      %v3040 = vadd.f32 %v2732, %v2997
      %v3041 = vadd.f32 %v2733, %v3000
      %v3042 = vadd.f32 %v2734, %v3003
      %v3043 = vadd.f32 %v2735, %v3006
      %v3044 = vld [vmem:[%s273 + $0x14] sm:$0xff]
      %v3045 = vld [vmem:[%s273 + $0x1c] sm:$0xff]
      %v3046 = vld [vmem:[%s273 + $0x24] sm:$0xff]
      %v3047 = vld [vmem:[%s273 + $0x2c] sm:$0xff]
      %v3048 = vld [vmem:[%s273 + $0x34] sm:$0xff]
      %v3049 = vld [vmem:[%s273 + $0x3c] sm:$0xff]
      %v3050 = vld [vmem:[%s273 + $0x44] sm:$0xff]
      %v3051 = vld [vmem:[%s273 + $0x4c] sm:$0xff]
      %v3052 = vld [vmem:[%s273 + $0x54] sm:$0xff]
      %v3053 = vld [vmem:[%s273 + $0x5c] sm:$0xff]
      %v3054 = vld [vmem:[%s273 + $0x64] sm:$0xff]
      %v3055 = vld [vmem:[%s273 + $0x6c] sm:$0xff]
      %v3056 = vld [vmem:[%s273 + $0x74] sm:$0xff]
      %v3057 = vld [vmem:[%s273 + $0x7c] sm:$0xff]
      %v3058 = vld [vmem:[%s273 + $0x84] sm:$0xff]
      %v3059 = vld [vmem:[%s273 + $0x8c] sm:$0xff]
      %v3060 = vld [vmem:[%s273 + $0x94] sm:$0xff]
      %v3061 = vld [vmem:[%s273 + $0x9c] sm:$0xff]
      %v3062 = vld [vmem:[%s273 + $0xa4] sm:$0xff]
      %v3063 = vld [vmem:[%s273 + $0xac] sm:$0xff]
      %v3064 = vld [vmem:[%s273 + $0xb4] sm:$0xff]
      %v3065 = vld [vmem:[%s273 + $0xbc] sm:$0xff]
      %v3066 = vld [vmem:[%s273 + $0xc4] sm:$0xff]
      %v3067 = vld [vmem:[%s273 + $0xcc] sm:$0xff]
      %v3068 = vld [vmem:[%s273 + $0xd4] sm:$0xff]
      %v3069 = vld [vmem:[%s273 + $0xdc] sm:$0xff]
      %v3070 = vld [vmem:[%s273 + $0xe4] sm:$0xff]
      %v3071 = vld [vmem:[%s273 + $0xec] sm:$0xff]
      %v3072 = vld [vmem:[%s273 + $0xf4] sm:$0xff]
      %v3073 = vld [vmem:[%s273 + $0xfc] sm:$0xff]
      %v3074 = vld [vmem:[%s273 + $0x104] sm:$0xff]
      %v3075 = vld [vmem:[%s273 + $0x10c] sm:$0xff]
      %v3076 = vld [vmem:[%s273 + $0x114] sm:$0xff]
      %v3077 = vld [vmem:[%s273 + $0x11c] sm:$0xff]
      %v3078 = vld [vmem:[%s273 + $0x124] sm:$0xff]
      %v3079 = vld [vmem:[%s273 + $0x12c] sm:$0xff]
      %s3080 = scalar_lea.vmem %s1, 80
      %v3081 = vld [vmem:[%s3080] sm:$0xff]
      %v3082 = vld [vmem:[%s3080 + $0x8] sm:$0xff]
      %v3084 = vsel %vm1653, %v3044, 0
      %v3087 = vsel %vm1653, %v3045, 0
      %v3090 = vsel %vm1653, %v3046, 0
      %v3093 = vsel %vm1653, %v3047, 0
      %v3096 = vsel %vm1653, %v3048, 0
      %v3099 = vsel %vm1653, %v3049, 0
      %v3102 = vsel %vm1653, %v3050, 0
      %v3105 = vsel %vm1653, %v3051, 0
      %v3108 = vsel %vm1653, %v3052, 0
      %v3111 = vsel %vm1653, %v3053, 0
      %v3114 = vsel %vm1653, %v3054, 0
      %v3117 = vsel %vm1653, %v3055, 0
      %v3120 = vsel %vm1653, %v3056, 0
      %v3123 = vsel %vm1653, %v3057, 0
      %v3126 = vsel %vm1653, %v3058, 0
      %v3129 = vsel %vm1653, %v3059, 0
      %v3132 = vsel %vm1653, %v3060, 0
      %v3135 = vsel %vm1653, %v3061, 0
      %v3138 = vsel %vm1653, %v3062, 0
      %v3141 = vsel %vm1653, %v3063, 0
      %v3144 = vsel %vm1653, %v3064, 0
      %v3147 = vsel %vm1653, %v3065, 0
      %v3150 = vsel %vm1653, %v3066, 0
      %v3153 = vsel %vm1653, %v3067, 0
      %v3156 = vsel %vm1653, %v3068, 0
      %v3159 = vsel %vm1653, %v3069, 0
      %v3162 = vsel %vm1653, %v3070, 0
      %v3165 = vsel %vm1653, %v3071, 0
      %v3168 = vsel %vm1653, %v3072, 0
      %v3171 = vsel %vm1653, %v3073, 0
      %v3174 = vsel %vm1653, %v3074, 0
      %v3177 = vsel %vm1653, %v3075, 0
      %v3180 = vsel %vm1653, %v3076, 0
      %v3183 = vsel %vm1653, %v3077, 0
      %v3186 = vsel %vm1653, %v3078, 0
      %v3189 = vsel %vm1653, %v3079, 0
      %3191 = vmatpush.msra.mxu0 0.0
      %3192 = vmatpush.msra.mxu0 0.0
      %3193 = vmatpush.msra.mxu0 0.0
      %3194 = vmatpush.msra.mxu0 0.0
      %3195 = vmatpush.msra.mxu0 0.0
      %3196 = vmatpush.msra.mxu0 0.0
      %3197 = vmatpush.msra.mxu0 0.0
      %3198 = vmatpush.msra.mxu0 0.0
      %3199 = vmatpush.msra.mxu0 0.0
      %3200 = vmatpush.msra.mxu0 0.0
      %3201 = vmatpush.msra.mxu0 0.0
      %3202 = vmatpush.msra.mxu0 0.0
      %3203 = vmatpush.msra.mxu0 0.0
      %3204 = vmatpush.msra.mxu0 0.0
      %3205 = vmatpush.msra.mxu0 %v3082
      %3206 = vmatpush.msra.mxu0 %v3081
      %3207 = vmatmul.f32.gmra.mxu0 %v3084
      %v3208 = vpop.f32.mrf.mxu0
      %v3209 = vadd.f32 0.0, %v3208
      %3210 = vmatmul.f32.gmra.mxu0 %v3087
      %v3211 = vpop.f32.mrf.mxu0
      %v3212 = vadd.f32 0.0, %v3211
      %3213 = vmatmul.f32.gmra.mxu0 %v3090
      %v3214 = vpop.f32.mrf.mxu0
      %v3215 = vadd.f32 0.0, %v3214
      %3216 = vmatmul.f32.gmra.mxu0 %v3093
      %v3217 = vpop.f32.mrf.mxu0
      %v3218 = vadd.f32 0.0, %v3217
      %3219 = vmatmul.f32.gmra.mxu0 %v3096
      %v3220 = vpop.f32.mrf.mxu0
      %v3221 = vadd.f32 0.0, %v3220
      %3222 = vmatmul.f32.gmra.mxu0 %v3099
      %v3223 = vpop.f32.mrf.mxu0
      %v3224 = vadd.f32 0.0, %v3223
      %3225 = vmatmul.f32.gmra.mxu0 %v3102
      %v3226 = vpop.f32.mrf.mxu0
      %v3227 = vadd.f32 0.0, %v3226
      %3228 = vmatmul.f32.gmra.mxu0 %v3105
      %v3229 = vpop.f32.mrf.mxu0
      %v3230 = vadd.f32 0.0, %v3229
      %3231 = vmatmul.f32.gmra.mxu0 %v3108
      %v3232 = vpop.f32.mrf.mxu0
      %v3233 = vadd.f32 0.0, %v3232
      %3234 = vmatmul.f32.gmra.mxu0 %v3111
      %v3235 = vpop.f32.mrf.mxu0
      %v3236 = vadd.f32 0.0, %v3235
      %3237 = vmatmul.f32.gmra.mxu0 %v3114
      %v3238 = vpop.f32.mrf.mxu0
      %v3239 = vadd.f32 0.0, %v3238
      %3240 = vmatmul.f32.gmra.mxu0 %v3117
      %v3241 = vpop.f32.mrf.mxu0
      %v3242 = vadd.f32 0.0, %v3241
      %3243 = vmatmul.f32.gmra.mxu0 %v3120
      %v3244 = vpop.f32.mrf.mxu0
      %v3245 = vadd.f32 0.0, %v3244
      %3246 = vmatmul.f32.gmra.mxu0 %v3123
      %v3247 = vpop.f32.mrf.mxu0
      %v3248 = vadd.f32 0.0, %v3247
      %3249 = vmatmul.f32.gmra.mxu0 %v3126
      %v3250 = vpop.f32.mrf.mxu0
      %v3251 = vadd.f32 0.0, %v3250
      %3252 = vmatmul.f32.gmra.mxu0 %v3129
      %v3253 = vpop.f32.mrf.mxu0
      %v3254 = vadd.f32 0.0, %v3253
      %3255 = vmatmul.f32.gmra.mxu0 %v3132
      %v3256 = vpop.f32.mrf.mxu0
      %v3257 = vadd.f32 0.0, %v3256
      %3258 = vmatmul.f32.gmra.mxu0 %v3135
      %v3259 = vpop.f32.mrf.mxu0
      %v3260 = vadd.f32 0.0, %v3259
      %3261 = vmatmul.f32.gmra.mxu0 %v3138
      %v3262 = vpop.f32.mrf.mxu0
      %v3263 = vadd.f32 0.0, %v3262
      %3264 = vmatmul.f32.gmra.mxu0 %v3141
      %v3265 = vpop.f32.mrf.mxu0
      %v3266 = vadd.f32 0.0, %v3265
      %3267 = vmatmul.f32.gmra.mxu0 %v3144
      %v3268 = vpop.f32.mrf.mxu0
      %v3269 = vadd.f32 0.0, %v3268
      %3270 = vmatmul.f32.gmra.mxu0 %v3147
      %v3271 = vpop.f32.mrf.mxu0
      %v3272 = vadd.f32 0.0, %v3271
      %3273 = vmatmul.f32.gmra.mxu0 %v3150
      %v3274 = vpop.f32.mrf.mxu0
      %v3275 = vadd.f32 0.0, %v3274
      %3276 = vmatmul.f32.gmra.mxu0 %v3153
      %v3277 = vpop.f32.mrf.mxu0
      %v3278 = vadd.f32 0.0, %v3277
      %3279 = vmatmul.f32.gmra.mxu0 %v3156
      %v3280 = vpop.f32.mrf.mxu0
      %v3281 = vadd.f32 0.0, %v3280
      %3282 = vmatmul.f32.gmra.mxu0 %v3159
      %v3283 = vpop.f32.mrf.mxu0
      %v3284 = vadd.f32 0.0, %v3283
      %3285 = vmatmul.f32.gmra.mxu0 %v3162
      %v3286 = vpop.f32.mrf.mxu0
      %v3287 = vadd.f32 0.0, %v3286
      %3288 = vmatmul.f32.gmra.mxu0 %v3165
      %v3289 = vpop.f32.mrf.mxu0
      %v3290 = vadd.f32 0.0, %v3289
      %3291 = vmatmul.f32.gmra.mxu0 %v3168
      %v3292 = vpop.f32.mrf.mxu0
      %v3293 = vadd.f32 0.0, %v3292
      %3294 = vmatmul.f32.gmra.mxu0 %v3171
      %v3295 = vpop.f32.mrf.mxu0
      %v3296 = vadd.f32 0.0, %v3295
      %3297 = vmatmul.f32.gmra.mxu0 %v3174
      %v3298 = vpop.f32.mrf.mxu0
      %v3299 = vadd.f32 0.0, %v3298
      %3300 = vmatmul.f32.gmra.mxu0 %v3177
      %v3301 = vpop.f32.mrf.mxu0
      %v3302 = vadd.f32 0.0, %v3301
      %3303 = vmatmul.f32.gmra.mxu0 %v3180
      %v3304 = vpop.f32.mrf.mxu0
      %v3305 = vadd.f32 0.0, %v3304
      %3306 = vmatmul.f32.gmra.mxu0 %v3183
      %v3307 = vpop.f32.mrf.mxu0
      %v3308 = vadd.f32 0.0, %v3307
      %3309 = vmatmul.f32.gmra.mxu0 %v3186
      %v3310 = vpop.f32.mrf.mxu0
      %v3311 = vadd.f32 0.0, %v3310
      %3312 = vmatmul.f32.gmra.mxu0 %v3189
      %v3313 = vpop.f32.mrf.mxu0
      %v3314 = vadd.f32 0.0, %v3313
      %3315 = vdwg.mxu0
      %v3316 = vadd.f32 %v3008, %v3209
      %v3317 = vadd.f32 %v3009, %v3212
      %v3318 = vadd.f32 %v3010, %v3215
      %v3319 = vadd.f32 %v3011, %v3218
      %v3320 = vadd.f32 %v3012, %v3221
      %v3321 = vadd.f32 %v3013, %v3224
      %v3322 = vadd.f32 %v3014, %v3227
      %v3323 = vadd.f32 %v3015, %v3230
      %v3324 = vadd.f32 %v3016, %v3233
      %v3325 = vadd.f32 %v3017, %v3236
      %v3326 = vadd.f32 %v3018, %v3239
      %v3327 = vadd.f32 %v3019, %v3242
      %v3328 = vadd.f32 %v3020, %v3245
      %v3329 = vadd.f32 %v3021, %v3248
      %v3330 = vadd.f32 %v3022, %v3251
      %v3331 = vadd.f32 %v3023, %v3254
      %v3332 = vadd.f32 %v3024, %v3257
      %v3333 = vadd.f32 %v3025, %v3260
      %v3334 = vadd.f32 %v3026, %v3263
      %v3335 = vadd.f32 %v3027, %v3266
      %v3336 = vadd.f32 %v3028, %v3269
      %v3337 = vadd.f32 %v3029, %v3272
      %v3338 = vadd.f32 %v3030, %v3275
      %v3339 = vadd.f32 %v3031, %v3278
      %v3340 = vadd.f32 %v3032, %v3281
      %v3341 = vadd.f32 %v3033, %v3284
      %v3342 = vadd.f32 %v3034, %v3287
      %v3343 = vadd.f32 %v3035, %v3290
      %v3344 = vadd.f32 %v3036, %v3293
      %v3345 = vadd.f32 %v3037, %v3296
      %v3346 = vadd.f32 %v3038, %v3299
      %v3347 = vadd.f32 %v3039, %v3302
      %v3348 = vadd.f32 %v3040, %v3305
      %v3349 = vadd.f32 %v3041, %v3308
      %v3350 = vadd.f32 %v3042, %v3311
      %v3351 = vadd.f32 %v3043, %v3314
      %v3352 = vld [vmem:[%s273 + $0x24] sm:$0xff]
      %v3353 = vld [vmem:[%s273 + $0x2c] sm:$0xff]
      %v3354 = vld [vmem:[%s273 + $0x34] sm:$0xff]
      %v3355 = vld [vmem:[%s273 + $0x3c] sm:$0xff]
      %v3356 = vld [vmem:[%s273 + $0x44] sm:$0xff]
      %v3357 = vld [vmem:[%s273 + $0x4c] sm:$0xff]
      %v3358 = vld [vmem:[%s273 + $0x54] sm:$0xff]
      %v3359 = vld [vmem:[%s273 + $0x5c] sm:$0xff]
      %v3360 = vld [vmem:[%s273 + $0x64] sm:$0xff]
      %v3361 = vld [vmem:[%s273 + $0x6c] sm:$0xff]
      %v3362 = vld [vmem:[%s273 + $0x74] sm:$0xff]
      %v3363 = vld [vmem:[%s273 + $0x7c] sm:$0xff]
      %v3364 = vld [vmem:[%s273 + $0x84] sm:$0xff]
      %v3365 = vld [vmem:[%s273 + $0x8c] sm:$0xff]
      %v3366 = vld [vmem:[%s273 + $0x94] sm:$0xff]
      %v3367 = vld [vmem:[%s273 + $0x9c] sm:$0xff]
      %v3368 = vld [vmem:[%s273 + $0xa4] sm:$0xff]
      %v3369 = vld [vmem:[%s273 + $0xac] sm:$0xff]
      %v3370 = vld [vmem:[%s273 + $0xb4] sm:$0xff]
      %v3371 = vld [vmem:[%s273 + $0xbc] sm:$0xff]
      %v3372 = vld [vmem:[%s273 + $0xc4] sm:$0xff]
      %v3373 = vld [vmem:[%s273 + $0xcc] sm:$0xff]
      %v3374 = vld [vmem:[%s273 + $0xd4] sm:$0xff]
      %v3375 = vld [vmem:[%s273 + $0xdc] sm:$0xff]
      %v3376 = vld [vmem:[%s273 + $0xe4] sm:$0xff]
      %v3377 = vld [vmem:[%s273 + $0xec] sm:$0xff]
      %v3378 = vld [vmem:[%s273 + $0xf4] sm:$0xff]
      %v3379 = vld [vmem:[%s273 + $0xfc] sm:$0xff]
      %v3380 = vld [vmem:[%s273 + $0x104] sm:$0xff]
      %v3381 = vld [vmem:[%s273 + $0x10c] sm:$0xff]
      %v3382 = vld [vmem:[%s273 + $0x114] sm:$0xff]
      %v3383 = vld [vmem:[%s273 + $0x11c] sm:$0xff]
      %v3384 = vld [vmem:[%s273 + $0x124] sm:$0xff]
      %v3385 = vld [vmem:[%s273 + $0x12c] sm:$0xff]
      %v3386 = vld [vmem:[%s273 + $0x134] sm:$0xff]
      %v3387 = vld [vmem:[%s273 + $0x13c] sm:$0xff]
      %s3388 = scalar_lea.vmem %s1, 96
      %v3389 = vld [vmem:[%s3388] sm:$0xff]
      %v3390 = vld [vmem:[%s3388 + $0x8] sm:$0xff]
      %v3392 = vsel %vm1653, %v3352, 0
      %v3395 = vsel %vm1653, %v3353, 0
      %v3398 = vsel %vm1653, %v3354, 0
      %v3401 = vsel %vm1653, %v3355, 0
      %v3404 = vsel %vm1653, %v3356, 0
      %v3407 = vsel %vm1653, %v3357, 0
      %v3410 = vsel %vm1653, %v3358, 0
      %v3413 = vsel %vm1653, %v3359, 0
      %v3416 = vsel %vm1653, %v3360, 0
      %v3419 = vsel %vm1653, %v3361, 0
      %v3422 = vsel %vm1653, %v3362, 0
      %v3425 = vsel %vm1653, %v3363, 0
      %v3428 = vsel %vm1653, %v3364, 0
      %v3431 = vsel %vm1653, %v3365, 0
      %v3434 = vsel %vm1653, %v3366, 0
      %v3437 = vsel %vm1653, %v3367, 0
      %v3440 = vsel %vm1653, %v3368, 0
      %v3443 = vsel %vm1653, %v3369, 0
      %v3446 = vsel %vm1653, %v3370, 0
      %v3449 = vsel %vm1653, %v3371, 0
      %v3452 = vsel %vm1653, %v3372, 0
      %v3455 = vsel %vm1653, %v3373, 0
      %v3458 = vsel %vm1653, %v3374, 0
      %v3461 = vsel %vm1653, %v3375, 0
      %v3464 = vsel %vm1653, %v3376, 0
      %v3467 = vsel %vm1653, %v3377, 0
      %v3470 = vsel %vm1653, %v3378, 0
      %v3473 = vsel %vm1653, %v3379, 0
      %v3476 = vsel %vm1653, %v3380, 0
      %v3479 = vsel %vm1653, %v3381, 0
      %v3482 = vsel %vm1653, %v3382, 0
      %v3485 = vsel %vm1653, %v3383, 0
      %v3488 = vsel %vm1653, %v3384, 0
      %v3491 = vsel %vm1653, %v3385, 0
      %v3494 = vsel %vm1653, %v3386, 0
      %v3497 = vsel %vm1653, %v3387, 0
      %3499 = vmatpush.msra.mxu0 0.0
      %3500 = vmatpush.msra.mxu0 0.0
      %3501 = vmatpush.msra.mxu0 0.0
      %3502 = vmatpush.msra.mxu0 0.0
      %3503 = vmatpush.msra.mxu0 0.0
      %3504 = vmatpush.msra.mxu0 0.0
      %3505 = vmatpush.msra.mxu0 0.0
      %3506 = vmatpush.msra.mxu0 0.0
      %3507 = vmatpush.msra.mxu0 0.0
      %3508 = vmatpush.msra.mxu0 0.0
      %3509 = vmatpush.msra.mxu0 0.0
      %3510 = vmatpush.msra.mxu0 0.0
      %3511 = vmatpush.msra.mxu0 0.0
      %3512 = vmatpush.msra.mxu0 0.0
      %3513 = vmatpush.msra.mxu0 %v3390
      %3514 = vmatpush.msra.mxu0 %v3389
      %3515 = vmatmul.f32.gmra.mxu0 %v3392
      %v3516 = vpop.f32.mrf.mxu0
      %v3517 = vadd.f32 0.0, %v3516
      %3518 = vmatmul.f32.gmra.mxu0 %v3395
      %v3519 = vpop.f32.mrf.mxu0
      %v3520 = vadd.f32 0.0, %v3519
      %3521 = vmatmul.f32.gmra.mxu0 %v3398
      %v3522 = vpop.f32.mrf.mxu0
      %v3523 = vadd.f32 0.0, %v3522
      %3524 = vmatmul.f32.gmra.mxu0 %v3401
      %v3525 = vpop.f32.mrf.mxu0
      %v3526 = vadd.f32 0.0, %v3525
      %3527 = vmatmul.f32.gmra.mxu0 %v3404
      %v3528 = vpop.f32.mrf.mxu0
      %v3529 = vadd.f32 0.0, %v3528
      %3530 = vmatmul.f32.gmra.mxu0 %v3407
      %v3531 = vpop.f32.mrf.mxu0
      %v3532 = vadd.f32 0.0, %v3531
      %3533 = vmatmul.f32.gmra.mxu0 %v3410
      %v3534 = vpop.f32.mrf.mxu0
      %v3535 = vadd.f32 0.0, %v3534
      %3536 = vmatmul.f32.gmra.mxu0 %v3413
      %v3537 = vpop.f32.mrf.mxu0
      %v3538 = vadd.f32 0.0, %v3537
      %3539 = vmatmul.f32.gmra.mxu0 %v3416
      %v3540 = vpop.f32.mrf.mxu0
      %v3541 = vadd.f32 0.0, %v3540
      %3542 = vmatmul.f32.gmra.mxu0 %v3419
      %v3543 = vpop.f32.mrf.mxu0
      %v3544 = vadd.f32 0.0, %v3543
      %3545 = vmatmul.f32.gmra.mxu0 %v3422
      %v3546 = vpop.f32.mrf.mxu0
      %v3547 = vadd.f32 0.0, %v3546
      %3548 = vmatmul.f32.gmra.mxu0 %v3425
      %v3549 = vpop.f32.mrf.mxu0
      %v3550 = vadd.f32 0.0, %v3549
      %3551 = vmatmul.f32.gmra.mxu0 %v3428
      %v3552 = vpop.f32.mrf.mxu0
      %v3553 = vadd.f32 0.0, %v3552
      %3554 = vmatmul.f32.gmra.mxu0 %v3431
      %v3555 = vpop.f32.mrf.mxu0
      %v3556 = vadd.f32 0.0, %v3555
      %3557 = vmatmul.f32.gmra.mxu0 %v3434
      %v3558 = vpop.f32.mrf.mxu0
      %v3559 = vadd.f32 0.0, %v3558
      %3560 = vmatmul.f32.gmra.mxu0 %v3437
      %v3561 = vpop.f32.mrf.mxu0
      %v3562 = vadd.f32 0.0, %v3561
      %3563 = vmatmul.f32.gmra.mxu0 %v3440
      %v3564 = vpop.f32.mrf.mxu0
      %v3565 = vadd.f32 0.0, %v3564
      %3566 = vmatmul.f32.gmra.mxu0 %v3443
      %v3567 = vpop.f32.mrf.mxu0
      %v3568 = vadd.f32 0.0, %v3567
      %3569 = vmatmul.f32.gmra.mxu0 %v3446
      %v3570 = vpop.f32.mrf.mxu0
      %v3571 = vadd.f32 0.0, %v3570
      %3572 = vmatmul.f32.gmra.mxu0 %v3449
      %v3573 = vpop.f32.mrf.mxu0
      %v3574 = vadd.f32 0.0, %v3573
      %3575 = vmatmul.f32.gmra.mxu0 %v3452
      %v3576 = vpop.f32.mrf.mxu0
      %v3577 = vadd.f32 0.0, %v3576
      %3578 = vmatmul.f32.gmra.mxu0 %v3455
      %v3579 = vpop.f32.mrf.mxu0
      %v3580 = vadd.f32 0.0, %v3579
      %3581 = vmatmul.f32.gmra.mxu0 %v3458
      %v3582 = vpop.f32.mrf.mxu0
      %v3583 = vadd.f32 0.0, %v3582
      %3584 = vmatmul.f32.gmra.mxu0 %v3461
      %v3585 = vpop.f32.mrf.mxu0
      %v3586 = vadd.f32 0.0, %v3585
      %3587 = vmatmul.f32.gmra.mxu0 %v3464
      %v3588 = vpop.f32.mrf.mxu0
      %v3589 = vadd.f32 0.0, %v3588
      %3590 = vmatmul.f32.gmra.mxu0 %v3467
      %v3591 = vpop.f32.mrf.mxu0
      %v3592 = vadd.f32 0.0, %v3591
      %3593 = vmatmul.f32.gmra.mxu0 %v3470
      %v3594 = vpop.f32.mrf.mxu0
      %v3595 = vadd.f32 0.0, %v3594
      %3596 = vmatmul.f32.gmra.mxu0 %v3473
      %v3597 = vpop.f32.mrf.mxu0
      %v3598 = vadd.f32 0.0, %v3597
      %3599 = vmatmul.f32.gmra.mxu0 %v3476
      %v3600 = vpop.f32.mrf.mxu0
      %v3601 = vadd.f32 0.0, %v3600
      %3602 = vmatmul.f32.gmra.mxu0 %v3479
      %v3603 = vpop.f32.mrf.mxu0
      %v3604 = vadd.f32 0.0, %v3603
      %3605 = vmatmul.f32.gmra.mxu0 %v3482
      %v3606 = vpop.f32.mrf.mxu0
      %v3607 = vadd.f32 0.0, %v3606
      %3608 = vmatmul.f32.gmra.mxu0 %v3485
      %v3609 = vpop.f32.mrf.mxu0
      %v3610 = vadd.f32 0.0, %v3609
      %3611 = vmatmul.f32.gmra.mxu0 %v3488
      %v3612 = vpop.f32.mrf.mxu0
      %v3613 = vadd.f32 0.0, %v3612
      %3614 = vmatmul.f32.gmra.mxu0 %v3491
      %v3615 = vpop.f32.mrf.mxu0
      %v3616 = vadd.f32 0.0, %v3615
      %3617 = vmatmul.f32.gmra.mxu0 %v3494
      %v3618 = vpop.f32.mrf.mxu0
      %v3619 = vadd.f32 0.0, %v3618
      %3620 = vmatmul.f32.gmra.mxu0 %v3497
      %v3621 = vpop.f32.mrf.mxu0
      %v3622 = vadd.f32 0.0, %v3621
      %3623 = vdwg.mxu0
      %v3624 = vadd.f32 %v3316, %v3517
      %v3625 = vadd.f32 %v3317, %v3520
      %v3626 = vadd.f32 %v3318, %v3523
      %v3627 = vadd.f32 %v3319, %v3526
      %v3628 = vadd.f32 %v3320, %v3529
      %v3629 = vadd.f32 %v3321, %v3532
      %v3630 = vadd.f32 %v3322, %v3535
      %v3631 = vadd.f32 %v3323, %v3538
      %v3632 = vadd.f32 %v3324, %v3541
      %v3633 = vadd.f32 %v3325, %v3544
      %v3634 = vadd.f32 %v3326, %v3547
      %v3635 = vadd.f32 %v3327, %v3550
      %v3636 = vadd.f32 %v3328, %v3553
      %v3637 = vadd.f32 %v3329, %v3556
      %v3638 = vadd.f32 %v3330, %v3559
      %v3639 = vadd.f32 %v3331, %v3562
      %v3640 = vadd.f32 %v3332, %v3565
      %v3641 = vadd.f32 %v3333, %v3568
      %v3642 = vadd.f32 %v3334, %v3571
      %v3643 = vadd.f32 %v3335, %v3574
      %v3644 = vadd.f32 %v3336, %v3577
      %v3645 = vadd.f32 %v3337, %v3580
      %v3646 = vadd.f32 %v3338, %v3583
      %v3647 = vadd.f32 %v3339, %v3586
      %v3648 = vadd.f32 %v3340, %v3589
      %v3649 = vadd.f32 %v3341, %v3592
      %v3650 = vadd.f32 %v3342, %v3595
      %v3651 = vadd.f32 %v3343, %v3598
      %v3652 = vadd.f32 %v3344, %v3601
      %v3653 = vadd.f32 %v3345, %v3604
      %v3654 = vadd.f32 %v3346, %v3607
      %v3655 = vadd.f32 %v3347, %v3610
      %v3656 = vadd.f32 %v3348, %v3613
      %v3657 = vadd.f32 %v3349, %v3616
      %v3658 = vadd.f32 %v3350, %v3619
      %v3659 = vadd.f32 %v3351, %v3622
      %v3660 = vld [vmem:[%s273 + $0x25] sm:$0xff]
      %v3661 = vld [vmem:[%s273 + $0x2d] sm:$0xff]
      %v3662 = vld [vmem:[%s273 + $0x35] sm:$0xff]
      %v3663 = vld [vmem:[%s273 + $0x3d] sm:$0xff]
      %v3664 = vld [vmem:[%s273 + $0x45] sm:$0xff]
      %v3665 = vld [vmem:[%s273 + $0x4d] sm:$0xff]
      %v3666 = vld [vmem:[%s273 + $0x55] sm:$0xff]
      %v3667 = vld [vmem:[%s273 + $0x5d] sm:$0xff]
      %v3668 = vld [vmem:[%s273 + $0x65] sm:$0xff]
      %v3669 = vld [vmem:[%s273 + $0x6d] sm:$0xff]
      %v3670 = vld [vmem:[%s273 + $0x75] sm:$0xff]
      %v3671 = vld [vmem:[%s273 + $0x7d] sm:$0xff]
      %v3672 = vld [vmem:[%s273 + $0x85] sm:$0xff]
      %v3673 = vld [vmem:[%s273 + $0x8d] sm:$0xff]
      %v3674 = vld [vmem:[%s273 + $0x95] sm:$0xff]
      %v3675 = vld [vmem:[%s273 + $0x9d] sm:$0xff]
      %v3676 = vld [vmem:[%s273 + $0xa5] sm:$0xff]
      %v3677 = vld [vmem:[%s273 + $0xad] sm:$0xff]
      %v3678 = vld [vmem:[%s273 + $0xb5] sm:$0xff]
      %v3679 = vld [vmem:[%s273 + $0xbd] sm:$0xff]
      %v3680 = vld [vmem:[%s273 + $0xc5] sm:$0xff]
      %v3681 = vld [vmem:[%s273 + $0xcd] sm:$0xff]
      %v3682 = vld [vmem:[%s273 + $0xd5] sm:$0xff]
      %v3683 = vld [vmem:[%s273 + $0xdd] sm:$0xff]
      %v3684 = vld [vmem:[%s273 + $0xe5] sm:$0xff]
      %v3685 = vld [vmem:[%s273 + $0xed] sm:$0xff]
      %v3686 = vld [vmem:[%s273 + $0xf5] sm:$0xff]
      %v3687 = vld [vmem:[%s273 + $0xfd] sm:$0xff]
      %v3688 = vld [vmem:[%s273 + $0x105] sm:$0xff]
      %v3689 = vld [vmem:[%s273 + $0x10d] sm:$0xff]
      %v3690 = vld [vmem:[%s273 + $0x115] sm:$0xff]
      %v3691 = vld [vmem:[%s273 + $0x11d] sm:$0xff]
      %v3692 = vld [vmem:[%s273 + $0x125] sm:$0xff]
      %v3693 = vld [vmem:[%s273 + $0x12d] sm:$0xff]
      %v3694 = vld [vmem:[%s273 + $0x135] sm:$0xff]
      %v3695 = vld [vmem:[%s273 + $0x13d] sm:$0xff]
      %s3696 = scalar_lea.vmem %s1, 112
      %v3697 = vld [vmem:[%s3696] sm:$0xff]
      %v3698 = vld [vmem:[%s3696 + $0x8] sm:$0xff]
      %v3700 = vsel %vm1653, %v3660, 0
      %v3703 = vsel %vm1653, %v3661, 0
      %v3706 = vsel %vm1653, %v3662, 0
      %v3709 = vsel %vm1653, %v3663, 0
      %v3712 = vsel %vm1653, %v3664, 0
      %v3715 = vsel %vm1653, %v3665, 0
      %v3718 = vsel %vm1653, %v3666, 0
      %v3721 = vsel %vm1653, %v3667, 0
      %v3724 = vsel %vm1653, %v3668, 0
      %v3727 = vsel %vm1653, %v3669, 0
      %v3730 = vsel %vm1653, %v3670, 0
      %v3733 = vsel %vm1653, %v3671, 0
      %v3736 = vsel %vm1653, %v3672, 0
      %v3739 = vsel %vm1653, %v3673, 0
      %v3742 = vsel %vm1653, %v3674, 0
      %v3745 = vsel %vm1653, %v3675, 0
      %v3748 = vsel %vm1653, %v3676, 0
      %v3751 = vsel %vm1653, %v3677, 0
      %v3754 = vsel %vm1653, %v3678, 0
      %v3757 = vsel %vm1653, %v3679, 0
      %v3760 = vsel %vm1653, %v3680, 0
      %v3763 = vsel %vm1653, %v3681, 0
      %v3766 = vsel %vm1653, %v3682, 0
      %v3769 = vsel %vm1653, %v3683, 0
      %v3772 = vsel %vm1653, %v3684, 0
      %v3775 = vsel %vm1653, %v3685, 0
      %v3778 = vsel %vm1653, %v3686, 0
      %v3781 = vsel %vm1653, %v3687, 0
      %v3784 = vsel %vm1653, %v3688, 0
      %v3787 = vsel %vm1653, %v3689, 0
      %v3790 = vsel %vm1653, %v3690, 0
      %v3793 = vsel %vm1653, %v3691, 0
      %v3796 = vsel %vm1653, %v3692, 0
      %v3799 = vsel %vm1653, %v3693, 0
      %v3802 = vsel %vm1653, %v3694, 0
      %v3805 = vsel %vm1653, %v3695, 0
      %3807 = vmatpush.msra.mxu0 0.0
      %3808 = vmatpush.msra.mxu0 0.0
      %3809 = vmatpush.msra.mxu0 0.0
      %3810 = vmatpush.msra.mxu0 0.0
      %3811 = vmatpush.msra.mxu0 0.0
      %3812 = vmatpush.msra.mxu0 0.0
      %3813 = vmatpush.msra.mxu0 0.0
      %3814 = vmatpush.msra.mxu0 0.0
      %3815 = vmatpush.msra.mxu0 0.0
      %3816 = vmatpush.msra.mxu0 0.0
      %3817 = vmatpush.msra.mxu0 0.0
      %3818 = vmatpush.msra.mxu0 0.0
      %3819 = vmatpush.msra.mxu0 0.0
      %3820 = vmatpush.msra.mxu0 0.0
      %3821 = vmatpush.msra.mxu0 %v3698
      %3822 = vmatpush.msra.mxu0 %v3697
      %3823 = vmatmul.f32.gmra.mxu0 %v3700
      %v3824 = vpop.f32.mrf.mxu0
      %v3825 = vadd.f32 0.0, %v3824
      %3826 = vmatmul.f32.gmra.mxu0 %v3703
      %v3827 = vpop.f32.mrf.mxu0
      %v3828 = vadd.f32 0.0, %v3827
      %3829 = vmatmul.f32.gmra.mxu0 %v3706
      %v3830 = vpop.f32.mrf.mxu0
      %v3831 = vadd.f32 0.0, %v3830
      %3832 = vmatmul.f32.gmra.mxu0 %v3709
      %v3833 = vpop.f32.mrf.mxu0
      %v3834 = vadd.f32 0.0, %v3833
      %3835 = vmatmul.f32.gmra.mxu0 %v3712
      %v3836 = vpop.f32.mrf.mxu0
      %v3837 = vadd.f32 0.0, %v3836
      %3838 = vmatmul.f32.gmra.mxu0 %v3715
      %v3839 = vpop.f32.mrf.mxu0
      %v3840 = vadd.f32 0.0, %v3839
      %3841 = vmatmul.f32.gmra.mxu0 %v3718
      %v3842 = vpop.f32.mrf.mxu0
      %v3843 = vadd.f32 0.0, %v3842
      %3844 = vmatmul.f32.gmra.mxu0 %v3721
      %v3845 = vpop.f32.mrf.mxu0
      %v3846 = vadd.f32 0.0, %v3845
      %3847 = vmatmul.f32.gmra.mxu0 %v3724
      %v3848 = vpop.f32.mrf.mxu0
      %v3849 = vadd.f32 0.0, %v3848
      %3850 = vmatmul.f32.gmra.mxu0 %v3727
      %v3851 = vpop.f32.mrf.mxu0
      %v3852 = vadd.f32 0.0, %v3851
      %3853 = vmatmul.f32.gmra.mxu0 %v3730
      %v3854 = vpop.f32.mrf.mxu0
      %v3855 = vadd.f32 0.0, %v3854
      %3856 = vmatmul.f32.gmra.mxu0 %v3733
      %v3857 = vpop.f32.mrf.mxu0
      %v3858 = vadd.f32 0.0, %v3857
      %3859 = vmatmul.f32.gmra.mxu0 %v3736
      %v3860 = vpop.f32.mrf.mxu0
      %v3861 = vadd.f32 0.0, %v3860
      %3862 = vmatmul.f32.gmra.mxu0 %v3739
      %v3863 = vpop.f32.mrf.mxu0
      %v3864 = vadd.f32 0.0, %v3863
      %3865 = vmatmul.f32.gmra.mxu0 %v3742
      %v3866 = vpop.f32.mrf.mxu0
      %v3867 = vadd.f32 0.0, %v3866
      %3868 = vmatmul.f32.gmra.mxu0 %v3745
      %v3869 = vpop.f32.mrf.mxu0
      %v3870 = vadd.f32 0.0, %v3869
      %3871 = vmatmul.f32.gmra.mxu0 %v3748
      %v3872 = vpop.f32.mrf.mxu0
      %v3873 = vadd.f32 0.0, %v3872
      %3874 = vmatmul.f32.gmra.mxu0 %v3751
      %v3875 = vpop.f32.mrf.mxu0
      %v3876 = vadd.f32 0.0, %v3875
      %3877 = vmatmul.f32.gmra.mxu0 %v3754
      %v3878 = vpop.f32.mrf.mxu0
      %v3879 = vadd.f32 0.0, %v3878
      %3880 = vmatmul.f32.gmra.mxu0 %v3757
      %v3881 = vpop.f32.mrf.mxu0
      %v3882 = vadd.f32 0.0, %v3881
      %3883 = vmatmul.f32.gmra.mxu0 %v3760
      %v3884 = vpop.f32.mrf.mxu0
      %v3885 = vadd.f32 0.0, %v3884
      %3886 = vmatmul.f32.gmra.mxu0 %v3763
      %v3887 = vpop.f32.mrf.mxu0
      %v3888 = vadd.f32 0.0, %v3887
      %3889 = vmatmul.f32.gmra.mxu0 %v3766
      %v3890 = vpop.f32.mrf.mxu0
      %v3891 = vadd.f32 0.0, %v3890
      %3892 = vmatmul.f32.gmra.mxu0 %v3769
      %v3893 = vpop.f32.mrf.mxu0
      %v3894 = vadd.f32 0.0, %v3893
      %3895 = vmatmul.f32.gmra.mxu0 %v3772
      %v3896 = vpop.f32.mrf.mxu0
      %v3897 = vadd.f32 0.0, %v3896
      %3898 = vmatmul.f32.gmra.mxu0 %v3775
      %v3899 = vpop.f32.mrf.mxu0
      %v3900 = vadd.f32 0.0, %v3899
      %3901 = vmatmul.f32.gmra.mxu0 %v3778
      %v3902 = vpop.f32.mrf.mxu0
      %v3903 = vadd.f32 0.0, %v3902
      %3904 = vmatmul.f32.gmra.mxu0 %v3781
      %v3905 = vpop.f32.mrf.mxu0
      %v3906 = vadd.f32 0.0, %v3905
      %3907 = vmatmul.f32.gmra.mxu0 %v3784
      %v3908 = vpop.f32.mrf.mxu0
      %v3909 = vadd.f32 0.0, %v3908
      %3910 = vmatmul.f32.gmra.mxu0 %v3787
      %v3911 = vpop.f32.mrf.mxu0
      %v3912 = vadd.f32 0.0, %v3911
      %3913 = vmatmul.f32.gmra.mxu0 %v3790
      %v3914 = vpop.f32.mrf.mxu0
      %v3915 = vadd.f32 0.0, %v3914
      %3916 = vmatmul.f32.gmra.mxu0 %v3793
      %v3917 = vpop.f32.mrf.mxu0
      %v3918 = vadd.f32 0.0, %v3917
      %3919 = vmatmul.f32.gmra.mxu0 %v3796
      %v3920 = vpop.f32.mrf.mxu0
      %v3921 = vadd.f32 0.0, %v3920
      %3922 = vmatmul.f32.gmra.mxu0 %v3799
      %v3923 = vpop.f32.mrf.mxu0
      %v3924 = vadd.f32 0.0, %v3923
      %3925 = vmatmul.f32.gmra.mxu0 %v3802
      %v3926 = vpop.f32.mrf.mxu0
      %v3927 = vadd.f32 0.0, %v3926
      %3928 = vmatmul.f32.gmra.mxu0 %v3805
      %v3929 = vpop.f32.mrf.mxu0
      %v3930 = vadd.f32 0.0, %v3929
      %3931 = vdwg.mxu0
      %v3932 = vadd.f32 %v3624, %v3825
      %v3933 = vadd.f32 %v3625, %v3828
      %v3934 = vadd.f32 %v3626, %v3831
      %v3935 = vadd.f32 %v3627, %v3834
      %v3936 = vadd.f32 %v3628, %v3837
      %v3937 = vadd.f32 %v3629, %v3840
      %v3938 = vadd.f32 %v3630, %v3843
      %v3939 = vadd.f32 %v3631, %v3846
      %v3940 = vadd.f32 %v3632, %v3849
      %v3941 = vadd.f32 %v3633, %v3852
      %v3942 = vadd.f32 %v3634, %v3855
      %v3943 = vadd.f32 %v3635, %v3858
      %v3944 = vadd.f32 %v3636, %v3861
      %v3945 = vadd.f32 %v3637, %v3864
      %v3946 = vadd.f32 %v3638, %v3867
      %v3947 = vadd.f32 %v3639, %v3870
      %v3948 = vadd.f32 %v3640, %v3873
      %v3949 = vadd.f32 %v3641, %v3876
      %v3950 = vadd.f32 %v3642, %v3879
      %v3951 = vadd.f32 %v3643, %v3882
      %v3952 = vadd.f32 %v3644, %v3885
      %v3953 = vadd.f32 %v3645, %v3888
      %v3954 = vadd.f32 %v3646, %v3891
      %v3955 = vadd.f32 %v3647, %v3894
      %v3956 = vadd.f32 %v3648, %v3897
      %v3957 = vadd.f32 %v3649, %v3900
      %v3958 = vadd.f32 %v3650, %v3903
      %v3959 = vadd.f32 %v3651, %v3906
      %v3960 = vadd.f32 %v3652, %v3909
      %v3961 = vadd.f32 %v3653, %v3912
      %v3962 = vadd.f32 %v3654, %v3915
      %v3963 = vadd.f32 %v3655, %v3918
      %v3964 = vadd.f32 %v3656, %v3921
      %v3965 = vadd.f32 %v3657, %v3924
      %v3966 = vadd.f32 %v3658, %v3927
      %v3967 = vadd.f32 %v3659, %v3930
      %v3968 = vld [vmem:[%s273 + $0x26] sm:$0xff]
      %v3969 = vld [vmem:[%s273 + $0x2e] sm:$0xff]
      %v3970 = vld [vmem:[%s273 + $0x36] sm:$0xff]
      %v3971 = vld [vmem:[%s273 + $0x3e] sm:$0xff]
      %v3972 = vld [vmem:[%s273 + $0x46] sm:$0xff]
      %v3973 = vld [vmem:[%s273 + $0x4e] sm:$0xff]
      %v3974 = vld [vmem:[%s273 + $0x56] sm:$0xff]
      %v3975 = vld [vmem:[%s273 + $0x5e] sm:$0xff]
      %v3976 = vld [vmem:[%s273 + $0x66] sm:$0xff]
      %v3977 = vld [vmem:[%s273 + $0x6e] sm:$0xff]
      %v3978 = vld [vmem:[%s273 + $0x76] sm:$0xff]
      %v3979 = vld [vmem:[%s273 + $0x7e] sm:$0xff]
      %v3980 = vld [vmem:[%s273 + $0x86] sm:$0xff]
      %v3981 = vld [vmem:[%s273 + $0x8e] sm:$0xff]
      %v3982 = vld [vmem:[%s273 + $0x96] sm:$0xff]
      %v3983 = vld [vmem:[%s273 + $0x9e] sm:$0xff]
      %v3984 = vld [vmem:[%s273 + $0xa6] sm:$0xff]
      %v3985 = vld [vmem:[%s273 + $0xae] sm:$0xff]
      %v3986 = vld [vmem:[%s273 + $0xb6] sm:$0xff]
      %v3987 = vld [vmem:[%s273 + $0xbe] sm:$0xff]
      %v3988 = vld [vmem:[%s273 + $0xc6] sm:$0xff]
      %v3989 = vld [vmem:[%s273 + $0xce] sm:$0xff]
      %v3990 = vld [vmem:[%s273 + $0xd6] sm:$0xff]
      %v3991 = vld [vmem:[%s273 + $0xde] sm:$0xff]
      %v3992 = vld [vmem:[%s273 + $0xe6] sm:$0xff]
      %v3993 = vld [vmem:[%s273 + $0xee] sm:$0xff]
      %v3994 = vld [vmem:[%s273 + $0xf6] sm:$0xff]
      %v3995 = vld [vmem:[%s273 + $0xfe] sm:$0xff]
      %v3996 = vld [vmem:[%s273 + $0x106] sm:$0xff]
      %v3997 = vld [vmem:[%s273 + $0x10e] sm:$0xff]
      %v3998 = vld [vmem:[%s273 + $0x116] sm:$0xff]
      %v3999 = vld [vmem:[%s273 + $0x11e] sm:$0xff]
      %v4000 = vld [vmem:[%s273 + $0x126] sm:$0xff]
      %v4001 = vld [vmem:[%s273 + $0x12e] sm:$0xff]
      %v4002 = vld [vmem:[%s273 + $0x136] sm:$0xff]
      %v4003 = vld [vmem:[%s273 + $0x13e] sm:$0xff]
      %s4004 = scalar_lea.vmem %s1, 128
      %v4005 = vld [vmem:[%s4004] sm:$0xff]
      %v4006 = vld [vmem:[%s4004 + $0x8] sm:$0xff]
      %v4008 = vsel %vm1653, %v3968, 0
      %v4011 = vsel %vm1653, %v3969, 0
      %v4014 = vsel %vm1653, %v3970, 0
      %v4017 = vsel %vm1653, %v3971, 0
      %v4020 = vsel %vm1653, %v3972, 0
      %v4023 = vsel %vm1653, %v3973, 0
      %v4026 = vsel %vm1653, %v3974, 0
      %v4029 = vsel %vm1653, %v3975, 0
      %v4032 = vsel %vm1653, %v3976, 0
      %v4035 = vsel %vm1653, %v3977, 0
      %v4038 = vsel %vm1653, %v3978, 0
      %v4041 = vsel %vm1653, %v3979, 0
      %v4044 = vsel %vm1653, %v3980, 0
      %v4047 = vsel %vm1653, %v3981, 0
      %v4050 = vsel %vm1653, %v3982, 0
      %v4053 = vsel %vm1653, %v3983, 0
      %v4056 = vsel %vm1653, %v3984, 0
      %v4059 = vsel %vm1653, %v3985, 0
      %v4062 = vsel %vm1653, %v3986, 0
      %v4065 = vsel %vm1653, %v3987, 0
      %v4068 = vsel %vm1653, %v3988, 0
      %v4071 = vsel %vm1653, %v3989, 0
      %v4074 = vsel %vm1653, %v3990, 0
      %v4077 = vsel %vm1653, %v3991, 0
      %v4080 = vsel %vm1653, %v3992, 0
      %v4083 = vsel %vm1653, %v3993, 0
      %v4086 = vsel %vm1653, %v3994, 0
      %v4089 = vsel %vm1653, %v3995, 0
      %v4092 = vsel %vm1653, %v3996, 0
      %v4095 = vsel %vm1653, %v3997, 0
      %v4098 = vsel %vm1653, %v3998, 0
      %v4101 = vsel %vm1653, %v3999, 0
      %v4104 = vsel %vm1653, %v4000, 0
      %v4107 = vsel %vm1653, %v4001, 0
      %v4110 = vsel %vm1653, %v4002, 0
      %v4113 = vsel %vm1653, %v4003, 0
      %4115 = vmatpush.msra.mxu0 0.0
      %4116 = vmatpush.msra.mxu0 0.0
      %4117 = vmatpush.msra.mxu0 0.0
      %4118 = vmatpush.msra.mxu0 0.0
      %4119 = vmatpush.msra.mxu0 0.0
      %4120 = vmatpush.msra.mxu0 0.0
      %4121 = vmatpush.msra.mxu0 0.0
      %4122 = vmatpush.msra.mxu0 0.0
      %4123 = vmatpush.msra.mxu0 0.0
      %4124 = vmatpush.msra.mxu0 0.0
      %4125 = vmatpush.msra.mxu0 0.0
      %4126 = vmatpush.msra.mxu0 0.0
      %4127 = vmatpush.msra.mxu0 0.0
      %4128 = vmatpush.msra.mxu0 0.0
      %4129 = vmatpush.msra.mxu0 %v4006
      %4130 = vmatpush.msra.mxu0 %v4005
      %4131 = vmatmul.f32.gmra.mxu0 %v4008
      %v4132 = vpop.f32.mrf.mxu0
      %v4133 = vadd.f32 0.0, %v4132
      %4134 = vmatmul.f32.gmra.mxu0 %v4011
      %v4135 = vpop.f32.mrf.mxu0
      %v4136 = vadd.f32 0.0, %v4135
      %4137 = vmatmul.f32.gmra.mxu0 %v4014
      %v4138 = vpop.f32.mrf.mxu0
      %v4139 = vadd.f32 0.0, %v4138
      %4140 = vmatmul.f32.gmra.mxu0 %v4017
      %v4141 = vpop.f32.mrf.mxu0
      %v4142 = vadd.f32 0.0, %v4141
      %4143 = vmatmul.f32.gmra.mxu0 %v4020
      %v4144 = vpop.f32.mrf.mxu0
      %v4145 = vadd.f32 0.0, %v4144
      %4146 = vmatmul.f32.gmra.mxu0 %v4023
      %v4147 = vpop.f32.mrf.mxu0
      %v4148 = vadd.f32 0.0, %v4147
      %4149 = vmatmul.f32.gmra.mxu0 %v4026
      %v4150 = vpop.f32.mrf.mxu0
      %v4151 = vadd.f32 0.0, %v4150
      %4152 = vmatmul.f32.gmra.mxu0 %v4029
      %v4153 = vpop.f32.mrf.mxu0
      %v4154 = vadd.f32 0.0, %v4153
      %4155 = vmatmul.f32.gmra.mxu0 %v4032
      %v4156 = vpop.f32.mrf.mxu0
      %v4157 = vadd.f32 0.0, %v4156
      %4158 = vmatmul.f32.gmra.mxu0 %v4035
      %v4159 = vpop.f32.mrf.mxu0
      %v4160 = vadd.f32 0.0, %v4159
      %4161 = vmatmul.f32.gmra.mxu0 %v4038
      %v4162 = vpop.f32.mrf.mxu0
      %v4163 = vadd.f32 0.0, %v4162
      %4164 = vmatmul.f32.gmra.mxu0 %v4041
      %v4165 = vpop.f32.mrf.mxu0
      %v4166 = vadd.f32 0.0, %v4165
      %4167 = vmatmul.f32.gmra.mxu0 %v4044
      %v4168 = vpop.f32.mrf.mxu0
      %v4169 = vadd.f32 0.0, %v4168
      %4170 = vmatmul.f32.gmra.mxu0 %v4047
      %v4171 = vpop.f32.mrf.mxu0
      %v4172 = vadd.f32 0.0, %v4171
      %4173 = vmatmul.f32.gmra.mxu0 %v4050
      %v4174 = vpop.f32.mrf.mxu0
      %v4175 = vadd.f32 0.0, %v4174
      %4176 = vmatmul.f32.gmra.mxu0 %v4053
      %v4177 = vpop.f32.mrf.mxu0
      %v4178 = vadd.f32 0.0, %v4177
      %4179 = vmatmul.f32.gmra.mxu0 %v4056
      %v4180 = vpop.f32.mrf.mxu0
      %v4181 = vadd.f32 0.0, %v4180
      %4182 = vmatmul.f32.gmra.mxu0 %v4059
      %v4183 = vpop.f32.mrf.mxu0
      %v4184 = vadd.f32 0.0, %v4183
      %4185 = vmatmul.f32.gmra.mxu0 %v4062
      %v4186 = vpop.f32.mrf.mxu0
      %v4187 = vadd.f32 0.0, %v4186
      %4188 = vmatmul.f32.gmra.mxu0 %v4065
      %v4189 = vpop.f32.mrf.mxu0
      %v4190 = vadd.f32 0.0, %v4189
      %4191 = vmatmul.f32.gmra.mxu0 %v4068
      %v4192 = vpop.f32.mrf.mxu0
      %v4193 = vadd.f32 0.0, %v4192
      %4194 = vmatmul.f32.gmra.mxu0 %v4071
      %v4195 = vpop.f32.mrf.mxu0
      %v4196 = vadd.f32 0.0, %v4195
      %4197 = vmatmul.f32.gmra.mxu0 %v4074
      %v4198 = vpop.f32.mrf.mxu0
      %v4199 = vadd.f32 0.0, %v4198
      %4200 = vmatmul.f32.gmra.mxu0 %v4077
      %v4201 = vpop.f32.mrf.mxu0
      %v4202 = vadd.f32 0.0, %v4201
      %4203 = vmatmul.f32.gmra.mxu0 %v4080
      %v4204 = vpop.f32.mrf.mxu0
      %v4205 = vadd.f32 0.0, %v4204
      %4206 = vmatmul.f32.gmra.mxu0 %v4083
      %v4207 = vpop.f32.mrf.mxu0
      %v4208 = vadd.f32 0.0, %v4207
      %4209 = vmatmul.f32.gmra.mxu0 %v4086
      %v4210 = vpop.f32.mrf.mxu0
      %v4211 = vadd.f32 0.0, %v4210
      %4212 = vmatmul.f32.gmra.mxu0 %v4089
      %v4213 = vpop.f32.mrf.mxu0
      %v4214 = vadd.f32 0.0, %v4213
      %4215 = vmatmul.f32.gmra.mxu0 %v4092
      %v4216 = vpop.f32.mrf.mxu0
      %v4217 = vadd.f32 0.0, %v4216
      %4218 = vmatmul.f32.gmra.mxu0 %v4095
      %v4219 = vpop.f32.mrf.mxu0
      %v4220 = vadd.f32 0.0, %v4219
      %4221 = vmatmul.f32.gmra.mxu0 %v4098
      %v4222 = vpop.f32.mrf.mxu0
      %v4223 = vadd.f32 0.0, %v4222
      %4224 = vmatmul.f32.gmra.mxu0 %v4101
      %v4225 = vpop.f32.mrf.mxu0
      %v4226 = vadd.f32 0.0, %v4225
      %4227 = vmatmul.f32.gmra.mxu0 %v4104
      %v4228 = vpop.f32.mrf.mxu0
      %v4229 = vadd.f32 0.0, %v4228
      %4230 = vmatmul.f32.gmra.mxu0 %v4107
      %v4231 = vpop.f32.mrf.mxu0
      %v4232 = vadd.f32 0.0, %v4231
      %4233 = vmatmul.f32.gmra.mxu0 %v4110
      %v4234 = vpop.f32.mrf.mxu0
      %v4235 = vadd.f32 0.0, %v4234
      %4236 = vmatmul.f32.gmra.mxu0 %v4113
      %v4237 = vpop.f32.mrf.mxu0
      %v4238 = vadd.f32 0.0, %v4237
      %4239 = vdwg.mxu0
      %v4240 = vadd.f32 %v3932, %v4133
      %v4241 = vadd.f32 %v3933, %v4136
      %v4242 = vadd.f32 %v3934, %v4139
      %v4243 = vadd.f32 %v3935, %v4142
      %v4244 = vadd.f32 %v3936, %v4145
      %v4245 = vadd.f32 %v3937, %v4148
      %v4246 = vadd.f32 %v3938, %v4151
      %v4247 = vadd.f32 %v3939, %v4154
      %v4248 = vadd.f32 %v3940, %v4157
      %v4249 = vadd.f32 %v3941, %v4160
      %v4250 = vadd.f32 %v3942, %v4163
      %v4251 = vadd.f32 %v3943, %v4166
      %v4252 = vadd.f32 %v3944, %v4169
      %v4253 = vadd.f32 %v3945, %v4172
      %v4254 = vadd.f32 %v3946, %v4175
      %v4255 = vadd.f32 %v3947, %v4178
      %v4256 = vadd.f32 %v3948, %v4181
      %v4257 = vadd.f32 %v3949, %v4184
      %v4258 = vadd.f32 %v3950, %v4187
      %v4259 = vadd.f32 %v3951, %v4190
      %v4260 = vadd.f32 %v3952, %v4193
      %v4261 = vadd.f32 %v3953, %v4196
      %v4262 = vadd.f32 %v3954, %v4199
      %v4263 = vadd.f32 %v3955, %v4202
      %v4264 = vadd.f32 %v3956, %v4205
      %v4265 = vadd.f32 %v3957, %v4208
      %v4266 = vadd.f32 %v3958, %v4211
      %v4267 = vadd.f32 %v3959, %v4214
      %v4268 = vadd.f32 %v3960, %v4217
      %v4269 = vadd.f32 %v3961, %v4220
      %v4270 = vadd.f32 %v3962, %v4223
      %v4271 = vadd.f32 %v3963, %v4226
      %v4272 = vadd.f32 %v3964, %v4229
      %v4273 = vadd.f32 %v3965, %v4232
      %v4274 = vadd.f32 %v3966, %v4235
      %v4275 = vadd.f32 %v3967, %v4238
      %v4276 = vld [vmem:[%s2] sm:$0x1]
      %v4278 = vperm.slane %v4276, 0
      %v4280 = vadd.f32 %v4240, %v4278
      %v4281 = vadd.f32 %v4241, %v4278
      %v4282 = vadd.f32 %v4242, %v4278
      %v4283 = vadd.f32 %v4243, %v4278
      %v4284 = vadd.f32 %v4244, %v4278
      %v4285 = vadd.f32 %v4245, %v4278
      %v4286 = vadd.f32 %v4246, %v4278
      %v4287 = vadd.f32 %v4247, %v4278
      %v4288 = vadd.f32 %v4248, %v4278
      %v4289 = vadd.f32 %v4249, %v4278
      %v4290 = vadd.f32 %v4250, %v4278
      %v4291 = vadd.f32 %v4251, %v4278
      %v4292 = vadd.f32 %v4252, %v4278
      %v4293 = vadd.f32 %v4253, %v4278
      %v4294 = vadd.f32 %v4254, %v4278
      %v4295 = vadd.f32 %v4255, %v4278
      %v4296 = vadd.f32 %v4256, %v4278
      %v4297 = vadd.f32 %v4257, %v4278
      %v4298 = vadd.f32 %v4258, %v4278
      %v4299 = vadd.f32 %v4259, %v4278
      %v4300 = vadd.f32 %v4260, %v4278
      %v4301 = vadd.f32 %v4261, %v4278
      %v4302 = vadd.f32 %v4262, %v4278
      %v4303 = vadd.f32 %v4263, %v4278
      %v4304 = vadd.f32 %v4264, %v4278
      %v4305 = vadd.f32 %v4265, %v4278
      %v4306 = vadd.f32 %v4266, %v4278
      %v4307 = vadd.f32 %v4267, %v4278
      %v4308 = vadd.f32 %v4268, %v4278
      %v4309 = vadd.f32 %v4269, %v4278
      %v4310 = vadd.f32 %v4270, %v4278
      %v4311 = vadd.f32 %v4271, %v4278
      %v4312 = vadd.f32 %v4272, %v4278
      %v4313 = vadd.f32 %v4273, %v4278
      %v4314 = vadd.f32 %v4274, %v4278
      %v4315 = vadd.f32 %v4275, %v4278
      %4316 = vst.msk [vmem:[#allocation2] sm:$0xff] %vm1653, 0.0
      %4317 = vst.msk [vmem:[#allocation2 + $0x8] sm:$0xff] %vm1653, 0.0
      %vm4318 = vcmask 124928
      %4319 = vst.msk [vmem:[#allocation2 + $0x10] sm:$0x7] %vm4318, 0.0
      %4320 = vst.msk [vmem:[#allocation2 + $0x133] sm:$0xff] %vm1653, 0.0
      %4321 = vst.msk [vmem:[#allocation2 + $0x13b] sm:$0xff] %vm1653, 0.0
      %vm4322 = vcmask 126976
      %4323 = vst.msk [vmem:[#allocation2 + $0x143] sm:$0x1f] %vm4322, 0.0
      %v4324 = vsel %vm1540, 1, 0
      %v4325 = vsel %vm1541, 1, 0
      %v4326 = vsel %vm1542, 1, 0
      %v4327 = vsel %vm1543, 1, 0
      %v4328 = vsel %vm1544, 1, 0
      %v4329 = vsel %vm1545, 1, 0
      %v4330 = vsel %vm1546, 1, 0
      %v4331 = vsel %vm1547, 1, 0
      %v4332 = vsel %vm1548, 1, 0
      %v4333 = vsel %vm1549, 1, 0
      %v4334 = vsel %vm1550, 1, 0
      %v4335 = vsel %vm1551, 1, 0
      %v4336 = vsel %vm1552, 1, 0
      %v4337 = vsel %vm1553, 1, 0
      %v4338 = vsel %vm1554, 1, 0
      %v4339 = vsel %vm1555, 1, 0
      %v4340 = vsel %vm1556, 1, 0
      %v4341 = vsel %vm1557, 1, 0
      %v4342 = vsel %vm1558, 1, 0
      %v4343 = vsel %vm1559, 1, 0
      %v4344 = vsel %vm1560, 1, 0
      %v4345 = vsel %vm1561, 1, 0
      %v4346 = vsel %vm1562, 1, 0
      %v4347 = vsel %vm1563, 1, 0
      %v4348 = vsel %vm1564, 1, 0
      %v4349 = vsel %vm1565, 1, 0
      %v4350 = vsel %vm1566, 1, 0
      %v4351 = vsel %vm1567, 1, 0
      %v4352 = vsel %vm1568, 1, 0
      %v4353 = vsel %vm1569, 1, 0
      %v4354 = vsel %vm1570, 1, 0
      %v4355 = vsel %vm1571, 1, 0
      %v4356 = vsel %vm1572, 1, 0
      %v4357 = vsel %vm1573, 1, 0
      %v4358 = vsel %vm1574, 1, 0
      %v4359 = vsel %vm1575, 1, 0
      %vm4360 = vcmp.eq.s32.totalorder %v4324, 1
      %vm4361 = vcmp.eq.s32.totalorder %v4325, 1
      %vm4362 = vcmp.eq.s32.totalorder %v4326, 1
      %vm4363 = vcmp.eq.s32.totalorder %v4327, 1
      %vm4364 = vcmp.eq.s32.totalorder %v4328, 1
      %vm4365 = vcmp.eq.s32.totalorder %v4329, 1
      %vm4366 = vcmp.eq.s32.totalorder %v4330, 1
      %vm4367 = vcmp.eq.s32.totalorder %v4331, 1
      %vm4368 = vcmp.eq.s32.totalorder %v4332, 1
      %vm4369 = vcmp.eq.s32.totalorder %v4333, 1
      %vm4370 = vcmp.eq.s32.totalorder %v4334, 1
      %vm4371 = vcmp.eq.s32.totalorder %v4335, 1
      %vm4372 = vcmp.eq.s32.totalorder %v4336, 1
      %vm4373 = vcmp.eq.s32.totalorder %v4337, 1
      %vm4374 = vcmp.eq.s32.totalorder %v4338, 1
      %vm4375 = vcmp.eq.s32.totalorder %v4339, 1
      %vm4376 = vcmp.eq.s32.totalorder %v4340, 1
      %vm4377 = vcmp.eq.s32.totalorder %v4341, 1
      %vm4378 = vcmp.eq.s32.totalorder %v4342, 1
      %vm4379 = vcmp.eq.s32.totalorder %v4343, 1
      %vm4380 = vcmp.eq.s32.totalorder %v4344, 1
      %vm4381 = vcmp.eq.s32.totalorder %v4345, 1
      %vm4382 = vcmp.eq.s32.totalorder %v4346, 1
      %vm4383 = vcmp.eq.s32.totalorder %v4347, 1
      %vm4384 = vcmp.eq.s32.totalorder %v4348, 1
      %vm4385 = vcmp.eq.s32.totalorder %v4349, 1
      %vm4386 = vcmp.eq.s32.totalorder %v4350, 1
      %vm4387 = vcmp.eq.s32.totalorder %v4351, 1
      %vm4388 = vcmp.eq.s32.totalorder %v4352, 1
      %vm4389 = vcmp.eq.s32.totalorder %v4353, 1
      %vm4390 = vcmp.eq.s32.totalorder %v4354, 1
      %vm4391 = vcmp.eq.s32.totalorder %v4355, 1
      %vm4392 = vcmp.eq.s32.totalorder %v4356, 1
      %vm4393 = vcmp.eq.s32.totalorder %v4357, 1
      %vm4394 = vcmp.eq.s32.totalorder %v4358, 1
      %vm4395 = vcmp.eq.s32.totalorder %v4359, 1
      %v4396 = vsel %vm4360, %v4280, 0.0
      %v4397 = vsel %vm4361, %v4281, 0.0
      %v4398 = vsel %vm4362, %v4282, 0.0
      %v4399 = vsel %vm4363, %v4283, 0.0
      %v4400 = vsel %vm4364, %v4284, 0.0
      %v4401 = vsel %vm4365, %v4285, 0.0
      %v4402 = vsel %vm4366, %v4286, 0.0
      %v4403 = vsel %vm4367, %v4287, 0.0
      %v4404 = vsel %vm4368, %v4288, 0.0
      %v4405 = vsel %vm4369, %v4289, 0.0
      %v4406 = vsel %vm4370, %v4290, 0.0
      %v4407 = vsel %vm4371, %v4291, 0.0
      %v4408 = vsel %vm4372, %v4292, 0.0
      %v4409 = vsel %vm4373, %v4293, 0.0
      %v4410 = vsel %vm4374, %v4294, 0.0
      %v4411 = vsel %vm4375, %v4295, 0.0
      %v4412 = vsel %vm4376, %v4296, 0.0
      %v4413 = vsel %vm4377, %v4297, 0.0
      %v4414 = vsel %vm4378, %v4298, 0.0
      %v4415 = vsel %vm4379, %v4299, 0.0
      %v4416 = vsel %vm4380, %v4300, 0.0
      %v4417 = vsel %vm4381, %v4301, 0.0
      %v4418 = vsel %vm4382, %v4302, 0.0
      %v4419 = vsel %vm4383, %v4303, 0.0
      %v4420 = vsel %vm4384, %v4304, 0.0
      %v4421 = vsel %vm4385, %v4305, 0.0
      %v4422 = vsel %vm4386, %v4306, 0.0
      %v4423 = vsel %vm4387, %v4307, 0.0
      %v4424 = vsel %vm4388, %v4308, 0.0
      %v4425 = vsel %vm4389, %v4309, 0.0
      %v4426 = vsel %vm4390, %v4310, 0.0
      %v4427 = vsel %vm4391, %v4311, 0.0
      %v4428 = vsel %vm4392, %v4312, 0.0
      %v4429 = vsel %vm4393, %v4313, 0.0
      %v4430 = vsel %vm4394, %v4314, 0.0
      %v4431 = vsel %vm4395, %v4315, 0.0
      %4468 = vrot.lane.b32.xlu0 %v4396, 112
      %v4469 = vpop.permute.xlu0 %4468
      %4470 = vrot.lane.b32.xlu0 %v4397, 112
      %v4471 = vpop.permute.xlu0 %4470
      %4472 = vrot.lane.b32.xlu0 %v4398, 112
      %v4473 = vpop.permute.xlu0 %4472
      %4474 = vrot.lane.b32.xlu0 %v4399, 112
      %v4475 = vpop.permute.xlu0 %4474
      %4476 = vrot.lane.b32.xlu0 %v4400, 112
      %v4477 = vpop.permute.xlu0 %4476
      %4478 = vrot.lane.b32.xlu0 %v4401, 112
      %v4479 = vpop.permute.xlu0 %4478
      %4480 = vrot.lane.b32.xlu0 %v4402, 112
      %v4481 = vpop.permute.xlu0 %4480
      %4482 = vrot.lane.b32.xlu0 %v4403, 112
      %v4483 = vpop.permute.xlu0 %4482
      %4484 = vrot.lane.b32.xlu0 %v4404, 112
      %v4485 = vpop.permute.xlu0 %4484
      %4486 = vrot.lane.b32.xlu0 %v4405, 112
      %v4487 = vpop.permute.xlu0 %4486
      %4488 = vrot.lane.b32.xlu0 %v4406, 112
      %v4489 = vpop.permute.xlu0 %4488
      %4490 = vrot.lane.b32.xlu0 %v4407, 112
      %v4491 = vpop.permute.xlu0 %4490
      %4492 = vrot.lane.b32.xlu0 %v4408, 112
      %v4493 = vpop.permute.xlu0 %4492
      %4494 = vrot.lane.b32.xlu0 %v4409, 112
      %v4495 = vpop.permute.xlu0 %4494
      %4496 = vrot.lane.b32.xlu0 %v4410, 112
      %v4497 = vpop.permute.xlu0 %4496
      %4498 = vrot.lane.b32.xlu0 %v4411, 112
      %v4499 = vpop.permute.xlu0 %4498
      %4500 = vrot.lane.b32.xlu0 %v4412, 112
      %v4501 = vpop.permute.xlu0 %4500
      %4502 = vrot.lane.b32.xlu0 %v4413, 112
      %v4503 = vpop.permute.xlu0 %4502
      %4504 = vrot.lane.b32.xlu0 %v4414, 112
      %v4505 = vpop.permute.xlu0 %4504
      %4506 = vrot.lane.b32.xlu0 %v4415, 112
      %v4507 = vpop.permute.xlu0 %4506
      %4508 = vrot.lane.b32.xlu0 %v4416, 112
      %v4509 = vpop.permute.xlu0 %4508
      %4510 = vrot.lane.b32.xlu0 %v4417, 112
      %v4511 = vpop.permute.xlu0 %4510
      %4512 = vrot.lane.b32.xlu0 %v4418, 112
      %v4513 = vpop.permute.xlu0 %4512
      %4514 = vrot.lane.b32.xlu0 %v4419, 112
      %v4515 = vpop.permute.xlu0 %4514
      %4516 = vrot.lane.b32.xlu0 %v4420, 112
      %v4517 = vpop.permute.xlu0 %4516
      %4518 = vrot.lane.b32.xlu0 %v4421, 112
      %v4519 = vpop.permute.xlu0 %4518
      %4520 = vrot.lane.b32.xlu0 %v4422, 112
      %v4521 = vpop.permute.xlu0 %4520
      %4522 = vrot.lane.b32.xlu0 %v4423, 112
      %v4523 = vpop.permute.xlu0 %4522
      %4524 = vrot.lane.b32.xlu0 %v4424, 112
      %v4525 = vpop.permute.xlu0 %4524
      %4526 = vrot.lane.b32.xlu0 %v4425, 112
      %v4527 = vpop.permute.xlu0 %4526
      %4528 = vrot.lane.b32.xlu0 %v4426, 112
      %v4529 = vpop.permute.xlu0 %4528
      %4530 = vrot.lane.b32.xlu0 %v4427, 112
      %v4531 = vpop.permute.xlu0 %4530
      %4532 = vrot.lane.b32.xlu0 %v4428, 112
      %v4533 = vpop.permute.xlu0 %4532
      %4534 = vrot.lane.b32.xlu0 %v4429, 112
      %v4535 = vpop.permute.xlu0 %4534
      %4536 = vrot.lane.b32.xlu0 %v4430, 112
      %v4537 = vpop.permute.xlu0 %4536
      %4538 = vrot.lane.b32.xlu0 %v4431, 112
      %v4539 = vpop.permute.xlu0 %4538
      %4576 = vst.msk [vmem:[#allocation2 + $0x13] sm:$0xff] %vm1653, %v4469
      %4577 = vst.msk [vmem:[#allocation2 + $0x1b] sm:$0xff] %vm1653, %v4471
      %4578 = vst.msk [vmem:[#allocation2 + $0x23] sm:$0xff] %vm1653, %v4473
      %4579 = vst.msk [vmem:[#allocation2 + $0x2b] sm:$0xff] %vm1653, %v4475
      %4580 = vst.msk [vmem:[#allocation2 + $0x33] sm:$0xff] %vm1653, %v4477
      %4581 = vst.msk [vmem:[#allocation2 + $0x3b] sm:$0xff] %vm1653, %v4479
      %4582 = vst.msk [vmem:[#allocation2 + $0x43] sm:$0xff] %vm1653, %v4481
      %4583 = vst.msk [vmem:[#allocation2 + $0x4b] sm:$0xff] %vm1653, %v4483
      %4584 = vst.msk [vmem:[#allocation2 + $0x53] sm:$0xff] %vm1653, %v4485
      %4585 = vst.msk [vmem:[#allocation2 + $0x5b] sm:$0xff] %vm1653, %v4487
      %4586 = vst.msk [vmem:[#allocation2 + $0x63] sm:$0xff] %vm1653, %v4489
      %4587 = vst.msk [vmem:[#allocation2 + $0x6b] sm:$0xff] %vm1653, %v4491
      %4588 = vst.msk [vmem:[#allocation2 + $0x73] sm:$0xff] %vm1653, %v4493
      %4589 = vst.msk [vmem:[#allocation2 + $0x7b] sm:$0xff] %vm1653, %v4495
      %4590 = vst.msk [vmem:[#allocation2 + $0x83] sm:$0xff] %vm1653, %v4497
      %4591 = vst.msk [vmem:[#allocation2 + $0x8b] sm:$0xff] %vm1653, %v4499
      %4592 = vst.msk [vmem:[#allocation2 + $0x93] sm:$0xff] %vm1653, %v4501
      %4593 = vst.msk [vmem:[#allocation2 + $0x9b] sm:$0xff] %vm1653, %v4503
      %4594 = vst.msk [vmem:[#allocation2 + $0xa3] sm:$0xff] %vm1653, %v4505
      %4595 = vst.msk [vmem:[#allocation2 + $0xab] sm:$0xff] %vm1653, %v4507
      %4596 = vst.msk [vmem:[#allocation2 + $0xb3] sm:$0xff] %vm1653, %v4509
      %4597 = vst.msk [vmem:[#allocation2 + $0xbb] sm:$0xff] %vm1653, %v4511
      %4598 = vst.msk [vmem:[#allocation2 + $0xc3] sm:$0xff] %vm1653, %v4513
      %4599 = vst.msk [vmem:[#allocation2 + $0xcb] sm:$0xff] %vm1653, %v4515
      %4600 = vst.msk [vmem:[#allocation2 + $0xd3] sm:$0xff] %vm1653, %v4517
      %4601 = vst.msk [vmem:[#allocation2 + $0xdb] sm:$0xff] %vm1653, %v4519
      %4602 = vst.msk [vmem:[#allocation2 + $0xe3] sm:$0xff] %vm1653, %v4521
      %4603 = vst.msk [vmem:[#allocation2 + $0xeb] sm:$0xff] %vm1653, %v4523
      %4604 = vst.msk [vmem:[#allocation2 + $0xf3] sm:$0xff] %vm1653, %v4525
      %4605 = vst.msk [vmem:[#allocation2 + $0xfb] sm:$0xff] %vm1653, %v4527
      %4606 = vst.msk [vmem:[#allocation2 + $0x103] sm:$0xff] %vm1653, %v4529
      %4607 = vst.msk [vmem:[#allocation2 + $0x10b] sm:$0xff] %vm1653, %v4531
      %4608 = vst.msk [vmem:[#allocation2 + $0x113] sm:$0xff] %vm1653, %v4533
      %4609 = vst.msk [vmem:[#allocation2 + $0x11b] sm:$0xff] %vm1653, %v4535
      %4610 = vst.msk [vmem:[#allocation2 + $0x123] sm:$0xff] %vm1653, %v4537
      %4611 = vst.msk [vmem:[#allocation2 + $0x12b] sm:$0xff] %vm1653, %v4539
      %v4612 = vld [vmem:[#allocation2] sm:$0xff]
      %v4613 = vld [vmem:[#allocation2 + $0x8] sm:$0xff]
      %v4614 = vld [vmem:[#allocation2 + $0x10] sm:$0xff]
      %v4615 = vld [vmem:[#allocation2 + $0x18] sm:$0xff]
      %v4616 = vld [vmem:[#allocation2 + $0x20] sm:$0xff]
      %v4617 = vld [vmem:[#allocation2 + $0x28] sm:$0xff]
      %v4618 = vld [vmem:[#allocation2 + $0x30] sm:$0xff]
      %v4619 = vld [vmem:[#allocation2 + $0x38] sm:$0xff]
      %v4620 = vld [vmem:[#allocation2 + $0x40] sm:$0xff]
      %v4621 = vld [vmem:[#allocation2 + $0x48] sm:$0xff]
      %v4622 = vld [vmem:[#allocation2 + $0x50] sm:$0xff]
      %v4623 = vld [vmem:[#allocation2 + $0x58] sm:$0xff]
      %v4624 = vld [vmem:[#allocation2 + $0x60] sm:$0xff]
      %v4625 = vld [vmem:[#allocation2 + $0x68] sm:$0xff]
      %v4626 = vld [vmem:[#allocation2 + $0x70] sm:$0xff]
      %v4627 = vld [vmem:[#allocation2 + $0x78] sm:$0xff]
      %v4628 = vld [vmem:[#allocation2 + $0x80] sm:$0xff]
      %v4629 = vld [vmem:[#allocation2 + $0x88] sm:$0xff]
      %v4630 = vld [vmem:[#allocation2 + $0x90] sm:$0xff]
      %v4631 = vld [vmem:[#allocation2 + $0x98] sm:$0xff]
      %v4632 = vld [vmem:[#allocation2 + $0xa0] sm:$0xff]
      %v4633 = vld [vmem:[#allocation2 + $0xa8] sm:$0xff]
      %v4634 = vld [vmem:[#allocation2 + $0xb0] sm:$0xff]
      %v4635 = vld [vmem:[#allocation2 + $0xb8] sm:$0xff]
      %v4636 = vld [vmem:[#allocation2 + $0xc0] sm:$0xff]
      %v4637 = vld [vmem:[#allocation2 + $0xc8] sm:$0xff]
      %v4638 = vld [vmem:[#allocation2 + $0xd0] sm:$0xff]
      %v4639 = vld [vmem:[#allocation2 + $0xd8] sm:$0xff]
      %v4640 = vld [vmem:[#allocation2 + $0xe0] sm:$0xff]
      %v4641 = vld [vmem:[#allocation2 + $0xe8] sm:$0xff]
      %v4642 = vld [vmem:[#allocation2 + $0xf0] sm:$0xff]
      %v4643 = vld [vmem:[#allocation2 + $0xf8] sm:$0xff]
      %v4644 = vld [vmem:[#allocation2 + $0x100] sm:$0xff]
      %v4645 = vld [vmem:[#allocation2 + $0x108] sm:$0xff]
      %v4646 = vld [vmem:[#allocation2 + $0x110] sm:$0xff]
      %v4647 = vld [vmem:[#allocation2 + $0x118] sm:$0xff]
      %v4648 = vld [vmem:[%s3] sm:$0xff]
      %v4649 = vld [vmem:[%s3 + $0x8] sm:$0xff]
      %v4650 = vld [vmem:[#allocation2 + $0x1] sm:$0xff]
      %v4651 = vld [vmem:[#allocation2 + $0x9] sm:$0xff]
      %v4652 = vld [vmem:[#allocation2 + $0x11] sm:$0xff]
      %v4653 = vld [vmem:[#allocation2 + $0x19] sm:$0xff]
      %v4654 = vld [vmem:[#allocation2 + $0x21] sm:$0xff]
      %v4655 = vld [vmem:[#allocation2 + $0x29] sm:$0xff]
      %v4656 = vld [vmem:[#allocation2 + $0x31] sm:$0xff]
      %v4657 = vld [vmem:[#allocation2 + $0x39] sm:$0xff]
      %v4658 = vld [vmem:[#allocation2 + $0x41] sm:$0xff]
      %v4659 = vld [vmem:[#allocation2 + $0x49] sm:$0xff]
      %v4660 = vld [vmem:[#allocation2 + $0x51] sm:$0xff]
      %v4661 = vld [vmem:[#allocation2 + $0x59] sm:$0xff]
      %v4662 = vld [vmem:[#allocation2 + $0x61] sm:$0xff]
      %v4663 = vld [vmem:[#allocation2 + $0x69] sm:$0xff]
      %v4664 = vld [vmem:[#allocation2 + $0x71] sm:$0xff]
      %v4665 = vld [vmem:[#allocation2 + $0x79] sm:$0xff]
      %v4666 = vld [vmem:[#allocation2 + $0x81] sm:$0xff]
      %v4667 = vld [vmem:[#allocation2 + $0x89] sm:$0xff]
      %v4668 = vld [vmem:[#allocation2 + $0x91] sm:$0xff]
      %v4669 = vld [vmem:[#allocation2 + $0x99] sm:$0xff]
      %v4670 = vld [vmem:[#allocation2 + $0xa1] sm:$0xff]
      %v4671 = vld [vmem:[#allocation2 + $0xa9] sm:$0xff]
      %v4672 = vld [vmem:[#allocation2 + $0xb1] sm:$0xff]
      %v4673 = vld [vmem:[#allocation2 + $0xb9] sm:$0xff]
      %v4674 = vld [vmem:[#allocation2 + $0xc1] sm:$0xff]
      %v4675 = vld [vmem:[#allocation2 + $0xc9] sm:$0xff]
      %v4676 = vld [vmem:[#allocation2 + $0xd1] sm:$0xff]
      %v4677 = vld [vmem:[#allocation2 + $0xd9] sm:$0xff]
      %v4678 = vld [vmem:[#allocation2 + $0xe1] sm:$0xff]
      %v4679 = vld [vmem:[#allocation2 + $0xe9] sm:$0xff]
      %v4680 = vld [vmem:[#allocation2 + $0xf1] sm:$0xff]
      %v4681 = vld [vmem:[#allocation2 + $0xf9] sm:$0xff]
      %v4682 = vld [vmem:[#allocation2 + $0x101] sm:$0xff]
      %v4683 = vld [vmem:[#allocation2 + $0x109] sm:$0xff]
      %v4684 = vld [vmem:[#allocation2 + $0x111] sm:$0xff]
      %v4685 = vld [vmem:[#allocation2 + $0x119] sm:$0xff]
      %s4686 = scalar_lea.vmem %s3, 16
      %v4687 = vld [vmem:[%s4686] sm:$0xff]
      %v4688 = vld [vmem:[%s4686 + $0x8] sm:$0xff]
      %v4690 = vsel %vm1653, %v4650, 0
      %v4693 = vsel %vm1653, %v4651, 0
      %v4696 = vsel %vm1653, %v4652, 0
      %v4699 = vsel %vm1653, %v4653, 0
      %v4702 = vsel %vm1653, %v4654, 0
      %v4705 = vsel %vm1653, %v4655, 0
      %v4708 = vsel %vm1653, %v4656, 0
      %v4711 = vsel %vm1653, %v4657, 0
      %v4714 = vsel %vm1653, %v4658, 0
      %v4717 = vsel %vm1653, %v4659, 0
      %v4720 = vsel %vm1653, %v4660, 0
      %v4723 = vsel %vm1653, %v4661, 0
      %v4726 = vsel %vm1653, %v4662, 0
      %v4729 = vsel %vm1653, %v4663, 0
      %v4732 = vsel %vm1653, %v4664, 0
      %v4735 = vsel %vm1653, %v4665, 0
      %v4738 = vsel %vm1653, %v4666, 0
      %v4741 = vsel %vm1653, %v4667, 0
      %v4744 = vsel %vm1653, %v4668, 0
      %v4747 = vsel %vm1653, %v4669, 0
      %v4750 = vsel %vm1653, %v4670, 0
      %v4753 = vsel %vm1653, %v4671, 0
      %v4756 = vsel %vm1653, %v4672, 0
      %v4759 = vsel %vm1653, %v4673, 0
      %v4762 = vsel %vm1653, %v4674, 0
      %v4765 = vsel %vm1653, %v4675, 0
      %v4768 = vsel %vm1653, %v4676, 0
      %v4771 = vsel %vm1653, %v4677, 0
      %v4774 = vsel %vm1653, %v4678, 0
      %v4777 = vsel %vm1653, %v4679, 0
      %v4780 = vsel %vm1653, %v4680, 0
      %v4783 = vsel %vm1653, %v4681, 0
      %v4786 = vsel %vm1653, %v4682, 0
      %v4789 = vsel %vm1653, %v4683, 0
      %v4792 = vsel %vm1653, %v4684, 0
      %v4795 = vsel %vm1653, %v4685, 0
      %4797 = vmatpush.msra.mxu0 0.0
      %4798 = vmatpush.msra.mxu0 0.0
      %4799 = vmatpush.msra.mxu0 0.0
      %4800 = vmatpush.msra.mxu0 0.0
      %4801 = vmatpush.msra.mxu0 0.0
      %4802 = vmatpush.msra.mxu0 0.0
      %4803 = vmatpush.msra.mxu0 0.0
      %4804 = vmatpush.msra.mxu0 0.0
      %4805 = vmatpush.msra.mxu0 0.0
      %4806 = vmatpush.msra.mxu0 0.0
      %4807 = vmatpush.msra.mxu0 0.0
      %4808 = vmatpush.msra.mxu0 0.0
      %4809 = vmatpush.msra.mxu0 0.0
      %4810 = vmatpush.msra.mxu0 0.0
      %4811 = vmatpush.msra.mxu0 %v4688
      %4812 = vmatpush.msra.mxu0 %v4687
      %4813 = vmatmul.f32.gmra.mxu0 %v4690
      %v4814 = vpop.f32.mrf.mxu0
      %v4815 = vadd.f32 0.0, %v4814
      %4816 = vmatmul.f32.gmra.mxu0 %v4693
      %v4817 = vpop.f32.mrf.mxu0
      %v4818 = vadd.f32 0.0, %v4817
      %4819 = vmatmul.f32.gmra.mxu0 %v4696
      %v4820 = vpop.f32.mrf.mxu0
      %v4821 = vadd.f32 0.0, %v4820
      %4822 = vmatmul.f32.gmra.mxu0 %v4699
      %v4823 = vpop.f32.mrf.mxu0
      %v4824 = vadd.f32 0.0, %v4823
      %4825 = vmatmul.f32.gmra.mxu0 %v4702
      %v4826 = vpop.f32.mrf.mxu0
      %v4827 = vadd.f32 0.0, %v4826
      %4828 = vmatmul.f32.gmra.mxu0 %v4705
      %v4829 = vpop.f32.mrf.mxu0
      %v4830 = vadd.f32 0.0, %v4829
      %4831 = vmatmul.f32.gmra.mxu0 %v4708
      %v4832 = vpop.f32.mrf.mxu0
      %v4833 = vadd.f32 0.0, %v4832
      %4834 = vmatmul.f32.gmra.mxu0 %v4711
      %v4835 = vpop.f32.mrf.mxu0
      %v4836 = vadd.f32 0.0, %v4835
      %4837 = vmatmul.f32.gmra.mxu0 %v4714
      %v4838 = vpop.f32.mrf.mxu0
      %v4839 = vadd.f32 0.0, %v4838
      %4840 = vmatmul.f32.gmra.mxu0 %v4717
      %v4841 = vpop.f32.mrf.mxu0
      %v4842 = vadd.f32 0.0, %v4841
      %4843 = vmatmul.f32.gmra.mxu0 %v4720
      %v4844 = vpop.f32.mrf.mxu0
      %v4845 = vadd.f32 0.0, %v4844
      %4846 = vmatmul.f32.gmra.mxu0 %v4723
      %v4847 = vpop.f32.mrf.mxu0
      %v4848 = vadd.f32 0.0, %v4847
      %4849 = vmatmul.f32.gmra.mxu0 %v4726
      %v4850 = vpop.f32.mrf.mxu0
      %v4851 = vadd.f32 0.0, %v4850
      %4852 = vmatmul.f32.gmra.mxu0 %v4729
      %v4853 = vpop.f32.mrf.mxu0
      %v4854 = vadd.f32 0.0, %v4853
      %4855 = vmatmul.f32.gmra.mxu0 %v4732
      %v4856 = vpop.f32.mrf.mxu0
      %v4857 = vadd.f32 0.0, %v4856
      %4858 = vmatmul.f32.gmra.mxu0 %v4735
      %v4859 = vpop.f32.mrf.mxu0
      %v4860 = vadd.f32 0.0, %v4859
      %4861 = vmatmul.f32.gmra.mxu0 %v4738
      %v4862 = vpop.f32.mrf.mxu0
      %v4863 = vadd.f32 0.0, %v4862
      %4864 = vmatmul.f32.gmra.mxu0 %v4741
      %v4865 = vpop.f32.mrf.mxu0
      %v4866 = vadd.f32 0.0, %v4865
      %4867 = vmatmul.f32.gmra.mxu0 %v4744
      %v4868 = vpop.f32.mrf.mxu0
      %v4869 = vadd.f32 0.0, %v4868
      %4870 = vmatmul.f32.gmra.mxu0 %v4747
      %v4871 = vpop.f32.mrf.mxu0
      %v4872 = vadd.f32 0.0, %v4871
      %4873 = vmatmul.f32.gmra.mxu0 %v4750
      %v4874 = vpop.f32.mrf.mxu0
      %v4875 = vadd.f32 0.0, %v4874
      %4876 = vmatmul.f32.gmra.mxu0 %v4753
      %v4877 = vpop.f32.mrf.mxu0
      %v4878 = vadd.f32 0.0, %v4877
      %4879 = vmatmul.f32.gmra.mxu0 %v4756
      %v4880 = vpop.f32.mrf.mxu0
      %v4881 = vadd.f32 0.0, %v4880
      %4882 = vmatmul.f32.gmra.mxu0 %v4759
      %v4883 = vpop.f32.mrf.mxu0
      %v4884 = vadd.f32 0.0, %v4883
      %4885 = vmatmul.f32.gmra.mxu0 %v4762
      %v4886 = vpop.f32.mrf.mxu0
      %v4887 = vadd.f32 0.0, %v4886
      %4888 = vmatmul.f32.gmra.mxu0 %v4765
      %v4889 = vpop.f32.mrf.mxu0
      %v4890 = vadd.f32 0.0, %v4889
      %4891 = vmatmul.f32.gmra.mxu0 %v4768
      %v4892 = vpop.f32.mrf.mxu0
      %v4893 = vadd.f32 0.0, %v4892
      %4894 = vmatmul.f32.gmra.mxu0 %v4771
      %v4895 = vpop.f32.mrf.mxu0
      %v4896 = vadd.f32 0.0, %v4895
      %4897 = vmatmul.f32.gmra.mxu0 %v4774
      %v4898 = vpop.f32.mrf.mxu0
      %v4899 = vadd.f32 0.0, %v4898
      %4900 = vmatmul.f32.gmra.mxu0 %v4777
      %v4901 = vpop.f32.mrf.mxu0
      %v4902 = vadd.f32 0.0, %v4901
      %4903 = vmatmul.f32.gmra.mxu0 %v4780
      %v4904 = vpop.f32.mrf.mxu0
      %v4905 = vadd.f32 0.0, %v4904
      %4906 = vmatmul.f32.gmra.mxu0 %v4783
      %v4907 = vpop.f32.mrf.mxu0
      %v4908 = vadd.f32 0.0, %v4907
      %4909 = vmatmul.f32.gmra.mxu0 %v4786
      %v4910 = vpop.f32.mrf.mxu0
      %v4911 = vadd.f32 0.0, %v4910
      %4912 = vmatmul.f32.gmra.mxu0 %v4789
      %v4913 = vpop.f32.mrf.mxu0
      %v4914 = vadd.f32 0.0, %v4913
      %4915 = vmatmul.f32.gmra.mxu0 %v4792
      %v4916 = vpop.f32.mrf.mxu0
      %v4917 = vadd.f32 0.0, %v4916
      %4918 = vmatmul.f32.gmra.mxu0 %v4795
      %v4919 = vpop.f32.mrf.mxu0
      %v4920 = vadd.f32 0.0, %v4919
      %4921 = vdwg.mxu0
      %v4923 = vsel %vm1653, %v4612, 0
      %v4926 = vsel %vm1653, %v4613, 0
      %v4929 = vsel %vm1653, %v4614, 0
      %v4932 = vsel %vm1653, %v4615, 0
      %v4935 = vsel %vm1653, %v4616, 0
      %v4938 = vsel %vm1653, %v4617, 0
      %v4941 = vsel %vm1653, %v4618, 0
      %v4944 = vsel %vm1653, %v4619, 0
      %v4947 = vsel %vm1653, %v4620, 0
      %v4950 = vsel %vm1653, %v4621, 0
      %v4953 = vsel %vm1653, %v4622, 0
      %v4956 = vsel %vm1653, %v4623, 0
      %v4959 = vsel %vm1653, %v4624, 0
      %v4962 = vsel %vm1653, %v4625, 0
      %v4965 = vsel %vm1653, %v4626, 0
      %v4968 = vsel %vm1653, %v4627, 0
      %v4971 = vsel %vm1653, %v4628, 0
      %v4974 = vsel %vm1653, %v4629, 0
      %v4977 = vsel %vm1653, %v4630, 0
      %v4980 = vsel %vm1653, %v4631, 0
      %v4983 = vsel %vm1653, %v4632, 0
      %v4986 = vsel %vm1653, %v4633, 0
      %v4989 = vsel %vm1653, %v4634, 0
      %v4992 = vsel %vm1653, %v4635, 0
      %v4995 = vsel %vm1653, %v4636, 0
      %v4998 = vsel %vm1653, %v4637, 0
      %v5001 = vsel %vm1653, %v4638, 0
      %v5004 = vsel %vm1653, %v4639, 0
      %v5007 = vsel %vm1653, %v4640, 0
      %v5010 = vsel %vm1653, %v4641, 0
      %v5013 = vsel %vm1653, %v4642, 0
      %v5016 = vsel %vm1653, %v4643, 0
      %v5019 = vsel %vm1653, %v4644, 0
      %v5022 = vsel %vm1653, %v4645, 0
      %v5025 = vsel %vm1653, %v4646, 0
      %v5028 = vsel %vm1653, %v4647, 0
      %5030 = vmatpush.msra.mxu0 0.0
      %5031 = vmatpush.msra.mxu0 0.0
      %5032 = vmatpush.msra.mxu0 0.0
      %5033 = vmatpush.msra.mxu0 0.0
      %5034 = vmatpush.msra.mxu0 0.0
      %5035 = vmatpush.msra.mxu0 0.0
      %5036 = vmatpush.msra.mxu0 0.0
      %5037 = vmatpush.msra.mxu0 0.0
      %5038 = vmatpush.msra.mxu0 0.0
      %5039 = vmatpush.msra.mxu0 0.0
      %5040 = vmatpush.msra.mxu0 0.0
      %5041 = vmatpush.msra.mxu0 0.0
      %5042 = vmatpush.msra.mxu0 0.0
      %5043 = vmatpush.msra.mxu0 0.0
      %5044 = vmatpush.msra.mxu0 %v4649
      %5045 = vmatpush.msra.mxu0 %v4648
      %5046 = vmatmul.f32.gmra.mxu0 %v4923
      %v5047 = vpop.f32.mrf.mxu0
      %v5048 = vadd.f32 %v4815, %v5047
      %5049 = vmatmul.f32.gmra.mxu0 %v4926
      %v5050 = vpop.f32.mrf.mxu0
      %v5051 = vadd.f32 %v4818, %v5050
      %5052 = vmatmul.f32.gmra.mxu0 %v4929
      %v5053 = vpop.f32.mrf.mxu0
      %v5054 = vadd.f32 %v4821, %v5053
      %5055 = vmatmul.f32.gmra.mxu0 %v4932
      %v5056 = vpop.f32.mrf.mxu0
      %v5057 = vadd.f32 %v4824, %v5056
      %5058 = vmatmul.f32.gmra.mxu0 %v4935
      %v5059 = vpop.f32.mrf.mxu0
      %v5060 = vadd.f32 %v4827, %v5059
      %5061 = vmatmul.f32.gmra.mxu0 %v4938
      %v5062 = vpop.f32.mrf.mxu0
      %v5063 = vadd.f32 %v4830, %v5062
      %5064 = vmatmul.f32.gmra.mxu0 %v4941
      %v5065 = vpop.f32.mrf.mxu0
      %v5066 = vadd.f32 %v4833, %v5065
      %5067 = vmatmul.f32.gmra.mxu0 %v4944
      %v5068 = vpop.f32.mrf.mxu0
      %v5069 = vadd.f32 %v4836, %v5068
      %5070 = vmatmul.f32.gmra.mxu0 %v4947
      %v5071 = vpop.f32.mrf.mxu0
      %v5072 = vadd.f32 %v4839, %v5071
      %5073 = vmatmul.f32.gmra.mxu0 %v4950
      %v5074 = vpop.f32.mrf.mxu0
      %v5075 = vadd.f32 %v4842, %v5074
      %5076 = vmatmul.f32.gmra.mxu0 %v4953
      %v5077 = vpop.f32.mrf.mxu0
      %v5078 = vadd.f32 %v4845, %v5077
      %5079 = vmatmul.f32.gmra.mxu0 %v4956
      %v5080 = vpop.f32.mrf.mxu0
      %v5081 = vadd.f32 %v4848, %v5080
      %5082 = vmatmul.f32.gmra.mxu0 %v4959
      %v5083 = vpop.f32.mrf.mxu0
      %v5084 = vadd.f32 %v4851, %v5083
      %5085 = vmatmul.f32.gmra.mxu0 %v4962
      %v5086 = vpop.f32.mrf.mxu0
      %v5087 = vadd.f32 %v4854, %v5086
      %5088 = vmatmul.f32.gmra.mxu0 %v4965
      %v5089 = vpop.f32.mrf.mxu0
      %v5090 = vadd.f32 %v4857, %v5089
      %5091 = vmatmul.f32.gmra.mxu0 %v4968
      %v5092 = vpop.f32.mrf.mxu0
      %v5093 = vadd.f32 %v4860, %v5092
      %5094 = vmatmul.f32.gmra.mxu0 %v4971
      %v5095 = vpop.f32.mrf.mxu0
      %v5096 = vadd.f32 %v4863, %v5095
      %5097 = vmatmul.f32.gmra.mxu0 %v4974
      %v5098 = vpop.f32.mrf.mxu0
      %v5099 = vadd.f32 %v4866, %v5098
      %5100 = vmatmul.f32.gmra.mxu0 %v4977
      %v5101 = vpop.f32.mrf.mxu0
      %v5102 = vadd.f32 %v4869, %v5101
      %5103 = vmatmul.f32.gmra.mxu0 %v4980
      %v5104 = vpop.f32.mrf.mxu0
      %v5105 = vadd.f32 %v4872, %v5104
      %5106 = vmatmul.f32.gmra.mxu0 %v4983
      %v5107 = vpop.f32.mrf.mxu0
      %v5108 = vadd.f32 %v4875, %v5107
      %5109 = vmatmul.f32.gmra.mxu0 %v4986
      %v5110 = vpop.f32.mrf.mxu0
      %v5111 = vadd.f32 %v4878, %v5110
      %5112 = vmatmul.f32.gmra.mxu0 %v4989
      %v5113 = vpop.f32.mrf.mxu0
      %v5114 = vadd.f32 %v4881, %v5113
      %5115 = vmatmul.f32.gmra.mxu0 %v4992
      %v5116 = vpop.f32.mrf.mxu0
      %v5117 = vadd.f32 %v4884, %v5116
      %5118 = vmatmul.f32.gmra.mxu0 %v4995
      %v5119 = vpop.f32.mrf.mxu0
      %v5120 = vadd.f32 %v4887, %v5119
      %5121 = vmatmul.f32.gmra.mxu0 %v4998
      %v5122 = vpop.f32.mrf.mxu0
      %v5123 = vadd.f32 %v4890, %v5122
      %5124 = vmatmul.f32.gmra.mxu0 %v5001
      %v5125 = vpop.f32.mrf.mxu0
      %v5126 = vadd.f32 %v4893, %v5125
      %5127 = vmatmul.f32.gmra.mxu0 %v5004
      %v5128 = vpop.f32.mrf.mxu0
      %v5129 = vadd.f32 %v4896, %v5128
      %5130 = vmatmul.f32.gmra.mxu0 %v5007
      %v5131 = vpop.f32.mrf.mxu0
      %v5132 = vadd.f32 %v4899, %v5131
      %5133 = vmatmul.f32.gmra.mxu0 %v5010
      %v5134 = vpop.f32.mrf.mxu0
      %v5135 = vadd.f32 %v4902, %v5134
      %5136 = vmatmul.f32.gmra.mxu0 %v5013
      %v5137 = vpop.f32.mrf.mxu0
      %v5138 = vadd.f32 %v4905, %v5137
      %5139 = vmatmul.f32.gmra.mxu0 %v5016
      %v5140 = vpop.f32.mrf.mxu0
      %v5141 = vadd.f32 %v4908, %v5140
      %5142 = vmatmul.f32.gmra.mxu0 %v5019
      %v5143 = vpop.f32.mrf.mxu0
      %v5144 = vadd.f32 %v4911, %v5143
      %5145 = vmatmul.f32.gmra.mxu0 %v5022
      %v5146 = vpop.f32.mrf.mxu0
      %v5147 = vadd.f32 %v4914, %v5146
      %5148 = vmatmul.f32.gmra.mxu0 %v5025
      %v5149 = vpop.f32.mrf.mxu0
      %v5150 = vadd.f32 %v4917, %v5149
      %5151 = vmatmul.f32.gmra.mxu0 %v5028
      %v5152 = vpop.f32.mrf.mxu0
      %v5153 = vadd.f32 %v4920, %v5152
      %5154 = vdwg.mxu0
      %v5155 = vld [vmem:[#allocation2 + $0x2] sm:$0xff]
      %v5156 = vld [vmem:[#allocation2 + $0xa] sm:$0xff]
      %v5157 = vld [vmem:[#allocation2 + $0x12] sm:$0xff]
      %v5158 = vld [vmem:[#allocation2 + $0x1a] sm:$0xff]
      %v5159 = vld [vmem:[#allocation2 + $0x22] sm:$0xff]
      %v5160 = vld [vmem:[#allocation2 + $0x2a] sm:$0xff]
      %v5161 = vld [vmem:[#allocation2 + $0x32] sm:$0xff]
      %v5162 = vld [vmem:[#allocation2 + $0x3a] sm:$0xff]
      %v5163 = vld [vmem:[#allocation2 + $0x42] sm:$0xff]
      %v5164 = vld [vmem:[#allocation2 + $0x4a] sm:$0xff]
      %v5165 = vld [vmem:[#allocation2 + $0x52] sm:$0xff]
      %v5166 = vld [vmem:[#allocation2 + $0x5a] sm:$0xff]
      %v5167 = vld [vmem:[#allocation2 + $0x62] sm:$0xff]
      %v5168 = vld [vmem:[#allocation2 + $0x6a] sm:$0xff]
      %v5169 = vld [vmem:[#allocation2 + $0x72] sm:$0xff]
      %v5170 = vld [vmem:[#allocation2 + $0x7a] sm:$0xff]
      %v5171 = vld [vmem:[#allocation2 + $0x82] sm:$0xff]
      %v5172 = vld [vmem:[#allocation2 + $0x8a] sm:$0xff]
      %v5173 = vld [vmem:[#allocation2 + $0x92] sm:$0xff]
      %v5174 = vld [vmem:[#allocation2 + $0x9a] sm:$0xff]
      %v5175 = vld [vmem:[#allocation2 + $0xa2] sm:$0xff]
      %v5176 = vld [vmem:[#allocation2 + $0xaa] sm:$0xff]
      %v5177 = vld [vmem:[#allocation2 + $0xb2] sm:$0xff]
      %v5178 = vld [vmem:[#allocation2 + $0xba] sm:$0xff]
      %v5179 = vld [vmem:[#allocation2 + $0xc2] sm:$0xff]
      %v5180 = vld [vmem:[#allocation2 + $0xca] sm:$0xff]
      %v5181 = vld [vmem:[#allocation2 + $0xd2] sm:$0xff]
      %v5182 = vld [vmem:[#allocation2 + $0xda] sm:$0xff]
      %v5183 = vld [vmem:[#allocation2 + $0xe2] sm:$0xff]
      %v5184 = vld [vmem:[#allocation2 + $0xea] sm:$0xff]
      %v5185 = vld [vmem:[#allocation2 + $0xf2] sm:$0xff]
      %v5186 = vld [vmem:[#allocation2 + $0xfa] sm:$0xff]
      %v5187 = vld [vmem:[#allocation2 + $0x102] sm:$0xff]
      %v5188 = vld [vmem:[#allocation2 + $0x10a] sm:$0xff]
      %v5189 = vld [vmem:[#allocation2 + $0x112] sm:$0xff]
      %v5190 = vld [vmem:[#allocation2 + $0x11a] sm:$0xff]
      %s5191 = scalar_lea.vmem %s3, 32
      %v5192 = vld [vmem:[%s5191] sm:$0xff]
      %v5193 = vld [vmem:[%s5191 + $0x8] sm:$0xff]
      %v5195 = vsel %vm1653, %v5155, 0
      %v5198 = vsel %vm1653, %v5156, 0
      %v5201 = vsel %vm1653, %v5157, 0
      %v5204 = vsel %vm1653, %v5158, 0
      %v5207 = vsel %vm1653, %v5159, 0
      %v5210 = vsel %vm1653, %v5160, 0
      %v5213 = vsel %vm1653, %v5161, 0
      %v5216 = vsel %vm1653, %v5162, 0
      %v5219 = vsel %vm1653, %v5163, 0
      %v5222 = vsel %vm1653, %v5164, 0
      %v5225 = vsel %vm1653, %v5165, 0
      %v5228 = vsel %vm1653, %v5166, 0
      %v5231 = vsel %vm1653, %v5167, 0
      %v5234 = vsel %vm1653, %v5168, 0
      %v5237 = vsel %vm1653, %v5169, 0
      %v5240 = vsel %vm1653, %v5170, 0
      %v5243 = vsel %vm1653, %v5171, 0
      %v5246 = vsel %vm1653, %v5172, 0
      %v5249 = vsel %vm1653, %v5173, 0
      %v5252 = vsel %vm1653, %v5174, 0
      %v5255 = vsel %vm1653, %v5175, 0
      %v5258 = vsel %vm1653, %v5176, 0
      %v5261 = vsel %vm1653, %v5177, 0
      %v5264 = vsel %vm1653, %v5178, 0
      %v5267 = vsel %vm1653, %v5179, 0
      %v5270 = vsel %vm1653, %v5180, 0
      %v5273 = vsel %vm1653, %v5181, 0
      %v5276 = vsel %vm1653, %v5182, 0
      %v5279 = vsel %vm1653, %v5183, 0
      %v5282 = vsel %vm1653, %v5184, 0
      %v5285 = vsel %vm1653, %v5185, 0
      %v5288 = vsel %vm1653, %v5186, 0
      %v5291 = vsel %vm1653, %v5187, 0
      %v5294 = vsel %vm1653, %v5188, 0
      %v5297 = vsel %vm1653, %v5189, 0
      %v5300 = vsel %vm1653, %v5190, 0
      %5302 = vmatpush.msra.mxu0 0.0
      %5303 = vmatpush.msra.mxu0 0.0
      %5304 = vmatpush.msra.mxu0 0.0
      %5305 = vmatpush.msra.mxu0 0.0
      %5306 = vmatpush.msra.mxu0 0.0
      %5307 = vmatpush.msra.mxu0 0.0
      %5308 = vmatpush.msra.mxu0 0.0
      %5309 = vmatpush.msra.mxu0 0.0
      %5310 = vmatpush.msra.mxu0 0.0
      %5311 = vmatpush.msra.mxu0 0.0
      %5312 = vmatpush.msra.mxu0 0.0
      %5313 = vmatpush.msra.mxu0 0.0
      %5314 = vmatpush.msra.mxu0 0.0
      %5315 = vmatpush.msra.mxu0 0.0
      %5316 = vmatpush.msra.mxu0 %v5193
      %5317 = vmatpush.msra.mxu0 %v5192
      %5318 = vmatmul.f32.gmra.mxu0 %v5195
      %v5319 = vpop.f32.mrf.mxu0
      %v5320 = vadd.f32 0.0, %v5319
      %5321 = vmatmul.f32.gmra.mxu0 %v5198
      %v5322 = vpop.f32.mrf.mxu0
      %v5323 = vadd.f32 0.0, %v5322
      %5324 = vmatmul.f32.gmra.mxu0 %v5201
      %v5325 = vpop.f32.mrf.mxu0
      %v5326 = vadd.f32 0.0, %v5325
      %5327 = vmatmul.f32.gmra.mxu0 %v5204
      %v5328 = vpop.f32.mrf.mxu0
      %v5329 = vadd.f32 0.0, %v5328
      %5330 = vmatmul.f32.gmra.mxu0 %v5207
      %v5331 = vpop.f32.mrf.mxu0
      %v5332 = vadd.f32 0.0, %v5331
      %5333 = vmatmul.f32.gmra.mxu0 %v5210
      %v5334 = vpop.f32.mrf.mxu0
      %v5335 = vadd.f32 0.0, %v5334
      %5336 = vmatmul.f32.gmra.mxu0 %v5213
      %v5337 = vpop.f32.mrf.mxu0
      %v5338 = vadd.f32 0.0, %v5337
      %5339 = vmatmul.f32.gmra.mxu0 %v5216
      %v5340 = vpop.f32.mrf.mxu0
      %v5341 = vadd.f32 0.0, %v5340
      %5342 = vmatmul.f32.gmra.mxu0 %v5219
      %v5343 = vpop.f32.mrf.mxu0
      %v5344 = vadd.f32 0.0, %v5343
      %5345 = vmatmul.f32.gmra.mxu0 %v5222
      %v5346 = vpop.f32.mrf.mxu0
      %v5347 = vadd.f32 0.0, %v5346
      %5348 = vmatmul.f32.gmra.mxu0 %v5225
      %v5349 = vpop.f32.mrf.mxu0
      %v5350 = vadd.f32 0.0, %v5349
      %5351 = vmatmul.f32.gmra.mxu0 %v5228
      %v5352 = vpop.f32.mrf.mxu0
      %v5353 = vadd.f32 0.0, %v5352
      %5354 = vmatmul.f32.gmra.mxu0 %v5231
      %v5355 = vpop.f32.mrf.mxu0
      %v5356 = vadd.f32 0.0, %v5355
      %5357 = vmatmul.f32.gmra.mxu0 %v5234
      %v5358 = vpop.f32.mrf.mxu0
      %v5359 = vadd.f32 0.0, %v5358
      %5360 = vmatmul.f32.gmra.mxu0 %v5237
      %v5361 = vpop.f32.mrf.mxu0
      %v5362 = vadd.f32 0.0, %v5361
      %5363 = vmatmul.f32.gmra.mxu0 %v5240
      %v5364 = vpop.f32.mrf.mxu0
      %v5365 = vadd.f32 0.0, %v5364
      %5366 = vmatmul.f32.gmra.mxu0 %v5243
      %v5367 = vpop.f32.mrf.mxu0
      %v5368 = vadd.f32 0.0, %v5367
      %5369 = vmatmul.f32.gmra.mxu0 %v5246
      %v5370 = vpop.f32.mrf.mxu0
      %v5371 = vadd.f32 0.0, %v5370
      %5372 = vmatmul.f32.gmra.mxu0 %v5249
      %v5373 = vpop.f32.mrf.mxu0
      %v5374 = vadd.f32 0.0, %v5373
      %5375 = vmatmul.f32.gmra.mxu0 %v5252
      %v5376 = vpop.f32.mrf.mxu0
      %v5377 = vadd.f32 0.0, %v5376
      %5378 = vmatmul.f32.gmra.mxu0 %v5255
      %v5379 = vpop.f32.mrf.mxu0
      %v5380 = vadd.f32 0.0, %v5379
      %5381 = vmatmul.f32.gmra.mxu0 %v5258
      %v5382 = vpop.f32.mrf.mxu0
      %v5383 = vadd.f32 0.0, %v5382
      %5384 = vmatmul.f32.gmra.mxu0 %v5261
      %v5385 = vpop.f32.mrf.mxu0
      %v5386 = vadd.f32 0.0, %v5385
      %5387 = vmatmul.f32.gmra.mxu0 %v5264
      %v5388 = vpop.f32.mrf.mxu0
      %v5389 = vadd.f32 0.0, %v5388
      %5390 = vmatmul.f32.gmra.mxu0 %v5267
      %v5391 = vpop.f32.mrf.mxu0
      %v5392 = vadd.f32 0.0, %v5391
      %5393 = vmatmul.f32.gmra.mxu0 %v5270
      %v5394 = vpop.f32.mrf.mxu0
      %v5395 = vadd.f32 0.0, %v5394
      %5396 = vmatmul.f32.gmra.mxu0 %v5273
      %v5397 = vpop.f32.mrf.mxu0
      %v5398 = vadd.f32 0.0, %v5397
      %5399 = vmatmul.f32.gmra.mxu0 %v5276
      %v5400 = vpop.f32.mrf.mxu0
      %v5401 = vadd.f32 0.0, %v5400
      %5402 = vmatmul.f32.gmra.mxu0 %v5279
      %v5403 = vpop.f32.mrf.mxu0
      %v5404 = vadd.f32 0.0, %v5403
      %5405 = vmatmul.f32.gmra.mxu0 %v5282
      %v5406 = vpop.f32.mrf.mxu0
      %v5407 = vadd.f32 0.0, %v5406
      %5408 = vmatmul.f32.gmra.mxu0 %v5285
      %v5409 = vpop.f32.mrf.mxu0
      %v5410 = vadd.f32 0.0, %v5409
      %5411 = vmatmul.f32.gmra.mxu0 %v5288
      %v5412 = vpop.f32.mrf.mxu0
      %v5413 = vadd.f32 0.0, %v5412
      %5414 = vmatmul.f32.gmra.mxu0 %v5291
      %v5415 = vpop.f32.mrf.mxu0
      %v5416 = vadd.f32 0.0, %v5415
      %5417 = vmatmul.f32.gmra.mxu0 %v5294
      %v5418 = vpop.f32.mrf.mxu0
      %v5419 = vadd.f32 0.0, %v5418
      %5420 = vmatmul.f32.gmra.mxu0 %v5297
      %v5421 = vpop.f32.mrf.mxu0
      %v5422 = vadd.f32 0.0, %v5421
      %5423 = vmatmul.f32.gmra.mxu0 %v5300
      %v5424 = vpop.f32.mrf.mxu0
      %v5425 = vadd.f32 0.0, %v5424
      %5426 = vdwg.mxu0
      %v5427 = vadd.f32 %v5048, %v5320
      %v5428 = vadd.f32 %v5051, %v5323
      %v5429 = vadd.f32 %v5054, %v5326
      %v5430 = vadd.f32 %v5057, %v5329
      %v5431 = vadd.f32 %v5060, %v5332
      %v5432 = vadd.f32 %v5063, %v5335
      %v5433 = vadd.f32 %v5066, %v5338
      %v5434 = vadd.f32 %v5069, %v5341
      %v5435 = vadd.f32 %v5072, %v5344
      %v5436 = vadd.f32 %v5075, %v5347
      %v5437 = vadd.f32 %v5078, %v5350
      %v5438 = vadd.f32 %v5081, %v5353
      %v5439 = vadd.f32 %v5084, %v5356
      %v5440 = vadd.f32 %v5087, %v5359
      %v5441 = vadd.f32 %v5090, %v5362
      %v5442 = vadd.f32 %v5093, %v5365
      %v5443 = vadd.f32 %v5096, %v5368
      %v5444 = vadd.f32 %v5099, %v5371
      %v5445 = vadd.f32 %v5102, %v5374
      %v5446 = vadd.f32 %v5105, %v5377
      %v5447 = vadd.f32 %v5108, %v5380
      %v5448 = vadd.f32 %v5111, %v5383
      %v5449 = vadd.f32 %v5114, %v5386
      %v5450 = vadd.f32 %v5117, %v5389
      %v5451 = vadd.f32 %v5120, %v5392
      %v5452 = vadd.f32 %v5123, %v5395
      %v5453 = vadd.f32 %v5126, %v5398
      %v5454 = vadd.f32 %v5129, %v5401
      %v5455 = vadd.f32 %v5132, %v5404
      %v5456 = vadd.f32 %v5135, %v5407
      %v5457 = vadd.f32 %v5138, %v5410
      %v5458 = vadd.f32 %v5141, %v5413
      %v5459 = vadd.f32 %v5144, %v5416
      %v5460 = vadd.f32 %v5147, %v5419
      %v5461 = vadd.f32 %v5150, %v5422
      %v5462 = vadd.f32 %v5153, %v5425
      %v5463 = vld [vmem:[#allocation2 + $0x12] sm:$0xff]
      %v5464 = vld [vmem:[#allocation2 + $0x1a] sm:$0xff]
      %v5465 = vld [vmem:[#allocation2 + $0x22] sm:$0xff]
      %v5466 = vld [vmem:[#allocation2 + $0x2a] sm:$0xff]
      %v5467 = vld [vmem:[#allocation2 + $0x32] sm:$0xff]
      %v5468 = vld [vmem:[#allocation2 + $0x3a] sm:$0xff]
      %v5469 = vld [vmem:[#allocation2 + $0x42] sm:$0xff]
      %v5470 = vld [vmem:[#allocation2 + $0x4a] sm:$0xff]
      %v5471 = vld [vmem:[#allocation2 + $0x52] sm:$0xff]
      %v5472 = vld [vmem:[#allocation2 + $0x5a] sm:$0xff]
      %v5473 = vld [vmem:[#allocation2 + $0x62] sm:$0xff]
      %v5474 = vld [vmem:[#allocation2 + $0x6a] sm:$0xff]
      %v5475 = vld [vmem:[#allocation2 + $0x72] sm:$0xff]
      %v5476 = vld [vmem:[#allocation2 + $0x7a] sm:$0xff]
      %v5477 = vld [vmem:[#allocation2 + $0x82] sm:$0xff]
      %v5478 = vld [vmem:[#allocation2 + $0x8a] sm:$0xff]
      %v5479 = vld [vmem:[#allocation2 + $0x92] sm:$0xff]
      %v5480 = vld [vmem:[#allocation2 + $0x9a] sm:$0xff]
      %v5481 = vld [vmem:[#allocation2 + $0xa2] sm:$0xff]
      %v5482 = vld [vmem:[#allocation2 + $0xaa] sm:$0xff]
      %v5483 = vld [vmem:[#allocation2 + $0xb2] sm:$0xff]
      %v5484 = vld [vmem:[#allocation2 + $0xba] sm:$0xff]
      %v5485 = vld [vmem:[#allocation2 + $0xc2] sm:$0xff]
      %v5486 = vld [vmem:[#allocation2 + $0xca] sm:$0xff]
      %v5487 = vld [vmem:[#allocation2 + $0xd2] sm:$0xff]
      %v5488 = vld [vmem:[#allocation2 + $0xda] sm:$0xff]
      %v5489 = vld [vmem:[#allocation2 + $0xe2] sm:$0xff]
      %v5490 = vld [vmem:[#allocation2 + $0xea] sm:$0xff]
      %v5491 = vld [vmem:[#allocation2 + $0xf2] sm:$0xff]
      %v5492 = vld [vmem:[#allocation2 + $0xfa] sm:$0xff]
      %v5493 = vld [vmem:[#allocation2 + $0x102] sm:$0xff]
      %v5494 = vld [vmem:[#allocation2 + $0x10a] sm:$0xff]
      %v5495 = vld [vmem:[#allocation2 + $0x112] sm:$0xff]
      %v5496 = vld [vmem:[#allocation2 + $0x11a] sm:$0xff]
      %v5497 = vld [vmem:[#allocation2 + $0x122] sm:$0xff]
      %v5498 = vld [vmem:[#allocation2 + $0x12a] sm:$0xff]
      %s5499 = scalar_lea.vmem %s3, 48
      %v5500 = vld [vmem:[%s5499] sm:$0xff]
      %v5501 = vld [vmem:[%s5499 + $0x8] sm:$0xff]
      %v5503 = vsel %vm1653, %v5463, 0
      %v5506 = vsel %vm1653, %v5464, 0
      %v5509 = vsel %vm1653, %v5465, 0
      %v5512 = vsel %vm1653, %v5466, 0
      %v5515 = vsel %vm1653, %v5467, 0
      %v5518 = vsel %vm1653, %v5468, 0
      %v5521 = vsel %vm1653, %v5469, 0
      %v5524 = vsel %vm1653, %v5470, 0
      %v5527 = vsel %vm1653, %v5471, 0
      %v5530 = vsel %vm1653, %v5472, 0
      %v5533 = vsel %vm1653, %v5473, 0
      %v5536 = vsel %vm1653, %v5474, 0
      %v5539 = vsel %vm1653, %v5475, 0
      %v5542 = vsel %vm1653, %v5476, 0
      %v5545 = vsel %vm1653, %v5477, 0
      %v5548 = vsel %vm1653, %v5478, 0
      %v5551 = vsel %vm1653, %v5479, 0
      %v5554 = vsel %vm1653, %v5480, 0
      %v5557 = vsel %vm1653, %v5481, 0
      %v5560 = vsel %vm1653, %v5482, 0
      %v5563 = vsel %vm1653, %v5483, 0
      %v5566 = vsel %vm1653, %v5484, 0
      %v5569 = vsel %vm1653, %v5485, 0
      %v5572 = vsel %vm1653, %v5486, 0
      %v5575 = vsel %vm1653, %v5487, 0
      %v5578 = vsel %vm1653, %v5488, 0
      %v5581 = vsel %vm1653, %v5489, 0
      %v5584 = vsel %vm1653, %v5490, 0
      %v5587 = vsel %vm1653, %v5491, 0
      %v5590 = vsel %vm1653, %v5492, 0
      %v5593 = vsel %vm1653, %v5493, 0
      %v5596 = vsel %vm1653, %v5494, 0
      %v5599 = vsel %vm1653, %v5495, 0
      %v5602 = vsel %vm1653, %v5496, 0
      %v5605 = vsel %vm1653, %v5497, 0
      %v5608 = vsel %vm1653, %v5498, 0
      %5610 = vmatpush.msra.mxu0 0.0
      %5611 = vmatpush.msra.mxu0 0.0
      %5612 = vmatpush.msra.mxu0 0.0
      %5613 = vmatpush.msra.mxu0 0.0
      %5614 = vmatpush.msra.mxu0 0.0
      %5615 = vmatpush.msra.mxu0 0.0
      %5616 = vmatpush.msra.mxu0 0.0
      %5617 = vmatpush.msra.mxu0 0.0
      %5618 = vmatpush.msra.mxu0 0.0
      %5619 = vmatpush.msra.mxu0 0.0
      %5620 = vmatpush.msra.mxu0 0.0
      %5621 = vmatpush.msra.mxu0 0.0
      %5622 = vmatpush.msra.mxu0 0.0
      %5623 = vmatpush.msra.mxu0 0.0
      %5624 = vmatpush.msra.mxu0 %v5501
      %5625 = vmatpush.msra.mxu0 %v5500
      %5626 = vmatmul.f32.gmra.mxu0 %v5503
      %v5627 = vpop.f32.mrf.mxu0
      %v5628 = vadd.f32 0.0, %v5627
      %5629 = vmatmul.f32.gmra.mxu0 %v5506
      %v5630 = vpop.f32.mrf.mxu0
      %v5631 = vadd.f32 0.0, %v5630
      %5632 = vmatmul.f32.gmra.mxu0 %v5509
      %v5633 = vpop.f32.mrf.mxu0
      %v5634 = vadd.f32 0.0, %v5633
      %5635 = vmatmul.f32.gmra.mxu0 %v5512
      %v5636 = vpop.f32.mrf.mxu0
      %v5637 = vadd.f32 0.0, %v5636
      %5638 = vmatmul.f32.gmra.mxu0 %v5515
      %v5639 = vpop.f32.mrf.mxu0
      %v5640 = vadd.f32 0.0, %v5639
      %5641 = vmatmul.f32.gmra.mxu0 %v5518
      %v5642 = vpop.f32.mrf.mxu0
      %v5643 = vadd.f32 0.0, %v5642
      %5644 = vmatmul.f32.gmra.mxu0 %v5521
      %v5645 = vpop.f32.mrf.mxu0
      %v5646 = vadd.f32 0.0, %v5645
      %5647 = vmatmul.f32.gmra.mxu0 %v5524
      %v5648 = vpop.f32.mrf.mxu0
      %v5649 = vadd.f32 0.0, %v5648
      %5650 = vmatmul.f32.gmra.mxu0 %v5527
      %v5651 = vpop.f32.mrf.mxu0
      %v5652 = vadd.f32 0.0, %v5651
      %5653 = vmatmul.f32.gmra.mxu0 %v5530
      %v5654 = vpop.f32.mrf.mxu0
      %v5655 = vadd.f32 0.0, %v5654
      %5656 = vmatmul.f32.gmra.mxu0 %v5533
      %v5657 = vpop.f32.mrf.mxu0
      %v5658 = vadd.f32 0.0, %v5657
      %5659 = vmatmul.f32.gmra.mxu0 %v5536
      %v5660 = vpop.f32.mrf.mxu0
      %v5661 = vadd.f32 0.0, %v5660
      %5662 = vmatmul.f32.gmra.mxu0 %v5539
      %v5663 = vpop.f32.mrf.mxu0
      %v5664 = vadd.f32 0.0, %v5663
      %5665 = vmatmul.f32.gmra.mxu0 %v5542
      %v5666 = vpop.f32.mrf.mxu0
      %v5667 = vadd.f32 0.0, %v5666
      %5668 = vmatmul.f32.gmra.mxu0 %v5545
      %v5669 = vpop.f32.mrf.mxu0
      %v5670 = vadd.f32 0.0, %v5669
      %5671 = vmatmul.f32.gmra.mxu0 %v5548
      %v5672 = vpop.f32.mrf.mxu0
      %v5673 = vadd.f32 0.0, %v5672
      %5674 = vmatmul.f32.gmra.mxu0 %v5551
      %v5675 = vpop.f32.mrf.mxu0
      %v5676 = vadd.f32 0.0, %v5675
      %5677 = vmatmul.f32.gmra.mxu0 %v5554
      %v5678 = vpop.f32.mrf.mxu0
      %v5679 = vadd.f32 0.0, %v5678
      %5680 = vmatmul.f32.gmra.mxu0 %v5557
      %v5681 = vpop.f32.mrf.mxu0
      %v5682 = vadd.f32 0.0, %v5681
      %5683 = vmatmul.f32.gmra.mxu0 %v5560
      %v5684 = vpop.f32.mrf.mxu0
      %v5685 = vadd.f32 0.0, %v5684
      %5686 = vmatmul.f32.gmra.mxu0 %v5563
      %v5687 = vpop.f32.mrf.mxu0
      %v5688 = vadd.f32 0.0, %v5687
      %5689 = vmatmul.f32.gmra.mxu0 %v5566
      %v5690 = vpop.f32.mrf.mxu0
      %v5691 = vadd.f32 0.0, %v5690
      %5692 = vmatmul.f32.gmra.mxu0 %v5569
      %v5693 = vpop.f32.mrf.mxu0
      %v5694 = vadd.f32 0.0, %v5693
      %5695 = vmatmul.f32.gmra.mxu0 %v5572
      %v5696 = vpop.f32.mrf.mxu0
      %v5697 = vadd.f32 0.0, %v5696
      %5698 = vmatmul.f32.gmra.mxu0 %v5575
      %v5699 = vpop.f32.mrf.mxu0
      %v5700 = vadd.f32 0.0, %v5699
      %5701 = vmatmul.f32.gmra.mxu0 %v5578
      %v5702 = vpop.f32.mrf.mxu0
      %v5703 = vadd.f32 0.0, %v5702
      %5704 = vmatmul.f32.gmra.mxu0 %v5581
      %v5705 = vpop.f32.mrf.mxu0
      %v5706 = vadd.f32 0.0, %v5705
      %5707 = vmatmul.f32.gmra.mxu0 %v5584
      %v5708 = vpop.f32.mrf.mxu0
      %v5709 = vadd.f32 0.0, %v5708
      %5710 = vmatmul.f32.gmra.mxu0 %v5587
      %v5711 = vpop.f32.mrf.mxu0
      %v5712 = vadd.f32 0.0, %v5711
      %5713 = vmatmul.f32.gmra.mxu0 %v5590
      %v5714 = vpop.f32.mrf.mxu0
      %v5715 = vadd.f32 0.0, %v5714
      %5716 = vmatmul.f32.gmra.mxu0 %v5593
      %v5717 = vpop.f32.mrf.mxu0
      %v5718 = vadd.f32 0.0, %v5717
      %5719 = vmatmul.f32.gmra.mxu0 %v5596
      %v5720 = vpop.f32.mrf.mxu0
      %v5721 = vadd.f32 0.0, %v5720
      %5722 = vmatmul.f32.gmra.mxu0 %v5599
      %v5723 = vpop.f32.mrf.mxu0
      %v5724 = vadd.f32 0.0, %v5723
      %5725 = vmatmul.f32.gmra.mxu0 %v5602
      %v5726 = vpop.f32.mrf.mxu0
      %v5727 = vadd.f32 0.0, %v5726
      %5728 = vmatmul.f32.gmra.mxu0 %v5605
      %v5729 = vpop.f32.mrf.mxu0
      %v5730 = vadd.f32 0.0, %v5729
      %5731 = vmatmul.f32.gmra.mxu0 %v5608
      %v5732 = vpop.f32.mrf.mxu0
      %v5733 = vadd.f32 0.0, %v5732
      %5734 = vdwg.mxu0
      %v5735 = vadd.f32 %v5427, %v5628
      %v5736 = vadd.f32 %v5428, %v5631
      %v5737 = vadd.f32 %v5429, %v5634
      %v5738 = vadd.f32 %v5430, %v5637
      %v5739 = vadd.f32 %v5431, %v5640
      %v5740 = vadd.f32 %v5432, %v5643
      %v5741 = vadd.f32 %v5433, %v5646
      %v5742 = vadd.f32 %v5434, %v5649
      %v5743 = vadd.f32 %v5435, %v5652
      %v5744 = vadd.f32 %v5436, %v5655
      %v5745 = vadd.f32 %v5437, %v5658
      %v5746 = vadd.f32 %v5438, %v5661
      %v5747 = vadd.f32 %v5439, %v5664
      %v5748 = vadd.f32 %v5440, %v5667
      %v5749 = vadd.f32 %v5441, %v5670
      %v5750 = vadd.f32 %v5442, %v5673
      %v5751 = vadd.f32 %v5443, %v5676
      %v5752 = vadd.f32 %v5444, %v5679
      %v5753 = vadd.f32 %v5445, %v5682
      %v5754 = vadd.f32 %v5446, %v5685
      %v5755 = vadd.f32 %v5447, %v5688
      %v5756 = vadd.f32 %v5448, %v5691
      %v5757 = vadd.f32 %v5449, %v5694
      %v5758 = vadd.f32 %v5450, %v5697
      %v5759 = vadd.f32 %v5451, %v5700
      %v5760 = vadd.f32 %v5452, %v5703
      %v5761 = vadd.f32 %v5453, %v5706
      %v5762 = vadd.f32 %v5454, %v5709
      %v5763 = vadd.f32 %v5455, %v5712
      %v5764 = vadd.f32 %v5456, %v5715
      %v5765 = vadd.f32 %v5457, %v5718
      %v5766 = vadd.f32 %v5458, %v5721
      %v5767 = vadd.f32 %v5459, %v5724
      %v5768 = vadd.f32 %v5460, %v5727
      %v5769 = vadd.f32 %v5461, %v5730
      %v5770 = vadd.f32 %v5462, %v5733
      %v5771 = vld [vmem:[#allocation2 + $0x13] sm:$0xff]
      %v5772 = vld [vmem:[#allocation2 + $0x1b] sm:$0xff]
      %v5773 = vld [vmem:[#allocation2 + $0x23] sm:$0xff]
      %v5774 = vld [vmem:[#allocation2 + $0x2b] sm:$0xff]
      %v5775 = vld [vmem:[#allocation2 + $0x33] sm:$0xff]
      %v5776 = vld [vmem:[#allocation2 + $0x3b] sm:$0xff]
      %v5777 = vld [vmem:[#allocation2 + $0x43] sm:$0xff]
      %v5778 = vld [vmem:[#allocation2 + $0x4b] sm:$0xff]
      %v5779 = vld [vmem:[#allocation2 + $0x53] sm:$0xff]
      %v5780 = vld [vmem:[#allocation2 + $0x5b] sm:$0xff]
      %v5781 = vld [vmem:[#allocation2 + $0x63] sm:$0xff]
      %v5782 = vld [vmem:[#allocation2 + $0x6b] sm:$0xff]
      %v5783 = vld [vmem:[#allocation2 + $0x73] sm:$0xff]
      %v5784 = vld [vmem:[#allocation2 + $0x7b] sm:$0xff]
      %v5785 = vld [vmem:[#allocation2 + $0x83] sm:$0xff]
      %v5786 = vld [vmem:[#allocation2 + $0x8b] sm:$0xff]
      %v5787 = vld [vmem:[#allocation2 + $0x93] sm:$0xff]
      %v5788 = vld [vmem:[#allocation2 + $0x9b] sm:$0xff]
      %v5789 = vld [vmem:[#allocation2 + $0xa3] sm:$0xff]
      %v5790 = vld [vmem:[#allocation2 + $0xab] sm:$0xff]
      %v5791 = vld [vmem:[#allocation2 + $0xb3] sm:$0xff]
      %v5792 = vld [vmem:[#allocation2 + $0xbb] sm:$0xff]
      %v5793 = vld [vmem:[#allocation2 + $0xc3] sm:$0xff]
      %v5794 = vld [vmem:[#allocation2 + $0xcb] sm:$0xff]
      %v5795 = vld [vmem:[#allocation2 + $0xd3] sm:$0xff]
      %v5796 = vld [vmem:[#allocation2 + $0xdb] sm:$0xff]
      %v5797 = vld [vmem:[#allocation2 + $0xe3] sm:$0xff]
      %v5798 = vld [vmem:[#allocation2 + $0xeb] sm:$0xff]
      %v5799 = vld [vmem:[#allocation2 + $0xf3] sm:$0xff]
      %v5800 = vld [vmem:[#allocation2 + $0xfb] sm:$0xff]
      %v5801 = vld [vmem:[#allocation2 + $0x103] sm:$0xff]
      %v5802 = vld [vmem:[#allocation2 + $0x10b] sm:$0xff]
      %v5803 = vld [vmem:[#allocation2 + $0x113] sm:$0xff]
      %v5804 = vld [vmem:[#allocation2 + $0x11b] sm:$0xff]
      %v5805 = vld [vmem:[#allocation2 + $0x123] sm:$0xff]
      %v5806 = vld [vmem:[#allocation2 + $0x12b] sm:$0xff]
      %s5807 = scalar_lea.vmem %s3, 64
      %v5808 = vld [vmem:[%s5807] sm:$0xff]
      %v5809 = vld [vmem:[%s5807 + $0x8] sm:$0xff]
      %v5811 = vsel %vm1653, %v5771, 0
      %v5814 = vsel %vm1653, %v5772, 0
      %v5817 = vsel %vm1653, %v5773, 0
      %v5820 = vsel %vm1653, %v5774, 0
      %v5823 = vsel %vm1653, %v5775, 0
      %v5826 = vsel %vm1653, %v5776, 0
      %v5829 = vsel %vm1653, %v5777, 0
      %v5832 = vsel %vm1653, %v5778, 0
      %v5835 = vsel %vm1653, %v5779, 0
      %v5838 = vsel %vm1653, %v5780, 0
      %v5841 = vsel %vm1653, %v5781, 0
      %v5844 = vsel %vm1653, %v5782, 0
      %v5847 = vsel %vm1653, %v5783, 0
      %v5850 = vsel %vm1653, %v5784, 0
      %v5853 = vsel %vm1653, %v5785, 0
      %v5856 = vsel %vm1653, %v5786, 0
      %v5859 = vsel %vm1653, %v5787, 0
      %v5862 = vsel %vm1653, %v5788, 0
      %v5865 = vsel %vm1653, %v5789, 0
      %v5868 = vsel %vm1653, %v5790, 0
      %v5871 = vsel %vm1653, %v5791, 0
      %v5874 = vsel %vm1653, %v5792, 0
      %v5877 = vsel %vm1653, %v5793, 0
      %v5880 = vsel %vm1653, %v5794, 0
      %v5883 = vsel %vm1653, %v5795, 0
      %v5886 = vsel %vm1653, %v5796, 0
      %v5889 = vsel %vm1653, %v5797, 0
      %v5892 = vsel %vm1653, %v5798, 0
      %v5895 = vsel %vm1653, %v5799, 0
      %v5898 = vsel %vm1653, %v5800, 0
      %v5901 = vsel %vm1653, %v5801, 0
      %v5904 = vsel %vm1653, %v5802, 0
      %v5907 = vsel %vm1653, %v5803, 0
      %v5910 = vsel %vm1653, %v5804, 0
      %v5913 = vsel %vm1653, %v5805, 0
      %v5916 = vsel %vm1653, %v5806, 0
      %5918 = vmatpush.msra.mxu0 0.0
      %5919 = vmatpush.msra.mxu0 0.0
      %5920 = vmatpush.msra.mxu0 0.0
      %5921 = vmatpush.msra.mxu0 0.0
      %5922 = vmatpush.msra.mxu0 0.0
      %5923 = vmatpush.msra.mxu0 0.0
      %5924 = vmatpush.msra.mxu0 0.0
      %5925 = vmatpush.msra.mxu0 0.0
      %5926 = vmatpush.msra.mxu0 0.0
      %5927 = vmatpush.msra.mxu0 0.0
      %5928 = vmatpush.msra.mxu0 0.0
      %5929 = vmatpush.msra.mxu0 0.0
      %5930 = vmatpush.msra.mxu0 0.0
      %5931 = vmatpush.msra.mxu0 0.0
      %5932 = vmatpush.msra.mxu0 %v5809
      %5933 = vmatpush.msra.mxu0 %v5808
      %5934 = vmatmul.f32.gmra.mxu0 %v5811
      %v5935 = vpop.f32.mrf.mxu0
      %v5936 = vadd.f32 0.0, %v5935
      %5937 = vmatmul.f32.gmra.mxu0 %v5814
      %v5938 = vpop.f32.mrf.mxu0
      %v5939 = vadd.f32 0.0, %v5938
      %5940 = vmatmul.f32.gmra.mxu0 %v5817
      %v5941 = vpop.f32.mrf.mxu0
      %v5942 = vadd.f32 0.0, %v5941
      %5943 = vmatmul.f32.gmra.mxu0 %v5820
      %v5944 = vpop.f32.mrf.mxu0
      %v5945 = vadd.f32 0.0, %v5944
      %5946 = vmatmul.f32.gmra.mxu0 %v5823
      %v5947 = vpop.f32.mrf.mxu0
      %v5948 = vadd.f32 0.0, %v5947
      %5949 = vmatmul.f32.gmra.mxu0 %v5826
      %v5950 = vpop.f32.mrf.mxu0
      %v5951 = vadd.f32 0.0, %v5950
      %5952 = vmatmul.f32.gmra.mxu0 %v5829
      %v5953 = vpop.f32.mrf.mxu0
      %v5954 = vadd.f32 0.0, %v5953
      %5955 = vmatmul.f32.gmra.mxu0 %v5832
      %v5956 = vpop.f32.mrf.mxu0
      %v5957 = vadd.f32 0.0, %v5956
      %5958 = vmatmul.f32.gmra.mxu0 %v5835
      %v5959 = vpop.f32.mrf.mxu0
      %v5960 = vadd.f32 0.0, %v5959
      %5961 = vmatmul.f32.gmra.mxu0 %v5838
      %v5962 = vpop.f32.mrf.mxu0
      %v5963 = vadd.f32 0.0, %v5962
      %5964 = vmatmul.f32.gmra.mxu0 %v5841
      %v5965 = vpop.f32.mrf.mxu0
      %v5966 = vadd.f32 0.0, %v5965
      %5967 = vmatmul.f32.gmra.mxu0 %v5844
      %v5968 = vpop.f32.mrf.mxu0
      %v5969 = vadd.f32 0.0, %v5968
      %5970 = vmatmul.f32.gmra.mxu0 %v5847
      %v5971 = vpop.f32.mrf.mxu0
      %v5972 = vadd.f32 0.0, %v5971
      %5973 = vmatmul.f32.gmra.mxu0 %v5850
      %v5974 = vpop.f32.mrf.mxu0
      %v5975 = vadd.f32 0.0, %v5974
      %5976 = vmatmul.f32.gmra.mxu0 %v5853
      %v5977 = vpop.f32.mrf.mxu0
      %v5978 = vadd.f32 0.0, %v5977
      %5979 = vmatmul.f32.gmra.mxu0 %v5856
      %v5980 = vpop.f32.mrf.mxu0
      %v5981 = vadd.f32 0.0, %v5980
      %5982 = vmatmul.f32.gmra.mxu0 %v5859
      %v5983 = vpop.f32.mrf.mxu0
      %v5984 = vadd.f32 0.0, %v5983
      %5985 = vmatmul.f32.gmra.mxu0 %v5862
      %v5986 = vpop.f32.mrf.mxu0
      %v5987 = vadd.f32 0.0, %v5986
      %5988 = vmatmul.f32.gmra.mxu0 %v5865
      %v5989 = vpop.f32.mrf.mxu0
      %v5990 = vadd.f32 0.0, %v5989
      %5991 = vmatmul.f32.gmra.mxu0 %v5868
      %v5992 = vpop.f32.mrf.mxu0
      %v5993 = vadd.f32 0.0, %v5992
      %5994 = vmatmul.f32.gmra.mxu0 %v5871
      %v5995 = vpop.f32.mrf.mxu0
      %v5996 = vadd.f32 0.0, %v5995
      %5997 = vmatmul.f32.gmra.mxu0 %v5874
      %v5998 = vpop.f32.mrf.mxu0
      %v5999 = vadd.f32 0.0, %v5998
      %6000 = vmatmul.f32.gmra.mxu0 %v5877
      %v6001 = vpop.f32.mrf.mxu0
      %v6002 = vadd.f32 0.0, %v6001
      %6003 = vmatmul.f32.gmra.mxu0 %v5880
      %v6004 = vpop.f32.mrf.mxu0
      %v6005 = vadd.f32 0.0, %v6004
      %6006 = vmatmul.f32.gmra.mxu0 %v5883
      %v6007 = vpop.f32.mrf.mxu0
      %v6008 = vadd.f32 0.0, %v6007
      %6009 = vmatmul.f32.gmra.mxu0 %v5886
      %v6010 = vpop.f32.mrf.mxu0
      %v6011 = vadd.f32 0.0, %v6010
      %6012 = vmatmul.f32.gmra.mxu0 %v5889
      %v6013 = vpop.f32.mrf.mxu0
      %v6014 = vadd.f32 0.0, %v6013
      %6015 = vmatmul.f32.gmra.mxu0 %v5892
      %v6016 = vpop.f32.mrf.mxu0
      %v6017 = vadd.f32 0.0, %v6016
      %6018 = vmatmul.f32.gmra.mxu0 %v5895
      %v6019 = vpop.f32.mrf.mxu0
      %v6020 = vadd.f32 0.0, %v6019
      %6021 = vmatmul.f32.gmra.mxu0 %v5898
      %v6022 = vpop.f32.mrf.mxu0
      %v6023 = vadd.f32 0.0, %v6022
      %6024 = vmatmul.f32.gmra.mxu0 %v5901
      %v6025 = vpop.f32.mrf.mxu0
      %v6026 = vadd.f32 0.0, %v6025
      %6027 = vmatmul.f32.gmra.mxu0 %v5904
      %v6028 = vpop.f32.mrf.mxu0
      %v6029 = vadd.f32 0.0, %v6028
      %6030 = vmatmul.f32.gmra.mxu0 %v5907
      %v6031 = vpop.f32.mrf.mxu0
      %v6032 = vadd.f32 0.0, %v6031
      %6033 = vmatmul.f32.gmra.mxu0 %v5910
      %v6034 = vpop.f32.mrf.mxu0
      %v6035 = vadd.f32 0.0, %v6034
      %6036 = vmatmul.f32.gmra.mxu0 %v5913
      %v6037 = vpop.f32.mrf.mxu0
      %v6038 = vadd.f32 0.0, %v6037
      %6039 = vmatmul.f32.gmra.mxu0 %v5916
      %v6040 = vpop.f32.mrf.mxu0
      %v6041 = vadd.f32 0.0, %v6040
      %6042 = vdwg.mxu0
      %v6043 = vadd.f32 %v5735, %v5936
      %v6044 = vadd.f32 %v5736, %v5939
      %v6045 = vadd.f32 %v5737, %v5942
      %v6046 = vadd.f32 %v5738, %v5945
      %v6047 = vadd.f32 %v5739, %v5948
      %v6048 = vadd.f32 %v5740, %v5951
      %v6049 = vadd.f32 %v5741, %v5954
      %v6050 = vadd.f32 %v5742, %v5957
      %v6051 = vadd.f32 %v5743, %v5960
      %v6052 = vadd.f32 %v5744, %v5963
      %v6053 = vadd.f32 %v5745, %v5966
      %v6054 = vadd.f32 %v5746, %v5969
      %v6055 = vadd.f32 %v5747, %v5972
      %v6056 = vadd.f32 %v5748, %v5975
      %v6057 = vadd.f32 %v5749, %v5978
      %v6058 = vadd.f32 %v5750, %v5981
      %v6059 = vadd.f32 %v5751, %v5984
      %v6060 = vadd.f32 %v5752, %v5987
      %v6061 = vadd.f32 %v5753, %v5990
      %v6062 = vadd.f32 %v5754, %v5993
      %v6063 = vadd.f32 %v5755, %v5996
      %v6064 = vadd.f32 %v5756, %v5999
      %v6065 = vadd.f32 %v5757, %v6002
      %v6066 = vadd.f32 %v5758, %v6005
      %v6067 = vadd.f32 %v5759, %v6008
      %v6068 = vadd.f32 %v5760, %v6011
      %v6069 = vadd.f32 %v5761, %v6014
      %v6070 = vadd.f32 %v5762, %v6017
      %v6071 = vadd.f32 %v5763, %v6020
      %v6072 = vadd.f32 %v5764, %v6023
      %v6073 = vadd.f32 %v5765, %v6026
      %v6074 = vadd.f32 %v5766, %v6029
      %v6075 = vadd.f32 %v5767, %v6032
      %v6076 = vadd.f32 %v5768, %v6035
      %v6077 = vadd.f32 %v5769, %v6038
      %v6078 = vadd.f32 %v5770, %v6041
      %v6079 = vld [vmem:[#allocation2 + $0x14] sm:$0xff]
      %v6080 = vld [vmem:[#allocation2 + $0x1c] sm:$0xff]
      %v6081 = vld [vmem:[#allocation2 + $0x24] sm:$0xff]
      %v6082 = vld [vmem:[#allocation2 + $0x2c] sm:$0xff]
      %v6083 = vld [vmem:[#allocation2 + $0x34] sm:$0xff]
      %v6084 = vld [vmem:[#allocation2 + $0x3c] sm:$0xff]
      %v6085 = vld [vmem:[#allocation2 + $0x44] sm:$0xff]
      %v6086 = vld [vmem:[#allocation2 + $0x4c] sm:$0xff]
      %v6087 = vld [vmem:[#allocation2 + $0x54] sm:$0xff]
      %v6088 = vld [vmem:[#allocation2 + $0x5c] sm:$0xff]
      %v6089 = vld [vmem:[#allocation2 + $0x64] sm:$0xff]
      %v6090 = vld [vmem:[#allocation2 + $0x6c] sm:$0xff]
      %v6091 = vld [vmem:[#allocation2 + $0x74] sm:$0xff]
      %v6092 = vld [vmem:[#allocation2 + $0x7c] sm:$0xff]
      %v6093 = vld [vmem:[#allocation2 + $0x84] sm:$0xff]
      %v6094 = vld [vmem:[#allocation2 + $0x8c] sm:$0xff]
      %v6095 = vld [vmem:[#allocation2 + $0x94] sm:$0xff]
      %v6096 = vld [vmem:[#allocation2 + $0x9c] sm:$0xff]
      %v6097 = vld [vmem:[#allocation2 + $0xa4] sm:$0xff]
      %v6098 = vld [vmem:[#allocation2 + $0xac] sm:$0xff]
      %v6099 = vld [vmem:[#allocation2 + $0xb4] sm:$0xff]
      %v6100 = vld [vmem:[#allocation2 + $0xbc] sm:$0xff]
      %v6101 = vld [vmem:[#allocation2 + $0xc4] sm:$0xff]
      %v6102 = vld [vmem:[#allocation2 + $0xcc] sm:$0xff]
      %v6103 = vld [vmem:[#allocation2 + $0xd4] sm:$0xff]
      %v6104 = vld [vmem:[#allocation2 + $0xdc] sm:$0xff]
      %v6105 = vld [vmem:[#allocation2 + $0xe4] sm:$0xff]
      %v6106 = vld [vmem:[#allocation2 + $0xec] sm:$0xff]
      %v6107 = vld [vmem:[#allocation2 + $0xf4] sm:$0xff]
      %v6108 = vld [vmem:[#allocation2 + $0xfc] sm:$0xff]
      %v6109 = vld [vmem:[#allocation2 + $0x104] sm:$0xff]
      %v6110 = vld [vmem:[#allocation2 + $0x10c] sm:$0xff]
      %v6111 = vld [vmem:[#allocation2 + $0x114] sm:$0xff]
      %v6112 = vld [vmem:[#allocation2 + $0x11c] sm:$0xff]
      %v6113 = vld [vmem:[#allocation2 + $0x124] sm:$0xff]
      %v6114 = vld [vmem:[#allocation2 + $0x12c] sm:$0xff]
      %s6115 = scalar_lea.vmem %s3, 80
      %v6116 = vld [vmem:[%s6115] sm:$0xff]
      %v6117 = vld [vmem:[%s6115 + $0x8] sm:$0xff]
      %v6119 = vsel %vm1653, %v6079, 0
      %v6122 = vsel %vm1653, %v6080, 0
      %v6125 = vsel %vm1653, %v6081, 0
      %v6128 = vsel %vm1653, %v6082, 0
      %v6131 = vsel %vm1653, %v6083, 0
      %v6134 = vsel %vm1653, %v6084, 0
      %v6137 = vsel %vm1653, %v6085, 0
      %v6140 = vsel %vm1653, %v6086, 0
      %v6143 = vsel %vm1653, %v6087, 0
      %v6146 = vsel %vm1653, %v6088, 0
      %v6149 = vsel %vm1653, %v6089, 0
      %v6152 = vsel %vm1653, %v6090, 0
      %v6155 = vsel %vm1653, %v6091, 0
      %v6158 = vsel %vm1653, %v6092, 0
      %v6161 = vsel %vm1653, %v6093, 0
      %v6164 = vsel %vm1653, %v6094, 0
      %v6167 = vsel %vm1653, %v6095, 0
      %v6170 = vsel %vm1653, %v6096, 0
      %v6173 = vsel %vm1653, %v6097, 0
      %v6176 = vsel %vm1653, %v6098, 0
      %v6179 = vsel %vm1653, %v6099, 0
      %v6182 = vsel %vm1653, %v6100, 0
      %v6185 = vsel %vm1653, %v6101, 0
      %v6188 = vsel %vm1653, %v6102, 0
      %v6191 = vsel %vm1653, %v6103, 0
      %v6194 = vsel %vm1653, %v6104, 0
      %v6197 = vsel %vm1653, %v6105, 0
      %v6200 = vsel %vm1653, %v6106, 0
      %v6203 = vsel %vm1653, %v6107, 0
      %v6206 = vsel %vm1653, %v6108, 0
      %v6209 = vsel %vm1653, %v6109, 0
      %v6212 = vsel %vm1653, %v6110, 0
      %v6215 = vsel %vm1653, %v6111, 0
      %v6218 = vsel %vm1653, %v6112, 0
      %v6221 = vsel %vm1653, %v6113, 0
      %v6224 = vsel %vm1653, %v6114, 0
      %6226 = vmatpush.msra.mxu0 0.0
      %6227 = vmatpush.msra.mxu0 0.0
      %6228 = vmatpush.msra.mxu0 0.0
      %6229 = vmatpush.msra.mxu0 0.0
      %6230 = vmatpush.msra.mxu0 0.0
      %6231 = vmatpush.msra.mxu0 0.0
      %6232 = vmatpush.msra.mxu0 0.0
      %6233 = vmatpush.msra.mxu0 0.0
      %6234 = vmatpush.msra.mxu0 0.0
      %6235 = vmatpush.msra.mxu0 0.0
      %6236 = vmatpush.msra.mxu0 0.0
      %6237 = vmatpush.msra.mxu0 0.0
      %6238 = vmatpush.msra.mxu0 0.0
      %6239 = vmatpush.msra.mxu0 0.0
      %6240 = vmatpush.msra.mxu0 %v6117
      %6241 = vmatpush.msra.mxu0 %v6116
      %6242 = vmatmul.f32.gmra.mxu0 %v6119
      %v6243 = vpop.f32.mrf.mxu0
      %v6244 = vadd.f32 0.0, %v6243
      %6245 = vmatmul.f32.gmra.mxu0 %v6122
      %v6246 = vpop.f32.mrf.mxu0
      %v6247 = vadd.f32 0.0, %v6246
      %6248 = vmatmul.f32.gmra.mxu0 %v6125
      %v6249 = vpop.f32.mrf.mxu0
      %v6250 = vadd.f32 0.0, %v6249
      %6251 = vmatmul.f32.gmra.mxu0 %v6128
      %v6252 = vpop.f32.mrf.mxu0
      %v6253 = vadd.f32 0.0, %v6252
      %6254 = vmatmul.f32.gmra.mxu0 %v6131
      %v6255 = vpop.f32.mrf.mxu0
      %v6256 = vadd.f32 0.0, %v6255
      %6257 = vmatmul.f32.gmra.mxu0 %v6134
      %v6258 = vpop.f32.mrf.mxu0
      %v6259 = vadd.f32 0.0, %v6258
      %6260 = vmatmul.f32.gmra.mxu0 %v6137
      %v6261 = vpop.f32.mrf.mxu0
      %v6262 = vadd.f32 0.0, %v6261
      %6263 = vmatmul.f32.gmra.mxu0 %v6140
      %v6264 = vpop.f32.mrf.mxu0
      %v6265 = vadd.f32 0.0, %v6264
      %6266 = vmatmul.f32.gmra.mxu0 %v6143
      %v6267 = vpop.f32.mrf.mxu0
      %v6268 = vadd.f32 0.0, %v6267
      %6269 = vmatmul.f32.gmra.mxu0 %v6146
      %v6270 = vpop.f32.mrf.mxu0
      %v6271 = vadd.f32 0.0, %v6270
      %6272 = vmatmul.f32.gmra.mxu0 %v6149
      %v6273 = vpop.f32.mrf.mxu0
      %v6274 = vadd.f32 0.0, %v6273
      %6275 = vmatmul.f32.gmra.mxu0 %v6152
      %v6276 = vpop.f32.mrf.mxu0
      %v6277 = vadd.f32 0.0, %v6276
      %6278 = vmatmul.f32.gmra.mxu0 %v6155
      %v6279 = vpop.f32.mrf.mxu0
      %v6280 = vadd.f32 0.0, %v6279
      %6281 = vmatmul.f32.gmra.mxu0 %v6158
      %v6282 = vpop.f32.mrf.mxu0
      %v6283 = vadd.f32 0.0, %v6282
      %6284 = vmatmul.f32.gmra.mxu0 %v6161
      %v6285 = vpop.f32.mrf.mxu0
      %v6286 = vadd.f32 0.0, %v6285
      %6287 = vmatmul.f32.gmra.mxu0 %v6164
      %v6288 = vpop.f32.mrf.mxu0
      %v6289 = vadd.f32 0.0, %v6288
      %6290 = vmatmul.f32.gmra.mxu0 %v6167
      %v6291 = vpop.f32.mrf.mxu0
      %v6292 = vadd.f32 0.0, %v6291
      %6293 = vmatmul.f32.gmra.mxu0 %v6170
      %v6294 = vpop.f32.mrf.mxu0
      %v6295 = vadd.f32 0.0, %v6294
      %6296 = vmatmul.f32.gmra.mxu0 %v6173
      %v6297 = vpop.f32.mrf.mxu0
      %v6298 = vadd.f32 0.0, %v6297
      %6299 = vmatmul.f32.gmra.mxu0 %v6176
      %v6300 = vpop.f32.mrf.mxu0
      %v6301 = vadd.f32 0.0, %v6300
      %6302 = vmatmul.f32.gmra.mxu0 %v6179
      %v6303 = vpop.f32.mrf.mxu0
      %v6304 = vadd.f32 0.0, %v6303
      %6305 = vmatmul.f32.gmra.mxu0 %v6182
      %v6306 = vpop.f32.mrf.mxu0
      %v6307 = vadd.f32 0.0, %v6306
      %6308 = vmatmul.f32.gmra.mxu0 %v6185
      %v6309 = vpop.f32.mrf.mxu0
      %v6310 = vadd.f32 0.0, %v6309
      %6311 = vmatmul.f32.gmra.mxu0 %v6188
      %v6312 = vpop.f32.mrf.mxu0
      %v6313 = vadd.f32 0.0, %v6312
      %6314 = vmatmul.f32.gmra.mxu0 %v6191
      %v6315 = vpop.f32.mrf.mxu0
      %v6316 = vadd.f32 0.0, %v6315
      %6317 = vmatmul.f32.gmra.mxu0 %v6194
      %v6318 = vpop.f32.mrf.mxu0
      %v6319 = vadd.f32 0.0, %v6318
      %6320 = vmatmul.f32.gmra.mxu0 %v6197
      %v6321 = vpop.f32.mrf.mxu0
      %v6322 = vadd.f32 0.0, %v6321
      %6323 = vmatmul.f32.gmra.mxu0 %v6200
      %v6324 = vpop.f32.mrf.mxu0
      %v6325 = vadd.f32 0.0, %v6324
      %6326 = vmatmul.f32.gmra.mxu0 %v6203
      %v6327 = vpop.f32.mrf.mxu0
      %v6328 = vadd.f32 0.0, %v6327
      %6329 = vmatmul.f32.gmra.mxu0 %v6206
      %v6330 = vpop.f32.mrf.mxu0
      %v6331 = vadd.f32 0.0, %v6330
      %6332 = vmatmul.f32.gmra.mxu0 %v6209
      %v6333 = vpop.f32.mrf.mxu0
      %v6334 = vadd.f32 0.0, %v6333
      %6335 = vmatmul.f32.gmra.mxu0 %v6212
      %v6336 = vpop.f32.mrf.mxu0
      %v6337 = vadd.f32 0.0, %v6336
      %6338 = vmatmul.f32.gmra.mxu0 %v6215
      %v6339 = vpop.f32.mrf.mxu0
      %v6340 = vadd.f32 0.0, %v6339
      %6341 = vmatmul.f32.gmra.mxu0 %v6218
      %v6342 = vpop.f32.mrf.mxu0
      %v6343 = vadd.f32 0.0, %v6342
      %6344 = vmatmul.f32.gmra.mxu0 %v6221
      %v6345 = vpop.f32.mrf.mxu0
      %v6346 = vadd.f32 0.0, %v6345
      %6347 = vmatmul.f32.gmra.mxu0 %v6224
      %v6348 = vpop.f32.mrf.mxu0
      %v6349 = vadd.f32 0.0, %v6348
      %6350 = vdwg.mxu0
      %v6351 = vadd.f32 %v6043, %v6244
      %v6352 = vadd.f32 %v6044, %v6247
      %v6353 = vadd.f32 %v6045, %v6250
      %v6354 = vadd.f32 %v6046, %v6253
      %v6355 = vadd.f32 %v6047, %v6256
      %v6356 = vadd.f32 %v6048, %v6259
      %v6357 = vadd.f32 %v6049, %v6262
      %v6358 = vadd.f32 %v6050, %v6265
      %v6359 = vadd.f32 %v6051, %v6268
      %v6360 = vadd.f32 %v6052, %v6271
      %v6361 = vadd.f32 %v6053, %v6274
      %v6362 = vadd.f32 %v6054, %v6277
      %v6363 = vadd.f32 %v6055, %v6280
      %v6364 = vadd.f32 %v6056, %v6283
      %v6365 = vadd.f32 %v6057, %v6286
      %v6366 = vadd.f32 %v6058, %v6289
      %v6367 = vadd.f32 %v6059, %v6292
      %v6368 = vadd.f32 %v6060, %v6295
      %v6369 = vadd.f32 %v6061, %v6298
      %v6370 = vadd.f32 %v6062, %v6301
      %v6371 = vadd.f32 %v6063, %v6304
      %v6372 = vadd.f32 %v6064, %v6307
      %v6373 = vadd.f32 %v6065, %v6310
      %v6374 = vadd.f32 %v6066, %v6313
      %v6375 = vadd.f32 %v6067, %v6316
      %v6376 = vadd.f32 %v6068, %v6319
      %v6377 = vadd.f32 %v6069, %v6322
      %v6378 = vadd.f32 %v6070, %v6325
      %v6379 = vadd.f32 %v6071, %v6328
      %v6380 = vadd.f32 %v6072, %v6331
      %v6381 = vadd.f32 %v6073, %v6334
      %v6382 = vadd.f32 %v6074, %v6337
      %v6383 = vadd.f32 %v6075, %v6340
      %v6384 = vadd.f32 %v6076, %v6343
      %v6385 = vadd.f32 %v6077, %v6346
      %v6386 = vadd.f32 %v6078, %v6349
      %v6387 = vld [vmem:[#allocation2 + $0x24] sm:$0xff]
      %v6388 = vld [vmem:[#allocation2 + $0x2c] sm:$0xff]
      %v6389 = vld [vmem:[#allocation2 + $0x34] sm:$0xff]
      %v6390 = vld [vmem:[#allocation2 + $0x3c] sm:$0xff]
      %v6391 = vld [vmem:[#allocation2 + $0x44] sm:$0xff]
      %v6392 = vld [vmem:[#allocation2 + $0x4c] sm:$0xff]
      %v6393 = vld [vmem:[#allocation2 + $0x54] sm:$0xff]
      %v6394 = vld [vmem:[#allocation2 + $0x5c] sm:$0xff]
      %v6395 = vld [vmem:[#allocation2 + $0x64] sm:$0xff]
      %v6396 = vld [vmem:[#allocation2 + $0x6c] sm:$0xff]
      %v6397 = vld [vmem:[#allocation2 + $0x74] sm:$0xff]
      %v6398 = vld [vmem:[#allocation2 + $0x7c] sm:$0xff]
      %v6399 = vld [vmem:[#allocation2 + $0x84] sm:$0xff]
      %v6400 = vld [vmem:[#allocation2 + $0x8c] sm:$0xff]
      %v6401 = vld [vmem:[#allocation2 + $0x94] sm:$0xff]
      %v6402 = vld [vmem:[#allocation2 + $0x9c] sm:$0xff]
      %v6403 = vld [vmem:[#allocation2 + $0xa4] sm:$0xff]
      %v6404 = vld [vmem:[#allocation2 + $0xac] sm:$0xff]
      %v6405 = vld [vmem:[#allocation2 + $0xb4] sm:$0xff]
      %v6406 = vld [vmem:[#allocation2 + $0xbc] sm:$0xff]
      %v6407 = vld [vmem:[#allocation2 + $0xc4] sm:$0xff]
      %v6408 = vld [vmem:[#allocation2 + $0xcc] sm:$0xff]
      %v6409 = vld [vmem:[#allocation2 + $0xd4] sm:$0xff]
      %v6410 = vld [vmem:[#allocation2 + $0xdc] sm:$0xff]
      %v6411 = vld [vmem:[#allocation2 + $0xe4] sm:$0xff]
      %v6412 = vld [vmem:[#allocation2 + $0xec] sm:$0xff]
      %v6413 = vld [vmem:[#allocation2 + $0xf4] sm:$0xff]
      %v6414 = vld [vmem:[#allocation2 + $0xfc] sm:$0xff]
      %v6415 = vld [vmem:[#allocation2 + $0x104] sm:$0xff]
      %v6416 = vld [vmem:[#allocation2 + $0x10c] sm:$0xff]
      %v6417 = vld [vmem:[#allocation2 + $0x114] sm:$0xff]
      %v6418 = vld [vmem:[#allocation2 + $0x11c] sm:$0xff]
      %v6419 = vld [vmem:[#allocation2 + $0x124] sm:$0xff]
      %v6420 = vld [vmem:[#allocation2 + $0x12c] sm:$0xff]
      %v6421 = vld [vmem:[#allocation2 + $0x134] sm:$0xff]
      %v6422 = vld [vmem:[#allocation2 + $0x13c] sm:$0xff]
      %s6423 = scalar_lea.vmem %s3, 96
      %v6424 = vld [vmem:[%s6423] sm:$0xff]
      %v6425 = vld [vmem:[%s6423 + $0x8] sm:$0xff]
      %v6427 = vsel %vm1653, %v6387, 0
      %v6430 = vsel %vm1653, %v6388, 0
      %v6433 = vsel %vm1653, %v6389, 0
      %v6436 = vsel %vm1653, %v6390, 0
      %v6439 = vsel %vm1653, %v6391, 0
      %v6442 = vsel %vm1653, %v6392, 0
      %v6445 = vsel %vm1653, %v6393, 0
      %v6448 = vsel %vm1653, %v6394, 0
      %v6451 = vsel %vm1653, %v6395, 0
      %v6454 = vsel %vm1653, %v6396, 0
      %v6457 = vsel %vm1653, %v6397, 0
      %v6460 = vsel %vm1653, %v6398, 0
      %v6463 = vsel %vm1653, %v6399, 0
      %v6466 = vsel %vm1653, %v6400, 0
      %v6469 = vsel %vm1653, %v6401, 0
      %v6472 = vsel %vm1653, %v6402, 0
      %v6475 = vsel %vm1653, %v6403, 0
      %v6478 = vsel %vm1653, %v6404, 0
      %v6481 = vsel %vm1653, %v6405, 0
      %v6484 = vsel %vm1653, %v6406, 0
      %v6487 = vsel %vm1653, %v6407, 0
      %v6490 = vsel %vm1653, %v6408, 0
      %v6493 = vsel %vm1653, %v6409, 0
      %v6496 = vsel %vm1653, %v6410, 0
      %v6499 = vsel %vm1653, %v6411, 0
      %v6502 = vsel %vm1653, %v6412, 0
      %v6505 = vsel %vm1653, %v6413, 0
      %v6508 = vsel %vm1653, %v6414, 0
      %v6511 = vsel %vm1653, %v6415, 0
      %v6514 = vsel %vm1653, %v6416, 0
      %v6517 = vsel %vm1653, %v6417, 0
      %v6520 = vsel %vm1653, %v6418, 0
      %v6523 = vsel %vm1653, %v6419, 0
      %v6526 = vsel %vm1653, %v6420, 0
      %v6529 = vsel %vm1653, %v6421, 0
      %v6532 = vsel %vm1653, %v6422, 0
      %6534 = vmatpush.msra.mxu0 0.0
      %6535 = vmatpush.msra.mxu0 0.0
      %6536 = vmatpush.msra.mxu0 0.0
      %6537 = vmatpush.msra.mxu0 0.0
      %6538 = vmatpush.msra.mxu0 0.0
      %6539 = vmatpush.msra.mxu0 0.0
      %6540 = vmatpush.msra.mxu0 0.0
      %6541 = vmatpush.msra.mxu0 0.0
      %6542 = vmatpush.msra.mxu0 0.0
      %6543 = vmatpush.msra.mxu0 0.0
      %6544 = vmatpush.msra.mxu0 0.0
      %6545 = vmatpush.msra.mxu0 0.0
      %6546 = vmatpush.msra.mxu0 0.0
      %6547 = vmatpush.msra.mxu0 0.0
      %6548 = vmatpush.msra.mxu0 %v6425
      %6549 = vmatpush.msra.mxu0 %v6424
      %6550 = vmatmul.f32.gmra.mxu0 %v6427
      %v6551 = vpop.f32.mrf.mxu0
      %v6552 = vadd.f32 0.0, %v6551
      %6553 = vmatmul.f32.gmra.mxu0 %v6430
      %v6554 = vpop.f32.mrf.mxu0
      %v6555 = vadd.f32 0.0, %v6554
      %6556 = vmatmul.f32.gmra.mxu0 %v6433
      %v6557 = vpop.f32.mrf.mxu0
      %v6558 = vadd.f32 0.0, %v6557
      %6559 = vmatmul.f32.gmra.mxu0 %v6436
      %v6560 = vpop.f32.mrf.mxu0
      %v6561 = vadd.f32 0.0, %v6560
      %6562 = vmatmul.f32.gmra.mxu0 %v6439
      %v6563 = vpop.f32.mrf.mxu0
      %v6564 = vadd.f32 0.0, %v6563
      %6565 = vmatmul.f32.gmra.mxu0 %v6442
      %v6566 = vpop.f32.mrf.mxu0
      %v6567 = vadd.f32 0.0, %v6566
      %6568 = vmatmul.f32.gmra.mxu0 %v6445
      %v6569 = vpop.f32.mrf.mxu0
      %v6570 = vadd.f32 0.0, %v6569
      %6571 = vmatmul.f32.gmra.mxu0 %v6448
      %v6572 = vpop.f32.mrf.mxu0
      %v6573 = vadd.f32 0.0, %v6572
      %6574 = vmatmul.f32.gmra.mxu0 %v6451
      %v6575 = vpop.f32.mrf.mxu0
      %v6576 = vadd.f32 0.0, %v6575
      %6577 = vmatmul.f32.gmra.mxu0 %v6454
      %v6578 = vpop.f32.mrf.mxu0
      %v6579 = vadd.f32 0.0, %v6578
      %6580 = vmatmul.f32.gmra.mxu0 %v6457
      %v6581 = vpop.f32.mrf.mxu0
      %v6582 = vadd.f32 0.0, %v6581
      %6583 = vmatmul.f32.gmra.mxu0 %v6460
      %v6584 = vpop.f32.mrf.mxu0
      %v6585 = vadd.f32 0.0, %v6584
      %6586 = vmatmul.f32.gmra.mxu0 %v6463
      %v6587 = vpop.f32.mrf.mxu0
      %v6588 = vadd.f32 0.0, %v6587
      %6589 = vmatmul.f32.gmra.mxu0 %v6466
      %v6590 = vpop.f32.mrf.mxu0
      %v6591 = vadd.f32 0.0, %v6590
      %6592 = vmatmul.f32.gmra.mxu0 %v6469
      %v6593 = vpop.f32.mrf.mxu0
      %v6594 = vadd.f32 0.0, %v6593
      %6595 = vmatmul.f32.gmra.mxu0 %v6472
      %v6596 = vpop.f32.mrf.mxu0
      %v6597 = vadd.f32 0.0, %v6596
      %6598 = vmatmul.f32.gmra.mxu0 %v6475
      %v6599 = vpop.f32.mrf.mxu0
      %v6600 = vadd.f32 0.0, %v6599
      %6601 = vmatmul.f32.gmra.mxu0 %v6478
      %v6602 = vpop.f32.mrf.mxu0
      %v6603 = vadd.f32 0.0, %v6602
      %6604 = vmatmul.f32.gmra.mxu0 %v6481
      %v6605 = vpop.f32.mrf.mxu0
      %v6606 = vadd.f32 0.0, %v6605
      %6607 = vmatmul.f32.gmra.mxu0 %v6484
      %v6608 = vpop.f32.mrf.mxu0
      %v6609 = vadd.f32 0.0, %v6608
      %6610 = vmatmul.f32.gmra.mxu0 %v6487
      %v6611 = vpop.f32.mrf.mxu0
      %v6612 = vadd.f32 0.0, %v6611
      %6613 = vmatmul.f32.gmra.mxu0 %v6490
      %v6614 = vpop.f32.mrf.mxu0
      %v6615 = vadd.f32 0.0, %v6614
      %6616 = vmatmul.f32.gmra.mxu0 %v6493
      %v6617 = vpop.f32.mrf.mxu0
      %v6618 = vadd.f32 0.0, %v6617
      %6619 = vmatmul.f32.gmra.mxu0 %v6496
      %v6620 = vpop.f32.mrf.mxu0
      %v6621 = vadd.f32 0.0, %v6620
      %6622 = vmatmul.f32.gmra.mxu0 %v6499
      %v6623 = vpop.f32.mrf.mxu0
      %v6624 = vadd.f32 0.0, %v6623
      %6625 = vmatmul.f32.gmra.mxu0 %v6502
      %v6626 = vpop.f32.mrf.mxu0
      %v6627 = vadd.f32 0.0, %v6626
      %6628 = vmatmul.f32.gmra.mxu0 %v6505
      %v6629 = vpop.f32.mrf.mxu0
      %v6630 = vadd.f32 0.0, %v6629
      %6631 = vmatmul.f32.gmra.mxu0 %v6508
      %v6632 = vpop.f32.mrf.mxu0
      %v6633 = vadd.f32 0.0, %v6632
      %6634 = vmatmul.f32.gmra.mxu0 %v6511
      %v6635 = vpop.f32.mrf.mxu0
      %v6636 = vadd.f32 0.0, %v6635
      %6637 = vmatmul.f32.gmra.mxu0 %v6514
      %v6638 = vpop.f32.mrf.mxu0
      %v6639 = vadd.f32 0.0, %v6638
      %6640 = vmatmul.f32.gmra.mxu0 %v6517
      %v6641 = vpop.f32.mrf.mxu0
      %v6642 = vadd.f32 0.0, %v6641
      %6643 = vmatmul.f32.gmra.mxu0 %v6520
      %v6644 = vpop.f32.mrf.mxu0
      %v6645 = vadd.f32 0.0, %v6644
      %6646 = vmatmul.f32.gmra.mxu0 %v6523
      %v6647 = vpop.f32.mrf.mxu0
      %v6648 = vadd.f32 0.0, %v6647
      %6649 = vmatmul.f32.gmra.mxu0 %v6526
      %v6650 = vpop.f32.mrf.mxu0
      %v6651 = vadd.f32 0.0, %v6650
      %6652 = vmatmul.f32.gmra.mxu0 %v6529
      %v6653 = vpop.f32.mrf.mxu0
      %v6654 = vadd.f32 0.0, %v6653
      %6655 = vmatmul.f32.gmra.mxu0 %v6532
      %v6656 = vpop.f32.mrf.mxu0
      %v6657 = vadd.f32 0.0, %v6656
      %6658 = vdwg.mxu0
      %v6659 = vadd.f32 %v6351, %v6552
      %v6660 = vadd.f32 %v6352, %v6555
      %v6661 = vadd.f32 %v6353, %v6558
      %v6662 = vadd.f32 %v6354, %v6561
      %v6663 = vadd.f32 %v6355, %v6564
      %v6664 = vadd.f32 %v6356, %v6567
      %v6665 = vadd.f32 %v6357, %v6570
      %v6666 = vadd.f32 %v6358, %v6573
      %v6667 = vadd.f32 %v6359, %v6576
      %v6668 = vadd.f32 %v6360, %v6579
      %v6669 = vadd.f32 %v6361, %v6582
      %v6670 = vadd.f32 %v6362, %v6585
      %v6671 = vadd.f32 %v6363, %v6588
      %v6672 = vadd.f32 %v6364, %v6591
      %v6673 = vadd.f32 %v6365, %v6594
      %v6674 = vadd.f32 %v6366, %v6597
      %v6675 = vadd.f32 %v6367, %v6600
      %v6676 = vadd.f32 %v6368, %v6603
      %v6677 = vadd.f32 %v6369, %v6606
      %v6678 = vadd.f32 %v6370, %v6609
      %v6679 = vadd.f32 %v6371, %v6612
      %v6680 = vadd.f32 %v6372, %v6615
      %v6681 = vadd.f32 %v6373, %v6618
      %v6682 = vadd.f32 %v6374, %v6621
      %v6683 = vadd.f32 %v6375, %v6624
      %v6684 = vadd.f32 %v6376, %v6627
      %v6685 = vadd.f32 %v6377, %v6630
      %v6686 = vadd.f32 %v6378, %v6633
      %v6687 = vadd.f32 %v6379, %v6636
      %v6688 = vadd.f32 %v6380, %v6639
      %v6689 = vadd.f32 %v6381, %v6642
      %v6690 = vadd.f32 %v6382, %v6645
      %v6691 = vadd.f32 %v6383, %v6648
      %v6692 = vadd.f32 %v6384, %v6651
      %v6693 = vadd.f32 %v6385, %v6654
      %v6694 = vadd.f32 %v6386, %v6657
      %v6695 = vld [vmem:[#allocation2 + $0x25] sm:$0xff]
      %v6696 = vld [vmem:[#allocation2 + $0x2d] sm:$0xff]
      %v6697 = vld [vmem:[#allocation2 + $0x35] sm:$0xff]
      %v6698 = vld [vmem:[#allocation2 + $0x3d] sm:$0xff]
      %v6699 = vld [vmem:[#allocation2 + $0x45] sm:$0xff]
      %v6700 = vld [vmem:[#allocation2 + $0x4d] sm:$0xff]
      %v6701 = vld [vmem:[#allocation2 + $0x55] sm:$0xff]
      %v6702 = vld [vmem:[#allocation2 + $0x5d] sm:$0xff]
      %v6703 = vld [vmem:[#allocation2 + $0x65] sm:$0xff]
      %v6704 = vld [vmem:[#allocation2 + $0x6d] sm:$0xff]
      %v6705 = vld [vmem:[#allocation2 + $0x75] sm:$0xff]
      %v6706 = vld [vmem:[#allocation2 + $0x7d] sm:$0xff]
      %v6707 = vld [vmem:[#allocation2 + $0x85] sm:$0xff]
      %v6708 = vld [vmem:[#allocation2 + $0x8d] sm:$0xff]
      %v6709 = vld [vmem:[#allocation2 + $0x95] sm:$0xff]
      %v6710 = vld [vmem:[#allocation2 + $0x9d] sm:$0xff]
      %v6711 = vld [vmem:[#allocation2 + $0xa5] sm:$0xff]
      %v6712 = vld [vmem:[#allocation2 + $0xad] sm:$0xff]
      %v6713 = vld [vmem:[#allocation2 + $0xb5] sm:$0xff]
      %v6714 = vld [vmem:[#allocation2 + $0xbd] sm:$0xff]
      %v6715 = vld [vmem:[#allocation2 + $0xc5] sm:$0xff]
      %v6716 = vld [vmem:[#allocation2 + $0xcd] sm:$0xff]
      %v6717 = vld [vmem:[#allocation2 + $0xd5] sm:$0xff]
      %v6718 = vld [vmem:[#allocation2 + $0xdd] sm:$0xff]
      %v6719 = vld [vmem:[#allocation2 + $0xe5] sm:$0xff]
      %v6720 = vld [vmem:[#allocation2 + $0xed] sm:$0xff]
      %v6721 = vld [vmem:[#allocation2 + $0xf5] sm:$0xff]
      %v6722 = vld [vmem:[#allocation2 + $0xfd] sm:$0xff]
      %v6723 = vld [vmem:[#allocation2 + $0x105] sm:$0xff]
      %v6724 = vld [vmem:[#allocation2 + $0x10d] sm:$0xff]
      %v6725 = vld [vmem:[#allocation2 + $0x115] sm:$0xff]
      %v6726 = vld [vmem:[#allocation2 + $0x11d] sm:$0xff]
      %v6727 = vld [vmem:[#allocation2 + $0x125] sm:$0xff]
      %v6728 = vld [vmem:[#allocation2 + $0x12d] sm:$0xff]
      %v6729 = vld [vmem:[#allocation2 + $0x135] sm:$0xff]
      %v6730 = vld [vmem:[#allocation2 + $0x13d] sm:$0xff]
      %s6731 = scalar_lea.vmem %s3, 112
      %v6732 = vld [vmem:[%s6731] sm:$0xff]
      %v6733 = vld [vmem:[%s6731 + $0x8] sm:$0xff]
      %v6735 = vsel %vm1653, %v6695, 0
      %v6738 = vsel %vm1653, %v6696, 0
      %v6741 = vsel %vm1653, %v6697, 0
      %v6744 = vsel %vm1653, %v6698, 0
      %v6747 = vsel %vm1653, %v6699, 0
      %v6750 = vsel %vm1653, %v6700, 0
      %v6753 = vsel %vm1653, %v6701, 0
      %v6756 = vsel %vm1653, %v6702, 0
      %v6759 = vsel %vm1653, %v6703, 0
      %v6762 = vsel %vm1653, %v6704, 0
      %v6765 = vsel %vm1653, %v6705, 0
      %v6768 = vsel %vm1653, %v6706, 0
      %v6771 = vsel %vm1653, %v6707, 0
      %v6774 = vsel %vm1653, %v6708, 0
      %v6777 = vsel %vm1653, %v6709, 0
      %v6780 = vsel %vm1653, %v6710, 0
      %v6783 = vsel %vm1653, %v6711, 0
      %v6786 = vsel %vm1653, %v6712, 0
      %v6789 = vsel %vm1653, %v6713, 0
      %v6792 = vsel %vm1653, %v6714, 0
      %v6795 = vsel %vm1653, %v6715, 0
      %v6798 = vsel %vm1653, %v6716, 0
      %v6801 = vsel %vm1653, %v6717, 0
      %v6804 = vsel %vm1653, %v6718, 0
      %v6807 = vsel %vm1653, %v6719, 0
      %v6810 = vsel %vm1653, %v6720, 0
      %v6813 = vsel %vm1653, %v6721, 0
      %v6816 = vsel %vm1653, %v6722, 0
      %v6819 = vsel %vm1653, %v6723, 0
      %v6822 = vsel %vm1653, %v6724, 0
      %v6825 = vsel %vm1653, %v6725, 0
      %v6828 = vsel %vm1653, %v6726, 0
      %v6831 = vsel %vm1653, %v6727, 0
      %v6834 = vsel %vm1653, %v6728, 0
      %v6837 = vsel %vm1653, %v6729, 0
      %v6840 = vsel %vm1653, %v6730, 0
      %6842 = vmatpush.msra.mxu0 0.0
      %6843 = vmatpush.msra.mxu0 0.0
      %6844 = vmatpush.msra.mxu0 0.0
      %6845 = vmatpush.msra.mxu0 0.0
      %6846 = vmatpush.msra.mxu0 0.0
      %6847 = vmatpush.msra.mxu0 0.0
      %6848 = vmatpush.msra.mxu0 0.0
      %6849 = vmatpush.msra.mxu0 0.0
      %6850 = vmatpush.msra.mxu0 0.0
      %6851 = vmatpush.msra.mxu0 0.0
      %6852 = vmatpush.msra.mxu0 0.0
      %6853 = vmatpush.msra.mxu0 0.0
      %6854 = vmatpush.msra.mxu0 0.0
      %6855 = vmatpush.msra.mxu0 0.0
      %6856 = vmatpush.msra.mxu0 %v6733
      %6857 = vmatpush.msra.mxu0 %v6732
      %6858 = vmatmul.f32.gmra.mxu0 %v6735
      %v6859 = vpop.f32.mrf.mxu0
      %v6860 = vadd.f32 0.0, %v6859
      %6861 = vmatmul.f32.gmra.mxu0 %v6738
      %v6862 = vpop.f32.mrf.mxu0
      %v6863 = vadd.f32 0.0, %v6862
      %6864 = vmatmul.f32.gmra.mxu0 %v6741
      %v6865 = vpop.f32.mrf.mxu0
      %v6866 = vadd.f32 0.0, %v6865
      %6867 = vmatmul.f32.gmra.mxu0 %v6744
      %v6868 = vpop.f32.mrf.mxu0
      %v6869 = vadd.f32 0.0, %v6868
      %6870 = vmatmul.f32.gmra.mxu0 %v6747
      %v6871 = vpop.f32.mrf.mxu0
      %v6872 = vadd.f32 0.0, %v6871
      %6873 = vmatmul.f32.gmra.mxu0 %v6750
      %v6874 = vpop.f32.mrf.mxu0
      %v6875 = vadd.f32 0.0, %v6874
      %6876 = vmatmul.f32.gmra.mxu0 %v6753
      %v6877 = vpop.f32.mrf.mxu0
      %v6878 = vadd.f32 0.0, %v6877
      %6879 = vmatmul.f32.gmra.mxu0 %v6756
      %v6880 = vpop.f32.mrf.mxu0
      %v6881 = vadd.f32 0.0, %v6880
      %6882 = vmatmul.f32.gmra.mxu0 %v6759
      %v6883 = vpop.f32.mrf.mxu0
      %v6884 = vadd.f32 0.0, %v6883
      %6885 = vmatmul.f32.gmra.mxu0 %v6762
      %v6886 = vpop.f32.mrf.mxu0
      %v6887 = vadd.f32 0.0, %v6886
      %6888 = vmatmul.f32.gmra.mxu0 %v6765
      %v6889 = vpop.f32.mrf.mxu0
      %v6890 = vadd.f32 0.0, %v6889
      %6891 = vmatmul.f32.gmra.mxu0 %v6768
      %v6892 = vpop.f32.mrf.mxu0
      %v6893 = vadd.f32 0.0, %v6892
      %6894 = vmatmul.f32.gmra.mxu0 %v6771
      %v6895 = vpop.f32.mrf.mxu0
      %v6896 = vadd.f32 0.0, %v6895
      %6897 = vmatmul.f32.gmra.mxu0 %v6774
      %v6898 = vpop.f32.mrf.mxu0
      %v6899 = vadd.f32 0.0, %v6898
      %6900 = vmatmul.f32.gmra.mxu0 %v6777
      %v6901 = vpop.f32.mrf.mxu0
      %v6902 = vadd.f32 0.0, %v6901
      %6903 = vmatmul.f32.gmra.mxu0 %v6780
      %v6904 = vpop.f32.mrf.mxu0
      %v6905 = vadd.f32 0.0, %v6904
      %6906 = vmatmul.f32.gmra.mxu0 %v6783
      %v6907 = vpop.f32.mrf.mxu0
      %v6908 = vadd.f32 0.0, %v6907
      %6909 = vmatmul.f32.gmra.mxu0 %v6786
      %v6910 = vpop.f32.mrf.mxu0
      %v6911 = vadd.f32 0.0, %v6910
      %6912 = vmatmul.f32.gmra.mxu0 %v6789
      %v6913 = vpop.f32.mrf.mxu0
      %v6914 = vadd.f32 0.0, %v6913
      %6915 = vmatmul.f32.gmra.mxu0 %v6792
      %v6916 = vpop.f32.mrf.mxu0
      %v6917 = vadd.f32 0.0, %v6916
      %6918 = vmatmul.f32.gmra.mxu0 %v6795
      %v6919 = vpop.f32.mrf.mxu0
      %v6920 = vadd.f32 0.0, %v6919
      %6921 = vmatmul.f32.gmra.mxu0 %v6798
      %v6922 = vpop.f32.mrf.mxu0
      %v6923 = vadd.f32 0.0, %v6922
      %6924 = vmatmul.f32.gmra.mxu0 %v6801
      %v6925 = vpop.f32.mrf.mxu0
      %v6926 = vadd.f32 0.0, %v6925
      %6927 = vmatmul.f32.gmra.mxu0 %v6804
      %v6928 = vpop.f32.mrf.mxu0
      %v6929 = vadd.f32 0.0, %v6928
      %6930 = vmatmul.f32.gmra.mxu0 %v6807
      %v6931 = vpop.f32.mrf.mxu0
      %v6932 = vadd.f32 0.0, %v6931
      %6933 = vmatmul.f32.gmra.mxu0 %v6810
      %v6934 = vpop.f32.mrf.mxu0
      %v6935 = vadd.f32 0.0, %v6934
      %6936 = vmatmul.f32.gmra.mxu0 %v6813
      %v6937 = vpop.f32.mrf.mxu0
      %v6938 = vadd.f32 0.0, %v6937
      %6939 = vmatmul.f32.gmra.mxu0 %v6816
      %v6940 = vpop.f32.mrf.mxu0
      %v6941 = vadd.f32 0.0, %v6940
      %6942 = vmatmul.f32.gmra.mxu0 %v6819
      %v6943 = vpop.f32.mrf.mxu0
      %v6944 = vadd.f32 0.0, %v6943
      %6945 = vmatmul.f32.gmra.mxu0 %v6822
      %v6946 = vpop.f32.mrf.mxu0
      %v6947 = vadd.f32 0.0, %v6946
      %6948 = vmatmul.f32.gmra.mxu0 %v6825
      %v6949 = vpop.f32.mrf.mxu0
      %v6950 = vadd.f32 0.0, %v6949
      %6951 = vmatmul.f32.gmra.mxu0 %v6828
      %v6952 = vpop.f32.mrf.mxu0
      %v6953 = vadd.f32 0.0, %v6952
      %6954 = vmatmul.f32.gmra.mxu0 %v6831
      %v6955 = vpop.f32.mrf.mxu0
      %v6956 = vadd.f32 0.0, %v6955
      %6957 = vmatmul.f32.gmra.mxu0 %v6834
      %v6958 = vpop.f32.mrf.mxu0
      %v6959 = vadd.f32 0.0, %v6958
      %6960 = vmatmul.f32.gmra.mxu0 %v6837
      %v6961 = vpop.f32.mrf.mxu0
      %v6962 = vadd.f32 0.0, %v6961
      %6963 = vmatmul.f32.gmra.mxu0 %v6840
      %v6964 = vpop.f32.mrf.mxu0
      %v6965 = vadd.f32 0.0, %v6964
      %6966 = vdwg.mxu0
      %v6967 = vadd.f32 %v6659, %v6860
      %v6968 = vadd.f32 %v6660, %v6863
      %v6969 = vadd.f32 %v6661, %v6866
      %v6970 = vadd.f32 %v6662, %v6869
      %v6971 = vadd.f32 %v6663, %v6872
      %v6972 = vadd.f32 %v6664, %v6875
      %v6973 = vadd.f32 %v6665, %v6878
      %v6974 = vadd.f32 %v6666, %v6881
      %v6975 = vadd.f32 %v6667, %v6884
      %v6976 = vadd.f32 %v6668, %v6887
      %v6977 = vadd.f32 %v6669, %v6890
      %v6978 = vadd.f32 %v6670, %v6893
      %v6979 = vadd.f32 %v6671, %v6896
      %v6980 = vadd.f32 %v6672, %v6899
      %v6981 = vadd.f32 %v6673, %v6902
      %v6982 = vadd.f32 %v6674, %v6905
      %v6983 = vadd.f32 %v6675, %v6908
      %v6984 = vadd.f32 %v6676, %v6911
      %v6985 = vadd.f32 %v6677, %v6914
      %v6986 = vadd.f32 %v6678, %v6917
      %v6987 = vadd.f32 %v6679, %v6920
      %v6988 = vadd.f32 %v6680, %v6923
      %v6989 = vadd.f32 %v6681, %v6926
      %v6990 = vadd.f32 %v6682, %v6929
      %v6991 = vadd.f32 %v6683, %v6932
      %v6992 = vadd.f32 %v6684, %v6935
      %v6993 = vadd.f32 %v6685, %v6938
      %v6994 = vadd.f32 %v6686, %v6941
      %v6995 = vadd.f32 %v6687, %v6944
      %v6996 = vadd.f32 %v6688, %v6947
      %v6997 = vadd.f32 %v6689, %v6950
      %v6998 = vadd.f32 %v6690, %v6953
      %v6999 = vadd.f32 %v6691, %v6956
      %v7000 = vadd.f32 %v6692, %v6959
      %v7001 = vadd.f32 %v6693, %v6962
      %v7002 = vadd.f32 %v6694, %v6965
      %v7003 = vld [vmem:[#allocation2 + $0x26] sm:$0xff]
      %v7004 = vld [vmem:[#allocation2 + $0x2e] sm:$0xff]
      %v7005 = vld [vmem:[#allocation2 + $0x36] sm:$0xff]
      %v7006 = vld [vmem:[#allocation2 + $0x3e] sm:$0xff]
      %v7007 = vld [vmem:[#allocation2 + $0x46] sm:$0xff]
      %v7008 = vld [vmem:[#allocation2 + $0x4e] sm:$0xff]
      %v7009 = vld [vmem:[#allocation2 + $0x56] sm:$0xff]
      %v7010 = vld [vmem:[#allocation2 + $0x5e] sm:$0xff]
      %v7011 = vld [vmem:[#allocation2 + $0x66] sm:$0xff]
      %v7012 = vld [vmem:[#allocation2 + $0x6e] sm:$0xff]
      %v7013 = vld [vmem:[#allocation2 + $0x76] sm:$0xff]
      %v7014 = vld [vmem:[#allocation2 + $0x7e] sm:$0xff]
      %v7015 = vld [vmem:[#allocation2 + $0x86] sm:$0xff]
      %v7016 = vld [vmem:[#allocation2 + $0x8e] sm:$0xff]
      %v7017 = vld [vmem:[#allocation2 + $0x96] sm:$0xff]
      %v7018 = vld [vmem:[#allocation2 + $0x9e] sm:$0xff]
      %v7019 = vld [vmem:[#allocation2 + $0xa6] sm:$0xff]
      %v7020 = vld [vmem:[#allocation2 + $0xae] sm:$0xff]
      %v7021 = vld [vmem:[#allocation2 + $0xb6] sm:$0xff]
      %v7022 = vld [vmem:[#allocation2 + $0xbe] sm:$0xff]
      %v7023 = vld [vmem:[#allocation2 + $0xc6] sm:$0xff]
      %v7024 = vld [vmem:[#allocation2 + $0xce] sm:$0xff]
      %v7025 = vld [vmem:[#allocation2 + $0xd6] sm:$0xff]
      %v7026 = vld [vmem:[#allocation2 + $0xde] sm:$0xff]
      %v7027 = vld [vmem:[#allocation2 + $0xe6] sm:$0xff]
      %v7028 = vld [vmem:[#allocation2 + $0xee] sm:$0xff]
      %v7029 = vld [vmem:[#allocation2 + $0xf6] sm:$0xff]
      %v7030 = vld [vmem:[#allocation2 + $0xfe] sm:$0xff]
      %v7031 = vld [vmem:[#allocation2 + $0x106] sm:$0xff]
      %v7032 = vld [vmem:[#allocation2 + $0x10e] sm:$0xff]
      %v7033 = vld [vmem:[#allocation2 + $0x116] sm:$0xff]
      %v7034 = vld [vmem:[#allocation2 + $0x11e] sm:$0xff]
      %v7035 = vld [vmem:[#allocation2 + $0x126] sm:$0xff]
      %v7036 = vld [vmem:[#allocation2 + $0x12e] sm:$0xff]
      %v7037 = vld [vmem:[#allocation2 + $0x136] sm:$0xff]
      %v7038 = vld [vmem:[#allocation2 + $0x13e] sm:$0xff]
      %s7039 = scalar_lea.vmem %s3, 128
      %v7040 = vld [vmem:[%s7039] sm:$0xff]
      %v7041 = vld [vmem:[%s7039 + $0x8] sm:$0xff]
      %v7043 = vsel %vm1653, %v7003, 0
      %v7046 = vsel %vm1653, %v7004, 0
      %v7049 = vsel %vm1653, %v7005, 0
      %v7052 = vsel %vm1653, %v7006, 0
      %v7055 = vsel %vm1653, %v7007, 0
      %v7058 = vsel %vm1653, %v7008, 0
      %v7061 = vsel %vm1653, %v7009, 0
      %v7064 = vsel %vm1653, %v7010, 0
      %v7067 = vsel %vm1653, %v7011, 0
      %v7070 = vsel %vm1653, %v7012, 0
      %v7073 = vsel %vm1653, %v7013, 0
      %v7076 = vsel %vm1653, %v7014, 0
      %v7079 = vsel %vm1653, %v7015, 0
      %v7082 = vsel %vm1653, %v7016, 0
      %v7085 = vsel %vm1653, %v7017, 0
      %v7088 = vsel %vm1653, %v7018, 0
      %v7091 = vsel %vm1653, %v7019, 0
      %v7094 = vsel %vm1653, %v7020, 0
      %v7097 = vsel %vm1653, %v7021, 0
      %v7100 = vsel %vm1653, %v7022, 0
      %v7103 = vsel %vm1653, %v7023, 0
      %v7106 = vsel %vm1653, %v7024, 0
      %v7109 = vsel %vm1653, %v7025, 0
      %v7112 = vsel %vm1653, %v7026, 0
      %v7115 = vsel %vm1653, %v7027, 0
      %v7118 = vsel %vm1653, %v7028, 0
      %v7121 = vsel %vm1653, %v7029, 0
      %v7124 = vsel %vm1653, %v7030, 0
      %v7127 = vsel %vm1653, %v7031, 0
      %v7130 = vsel %vm1653, %v7032, 0
      %v7133 = vsel %vm1653, %v7033, 0
      %v7136 = vsel %vm1653, %v7034, 0
      %v7139 = vsel %vm1653, %v7035, 0
      %v7142 = vsel %vm1653, %v7036, 0
      %v7145 = vsel %vm1653, %v7037, 0
      %v7148 = vsel %vm1653, %v7038, 0
      %7150 = vmatpush.msra.mxu0 0.0
      %7151 = vmatpush.msra.mxu0 0.0
      %7152 = vmatpush.msra.mxu0 0.0
      %7153 = vmatpush.msra.mxu0 0.0
      %7154 = vmatpush.msra.mxu0 0.0
      %7155 = vmatpush.msra.mxu0 0.0
      %7156 = vmatpush.msra.mxu0 0.0
      %7157 = vmatpush.msra.mxu0 0.0
      %7158 = vmatpush.msra.mxu0 0.0
      %7159 = vmatpush.msra.mxu0 0.0
      %7160 = vmatpush.msra.mxu0 0.0
      %7161 = vmatpush.msra.mxu0 0.0
      %7162 = vmatpush.msra.mxu0 0.0
      %7163 = vmatpush.msra.mxu0 0.0
      %7164 = vmatpush.msra.mxu0 %v7041
      %7165 = vmatpush.msra.mxu0 %v7040
      %7166 = vmatmul.f32.gmra.mxu0 %v7043
      %v7167 = vpop.f32.mrf.mxu0
      %v7168 = vadd.f32 0.0, %v7167
      %7169 = vmatmul.f32.gmra.mxu0 %v7046
      %v7170 = vpop.f32.mrf.mxu0
      %v7171 = vadd.f32 0.0, %v7170
      %7172 = vmatmul.f32.gmra.mxu0 %v7049
      %v7173 = vpop.f32.mrf.mxu0
      %v7174 = vadd.f32 0.0, %v7173
      %7175 = vmatmul.f32.gmra.mxu0 %v7052
      %v7176 = vpop.f32.mrf.mxu0
      %v7177 = vadd.f32 0.0, %v7176
      %7178 = vmatmul.f32.gmra.mxu0 %v7055
      %v7179 = vpop.f32.mrf.mxu0
      %v7180 = vadd.f32 0.0, %v7179
      %7181 = vmatmul.f32.gmra.mxu0 %v7058
      %v7182 = vpop.f32.mrf.mxu0
      %v7183 = vadd.f32 0.0, %v7182
      %7184 = vmatmul.f32.gmra.mxu0 %v7061
      %v7185 = vpop.f32.mrf.mxu0
      %v7186 = vadd.f32 0.0, %v7185
      %7187 = vmatmul.f32.gmra.mxu0 %v7064
      %v7188 = vpop.f32.mrf.mxu0
      %v7189 = vadd.f32 0.0, %v7188
      %7190 = vmatmul.f32.gmra.mxu0 %v7067
      %v7191 = vpop.f32.mrf.mxu0
      %v7192 = vadd.f32 0.0, %v7191
      %7193 = vmatmul.f32.gmra.mxu0 %v7070
      %v7194 = vpop.f32.mrf.mxu0
      %v7195 = vadd.f32 0.0, %v7194
      %7196 = vmatmul.f32.gmra.mxu0 %v7073
      %v7197 = vpop.f32.mrf.mxu0
      %v7198 = vadd.f32 0.0, %v7197
      %7199 = vmatmul.f32.gmra.mxu0 %v7076
      %v7200 = vpop.f32.mrf.mxu0
      %v7201 = vadd.f32 0.0, %v7200
      %7202 = vmatmul.f32.gmra.mxu0 %v7079
      %v7203 = vpop.f32.mrf.mxu0
      %v7204 = vadd.f32 0.0, %v7203
      %7205 = vmatmul.f32.gmra.mxu0 %v7082
      %v7206 = vpop.f32.mrf.mxu0
      %v7207 = vadd.f32 0.0, %v7206
      %7208 = vmatmul.f32.gmra.mxu0 %v7085
      %v7209 = vpop.f32.mrf.mxu0
      %v7210 = vadd.f32 0.0, %v7209
      %7211 = vmatmul.f32.gmra.mxu0 %v7088
      %v7212 = vpop.f32.mrf.mxu0
      %v7213 = vadd.f32 0.0, %v7212
      %7214 = vmatmul.f32.gmra.mxu0 %v7091
      %v7215 = vpop.f32.mrf.mxu0
      %v7216 = vadd.f32 0.0, %v7215
      %7217 = vmatmul.f32.gmra.mxu0 %v7094
      %v7218 = vpop.f32.mrf.mxu0
      %v7219 = vadd.f32 0.0, %v7218
      %7220 = vmatmul.f32.gmra.mxu0 %v7097
      %v7221 = vpop.f32.mrf.mxu0
      %v7222 = vadd.f32 0.0, %v7221
      %7223 = vmatmul.f32.gmra.mxu0 %v7100
      %v7224 = vpop.f32.mrf.mxu0
      %v7225 = vadd.f32 0.0, %v7224
      %7226 = vmatmul.f32.gmra.mxu0 %v7103
      %v7227 = vpop.f32.mrf.mxu0
      %v7228 = vadd.f32 0.0, %v7227
      %7229 = vmatmul.f32.gmra.mxu0 %v7106
      %v7230 = vpop.f32.mrf.mxu0
      %v7231 = vadd.f32 0.0, %v7230
      %7232 = vmatmul.f32.gmra.mxu0 %v7109
      %v7233 = vpop.f32.mrf.mxu0
      %v7234 = vadd.f32 0.0, %v7233
      %7235 = vmatmul.f32.gmra.mxu0 %v7112
      %v7236 = vpop.f32.mrf.mxu0
      %v7237 = vadd.f32 0.0, %v7236
      %7238 = vmatmul.f32.gmra.mxu0 %v7115
      %v7239 = vpop.f32.mrf.mxu0
      %v7240 = vadd.f32 0.0, %v7239
      %7241 = vmatmul.f32.gmra.mxu0 %v7118
      %v7242 = vpop.f32.mrf.mxu0
      %v7243 = vadd.f32 0.0, %v7242
      %7244 = vmatmul.f32.gmra.mxu0 %v7121
      %v7245 = vpop.f32.mrf.mxu0
      %v7246 = vadd.f32 0.0, %v7245
      %7247 = vmatmul.f32.gmra.mxu0 %v7124
      %v7248 = vpop.f32.mrf.mxu0
      %v7249 = vadd.f32 0.0, %v7248
      %7250 = vmatmul.f32.gmra.mxu0 %v7127
      %v7251 = vpop.f32.mrf.mxu0
      %v7252 = vadd.f32 0.0, %v7251
      %7253 = vmatmul.f32.gmra.mxu0 %v7130
      %v7254 = vpop.f32.mrf.mxu0
      %v7255 = vadd.f32 0.0, %v7254
      %7256 = vmatmul.f32.gmra.mxu0 %v7133
      %v7257 = vpop.f32.mrf.mxu0
      %v7258 = vadd.f32 0.0, %v7257
      %7259 = vmatmul.f32.gmra.mxu0 %v7136
      %v7260 = vpop.f32.mrf.mxu0
      %v7261 = vadd.f32 0.0, %v7260
      %7262 = vmatmul.f32.gmra.mxu0 %v7139
      %v7263 = vpop.f32.mrf.mxu0
      %v7264 = vadd.f32 0.0, %v7263
      %7265 = vmatmul.f32.gmra.mxu0 %v7142
      %v7266 = vpop.f32.mrf.mxu0
      %v7267 = vadd.f32 0.0, %v7266
      %7268 = vmatmul.f32.gmra.mxu0 %v7145
      %v7269 = vpop.f32.mrf.mxu0
      %v7270 = vadd.f32 0.0, %v7269
      %7271 = vmatmul.f32.gmra.mxu0 %v7148
      %v7272 = vpop.f32.mrf.mxu0
      %v7273 = vadd.f32 0.0, %v7272
      %7274 = vdwg.mxu0
      %v7275 = vadd.f32 %v6967, %v7168
      %v7276 = vadd.f32 %v6968, %v7171
      %v7277 = vadd.f32 %v6969, %v7174
      %v7278 = vadd.f32 %v6970, %v7177
      %v7279 = vadd.f32 %v6971, %v7180
      %v7280 = vadd.f32 %v6972, %v7183
      %v7281 = vadd.f32 %v6973, %v7186
      %v7282 = vadd.f32 %v6974, %v7189
      %v7283 = vadd.f32 %v6975, %v7192
      %v7284 = vadd.f32 %v6976, %v7195
      %v7285 = vadd.f32 %v6977, %v7198
      %v7286 = vadd.f32 %v6978, %v7201
      %v7287 = vadd.f32 %v6979, %v7204
      %v7288 = vadd.f32 %v6980, %v7207
      %v7289 = vadd.f32 %v6981, %v7210
      %v7290 = vadd.f32 %v6982, %v7213
      %v7291 = vadd.f32 %v6983, %v7216
      %v7292 = vadd.f32 %v6984, %v7219
      %v7293 = vadd.f32 %v6985, %v7222
      %v7294 = vadd.f32 %v6986, %v7225
      %v7295 = vadd.f32 %v6987, %v7228
      %v7296 = vadd.f32 %v6988, %v7231
      %v7297 = vadd.f32 %v6989, %v7234
      %v7298 = vadd.f32 %v6990, %v7237
      %v7299 = vadd.f32 %v6991, %v7240
      %v7300 = vadd.f32 %v6992, %v7243
      %v7301 = vadd.f32 %v6993, %v7246
      %v7302 = vadd.f32 %v6994, %v7249
      %v7303 = vadd.f32 %v6995, %v7252
      %v7304 = vadd.f32 %v6996, %v7255
      %v7305 = vadd.f32 %v6997, %v7258
      %v7306 = vadd.f32 %v6998, %v7261
      %v7307 = vadd.f32 %v6999, %v7264
      %v7308 = vadd.f32 %v7000, %v7267
      %v7309 = vadd.f32 %v7001, %v7270
      %v7310 = vadd.f32 %v7002, %v7273
      %v7311 = vld [vmem:[%s4] sm:$0x1]
      %v7313 = vperm.slane %v7311, 0
      %v7315 = vadd.f32 %v7275, %v7313
      %v7316 = vadd.f32 %v7276, %v7313
      %v7317 = vadd.f32 %v7277, %v7313
      %v7318 = vadd.f32 %v7278, %v7313
      %v7319 = vadd.f32 %v7279, %v7313
      %v7320 = vadd.f32 %v7280, %v7313
      %v7321 = vadd.f32 %v7281, %v7313
      %v7322 = vadd.f32 %v7282, %v7313
      %v7323 = vadd.f32 %v7283, %v7313
      %v7324 = vadd.f32 %v7284, %v7313
      %v7325 = vadd.f32 %v7285, %v7313
      %v7326 = vadd.f32 %v7286, %v7313
      %v7327 = vadd.f32 %v7287, %v7313
      %v7328 = vadd.f32 %v7288, %v7313
      %v7329 = vadd.f32 %v7289, %v7313
      %v7330 = vadd.f32 %v7290, %v7313
      %v7331 = vadd.f32 %v7291, %v7313
      %v7332 = vadd.f32 %v7292, %v7313
      %v7333 = vadd.f32 %v7293, %v7313
      %v7334 = vadd.f32 %v7294, %v7313
      %v7335 = vadd.f32 %v7295, %v7313
      %v7336 = vadd.f32 %v7296, %v7313
      %v7337 = vadd.f32 %v7297, %v7313
      %v7338 = vadd.f32 %v7298, %v7313
      %v7339 = vadd.f32 %v7299, %v7313
      %v7340 = vadd.f32 %v7300, %v7313
      %v7341 = vadd.f32 %v7301, %v7313
      %v7342 = vadd.f32 %v7302, %v7313
      %v7343 = vadd.f32 %v7303, %v7313
      %v7344 = vadd.f32 %v7304, %v7313
      %v7345 = vadd.f32 %v7305, %v7313
      %v7346 = vadd.f32 %v7306, %v7313
      %v7347 = vadd.f32 %v7307, %v7313
      %v7348 = vadd.f32 %v7308, %v7313
      %v7349 = vadd.f32 %v7309, %v7313
      %v7350 = vadd.f32 %v7310, %v7313
      %vm7351 = vcmask 64512
      %7352 = vst.msk [vmem:[#allocation3] sm:$0xff] %vm7351, 0.0
      %7353 = vst.msk [vmem:[#allocation3 + $0x8] sm:$0xff] %vm7351, 0.0
      %vm7354 = vcmask 59392
      %7355 = vst.msk [vmem:[#allocation3 + $0x10] sm:$0x7] %vm7354, 0.0
      %7356 = vst.msk [vmem:[#allocation3 + $0x133] sm:$0xff] %vm7351, 0.0
      %7357 = vst.msk [vmem:[#allocation3 + $0x13b] sm:$0xff] %vm7351, 0.0
      %vm7358 = vcmask 61440
      %7359 = vst.msk [vmem:[#allocation3 + $0x143] sm:$0x1f] %vm7358, 0.0
      %v7360 = vsel %vm4360, %v7315, 0.0
      %v7361 = vsel %vm4361, %v7316, 0.0
      %v7362 = vsel %vm4362, %v7317, 0.0
      %v7363 = vsel %vm4363, %v7318, 0.0
      %v7364 = vsel %vm4364, %v7319, 0.0
      %v7365 = vsel %vm4365, %v7320, 0.0
      %v7366 = vsel %vm4366, %v7321, 0.0
      %v7367 = vsel %vm4367, %v7322, 0.0
      %v7368 = vsel %vm4368, %v7323, 0.0
      %v7369 = vsel %vm4369, %v7324, 0.0
      %v7370 = vsel %vm4370, %v7325, 0.0
      %v7371 = vsel %vm4371, %v7326, 0.0
      %v7372 = vsel %vm4372, %v7327, 0.0
      %v7373 = vsel %vm4373, %v7328, 0.0
      %v7374 = vsel %vm4374, %v7329, 0.0
      %v7375 = vsel %vm4375, %v7330, 0.0
      %v7376 = vsel %vm4376, %v7331, 0.0
      %v7377 = vsel %vm4377, %v7332, 0.0
      %v7378 = vsel %vm4378, %v7333, 0.0
      %v7379 = vsel %vm4379, %v7334, 0.0
      %v7380 = vsel %vm4380, %v7335, 0.0
      %v7381 = vsel %vm4381, %v7336, 0.0
      %v7382 = vsel %vm4382, %v7337, 0.0
      %v7383 = vsel %vm4383, %v7338, 0.0
      %v7384 = vsel %vm4384, %v7339, 0.0
      %v7385 = vsel %vm4385, %v7340, 0.0
      %v7386 = vsel %vm4386, %v7341, 0.0
      %v7387 = vsel %vm4387, %v7342, 0.0
      %v7388 = vsel %vm4388, %v7343, 0.0
      %v7389 = vsel %vm4389, %v7344, 0.0
      %v7390 = vsel %vm4390, %v7345, 0.0
      %v7391 = vsel %vm4391, %v7346, 0.0
      %v7392 = vsel %vm4392, %v7347, 0.0
      %v7393 = vsel %vm4393, %v7348, 0.0
      %v7394 = vsel %vm4394, %v7349, 0.0
      %v7395 = vsel %vm4395, %v7350, 0.0
      %7432 = vrot.lane.b32.xlu0 %v7360, 120
      %v7433 = vpop.permute.xlu0 %7432
      %7434 = vrot.lane.b32.xlu0 %v7361, 120
      %v7435 = vpop.permute.xlu0 %7434
      %7436 = vrot.lane.b32.xlu0 %v7362, 120
      %v7437 = vpop.permute.xlu0 %7436
      %7438 = vrot.lane.b32.xlu0 %v7363, 120
      %v7439 = vpop.permute.xlu0 %7438
      %7440 = vrot.lane.b32.xlu0 %v7364, 120
      %v7441 = vpop.permute.xlu0 %7440
      %7442 = vrot.lane.b32.xlu0 %v7365, 120
      %v7443 = vpop.permute.xlu0 %7442
      %7444 = vrot.lane.b32.xlu0 %v7366, 120
      %v7445 = vpop.permute.xlu0 %7444
      %7446 = vrot.lane.b32.xlu0 %v7367, 120
      %v7447 = vpop.permute.xlu0 %7446
      %7448 = vrot.lane.b32.xlu0 %v7368, 120
      %v7449 = vpop.permute.xlu0 %7448
      %7450 = vrot.lane.b32.xlu0 %v7369, 120
      %v7451 = vpop.permute.xlu0 %7450
      %7452 = vrot.lane.b32.xlu0 %v7370, 120
      %v7453 = vpop.permute.xlu0 %7452
      %7454 = vrot.lane.b32.xlu0 %v7371, 120
      %v7455 = vpop.permute.xlu0 %7454
      %7456 = vrot.lane.b32.xlu0 %v7372, 120
      %v7457 = vpop.permute.xlu0 %7456
      %7458 = vrot.lane.b32.xlu0 %v7373, 120
      %v7459 = vpop.permute.xlu0 %7458
      %7460 = vrot.lane.b32.xlu0 %v7374, 120
      %v7461 = vpop.permute.xlu0 %7460
      %7462 = vrot.lane.b32.xlu0 %v7375, 120
      %v7463 = vpop.permute.xlu0 %7462
      %7464 = vrot.lane.b32.xlu0 %v7376, 120
      %v7465 = vpop.permute.xlu0 %7464
      %7466 = vrot.lane.b32.xlu0 %v7377, 120
      %v7467 = vpop.permute.xlu0 %7466
      %7468 = vrot.lane.b32.xlu0 %v7378, 120
      %v7469 = vpop.permute.xlu0 %7468
      %7470 = vrot.lane.b32.xlu0 %v7379, 120
      %v7471 = vpop.permute.xlu0 %7470
      %7472 = vrot.lane.b32.xlu0 %v7380, 120
      %v7473 = vpop.permute.xlu0 %7472
      %7474 = vrot.lane.b32.xlu0 %v7381, 120
      %v7475 = vpop.permute.xlu0 %7474
      %7476 = vrot.lane.b32.xlu0 %v7382, 120
      %v7477 = vpop.permute.xlu0 %7476
      %7478 = vrot.lane.b32.xlu0 %v7383, 120
      %v7479 = vpop.permute.xlu0 %7478
      %7480 = vrot.lane.b32.xlu0 %v7384, 120
      %v7481 = vpop.permute.xlu0 %7480
      %7482 = vrot.lane.b32.xlu0 %v7385, 120
      %v7483 = vpop.permute.xlu0 %7482
      %7484 = vrot.lane.b32.xlu0 %v7386, 120
      %v7485 = vpop.permute.xlu0 %7484
      %7486 = vrot.lane.b32.xlu0 %v7387, 120
      %v7487 = vpop.permute.xlu0 %7486
      %7488 = vrot.lane.b32.xlu0 %v7388, 120
      %v7489 = vpop.permute.xlu0 %7488
      %7490 = vrot.lane.b32.xlu0 %v7389, 120
      %v7491 = vpop.permute.xlu0 %7490
      %7492 = vrot.lane.b32.xlu0 %v7390, 120
      %v7493 = vpop.permute.xlu0 %7492
      %7494 = vrot.lane.b32.xlu0 %v7391, 120
      %v7495 = vpop.permute.xlu0 %7494
      %7496 = vrot.lane.b32.xlu0 %v7392, 120
      %v7497 = vpop.permute.xlu0 %7496
      %7498 = vrot.lane.b32.xlu0 %v7393, 120
      %v7499 = vpop.permute.xlu0 %7498
      %7500 = vrot.lane.b32.xlu0 %v7394, 120
      %v7501 = vpop.permute.xlu0 %7500
      %7502 = vrot.lane.b32.xlu0 %v7395, 120
      %v7503 = vpop.permute.xlu0 %7502
      %7540 = vst.msk [vmem:[#allocation3 + $0x13] sm:$0xff] %vm7351, %v7433
      %7541 = vst.msk [vmem:[#allocation3 + $0x1b] sm:$0xff] %vm7351, %v7435
      %7542 = vst.msk [vmem:[#allocation3 + $0x23] sm:$0xff] %vm7351, %v7437
      %7543 = vst.msk [vmem:[#allocation3 + $0x2b] sm:$0xff] %vm7351, %v7439
      %7544 = vst.msk [vmem:[#allocation3 + $0x33] sm:$0xff] %vm7351, %v7441
      %7545 = vst.msk [vmem:[#allocation3 + $0x3b] sm:$0xff] %vm7351, %v7443
      %7546 = vst.msk [vmem:[#allocation3 + $0x43] sm:$0xff] %vm7351, %v7445
      %7547 = vst.msk [vmem:[#allocation3 + $0x4b] sm:$0xff] %vm7351, %v7447
      %7548 = vst.msk [vmem:[#allocation3 + $0x53] sm:$0xff] %vm7351, %v7449
      %7549 = vst.msk [vmem:[#allocation3 + $0x5b] sm:$0xff] %vm7351, %v7451
      %7550 = vst.msk [vmem:[#allocation3 + $0x63] sm:$0xff] %vm7351, %v7453
      %7551 = vst.msk [vmem:[#allocation3 + $0x6b] sm:$0xff] %vm7351, %v7455
      %7552 = vst.msk [vmem:[#allocation3 + $0x73] sm:$0xff] %vm7351, %v7457
      %7553 = vst.msk [vmem:[#allocation3 + $0x7b] sm:$0xff] %vm7351, %v7459
      %7554 = vst.msk [vmem:[#allocation3 + $0x83] sm:$0xff] %vm7351, %v7461
      %7555 = vst.msk [vmem:[#allocation3 + $0x8b] sm:$0xff] %vm7351, %v7463
      %7556 = vst.msk [vmem:[#allocation3 + $0x93] sm:$0xff] %vm7351, %v7465
      %7557 = vst.msk [vmem:[#allocation3 + $0x9b] sm:$0xff] %vm7351, %v7467
      %7558 = vst.msk [vmem:[#allocation3 + $0xa3] sm:$0xff] %vm7351, %v7469
      %7559 = vst.msk [vmem:[#allocation3 + $0xab] sm:$0xff] %vm7351, %v7471
      %7560 = vst.msk [vmem:[#allocation3 + $0xb3] sm:$0xff] %vm7351, %v7473
      %7561 = vst.msk [vmem:[#allocation3 + $0xbb] sm:$0xff] %vm7351, %v7475
      %7562 = vst.msk [vmem:[#allocation3 + $0xc3] sm:$0xff] %vm7351, %v7477
      %7563 = vst.msk [vmem:[#allocation3 + $0xcb] sm:$0xff] %vm7351, %v7479
      %7564 = vst.msk [vmem:[#allocation3 + $0xd3] sm:$0xff] %vm7351, %v7481
      %7565 = vst.msk [vmem:[#allocation3 + $0xdb] sm:$0xff] %vm7351, %v7483
      %7566 = vst.msk [vmem:[#allocation3 + $0xe3] sm:$0xff] %vm7351, %v7485
      %7567 = vst.msk [vmem:[#allocation3 + $0xeb] sm:$0xff] %vm7351, %v7487
      %7568 = vst.msk [vmem:[#allocation3 + $0xf3] sm:$0xff] %vm7351, %v7489
      %7569 = vst.msk [vmem:[#allocation3 + $0xfb] sm:$0xff] %vm7351, %v7491
      %7570 = vst.msk [vmem:[#allocation3 + $0x103] sm:$0xff] %vm7351, %v7493
      %7571 = vst.msk [vmem:[#allocation3 + $0x10b] sm:$0xff] %vm7351, %v7495
      %7572 = vst.msk [vmem:[#allocation3 + $0x113] sm:$0xff] %vm7351, %v7497
      %7573 = vst.msk [vmem:[#allocation3 + $0x11b] sm:$0xff] %vm7351, %v7499
      %7574 = vst.msk [vmem:[#allocation3 + $0x123] sm:$0xff] %vm7351, %v7501
      %7575 = vst.msk [vmem:[#allocation3 + $0x12b] sm:$0xff] %vm7351, %v7503
      %v7576 = vld [vmem:[#allocation3] sm:$0xff]
      %v7577 = vld [vmem:[#allocation3 + $0x8] sm:$0xff]
      %v7578 = vld [vmem:[#allocation3 + $0x10] sm:$0xff]
      %v7579 = vld [vmem:[#allocation3 + $0x18] sm:$0xff]
      %v7580 = vld [vmem:[#allocation3 + $0x20] sm:$0xff]
      %v7581 = vld [vmem:[#allocation3 + $0x28] sm:$0xff]
      %v7582 = vld [vmem:[#allocation3 + $0x30] sm:$0xff]
      %v7583 = vld [vmem:[#allocation3 + $0x38] sm:$0xff]
      %v7584 = vld [vmem:[#allocation3 + $0x40] sm:$0xff]
      %v7585 = vld [vmem:[#allocation3 + $0x48] sm:$0xff]
      %v7586 = vld [vmem:[#allocation3 + $0x50] sm:$0xff]
      %v7587 = vld [vmem:[#allocation3 + $0x58] sm:$0xff]
      %v7588 = vld [vmem:[#allocation3 + $0x60] sm:$0xff]
      %v7589 = vld [vmem:[#allocation3 + $0x68] sm:$0xff]
      %v7590 = vld [vmem:[#allocation3 + $0x70] sm:$0xff]
      %v7591 = vld [vmem:[#allocation3 + $0x78] sm:$0xff]
      %v7592 = vld [vmem:[#allocation3 + $0x80] sm:$0xff]
      %v7593 = vld [vmem:[#allocation3 + $0x88] sm:$0xff]
      %v7594 = vld [vmem:[#allocation3 + $0x90] sm:$0xff]
      %v7595 = vld [vmem:[#allocation3 + $0x98] sm:$0xff]
      %v7596 = vld [vmem:[#allocation3 + $0xa0] sm:$0xff]
      %v7597 = vld [vmem:[#allocation3 + $0xa8] sm:$0xff]
      %v7598 = vld [vmem:[#allocation3 + $0xb0] sm:$0xff]
      %v7599 = vld [vmem:[#allocation3 + $0xb8] sm:$0xff]
      %v7600 = vld [vmem:[#allocation3 + $0xc0] sm:$0xff]
      %v7601 = vld [vmem:[#allocation3 + $0xc8] sm:$0xff]
      %v7602 = vld [vmem:[#allocation3 + $0xd0] sm:$0xff]
      %v7603 = vld [vmem:[#allocation3 + $0xd8] sm:$0xff]
      %v7604 = vld [vmem:[#allocation3 + $0xe0] sm:$0xff]
      %v7605 = vld [vmem:[#allocation3 + $0xe8] sm:$0xff]
      %v7606 = vld [vmem:[#allocation3 + $0xf0] sm:$0xff]
      %v7607 = vld [vmem:[#allocation3 + $0xf8] sm:$0xff]
      %v7608 = vld [vmem:[#allocation3 + $0x100] sm:$0xff]
      %v7609 = vld [vmem:[#allocation3 + $0x108] sm:$0xff]
      %v7610 = vld [vmem:[#allocation3 + $0x110] sm:$0xff]
      %v7611 = vld [vmem:[#allocation3 + $0x118] sm:$0xff]
      %v7612 = vld [vmem:[%s5] sm:$0xff]
      %v7613 = vld [vmem:[#allocation3 + $0x1] sm:$0xff]
      %v7614 = vld [vmem:[#allocation3 + $0x9] sm:$0xff]
      %v7615 = vld [vmem:[#allocation3 + $0x11] sm:$0xff]
      %v7616 = vld [vmem:[#allocation3 + $0x19] sm:$0xff]
      %v7617 = vld [vmem:[#allocation3 + $0x21] sm:$0xff]
      %v7618 = vld [vmem:[#allocation3 + $0x29] sm:$0xff]
      %v7619 = vld [vmem:[#allocation3 + $0x31] sm:$0xff]
      %v7620 = vld [vmem:[#allocation3 + $0x39] sm:$0xff]
      %v7621 = vld [vmem:[#allocation3 + $0x41] sm:$0xff]
      %v7622 = vld [vmem:[#allocation3 + $0x49] sm:$0xff]
      %v7623 = vld [vmem:[#allocation3 + $0x51] sm:$0xff]
      %v7624 = vld [vmem:[#allocation3 + $0x59] sm:$0xff]
      %v7625 = vld [vmem:[#allocation3 + $0x61] sm:$0xff]
      %v7626 = vld [vmem:[#allocation3 + $0x69] sm:$0xff]
      %v7627 = vld [vmem:[#allocation3 + $0x71] sm:$0xff]
      %v7628 = vld [vmem:[#allocation3 + $0x79] sm:$0xff]
      %v7629 = vld [vmem:[#allocation3 + $0x81] sm:$0xff]
      %v7630 = vld [vmem:[#allocation3 + $0x89] sm:$0xff]
      %v7631 = vld [vmem:[#allocation3 + $0x91] sm:$0xff]
      %v7632 = vld [vmem:[#allocation3 + $0x99] sm:$0xff]
      %v7633 = vld [vmem:[#allocation3 + $0xa1] sm:$0xff]
      %v7634 = vld [vmem:[#allocation3 + $0xa9] sm:$0xff]
      %v7635 = vld [vmem:[#allocation3 + $0xb1] sm:$0xff]
      %v7636 = vld [vmem:[#allocation3 + $0xb9] sm:$0xff]
      %v7637 = vld [vmem:[#allocation3 + $0xc1] sm:$0xff]
      %v7638 = vld [vmem:[#allocation3 + $0xc9] sm:$0xff]
      %v7639 = vld [vmem:[#allocation3 + $0xd1] sm:$0xff]
      %v7640 = vld [vmem:[#allocation3 + $0xd9] sm:$0xff]
      %v7641 = vld [vmem:[#allocation3 + $0xe1] sm:$0xff]
      %v7642 = vld [vmem:[#allocation3 + $0xe9] sm:$0xff]
      %v7643 = vld [vmem:[#allocation3 + $0xf1] sm:$0xff]
      %v7644 = vld [vmem:[#allocation3 + $0xf9] sm:$0xff]
      %v7645 = vld [vmem:[#allocation3 + $0x101] sm:$0xff]
      %v7646 = vld [vmem:[#allocation3 + $0x109] sm:$0xff]
      %v7647 = vld [vmem:[#allocation3 + $0x111] sm:$0xff]
      %v7648 = vld [vmem:[#allocation3 + $0x119] sm:$0xff]
      %s7649 = scalar_lea.vmem %s5, 8
      %v7650 = vld [vmem:[%s7649] sm:$0xff]
      %v7652 = vsel %vm7351, %v7613, 0
      %v7655 = vsel %vm7351, %v7614, 0
      %v7658 = vsel %vm7351, %v7615, 0
      %v7661 = vsel %vm7351, %v7616, 0
      %v7664 = vsel %vm7351, %v7617, 0
      %v7667 = vsel %vm7351, %v7618, 0
      %v7670 = vsel %vm7351, %v7619, 0
      %v7673 = vsel %vm7351, %v7620, 0
      %v7676 = vsel %vm7351, %v7621, 0
      %v7679 = vsel %vm7351, %v7622, 0
      %v7682 = vsel %vm7351, %v7623, 0
      %v7685 = vsel %vm7351, %v7624, 0
      %v7688 = vsel %vm7351, %v7625, 0
      %v7691 = vsel %vm7351, %v7626, 0
      %v7694 = vsel %vm7351, %v7627, 0
      %v7697 = vsel %vm7351, %v7628, 0
      %v7700 = vsel %vm7351, %v7629, 0
      %v7703 = vsel %vm7351, %v7630, 0
      %v7706 = vsel %vm7351, %v7631, 0
      %v7709 = vsel %vm7351, %v7632, 0
      %v7712 = vsel %vm7351, %v7633, 0
      %v7715 = vsel %vm7351, %v7634, 0
      %v7718 = vsel %vm7351, %v7635, 0
      %v7721 = vsel %vm7351, %v7636, 0
      %v7724 = vsel %vm7351, %v7637, 0
      %v7727 = vsel %vm7351, %v7638, 0
      %v7730 = vsel %vm7351, %v7639, 0
      %v7733 = vsel %vm7351, %v7640, 0
      %v7736 = vsel %vm7351, %v7641, 0
      %v7739 = vsel %vm7351, %v7642, 0
      %v7742 = vsel %vm7351, %v7643, 0
      %v7745 = vsel %vm7351, %v7644, 0
      %v7748 = vsel %vm7351, %v7645, 0
      %v7751 = vsel %vm7351, %v7646, 0
      %v7754 = vsel %vm7351, %v7647, 0
      %v7757 = vsel %vm7351, %v7648, 0
      %7759 = vmatpush.msra.mxu0 0.0
      %7760 = vmatpush.msra.mxu0 0.0
      %7761 = vmatpush.msra.mxu0 0.0
      %7762 = vmatpush.msra.mxu0 0.0
      %7763 = vmatpush.msra.mxu0 0.0
      %7764 = vmatpush.msra.mxu0 0.0
      %7765 = vmatpush.msra.mxu0 0.0
      %7766 = vmatpush.msra.mxu0 0.0
      %7767 = vmatpush.msra.mxu0 0.0
      %7768 = vmatpush.msra.mxu0 0.0
      %7769 = vmatpush.msra.mxu0 0.0
      %7770 = vmatpush.msra.mxu0 0.0
      %7771 = vmatpush.msra.mxu0 0.0
      %7772 = vmatpush.msra.mxu0 0.0
      %7773 = vmatpush.msra.mxu0 0.0
      %7774 = vmatpush.msra.mxu0 %v7650
      %7775 = vmatmul.f32.gmra.mxu0 %v7652
      %v7776 = vpop.f32.mrf.mxu0
      %v7777 = vadd.f32 0.0, %v7776
      %7778 = vmatmul.f32.gmra.mxu0 %v7655
      %v7779 = vpop.f32.mrf.mxu0
      %v7780 = vadd.f32 0.0, %v7779
      %7781 = vmatmul.f32.gmra.mxu0 %v7658
      %v7782 = vpop.f32.mrf.mxu0
      %v7783 = vadd.f32 0.0, %v7782
      %7784 = vmatmul.f32.gmra.mxu0 %v7661
      %v7785 = vpop.f32.mrf.mxu0
      %v7786 = vadd.f32 0.0, %v7785
      %7787 = vmatmul.f32.gmra.mxu0 %v7664
      %v7788 = vpop.f32.mrf.mxu0
      %v7789 = vadd.f32 0.0, %v7788
      %7790 = vmatmul.f32.gmra.mxu0 %v7667
      %v7791 = vpop.f32.mrf.mxu0
      %v7792 = vadd.f32 0.0, %v7791
      %7793 = vmatmul.f32.gmra.mxu0 %v7670
      %v7794 = vpop.f32.mrf.mxu0
      %v7795 = vadd.f32 0.0, %v7794
      %7796 = vmatmul.f32.gmra.mxu0 %v7673
      %v7797 = vpop.f32.mrf.mxu0
      %v7798 = vadd.f32 0.0, %v7797
      %7799 = vmatmul.f32.gmra.mxu0 %v7676
      %v7800 = vpop.f32.mrf.mxu0
      %v7801 = vadd.f32 0.0, %v7800
      %7802 = vmatmul.f32.gmra.mxu0 %v7679
      %v7803 = vpop.f32.mrf.mxu0
      %v7804 = vadd.f32 0.0, %v7803
      %7805 = vmatmul.f32.gmra.mxu0 %v7682
      %v7806 = vpop.f32.mrf.mxu0
      %v7807 = vadd.f32 0.0, %v7806
      %7808 = vmatmul.f32.gmra.mxu0 %v7685
      %v7809 = vpop.f32.mrf.mxu0
      %v7810 = vadd.f32 0.0, %v7809
      %7811 = vmatmul.f32.gmra.mxu0 %v7688
      %v7812 = vpop.f32.mrf.mxu0
      %v7813 = vadd.f32 0.0, %v7812
      %7814 = vmatmul.f32.gmra.mxu0 %v7691
      %v7815 = vpop.f32.mrf.mxu0
      %v7816 = vadd.f32 0.0, %v7815
      %7817 = vmatmul.f32.gmra.mxu0 %v7694
      %v7818 = vpop.f32.mrf.mxu0
      %v7819 = vadd.f32 0.0, %v7818
      %7820 = vmatmul.f32.gmra.mxu0 %v7697
      %v7821 = vpop.f32.mrf.mxu0
      %v7822 = vadd.f32 0.0, %v7821
      %7823 = vmatmul.f32.gmra.mxu0 %v7700
      %v7824 = vpop.f32.mrf.mxu0
      %v7825 = vadd.f32 0.0, %v7824
      %7826 = vmatmul.f32.gmra.mxu0 %v7703
      %v7827 = vpop.f32.mrf.mxu0
      %v7828 = vadd.f32 0.0, %v7827
      %7829 = vmatmul.f32.gmra.mxu0 %v7706
      %v7830 = vpop.f32.mrf.mxu0
      %v7831 = vadd.f32 0.0, %v7830
      %7832 = vmatmul.f32.gmra.mxu0 %v7709
      %v7833 = vpop.f32.mrf.mxu0
      %v7834 = vadd.f32 0.0, %v7833
      %7835 = vmatmul.f32.gmra.mxu0 %v7712
      %v7836 = vpop.f32.mrf.mxu0
      %v7837 = vadd.f32 0.0, %v7836
      %7838 = vmatmul.f32.gmra.mxu0 %v7715
      %v7839 = vpop.f32.mrf.mxu0
      %v7840 = vadd.f32 0.0, %v7839
      %7841 = vmatmul.f32.gmra.mxu0 %v7718
      %v7842 = vpop.f32.mrf.mxu0
      %v7843 = vadd.f32 0.0, %v7842
      %7844 = vmatmul.f32.gmra.mxu0 %v7721
      %v7845 = vpop.f32.mrf.mxu0
      %v7846 = vadd.f32 0.0, %v7845
      %7847 = vmatmul.f32.gmra.mxu0 %v7724
      %v7848 = vpop.f32.mrf.mxu0
      %v7849 = vadd.f32 0.0, %v7848
      %7850 = vmatmul.f32.gmra.mxu0 %v7727
      %v7851 = vpop.f32.mrf.mxu0
      %v7852 = vadd.f32 0.0, %v7851
      %7853 = vmatmul.f32.gmra.mxu0 %v7730
      %v7854 = vpop.f32.mrf.mxu0
      %v7855 = vadd.f32 0.0, %v7854
      %7856 = vmatmul.f32.gmra.mxu0 %v7733
      %v7857 = vpop.f32.mrf.mxu0
      %v7858 = vadd.f32 0.0, %v7857
      %7859 = vmatmul.f32.gmra.mxu0 %v7736
      %v7860 = vpop.f32.mrf.mxu0
      %v7861 = vadd.f32 0.0, %v7860
      %7862 = vmatmul.f32.gmra.mxu0 %v7739
      %v7863 = vpop.f32.mrf.mxu0
      %v7864 = vadd.f32 0.0, %v7863
      %7865 = vmatmul.f32.gmra.mxu0 %v7742
      %v7866 = vpop.f32.mrf.mxu0
      %v7867 = vadd.f32 0.0, %v7866
      %7868 = vmatmul.f32.gmra.mxu0 %v7745
      %v7869 = vpop.f32.mrf.mxu0
      %v7870 = vadd.f32 0.0, %v7869
      %7871 = vmatmul.f32.gmra.mxu0 %v7748
      %v7872 = vpop.f32.mrf.mxu0
      %v7873 = vadd.f32 0.0, %v7872
      %7874 = vmatmul.f32.gmra.mxu0 %v7751
      %v7875 = vpop.f32.mrf.mxu0
      %v7876 = vadd.f32 0.0, %v7875
      %7877 = vmatmul.f32.gmra.mxu0 %v7754
      %v7878 = vpop.f32.mrf.mxu0
      %v7879 = vadd.f32 0.0, %v7878
      %7880 = vmatmul.f32.gmra.mxu0 %v7757
      %v7881 = vpop.f32.mrf.mxu0
      %v7882 = vadd.f32 0.0, %v7881
      %7883 = vdwg.mxu0
      %v7885 = vsel %vm7351, %v7576, 0
      %v7888 = vsel %vm7351, %v7577, 0
      %v7891 = vsel %vm7351, %v7578, 0
      %v7894 = vsel %vm7351, %v7579, 0
      %v7897 = vsel %vm7351, %v7580, 0
      %v7900 = vsel %vm7351, %v7581, 0
      %v7903 = vsel %vm7351, %v7582, 0
      %v7906 = vsel %vm7351, %v7583, 0
      %v7909 = vsel %vm7351, %v7584, 0
      %v7912 = vsel %vm7351, %v7585, 0
      %v7915 = vsel %vm7351, %v7586, 0
      %v7918 = vsel %vm7351, %v7587, 0
      %v7921 = vsel %vm7351, %v7588, 0
      %v7924 = vsel %vm7351, %v7589, 0
      %v7927 = vsel %vm7351, %v7590, 0
      %v7930 = vsel %vm7351, %v7591, 0
      %v7933 = vsel %vm7351, %v7592, 0
      %v7936 = vsel %vm7351, %v7593, 0
      %v7939 = vsel %vm7351, %v7594, 0
      %v7942 = vsel %vm7351, %v7595, 0
      %v7945 = vsel %vm7351, %v7596, 0
      %v7948 = vsel %vm7351, %v7597, 0
      %v7951 = vsel %vm7351, %v7598, 0
      %v7954 = vsel %vm7351, %v7599, 0
      %v7957 = vsel %vm7351, %v7600, 0
      %v7960 = vsel %vm7351, %v7601, 0
      %v7963 = vsel %vm7351, %v7602, 0
      %v7966 = vsel %vm7351, %v7603, 0
      %v7969 = vsel %vm7351, %v7604, 0
      %v7972 = vsel %vm7351, %v7605, 0
      %v7975 = vsel %vm7351, %v7606, 0
      %v7978 = vsel %vm7351, %v7607, 0
      %v7981 = vsel %vm7351, %v7608, 0
      %v7984 = vsel %vm7351, %v7609, 0
      %v7987 = vsel %vm7351, %v7610, 0
      %v7990 = vsel %vm7351, %v7611, 0
      %7992 = vmatpush.msra.mxu0 0.0
      %7993 = vmatpush.msra.mxu0 0.0
      %7994 = vmatpush.msra.mxu0 0.0
      %7995 = vmatpush.msra.mxu0 0.0
      %7996 = vmatpush.msra.mxu0 0.0
      %7997 = vmatpush.msra.mxu0 0.0
      %7998 = vmatpush.msra.mxu0 0.0
      %7999 = vmatpush.msra.mxu0 0.0
      %8000 = vmatpush.msra.mxu0 0.0
      %8001 = vmatpush.msra.mxu0 0.0
      %8002 = vmatpush.msra.mxu0 0.0
      %8003 = vmatpush.msra.mxu0 0.0
      %8004 = vmatpush.msra.mxu0 0.0
      %8005 = vmatpush.msra.mxu0 0.0
      %8006 = vmatpush.msra.mxu0 0.0
      %8007 = vmatpush.msra.mxu0 %v7612
      %8008 = vmatmul.f32.gmra.mxu0 %v7885
      %v8009 = vpop.f32.mrf.mxu0
      %v8010 = vadd.f32 %v7777, %v8009
      %8011 = vmatmul.f32.gmra.mxu0 %v7888
      %v8012 = vpop.f32.mrf.mxu0
      %v8013 = vadd.f32 %v7780, %v8012
      %8014 = vmatmul.f32.gmra.mxu0 %v7891
      %v8015 = vpop.f32.mrf.mxu0
      %v8016 = vadd.f32 %v7783, %v8015
      %8017 = vmatmul.f32.gmra.mxu0 %v7894
      %v8018 = vpop.f32.mrf.mxu0
      %v8019 = vadd.f32 %v7786, %v8018
      %8020 = vmatmul.f32.gmra.mxu0 %v7897
      %v8021 = vpop.f32.mrf.mxu0
      %v8022 = vadd.f32 %v7789, %v8021
      %8023 = vmatmul.f32.gmra.mxu0 %v7900
      %v8024 = vpop.f32.mrf.mxu0
      %v8025 = vadd.f32 %v7792, %v8024
      %8026 = vmatmul.f32.gmra.mxu0 %v7903
      %v8027 = vpop.f32.mrf.mxu0
      %v8028 = vadd.f32 %v7795, %v8027
      %8029 = vmatmul.f32.gmra.mxu0 %v7906
      %v8030 = vpop.f32.mrf.mxu0
      %v8031 = vadd.f32 %v7798, %v8030
      %8032 = vmatmul.f32.gmra.mxu0 %v7909
      %v8033 = vpop.f32.mrf.mxu0
      %v8034 = vadd.f32 %v7801, %v8033
      %8035 = vmatmul.f32.gmra.mxu0 %v7912
      %v8036 = vpop.f32.mrf.mxu0
      %v8037 = vadd.f32 %v7804, %v8036
      %8038 = vmatmul.f32.gmra.mxu0 %v7915
      %v8039 = vpop.f32.mrf.mxu0
      %v8040 = vadd.f32 %v7807, %v8039
      %8041 = vmatmul.f32.gmra.mxu0 %v7918
      %v8042 = vpop.f32.mrf.mxu0
      %v8043 = vadd.f32 %v7810, %v8042
      %8044 = vmatmul.f32.gmra.mxu0 %v7921
      %v8045 = vpop.f32.mrf.mxu0
      %v8046 = vadd.f32 %v7813, %v8045
      %8047 = vmatmul.f32.gmra.mxu0 %v7924
      %v8048 = vpop.f32.mrf.mxu0
      %v8049 = vadd.f32 %v7816, %v8048
      %8050 = vmatmul.f32.gmra.mxu0 %v7927
      %v8051 = vpop.f32.mrf.mxu0
      %v8052 = vadd.f32 %v7819, %v8051
      %8053 = vmatmul.f32.gmra.mxu0 %v7930
      %v8054 = vpop.f32.mrf.mxu0
      %v8055 = vadd.f32 %v7822, %v8054
      %8056 = vmatmul.f32.gmra.mxu0 %v7933
      %v8057 = vpop.f32.mrf.mxu0
      %v8058 = vadd.f32 %v7825, %v8057
      %8059 = vmatmul.f32.gmra.mxu0 %v7936
      %v8060 = vpop.f32.mrf.mxu0
      %v8061 = vadd.f32 %v7828, %v8060
      %8062 = vmatmul.f32.gmra.mxu0 %v7939
      %v8063 = vpop.f32.mrf.mxu0
      %v8064 = vadd.f32 %v7831, %v8063
      %8065 = vmatmul.f32.gmra.mxu0 %v7942
      %v8066 = vpop.f32.mrf.mxu0
      %v8067 = vadd.f32 %v7834, %v8066
      %8068 = vmatmul.f32.gmra.mxu0 %v7945
      %v8069 = vpop.f32.mrf.mxu0
      %v8070 = vadd.f32 %v7837, %v8069
      %8071 = vmatmul.f32.gmra.mxu0 %v7948
      %v8072 = vpop.f32.mrf.mxu0
      %v8073 = vadd.f32 %v7840, %v8072
      %8074 = vmatmul.f32.gmra.mxu0 %v7951
      %v8075 = vpop.f32.mrf.mxu0
      %v8076 = vadd.f32 %v7843, %v8075
      %8077 = vmatmul.f32.gmra.mxu0 %v7954
      %v8078 = vpop.f32.mrf.mxu0
      %v8079 = vadd.f32 %v7846, %v8078
      %8080 = vmatmul.f32.gmra.mxu0 %v7957
      %v8081 = vpop.f32.mrf.mxu0
      %v8082 = vadd.f32 %v7849, %v8081
      %8083 = vmatmul.f32.gmra.mxu0 %v7960
      %v8084 = vpop.f32.mrf.mxu0
      %v8085 = vadd.f32 %v7852, %v8084
      %8086 = vmatmul.f32.gmra.mxu0 %v7963
      %v8087 = vpop.f32.mrf.mxu0
      %v8088 = vadd.f32 %v7855, %v8087
      %8089 = vmatmul.f32.gmra.mxu0 %v7966
      %v8090 = vpop.f32.mrf.mxu0
      %v8091 = vadd.f32 %v7858, %v8090
      %8092 = vmatmul.f32.gmra.mxu0 %v7969
      %v8093 = vpop.f32.mrf.mxu0
      %v8094 = vadd.f32 %v7861, %v8093
      %8095 = vmatmul.f32.gmra.mxu0 %v7972
      %v8096 = vpop.f32.mrf.mxu0
      %v8097 = vadd.f32 %v7864, %v8096
      %8098 = vmatmul.f32.gmra.mxu0 %v7975
      %v8099 = vpop.f32.mrf.mxu0
      %v8100 = vadd.f32 %v7867, %v8099
      %8101 = vmatmul.f32.gmra.mxu0 %v7978
      %v8102 = vpop.f32.mrf.mxu0
      %v8103 = vadd.f32 %v7870, %v8102
      %8104 = vmatmul.f32.gmra.mxu0 %v7981
      %v8105 = vpop.f32.mrf.mxu0
      %v8106 = vadd.f32 %v7873, %v8105
      %8107 = vmatmul.f32.gmra.mxu0 %v7984
      %v8108 = vpop.f32.mrf.mxu0
      %v8109 = vadd.f32 %v7876, %v8108
      %8110 = vmatmul.f32.gmra.mxu0 %v7987
      %v8111 = vpop.f32.mrf.mxu0
      %v8112 = vadd.f32 %v7879, %v8111
      %8113 = vmatmul.f32.gmra.mxu0 %v7990
      %v8114 = vpop.f32.mrf.mxu0
      %v8115 = vadd.f32 %v7882, %v8114
      %8116 = vdwg.mxu0
      %v8117 = vld [vmem:[#allocation3 + $0x2] sm:$0xff]
      %v8118 = vld [vmem:[#allocation3 + $0xa] sm:$0xff]
      %v8119 = vld [vmem:[#allocation3 + $0x12] sm:$0xff]
      %v8120 = vld [vmem:[#allocation3 + $0x1a] sm:$0xff]
      %v8121 = vld [vmem:[#allocation3 + $0x22] sm:$0xff]
      %v8122 = vld [vmem:[#allocation3 + $0x2a] sm:$0xff]
      %v8123 = vld [vmem:[#allocation3 + $0x32] sm:$0xff]
      %v8124 = vld [vmem:[#allocation3 + $0x3a] sm:$0xff]
      %v8125 = vld [vmem:[#allocation3 + $0x42] sm:$0xff]
      %v8126 = vld [vmem:[#allocation3 + $0x4a] sm:$0xff]
      %v8127 = vld [vmem:[#allocation3 + $0x52] sm:$0xff]
      %v8128 = vld [vmem:[#allocation3 + $0x5a] sm:$0xff]
      %v8129 = vld [vmem:[#allocation3 + $0x62] sm:$0xff]
      %v8130 = vld [vmem:[#allocation3 + $0x6a] sm:$0xff]
      %v8131 = vld [vmem:[#allocation3 + $0x72] sm:$0xff]
      %v8132 = vld [vmem:[#allocation3 + $0x7a] sm:$0xff]
      %v8133 = vld [vmem:[#allocation3 + $0x82] sm:$0xff]
      %v8134 = vld [vmem:[#allocation3 + $0x8a] sm:$0xff]
      %v8135 = vld [vmem:[#allocation3 + $0x92] sm:$0xff]
      %v8136 = vld [vmem:[#allocation3 + $0x9a] sm:$0xff]
      %v8137 = vld [vmem:[#allocation3 + $0xa2] sm:$0xff]
      %v8138 = vld [vmem:[#allocation3 + $0xaa] sm:$0xff]
      %v8139 = vld [vmem:[#allocation3 + $0xb2] sm:$0xff]
      %v8140 = vld [vmem:[#allocation3 + $0xba] sm:$0xff]
      %v8141 = vld [vmem:[#allocation3 + $0xc2] sm:$0xff]
      %v8142 = vld [vmem:[#allocation3 + $0xca] sm:$0xff]
      %v8143 = vld [vmem:[#allocation3 + $0xd2] sm:$0xff]
      %v8144 = vld [vmem:[#allocation3 + $0xda] sm:$0xff]
      %v8145 = vld [vmem:[#allocation3 + $0xe2] sm:$0xff]
      %v8146 = vld [vmem:[#allocation3 + $0xea] sm:$0xff]
      %v8147 = vld [vmem:[#allocation3 + $0xf2] sm:$0xff]
      %v8148 = vld [vmem:[#allocation3 + $0xfa] sm:$0xff]
      %v8149 = vld [vmem:[#allocation3 + $0x102] sm:$0xff]
      %v8150 = vld [vmem:[#allocation3 + $0x10a] sm:$0xff]
      %v8151 = vld [vmem:[#allocation3 + $0x112] sm:$0xff]
      %v8152 = vld [vmem:[#allocation3 + $0x11a] sm:$0xff]
      %s8153 = scalar_lea.vmem %s5, 16
      %v8154 = vld [vmem:[%s8153] sm:$0xff]
      %v8156 = vsel %vm7351, %v8117, 0
      %v8159 = vsel %vm7351, %v8118, 0
      %v8162 = vsel %vm7351, %v8119, 0
      %v8165 = vsel %vm7351, %v8120, 0
      %v8168 = vsel %vm7351, %v8121, 0
      %v8171 = vsel %vm7351, %v8122, 0
      %v8174 = vsel %vm7351, %v8123, 0
      %v8177 = vsel %vm7351, %v8124, 0
      %v8180 = vsel %vm7351, %v8125, 0
      %v8183 = vsel %vm7351, %v8126, 0
      %v8186 = vsel %vm7351, %v8127, 0
      %v8189 = vsel %vm7351, %v8128, 0
      %v8192 = vsel %vm7351, %v8129, 0
      %v8195 = vsel %vm7351, %v8130, 0
      %v8198 = vsel %vm7351, %v8131, 0
      %v8201 = vsel %vm7351, %v8132, 0
      %v8204 = vsel %vm7351, %v8133, 0
      %v8207 = vsel %vm7351, %v8134, 0
      %v8210 = vsel %vm7351, %v8135, 0
      %v8213 = vsel %vm7351, %v8136, 0
      %v8216 = vsel %vm7351, %v8137, 0
      %v8219 = vsel %vm7351, %v8138, 0
      %v8222 = vsel %vm7351, %v8139, 0
      %v8225 = vsel %vm7351, %v8140, 0
      %v8228 = vsel %vm7351, %v8141, 0
      %v8231 = vsel %vm7351, %v8142, 0
      %v8234 = vsel %vm7351, %v8143, 0
      %v8237 = vsel %vm7351, %v8144, 0
      %v8240 = vsel %vm7351, %v8145, 0
      %v8243 = vsel %vm7351, %v8146, 0
      %v8246 = vsel %vm7351, %v8147, 0
      %v8249 = vsel %vm7351, %v8148, 0
      %v8252 = vsel %vm7351, %v8149, 0
      %v8255 = vsel %vm7351, %v8150, 0
      %v8258 = vsel %vm7351, %v8151, 0
      %v8261 = vsel %vm7351, %v8152, 0
      %8263 = vmatpush.msra.mxu0 0.0
      %8264 = vmatpush.msra.mxu0 0.0
      %8265 = vmatpush.msra.mxu0 0.0
      %8266 = vmatpush.msra.mxu0 0.0
      %8267 = vmatpush.msra.mxu0 0.0
      %8268 = vmatpush.msra.mxu0 0.0
      %8269 = vmatpush.msra.mxu0 0.0
      %8270 = vmatpush.msra.mxu0 0.0
      %8271 = vmatpush.msra.mxu0 0.0
      %8272 = vmatpush.msra.mxu0 0.0
      %8273 = vmatpush.msra.mxu0 0.0
      %8274 = vmatpush.msra.mxu0 0.0
      %8275 = vmatpush.msra.mxu0 0.0
      %8276 = vmatpush.msra.mxu0 0.0
      %8277 = vmatpush.msra.mxu0 0.0
      %8278 = vmatpush.msra.mxu0 %v8154
      %8279 = vmatmul.f32.gmra.mxu0 %v8156
      %v8280 = vpop.f32.mrf.mxu0
      %v8281 = vadd.f32 0.0, %v8280
      %8282 = vmatmul.f32.gmra.mxu0 %v8159
      %v8283 = vpop.f32.mrf.mxu0
      %v8284 = vadd.f32 0.0, %v8283
      %8285 = vmatmul.f32.gmra.mxu0 %v8162
      %v8286 = vpop.f32.mrf.mxu0
      %v8287 = vadd.f32 0.0, %v8286
      %8288 = vmatmul.f32.gmra.mxu0 %v8165
      %v8289 = vpop.f32.mrf.mxu0
      %v8290 = vadd.f32 0.0, %v8289
      %8291 = vmatmul.f32.gmra.mxu0 %v8168
      %v8292 = vpop.f32.mrf.mxu0
      %v8293 = vadd.f32 0.0, %v8292
      %8294 = vmatmul.f32.gmra.mxu0 %v8171
      %v8295 = vpop.f32.mrf.mxu0
      %v8296 = vadd.f32 0.0, %v8295
      %8297 = vmatmul.f32.gmra.mxu0 %v8174
      %v8298 = vpop.f32.mrf.mxu0
      %v8299 = vadd.f32 0.0, %v8298
      %8300 = vmatmul.f32.gmra.mxu0 %v8177
      %v8301 = vpop.f32.mrf.mxu0
      %v8302 = vadd.f32 0.0, %v8301
      %8303 = vmatmul.f32.gmra.mxu0 %v8180
      %v8304 = vpop.f32.mrf.mxu0
      %v8305 = vadd.f32 0.0, %v8304
      %8306 = vmatmul.f32.gmra.mxu0 %v8183
      %v8307 = vpop.f32.mrf.mxu0
      %v8308 = vadd.f32 0.0, %v8307
      %8309 = vmatmul.f32.gmra.mxu0 %v8186
      %v8310 = vpop.f32.mrf.mxu0
      %v8311 = vadd.f32 0.0, %v8310
      %8312 = vmatmul.f32.gmra.mxu0 %v8189
      %v8313 = vpop.f32.mrf.mxu0
      %v8314 = vadd.f32 0.0, %v8313
      %8315 = vmatmul.f32.gmra.mxu0 %v8192
      %v8316 = vpop.f32.mrf.mxu0
      %v8317 = vadd.f32 0.0, %v8316
      %8318 = vmatmul.f32.gmra.mxu0 %v8195
      %v8319 = vpop.f32.mrf.mxu0
      %v8320 = vadd.f32 0.0, %v8319
      %8321 = vmatmul.f32.gmra.mxu0 %v8198
      %v8322 = vpop.f32.mrf.mxu0
      %v8323 = vadd.f32 0.0, %v8322
      %8324 = vmatmul.f32.gmra.mxu0 %v8201
      %v8325 = vpop.f32.mrf.mxu0
      %v8326 = vadd.f32 0.0, %v8325
      %8327 = vmatmul.f32.gmra.mxu0 %v8204
      %v8328 = vpop.f32.mrf.mxu0
      %v8329 = vadd.f32 0.0, %v8328
      %8330 = vmatmul.f32.gmra.mxu0 %v8207
      %v8331 = vpop.f32.mrf.mxu0
      %v8332 = vadd.f32 0.0, %v8331
      %8333 = vmatmul.f32.gmra.mxu0 %v8210
      %v8334 = vpop.f32.mrf.mxu0
      %v8335 = vadd.f32 0.0, %v8334
      %8336 = vmatmul.f32.gmra.mxu0 %v8213
      %v8337 = vpop.f32.mrf.mxu0
      %v8338 = vadd.f32 0.0, %v8337
      %8339 = vmatmul.f32.gmra.mxu0 %v8216
      %v8340 = vpop.f32.mrf.mxu0
      %v8341 = vadd.f32 0.0, %v8340
      %8342 = vmatmul.f32.gmra.mxu0 %v8219
      %v8343 = vpop.f32.mrf.mxu0
      %v8344 = vadd.f32 0.0, %v8343
      %8345 = vmatmul.f32.gmra.mxu0 %v8222
      %v8346 = vpop.f32.mrf.mxu0
      %v8347 = vadd.f32 0.0, %v8346
      %8348 = vmatmul.f32.gmra.mxu0 %v8225
      %v8349 = vpop.f32.mrf.mxu0
      %v8350 = vadd.f32 0.0, %v8349
      %8351 = vmatmul.f32.gmra.mxu0 %v8228
      %v8352 = vpop.f32.mrf.mxu0
      %v8353 = vadd.f32 0.0, %v8352
      %8354 = vmatmul.f32.gmra.mxu0 %v8231
      %v8355 = vpop.f32.mrf.mxu0
      %v8356 = vadd.f32 0.0, %v8355
      %8357 = vmatmul.f32.gmra.mxu0 %v8234
      %v8358 = vpop.f32.mrf.mxu0
      %v8359 = vadd.f32 0.0, %v8358
      %8360 = vmatmul.f32.gmra.mxu0 %v8237
      %v8361 = vpop.f32.mrf.mxu0
      %v8362 = vadd.f32 0.0, %v8361
      %8363 = vmatmul.f32.gmra.mxu0 %v8240
      %v8364 = vpop.f32.mrf.mxu0
      %v8365 = vadd.f32 0.0, %v8364
      %8366 = vmatmul.f32.gmra.mxu0 %v8243
      %v8367 = vpop.f32.mrf.mxu0
      %v8368 = vadd.f32 0.0, %v8367
      %8369 = vmatmul.f32.gmra.mxu0 %v8246
      %v8370 = vpop.f32.mrf.mxu0
      %v8371 = vadd.f32 0.0, %v8370
      %8372 = vmatmul.f32.gmra.mxu0 %v8249
      %v8373 = vpop.f32.mrf.mxu0
      %v8374 = vadd.f32 0.0, %v8373
      %8375 = vmatmul.f32.gmra.mxu0 %v8252
      %v8376 = vpop.f32.mrf.mxu0
      %v8377 = vadd.f32 0.0, %v8376
      %8378 = vmatmul.f32.gmra.mxu0 %v8255
      %v8379 = vpop.f32.mrf.mxu0
      %v8380 = vadd.f32 0.0, %v8379
      %8381 = vmatmul.f32.gmra.mxu0 %v8258
      %v8382 = vpop.f32.mrf.mxu0
      %v8383 = vadd.f32 0.0, %v8382
      %8384 = vmatmul.f32.gmra.mxu0 %v8261
      %v8385 = vpop.f32.mrf.mxu0
      %v8386 = vadd.f32 0.0, %v8385
      %8387 = vdwg.mxu0
      %v8388 = vadd.f32 %v8010, %v8281
      %v8389 = vadd.f32 %v8013, %v8284
      %v8390 = vadd.f32 %v8016, %v8287
      %v8391 = vadd.f32 %v8019, %v8290
      %v8392 = vadd.f32 %v8022, %v8293
      %v8393 = vadd.f32 %v8025, %v8296
      %v8394 = vadd.f32 %v8028, %v8299
      %v8395 = vadd.f32 %v8031, %v8302
      %v8396 = vadd.f32 %v8034, %v8305
      %v8397 = vadd.f32 %v8037, %v8308
      %v8398 = vadd.f32 %v8040, %v8311
      %v8399 = vadd.f32 %v8043, %v8314
      %v8400 = vadd.f32 %v8046, %v8317
      %v8401 = vadd.f32 %v8049, %v8320
      %v8402 = vadd.f32 %v8052, %v8323
      %v8403 = vadd.f32 %v8055, %v8326
      %v8404 = vadd.f32 %v8058, %v8329
      %v8405 = vadd.f32 %v8061, %v8332
      %v8406 = vadd.f32 %v8064, %v8335
      %v8407 = vadd.f32 %v8067, %v8338
      %v8408 = vadd.f32 %v8070, %v8341
      %v8409 = vadd.f32 %v8073, %v8344
      %v8410 = vadd.f32 %v8076, %v8347
      %v8411 = vadd.f32 %v8079, %v8350
      %v8412 = vadd.f32 %v8082, %v8353
      %v8413 = vadd.f32 %v8085, %v8356
      %v8414 = vadd.f32 %v8088, %v8359
      %v8415 = vadd.f32 %v8091, %v8362
      %v8416 = vadd.f32 %v8094, %v8365
      %v8417 = vadd.f32 %v8097, %v8368
      %v8418 = vadd.f32 %v8100, %v8371
      %v8419 = vadd.f32 %v8103, %v8374
      %v8420 = vadd.f32 %v8106, %v8377
      %v8421 = vadd.f32 %v8109, %v8380
      %v8422 = vadd.f32 %v8112, %v8383
      %v8423 = vadd.f32 %v8115, %v8386
      %v8424 = vld [vmem:[#allocation3 + $0x12] sm:$0xff]
      %v8425 = vld [vmem:[#allocation3 + $0x1a] sm:$0xff]
      %v8426 = vld [vmem:[#allocation3 + $0x22] sm:$0xff]
      %v8427 = vld [vmem:[#allocation3 + $0x2a] sm:$0xff]
      %v8428 = vld [vmem:[#allocation3 + $0x32] sm:$0xff]
      %v8429 = vld [vmem:[#allocation3 + $0x3a] sm:$0xff]
      %v8430 = vld [vmem:[#allocation3 + $0x42] sm:$0xff]
      %v8431 = vld [vmem:[#allocation3 + $0x4a] sm:$0xff]
      %v8432 = vld [vmem:[#allocation3 + $0x52] sm:$0xff]
      %v8433 = vld [vmem:[#allocation3 + $0x5a] sm:$0xff]
      %v8434 = vld [vmem:[#allocation3 + $0x62] sm:$0xff]
      %v8435 = vld [vmem:[#allocation3 + $0x6a] sm:$0xff]
      %v8436 = vld [vmem:[#allocation3 + $0x72] sm:$0xff]
      %v8437 = vld [vmem:[#allocation3 + $0x7a] sm:$0xff]
      %v8438 = vld [vmem:[#allocation3 + $0x82] sm:$0xff]
      %v8439 = vld [vmem:[#allocation3 + $0x8a] sm:$0xff]
      %v8440 = vld [vmem:[#allocation3 + $0x92] sm:$0xff]
      %v8441 = vld [vmem:[#allocation3 + $0x9a] sm:$0xff]
      %v8442 = vld [vmem:[#allocation3 + $0xa2] sm:$0xff]
      %v8443 = vld [vmem:[#allocation3 + $0xaa] sm:$0xff]
      %v8444 = vld [vmem:[#allocation3 + $0xb2] sm:$0xff]
      %v8445 = vld [vmem:[#allocation3 + $0xba] sm:$0xff]
      %v8446 = vld [vmem:[#allocation3 + $0xc2] sm:$0xff]
      %v8447 = vld [vmem:[#allocation3 + $0xca] sm:$0xff]
      %v8448 = vld [vmem:[#allocation3 + $0xd2] sm:$0xff]
      %v8449 = vld [vmem:[#allocation3 + $0xda] sm:$0xff]
      %v8450 = vld [vmem:[#allocation3 + $0xe2] sm:$0xff]
      %v8451 = vld [vmem:[#allocation3 + $0xea] sm:$0xff]
      %v8452 = vld [vmem:[#allocation3 + $0xf2] sm:$0xff]
      %v8453 = vld [vmem:[#allocation3 + $0xfa] sm:$0xff]
      %v8454 = vld [vmem:[#allocation3 + $0x102] sm:$0xff]
      %v8455 = vld [vmem:[#allocation3 + $0x10a] sm:$0xff]
      %v8456 = vld [vmem:[#allocation3 + $0x112] sm:$0xff]
      %v8457 = vld [vmem:[#allocation3 + $0x11a] sm:$0xff]
      %v8458 = vld [vmem:[#allocation3 + $0x122] sm:$0xff]
      %v8459 = vld [vmem:[#allocation3 + $0x12a] sm:$0xff]
      %s8460 = scalar_lea.vmem %s5, 24
      %v8461 = vld [vmem:[%s8460] sm:$0xff]
      %v8463 = vsel %vm7351, %v8424, 0
      %v8466 = vsel %vm7351, %v8425, 0
      %v8469 = vsel %vm7351, %v8426, 0
      %v8472 = vsel %vm7351, %v8427, 0
      %v8475 = vsel %vm7351, %v8428, 0
      %v8478 = vsel %vm7351, %v8429, 0
      %v8481 = vsel %vm7351, %v8430, 0
      %v8484 = vsel %vm7351, %v8431, 0
      %v8487 = vsel %vm7351, %v8432, 0
      %v8490 = vsel %vm7351, %v8433, 0
      %v8493 = vsel %vm7351, %v8434, 0
      %v8496 = vsel %vm7351, %v8435, 0
      %v8499 = vsel %vm7351, %v8436, 0
      %v8502 = vsel %vm7351, %v8437, 0
      %v8505 = vsel %vm7351, %v8438, 0
      %v8508 = vsel %vm7351, %v8439, 0
      %v8511 = vsel %vm7351, %v8440, 0
      %v8514 = vsel %vm7351, %v8441, 0
      %v8517 = vsel %vm7351, %v8442, 0
      %v8520 = vsel %vm7351, %v8443, 0
      %v8523 = vsel %vm7351, %v8444, 0
      %v8526 = vsel %vm7351, %v8445, 0
      %v8529 = vsel %vm7351, %v8446, 0
      %v8532 = vsel %vm7351, %v8447, 0
      %v8535 = vsel %vm7351, %v8448, 0
      %v8538 = vsel %vm7351, %v8449, 0
      %v8541 = vsel %vm7351, %v8450, 0
      %v8544 = vsel %vm7351, %v8451, 0
      %v8547 = vsel %vm7351, %v8452, 0
      %v8550 = vsel %vm7351, %v8453, 0
      %v8553 = vsel %vm7351, %v8454, 0
      %v8556 = vsel %vm7351, %v8455, 0
      %v8559 = vsel %vm7351, %v8456, 0
      %v8562 = vsel %vm7351, %v8457, 0
      %v8565 = vsel %vm7351, %v8458, 0
      %v8568 = vsel %vm7351, %v8459, 0
      %8570 = vmatpush.msra.mxu0 0.0
      %8571 = vmatpush.msra.mxu0 0.0
      %8572 = vmatpush.msra.mxu0 0.0
      %8573 = vmatpush.msra.mxu0 0.0
      %8574 = vmatpush.msra.mxu0 0.0
      %8575 = vmatpush.msra.mxu0 0.0
      %8576 = vmatpush.msra.mxu0 0.0
      %8577 = vmatpush.msra.mxu0 0.0
      %8578 = vmatpush.msra.mxu0 0.0
      %8579 = vmatpush.msra.mxu0 0.0
      %8580 = vmatpush.msra.mxu0 0.0
      %8581 = vmatpush.msra.mxu0 0.0
      %8582 = vmatpush.msra.mxu0 0.0
      %8583 = vmatpush.msra.mxu0 0.0
      %8584 = vmatpush.msra.mxu0 0.0
      %8585 = vmatpush.msra.mxu0 %v8461
      %8586 = vmatmul.f32.gmra.mxu0 %v8463
      %v8587 = vpop.f32.mrf.mxu0
      %v8588 = vadd.f32 0.0, %v8587
      %8589 = vmatmul.f32.gmra.mxu0 %v8466
      %v8590 = vpop.f32.mrf.mxu0
      %v8591 = vadd.f32 0.0, %v8590
      %8592 = vmatmul.f32.gmra.mxu0 %v8469
      %v8593 = vpop.f32.mrf.mxu0
      %v8594 = vadd.f32 0.0, %v8593
      %8595 = vmatmul.f32.gmra.mxu0 %v8472
      %v8596 = vpop.f32.mrf.mxu0
      %v8597 = vadd.f32 0.0, %v8596
      %8598 = vmatmul.f32.gmra.mxu0 %v8475
      %v8599 = vpop.f32.mrf.mxu0
      %v8600 = vadd.f32 0.0, %v8599
      %8601 = vmatmul.f32.gmra.mxu0 %v8478
      %v8602 = vpop.f32.mrf.mxu0
      %v8603 = vadd.f32 0.0, %v8602
      %8604 = vmatmul.f32.gmra.mxu0 %v8481
      %v8605 = vpop.f32.mrf.mxu0
      %v8606 = vadd.f32 0.0, %v8605
      %8607 = vmatmul.f32.gmra.mxu0 %v8484
      %v8608 = vpop.f32.mrf.mxu0
      %v8609 = vadd.f32 0.0, %v8608
      %8610 = vmatmul.f32.gmra.mxu0 %v8487
      %v8611 = vpop.f32.mrf.mxu0
      %v8612 = vadd.f32 0.0, %v8611
      %8613 = vmatmul.f32.gmra.mxu0 %v8490
      %v8614 = vpop.f32.mrf.mxu0
      %v8615 = vadd.f32 0.0, %v8614
      %8616 = vmatmul.f32.gmra.mxu0 %v8493
      %v8617 = vpop.f32.mrf.mxu0
      %v8618 = vadd.f32 0.0, %v8617
      %8619 = vmatmul.f32.gmra.mxu0 %v8496
      %v8620 = vpop.f32.mrf.mxu0
      %v8621 = vadd.f32 0.0, %v8620
      %8622 = vmatmul.f32.gmra.mxu0 %v8499
      %v8623 = vpop.f32.mrf.mxu0
      %v8624 = vadd.f32 0.0, %v8623
      %8625 = vmatmul.f32.gmra.mxu0 %v8502
      %v8626 = vpop.f32.mrf.mxu0
      %v8627 = vadd.f32 0.0, %v8626
      %8628 = vmatmul.f32.gmra.mxu0 %v8505
      %v8629 = vpop.f32.mrf.mxu0
      %v8630 = vadd.f32 0.0, %v8629
      %8631 = vmatmul.f32.gmra.mxu0 %v8508
      %v8632 = vpop.f32.mrf.mxu0
      %v8633 = vadd.f32 0.0, %v8632
      %8634 = vmatmul.f32.gmra.mxu0 %v8511
      %v8635 = vpop.f32.mrf.mxu0
      %v8636 = vadd.f32 0.0, %v8635
      %8637 = vmatmul.f32.gmra.mxu0 %v8514
      %v8638 = vpop.f32.mrf.mxu0
      %v8639 = vadd.f32 0.0, %v8638
      %8640 = vmatmul.f32.gmra.mxu0 %v8517
      %v8641 = vpop.f32.mrf.mxu0
      %v8642 = vadd.f32 0.0, %v8641
      %8643 = vmatmul.f32.gmra.mxu0 %v8520
      %v8644 = vpop.f32.mrf.mxu0
      %v8645 = vadd.f32 0.0, %v8644
      %8646 = vmatmul.f32.gmra.mxu0 %v8523
      %v8647 = vpop.f32.mrf.mxu0
      %v8648 = vadd.f32 0.0, %v8647
      %8649 = vmatmul.f32.gmra.mxu0 %v8526
      %v8650 = vpop.f32.mrf.mxu0
      %v8651 = vadd.f32 0.0, %v8650
      %8652 = vmatmul.f32.gmra.mxu0 %v8529
      %v8653 = vpop.f32.mrf.mxu0
      %v8654 = vadd.f32 0.0, %v8653
      %8655 = vmatmul.f32.gmra.mxu0 %v8532
      %v8656 = vpop.f32.mrf.mxu0
      %v8657 = vadd.f32 0.0, %v8656
      %8658 = vmatmul.f32.gmra.mxu0 %v8535
      %v8659 = vpop.f32.mrf.mxu0
      %v8660 = vadd.f32 0.0, %v8659
      %8661 = vmatmul.f32.gmra.mxu0 %v8538
      %v8662 = vpop.f32.mrf.mxu0
      %v8663 = vadd.f32 0.0, %v8662
      %8664 = vmatmul.f32.gmra.mxu0 %v8541
      %v8665 = vpop.f32.mrf.mxu0
      %v8666 = vadd.f32 0.0, %v8665
      %8667 = vmatmul.f32.gmra.mxu0 %v8544
      %v8668 = vpop.f32.mrf.mxu0
      %v8669 = vadd.f32 0.0, %v8668
      %8670 = vmatmul.f32.gmra.mxu0 %v8547
      %v8671 = vpop.f32.mrf.mxu0
      %v8672 = vadd.f32 0.0, %v8671
      %8673 = vmatmul.f32.gmra.mxu0 %v8550
      %v8674 = vpop.f32.mrf.mxu0
      %v8675 = vadd.f32 0.0, %v8674
      %8676 = vmatmul.f32.gmra.mxu0 %v8553
      %v8677 = vpop.f32.mrf.mxu0
      %v8678 = vadd.f32 0.0, %v8677
      %8679 = vmatmul.f32.gmra.mxu0 %v8556
      %v8680 = vpop.f32.mrf.mxu0
      %v8681 = vadd.f32 0.0, %v8680
      %8682 = vmatmul.f32.gmra.mxu0 %v8559
      %v8683 = vpop.f32.mrf.mxu0
      %v8684 = vadd.f32 0.0, %v8683
      %8685 = vmatmul.f32.gmra.mxu0 %v8562
      %v8686 = vpop.f32.mrf.mxu0
      %v8687 = vadd.f32 0.0, %v8686
      %8688 = vmatmul.f32.gmra.mxu0 %v8565
      %v8689 = vpop.f32.mrf.mxu0
      %v8690 = vadd.f32 0.0, %v8689
      %8691 = vmatmul.f32.gmra.mxu0 %v8568
      %v8692 = vpop.f32.mrf.mxu0
      %v8693 = vadd.f32 0.0, %v8692
      %8694 = vdwg.mxu0
      %v8695 = vadd.f32 %v8388, %v8588
      %v8696 = vadd.f32 %v8389, %v8591
      %v8697 = vadd.f32 %v8390, %v8594
      %v8698 = vadd.f32 %v8391, %v8597
      %v8699 = vadd.f32 %v8392, %v8600
      %v8700 = vadd.f32 %v8393, %v8603
      %v8701 = vadd.f32 %v8394, %v8606
      %v8702 = vadd.f32 %v8395, %v8609
      %v8703 = vadd.f32 %v8396, %v8612
      %v8704 = vadd.f32 %v8397, %v8615
      %v8705 = vadd.f32 %v8398, %v8618
      %v8706 = vadd.f32 %v8399, %v8621
      %v8707 = vadd.f32 %v8400, %v8624
      %v8708 = vadd.f32 %v8401, %v8627
      %v8709 = vadd.f32 %v8402, %v8630
      %v8710 = vadd.f32 %v8403, %v8633
      %v8711 = vadd.f32 %v8404, %v8636
      %v8712 = vadd.f32 %v8405, %v8639
      %v8713 = vadd.f32 %v8406, %v8642
      %v8714 = vadd.f32 %v8407, %v8645
      %v8715 = vadd.f32 %v8408, %v8648
      %v8716 = vadd.f32 %v8409, %v8651
      %v8717 = vadd.f32 %v8410, %v8654
      %v8718 = vadd.f32 %v8411, %v8657
      %v8719 = vadd.f32 %v8412, %v8660
      %v8720 = vadd.f32 %v8413, %v8663
      %v8721 = vadd.f32 %v8414, %v8666
      %v8722 = vadd.f32 %v8415, %v8669
      %v8723 = vadd.f32 %v8416, %v8672
      %v8724 = vadd.f32 %v8417, %v8675
      %v8725 = vadd.f32 %v8418, %v8678
      %v8726 = vadd.f32 %v8419, %v8681
      %v8727 = vadd.f32 %v8420, %v8684
      %v8728 = vadd.f32 %v8421, %v8687
      %v8729 = vadd.f32 %v8422, %v8690
      %v8730 = vadd.f32 %v8423, %v8693
      %v8731 = vld [vmem:[#allocation3 + $0x13] sm:$0xff]
      %v8732 = vld [vmem:[#allocation3 + $0x1b] sm:$0xff]
      %v8733 = vld [vmem:[#allocation3 + $0x23] sm:$0xff]
      %v8734 = vld [vmem:[#allocation3 + $0x2b] sm:$0xff]
      %v8735 = vld [vmem:[#allocation3 + $0x33] sm:$0xff]
      %v8736 = vld [vmem:[#allocation3 + $0x3b] sm:$0xff]
      %v8737 = vld [vmem:[#allocation3 + $0x43] sm:$0xff]
      %v8738 = vld [vmem:[#allocation3 + $0x4b] sm:$0xff]
      %v8739 = vld [vmem:[#allocation3 + $0x53] sm:$0xff]
      %v8740 = vld [vmem:[#allocation3 + $0x5b] sm:$0xff]
      %v8741 = vld [vmem:[#allocation3 + $0x63] sm:$0xff]
      %v8742 = vld [vmem:[#allocation3 + $0x6b] sm:$0xff]
      %v8743 = vld [vmem:[#allocation3 + $0x73] sm:$0xff]
      %v8744 = vld [vmem:[#allocation3 + $0x7b] sm:$0xff]
      %v8745 = vld [vmem:[#allocation3 + $0x83] sm:$0xff]
      %v8746 = vld [vmem:[#allocation3 + $0x8b] sm:$0xff]
      %v8747 = vld [vmem:[#allocation3 + $0x93] sm:$0xff]
      %v8748 = vld [vmem:[#allocation3 + $0x9b] sm:$0xff]
      %v8749 = vld [vmem:[#allocation3 + $0xa3] sm:$0xff]
      %v8750 = vld [vmem:[#allocation3 + $0xab] sm:$0xff]
      %v8751 = vld [vmem:[#allocation3 + $0xb3] sm:$0xff]
      %v8752 = vld [vmem:[#allocation3 + $0xbb] sm:$0xff]
      %v8753 = vld [vmem:[#allocation3 + $0xc3] sm:$0xff]
      %v8754 = vld [vmem:[#allocation3 + $0xcb] sm:$0xff]
      %v8755 = vld [vmem:[#allocation3 + $0xd3] sm:$0xff]
      %v8756 = vld [vmem:[#allocation3 + $0xdb] sm:$0xff]
      %v8757 = vld [vmem:[#allocation3 + $0xe3] sm:$0xff]
      %v8758 = vld [vmem:[#allocation3 + $0xeb] sm:$0xff]
      %v8759 = vld [vmem:[#allocation3 + $0xf3] sm:$0xff]
      %v8760 = vld [vmem:[#allocation3 + $0xfb] sm:$0xff]
      %v8761 = vld [vmem:[#allocation3 + $0x103] sm:$0xff]
      %v8762 = vld [vmem:[#allocation3 + $0x10b] sm:$0xff]
      %v8763 = vld [vmem:[#allocation3 + $0x113] sm:$0xff]
      %v8764 = vld [vmem:[#allocation3 + $0x11b] sm:$0xff]
      %v8765 = vld [vmem:[#allocation3 + $0x123] sm:$0xff]
      %v8766 = vld [vmem:[#allocation3 + $0x12b] sm:$0xff]
      %s8767 = scalar_lea.vmem %s5, 32
      %v8768 = vld [vmem:[%s8767] sm:$0xff]
      %v8770 = vsel %vm7351, %v8731, 0
      %v8773 = vsel %vm7351, %v8732, 0
      %v8776 = vsel %vm7351, %v8733, 0
      %v8779 = vsel %vm7351, %v8734, 0
      %v8782 = vsel %vm7351, %v8735, 0
      %v8785 = vsel %vm7351, %v8736, 0
      %v8788 = vsel %vm7351, %v8737, 0
      %v8791 = vsel %vm7351, %v8738, 0
      %v8794 = vsel %vm7351, %v8739, 0
      %v8797 = vsel %vm7351, %v8740, 0
      %v8800 = vsel %vm7351, %v8741, 0
      %v8803 = vsel %vm7351, %v8742, 0
      %v8806 = vsel %vm7351, %v8743, 0
      %v8809 = vsel %vm7351, %v8744, 0
      %v8812 = vsel %vm7351, %v8745, 0
      %v8815 = vsel %vm7351, %v8746, 0
      %v8818 = vsel %vm7351, %v8747, 0
      %v8821 = vsel %vm7351, %v8748, 0
      %v8824 = vsel %vm7351, %v8749, 0
      %v8827 = vsel %vm7351, %v8750, 0
      %v8830 = vsel %vm7351, %v8751, 0
      %v8833 = vsel %vm7351, %v8752, 0
      %v8836 = vsel %vm7351, %v8753, 0
      %v8839 = vsel %vm7351, %v8754, 0
      %v8842 = vsel %vm7351, %v8755, 0
      %v8845 = vsel %vm7351, %v8756, 0
      %v8848 = vsel %vm7351, %v8757, 0
      %v8851 = vsel %vm7351, %v8758, 0
      %v8854 = vsel %vm7351, %v8759, 0
      %v8857 = vsel %vm7351, %v8760, 0
      %v8860 = vsel %vm7351, %v8761, 0
      %v8863 = vsel %vm7351, %v8762, 0
      %v8866 = vsel %vm7351, %v8763, 0
      %v8869 = vsel %vm7351, %v8764, 0
      %v8872 = vsel %vm7351, %v8765, 0
      %v8875 = vsel %vm7351, %v8766, 0
      %8877 = vmatpush.msra.mxu0 0.0
      %8878 = vmatpush.msra.mxu0 0.0
      %8879 = vmatpush.msra.mxu0 0.0
      %8880 = vmatpush.msra.mxu0 0.0
      %8881 = vmatpush.msra.mxu0 0.0
      %8882 = vmatpush.msra.mxu0 0.0
      %8883 = vmatpush.msra.mxu0 0.0
      %8884 = vmatpush.msra.mxu0 0.0
      %8885 = vmatpush.msra.mxu0 0.0
      %8886 = vmatpush.msra.mxu0 0.0
      %8887 = vmatpush.msra.mxu0 0.0
      %8888 = vmatpush.msra.mxu0 0.0
      %8889 = vmatpush.msra.mxu0 0.0
      %8890 = vmatpush.msra.mxu0 0.0
      %8891 = vmatpush.msra.mxu0 0.0
      %8892 = vmatpush.msra.mxu0 %v8768
      %8893 = vmatmul.f32.gmra.mxu0 %v8770
      %v8894 = vpop.f32.mrf.mxu0
      %v8895 = vadd.f32 0.0, %v8894
      %8896 = vmatmul.f32.gmra.mxu0 %v8773
      %v8897 = vpop.f32.mrf.mxu0
      %v8898 = vadd.f32 0.0, %v8897
      %8899 = vmatmul.f32.gmra.mxu0 %v8776
      %v8900 = vpop.f32.mrf.mxu0
      %v8901 = vadd.f32 0.0, %v8900
      %8902 = vmatmul.f32.gmra.mxu0 %v8779
      %v8903 = vpop.f32.mrf.mxu0
      %v8904 = vadd.f32 0.0, %v8903
      %8905 = vmatmul.f32.gmra.mxu0 %v8782
      %v8906 = vpop.f32.mrf.mxu0
      %v8907 = vadd.f32 0.0, %v8906
      %8908 = vmatmul.f32.gmra.mxu0 %v8785
      %v8909 = vpop.f32.mrf.mxu0
      %v8910 = vadd.f32 0.0, %v8909
      %8911 = vmatmul.f32.gmra.mxu0 %v8788
      %v8912 = vpop.f32.mrf.mxu0
      %v8913 = vadd.f32 0.0, %v8912
      %8914 = vmatmul.f32.gmra.mxu0 %v8791
      %v8915 = vpop.f32.mrf.mxu0
      %v8916 = vadd.f32 0.0, %v8915
      %8917 = vmatmul.f32.gmra.mxu0 %v8794
      %v8918 = vpop.f32.mrf.mxu0
      %v8919 = vadd.f32 0.0, %v8918
      %8920 = vmatmul.f32.gmra.mxu0 %v8797
      %v8921 = vpop.f32.mrf.mxu0
      %v8922 = vadd.f32 0.0, %v8921
      %8923 = vmatmul.f32.gmra.mxu0 %v8800
      %v8924 = vpop.f32.mrf.mxu0
      %v8925 = vadd.f32 0.0, %v8924
      %8926 = vmatmul.f32.gmra.mxu0 %v8803
      %v8927 = vpop.f32.mrf.mxu0
      %v8928 = vadd.f32 0.0, %v8927
      %8929 = vmatmul.f32.gmra.mxu0 %v8806
      %v8930 = vpop.f32.mrf.mxu0
      %v8931 = vadd.f32 0.0, %v8930
      %8932 = vmatmul.f32.gmra.mxu0 %v8809
      %v8933 = vpop.f32.mrf.mxu0
      %v8934 = vadd.f32 0.0, %v8933
      %8935 = vmatmul.f32.gmra.mxu0 %v8812
      %v8936 = vpop.f32.mrf.mxu0
      %v8937 = vadd.f32 0.0, %v8936
      %8938 = vmatmul.f32.gmra.mxu0 %v8815
      %v8939 = vpop.f32.mrf.mxu0
      %v8940 = vadd.f32 0.0, %v8939
      %8941 = vmatmul.f32.gmra.mxu0 %v8818
      %v8942 = vpop.f32.mrf.mxu0
      %v8943 = vadd.f32 0.0, %v8942
      %8944 = vmatmul.f32.gmra.mxu0 %v8821
      %v8945 = vpop.f32.mrf.mxu0
      %v8946 = vadd.f32 0.0, %v8945
      %8947 = vmatmul.f32.gmra.mxu0 %v8824
      %v8948 = vpop.f32.mrf.mxu0
      %v8949 = vadd.f32 0.0, %v8948
      %8950 = vmatmul.f32.gmra.mxu0 %v8827
      %v8951 = vpop.f32.mrf.mxu0
      %v8952 = vadd.f32 0.0, %v8951
      %8953 = vmatmul.f32.gmra.mxu0 %v8830
      %v8954 = vpop.f32.mrf.mxu0
      %v8955 = vadd.f32 0.0, %v8954
      %8956 = vmatmul.f32.gmra.mxu0 %v8833
      %v8957 = vpop.f32.mrf.mxu0
      %v8958 = vadd.f32 0.0, %v8957
      %8959 = vmatmul.f32.gmra.mxu0 %v8836
      %v8960 = vpop.f32.mrf.mxu0
      %v8961 = vadd.f32 0.0, %v8960
      %8962 = vmatmul.f32.gmra.mxu0 %v8839
      %v8963 = vpop.f32.mrf.mxu0
      %v8964 = vadd.f32 0.0, %v8963
      %8965 = vmatmul.f32.gmra.mxu0 %v8842
      %v8966 = vpop.f32.mrf.mxu0
      %v8967 = vadd.f32 0.0, %v8966
      %8968 = vmatmul.f32.gmra.mxu0 %v8845
      %v8969 = vpop.f32.mrf.mxu0
      %v8970 = vadd.f32 0.0, %v8969
      %8971 = vmatmul.f32.gmra.mxu0 %v8848
      %v8972 = vpop.f32.mrf.mxu0
      %v8973 = vadd.f32 0.0, %v8972
      %8974 = vmatmul.f32.gmra.mxu0 %v8851
      %v8975 = vpop.f32.mrf.mxu0
      %v8976 = vadd.f32 0.0, %v8975
      %8977 = vmatmul.f32.gmra.mxu0 %v8854
      %v8978 = vpop.f32.mrf.mxu0
      %v8979 = vadd.f32 0.0, %v8978
      %8980 = vmatmul.f32.gmra.mxu0 %v8857
      %v8981 = vpop.f32.mrf.mxu0
      %v8982 = vadd.f32 0.0, %v8981
      %8983 = vmatmul.f32.gmra.mxu0 %v8860
      %v8984 = vpop.f32.mrf.mxu0
      %v8985 = vadd.f32 0.0, %v8984
      %8986 = vmatmul.f32.gmra.mxu0 %v8863
      %v8987 = vpop.f32.mrf.mxu0
      %v8988 = vadd.f32 0.0, %v8987
      %8989 = vmatmul.f32.gmra.mxu0 %v8866
      %v8990 = vpop.f32.mrf.mxu0
      %v8991 = vadd.f32 0.0, %v8990
      %8992 = vmatmul.f32.gmra.mxu0 %v8869
      %v8993 = vpop.f32.mrf.mxu0
      %v8994 = vadd.f32 0.0, %v8993
      %8995 = vmatmul.f32.gmra.mxu0 %v8872
      %v8996 = vpop.f32.mrf.mxu0
      %v8997 = vadd.f32 0.0, %v8996
      %8998 = vmatmul.f32.gmra.mxu0 %v8875
      %v8999 = vpop.f32.mrf.mxu0
      %v9000 = vadd.f32 0.0, %v8999
      %9001 = vdwg.mxu0
      %v9002 = vadd.f32 %v8695, %v8895
      %v9003 = vadd.f32 %v8696, %v8898
      %v9004 = vadd.f32 %v8697, %v8901
      %v9005 = vadd.f32 %v8698, %v8904
      %v9006 = vadd.f32 %v8699, %v8907
      %v9007 = vadd.f32 %v8700, %v8910
      %v9008 = vadd.f32 %v8701, %v8913
      %v9009 = vadd.f32 %v8702, %v8916
      %v9010 = vadd.f32 %v8703, %v8919
      %v9011 = vadd.f32 %v8704, %v8922
      %v9012 = vadd.f32 %v8705, %v8925
      %v9013 = vadd.f32 %v8706, %v8928
      %v9014 = vadd.f32 %v8707, %v8931
      %v9015 = vadd.f32 %v8708, %v8934
      %v9016 = vadd.f32 %v8709, %v8937
      %v9017 = vadd.f32 %v8710, %v8940
      %v9018 = vadd.f32 %v8711, %v8943
      %v9019 = vadd.f32 %v8712, %v8946
      %v9020 = vadd.f32 %v8713, %v8949
      %v9021 = vadd.f32 %v8714, %v8952
      %v9022 = vadd.f32 %v8715, %v8955
      %v9023 = vadd.f32 %v8716, %v8958
      %v9024 = vadd.f32 %v8717, %v8961
      %v9025 = vadd.f32 %v8718, %v8964
      %v9026 = vadd.f32 %v8719, %v8967
      %v9027 = vadd.f32 %v8720, %v8970
      %v9028 = vadd.f32 %v8721, %v8973
      %v9029 = vadd.f32 %v8722, %v8976
      %v9030 = vadd.f32 %v8723, %v8979
      %v9031 = vadd.f32 %v8724, %v8982
      %v9032 = vadd.f32 %v8725, %v8985
      %v9033 = vadd.f32 %v8726, %v8988
      %v9034 = vadd.f32 %v8727, %v8991
      %v9035 = vadd.f32 %v8728, %v8994
      %v9036 = vadd.f32 %v8729, %v8997
      %v9037 = vadd.f32 %v8730, %v9000
      %v9038 = vld [vmem:[#allocation3 + $0x14] sm:$0xff]
      %v9039 = vld [vmem:[#allocation3 + $0x1c] sm:$0xff]
      %v9040 = vld [vmem:[#allocation3 + $0x24] sm:$0xff]
      %v9041 = vld [vmem:[#allocation3 + $0x2c] sm:$0xff]
      %v9042 = vld [vmem:[#allocation3 + $0x34] sm:$0xff]
      %v9043 = vld [vmem:[#allocation3 + $0x3c] sm:$0xff]
      %v9044 = vld [vmem:[#allocation3 + $0x44] sm:$0xff]
      %v9045 = vld [vmem:[#allocation3 + $0x4c] sm:$0xff]
      %v9046 = vld [vmem:[#allocation3 + $0x54] sm:$0xff]
      %v9047 = vld [vmem:[#allocation3 + $0x5c] sm:$0xff]
      %v9048 = vld [vmem:[#allocation3 + $0x64] sm:$0xff]
      %v9049 = vld [vmem:[#allocation3 + $0x6c] sm:$0xff]
      %v9050 = vld [vmem:[#allocation3 + $0x74] sm:$0xff]
      %v9051 = vld [vmem:[#allocation3 + $0x7c] sm:$0xff]
      %v9052 = vld [vmem:[#allocation3 + $0x84] sm:$0xff]
      %v9053 = vld [vmem:[#allocation3 + $0x8c] sm:$0xff]
      %v9054 = vld [vmem:[#allocation3 + $0x94] sm:$0xff]
      %v9055 = vld [vmem:[#allocation3 + $0x9c] sm:$0xff]
      %v9056 = vld [vmem:[#allocation3 + $0xa4] sm:$0xff]
      %v9057 = vld [vmem:[#allocation3 + $0xac] sm:$0xff]
      %v9058 = vld [vmem:[#allocation3 + $0xb4] sm:$0xff]
      %v9059 = vld [vmem:[#allocation3 + $0xbc] sm:$0xff]
      %v9060 = vld [vmem:[#allocation3 + $0xc4] sm:$0xff]
      %v9061 = vld [vmem:[#allocation3 + $0xcc] sm:$0xff]
      %v9062 = vld [vmem:[#allocation3 + $0xd4] sm:$0xff]
      %v9063 = vld [vmem:[#allocation3 + $0xdc] sm:$0xff]
      %v9064 = vld [vmem:[#allocation3 + $0xe4] sm:$0xff]
      %v9065 = vld [vmem:[#allocation3 + $0xec] sm:$0xff]
      %v9066 = vld [vmem:[#allocation3 + $0xf4] sm:$0xff]
      %v9067 = vld [vmem:[#allocation3 + $0xfc] sm:$0xff]
      %v9068 = vld [vmem:[#allocation3 + $0x104] sm:$0xff]
      %v9069 = vld [vmem:[#allocation3 + $0x10c] sm:$0xff]
      %v9070 = vld [vmem:[#allocation3 + $0x114] sm:$0xff]
      %v9071 = vld [vmem:[#allocation3 + $0x11c] sm:$0xff]
      %v9072 = vld [vmem:[#allocation3 + $0x124] sm:$0xff]
      %v9073 = vld [vmem:[#allocation3 + $0x12c] sm:$0xff]
      %s9074 = scalar_lea.vmem %s5, 40
      %v9075 = vld [vmem:[%s9074] sm:$0xff]
      %v9077 = vsel %vm7351, %v9038, 0
      %v9080 = vsel %vm7351, %v9039, 0
      %v9083 = vsel %vm7351, %v9040, 0
      %v9086 = vsel %vm7351, %v9041, 0
      %v9089 = vsel %vm7351, %v9042, 0
      %v9092 = vsel %vm7351, %v9043, 0
      %v9095 = vsel %vm7351, %v9044, 0
      %v9098 = vsel %vm7351, %v9045, 0
      %v9101 = vsel %vm7351, %v9046, 0
      %v9104 = vsel %vm7351, %v9047, 0
      %v9107 = vsel %vm7351, %v9048, 0
      %v9110 = vsel %vm7351, %v9049, 0
      %v9113 = vsel %vm7351, %v9050, 0
      %v9116 = vsel %vm7351, %v9051, 0
      %v9119 = vsel %vm7351, %v9052, 0
      %v9122 = vsel %vm7351, %v9053, 0
      %v9125 = vsel %vm7351, %v9054, 0
      %v9128 = vsel %vm7351, %v9055, 0
      %v9131 = vsel %vm7351, %v9056, 0
      %v9134 = vsel %vm7351, %v9057, 0
      %v9137 = vsel %vm7351, %v9058, 0
      %v9140 = vsel %vm7351, %v9059, 0
      %v9143 = vsel %vm7351, %v9060, 0
      %v9146 = vsel %vm7351, %v9061, 0
      %v9149 = vsel %vm7351, %v9062, 0
      %v9152 = vsel %vm7351, %v9063, 0
      %v9155 = vsel %vm7351, %v9064, 0
      %v9158 = vsel %vm7351, %v9065, 0
      %v9161 = vsel %vm7351, %v9066, 0
      %v9164 = vsel %vm7351, %v9067, 0
      %v9167 = vsel %vm7351, %v9068, 0
      %v9170 = vsel %vm7351, %v9069, 0
      %v9173 = vsel %vm7351, %v9070, 0
      %v9176 = vsel %vm7351, %v9071, 0
      %v9179 = vsel %vm7351, %v9072, 0
      %v9182 = vsel %vm7351, %v9073, 0
      %9184 = vmatpush.msra.mxu0 0.0
      %9185 = vmatpush.msra.mxu0 0.0
      %9186 = vmatpush.msra.mxu0 0.0
      %9187 = vmatpush.msra.mxu0 0.0
      %9188 = vmatpush.msra.mxu0 0.0
      %9189 = vmatpush.msra.mxu0 0.0
      %9190 = vmatpush.msra.mxu0 0.0
      %9191 = vmatpush.msra.mxu0 0.0
      %9192 = vmatpush.msra.mxu0 0.0
      %9193 = vmatpush.msra.mxu0 0.0
      %9194 = vmatpush.msra.mxu0 0.0
      %9195 = vmatpush.msra.mxu0 0.0
      %9196 = vmatpush.msra.mxu0 0.0
      %9197 = vmatpush.msra.mxu0 0.0
      %9198 = vmatpush.msra.mxu0 0.0
      %9199 = vmatpush.msra.mxu0 %v9075
      %9200 = vmatmul.f32.gmra.mxu0 %v9077
      %v9201 = vpop.f32.mrf.mxu0
      %v9202 = vadd.f32 0.0, %v9201
      %9203 = vmatmul.f32.gmra.mxu0 %v9080
      %v9204 = vpop.f32.mrf.mxu0
      %v9205 = vadd.f32 0.0, %v9204
      %9206 = vmatmul.f32.gmra.mxu0 %v9083
      %v9207 = vpop.f32.mrf.mxu0
      %v9208 = vadd.f32 0.0, %v9207
      %9209 = vmatmul.f32.gmra.mxu0 %v9086
      %v9210 = vpop.f32.mrf.mxu0
      %v9211 = vadd.f32 0.0, %v9210
      %9212 = vmatmul.f32.gmra.mxu0 %v9089
      %v9213 = vpop.f32.mrf.mxu0
      %v9214 = vadd.f32 0.0, %v9213
      %9215 = vmatmul.f32.gmra.mxu0 %v9092
      %v9216 = vpop.f32.mrf.mxu0
      %v9217 = vadd.f32 0.0, %v9216
      %9218 = vmatmul.f32.gmra.mxu0 %v9095
      %v9219 = vpop.f32.mrf.mxu0
      %v9220 = vadd.f32 0.0, %v9219
      %9221 = vmatmul.f32.gmra.mxu0 %v9098
      %v9222 = vpop.f32.mrf.mxu0
      %v9223 = vadd.f32 0.0, %v9222
      %9224 = vmatmul.f32.gmra.mxu0 %v9101
      %v9225 = vpop.f32.mrf.mxu0
      %v9226 = vadd.f32 0.0, %v9225
      %9227 = vmatmul.f32.gmra.mxu0 %v9104
      %v9228 = vpop.f32.mrf.mxu0
      %v9229 = vadd.f32 0.0, %v9228
      %9230 = vmatmul.f32.gmra.mxu0 %v9107
      %v9231 = vpop.f32.mrf.mxu0
      %v9232 = vadd.f32 0.0, %v9231
      %9233 = vmatmul.f32.gmra.mxu0 %v9110
      %v9234 = vpop.f32.mrf.mxu0
      %v9235 = vadd.f32 0.0, %v9234
      %9236 = vmatmul.f32.gmra.mxu0 %v9113
      %v9237 = vpop.f32.mrf.mxu0
      %v9238 = vadd.f32 0.0, %v9237
      %9239 = vmatmul.f32.gmra.mxu0 %v9116
      %v9240 = vpop.f32.mrf.mxu0
      %v9241 = vadd.f32 0.0, %v9240
      %9242 = vmatmul.f32.gmra.mxu0 %v9119
      %v9243 = vpop.f32.mrf.mxu0
      %v9244 = vadd.f32 0.0, %v9243
      %9245 = vmatmul.f32.gmra.mxu0 %v9122
      %v9246 = vpop.f32.mrf.mxu0
      %v9247 = vadd.f32 0.0, %v9246
      %9248 = vmatmul.f32.gmra.mxu0 %v9125
      %v9249 = vpop.f32.mrf.mxu0
      %v9250 = vadd.f32 0.0, %v9249
      %9251 = vmatmul.f32.gmra.mxu0 %v9128
      %v9252 = vpop.f32.mrf.mxu0
      %v9253 = vadd.f32 0.0, %v9252
      %9254 = vmatmul.f32.gmra.mxu0 %v9131
      %v9255 = vpop.f32.mrf.mxu0
      %v9256 = vadd.f32 0.0, %v9255
      %9257 = vmatmul.f32.gmra.mxu0 %v9134
      %v9258 = vpop.f32.mrf.mxu0
      %v9259 = vadd.f32 0.0, %v9258
      %9260 = vmatmul.f32.gmra.mxu0 %v9137
      %v9261 = vpop.f32.mrf.mxu0
      %v9262 = vadd.f32 0.0, %v9261
      %9263 = vmatmul.f32.gmra.mxu0 %v9140
      %v9264 = vpop.f32.mrf.mxu0
      %v9265 = vadd.f32 0.0, %v9264
      %9266 = vmatmul.f32.gmra.mxu0 %v9143
      %v9267 = vpop.f32.mrf.mxu0
      %v9268 = vadd.f32 0.0, %v9267
      %9269 = vmatmul.f32.gmra.mxu0 %v9146
      %v9270 = vpop.f32.mrf.mxu0
      %v9271 = vadd.f32 0.0, %v9270
      %9272 = vmatmul.f32.gmra.mxu0 %v9149
      %v9273 = vpop.f32.mrf.mxu0
      %v9274 = vadd.f32 0.0, %v9273
      %9275 = vmatmul.f32.gmra.mxu0 %v9152
      %v9276 = vpop.f32.mrf.mxu0
      %v9277 = vadd.f32 0.0, %v9276
      %9278 = vmatmul.f32.gmra.mxu0 %v9155
      %v9279 = vpop.f32.mrf.mxu0
      %v9280 = vadd.f32 0.0, %v9279
      %9281 = vmatmul.f32.gmra.mxu0 %v9158
      %v9282 = vpop.f32.mrf.mxu0
      %v9283 = vadd.f32 0.0, %v9282
      %9284 = vmatmul.f32.gmra.mxu0 %v9161
      %v9285 = vpop.f32.mrf.mxu0
      %v9286 = vadd.f32 0.0, %v9285
      %9287 = vmatmul.f32.gmra.mxu0 %v9164
      %v9288 = vpop.f32.mrf.mxu0
      %v9289 = vadd.f32 0.0, %v9288
      %9290 = vmatmul.f32.gmra.mxu0 %v9167
      %v9291 = vpop.f32.mrf.mxu0
      %v9292 = vadd.f32 0.0, %v9291
      %9293 = vmatmul.f32.gmra.mxu0 %v9170
      %v9294 = vpop.f32.mrf.mxu0
      %v9295 = vadd.f32 0.0, %v9294
      %9296 = vmatmul.f32.gmra.mxu0 %v9173
      %v9297 = vpop.f32.mrf.mxu0
      %v9298 = vadd.f32 0.0, %v9297
      %9299 = vmatmul.f32.gmra.mxu0 %v9176
      %v9300 = vpop.f32.mrf.mxu0
      %v9301 = vadd.f32 0.0, %v9300
      %9302 = vmatmul.f32.gmra.mxu0 %v9179
      %v9303 = vpop.f32.mrf.mxu0
      %v9304 = vadd.f32 0.0, %v9303
      %9305 = vmatmul.f32.gmra.mxu0 %v9182
      %v9306 = vpop.f32.mrf.mxu0
      %v9307 = vadd.f32 0.0, %v9306
      %9308 = vdwg.mxu0
      %v9309 = vadd.f32 %v9002, %v9202
      %v9310 = vadd.f32 %v9003, %v9205
      %v9311 = vadd.f32 %v9004, %v9208
      %v9312 = vadd.f32 %v9005, %v9211
      %v9313 = vadd.f32 %v9006, %v9214
      %v9314 = vadd.f32 %v9007, %v9217
      %v9315 = vadd.f32 %v9008, %v9220
      %v9316 = vadd.f32 %v9009, %v9223
      %v9317 = vadd.f32 %v9010, %v9226
      %v9318 = vadd.f32 %v9011, %v9229
      %v9319 = vadd.f32 %v9012, %v9232
      %v9320 = vadd.f32 %v9013, %v9235
      %v9321 = vadd.f32 %v9014, %v9238
      %v9322 = vadd.f32 %v9015, %v9241
      %v9323 = vadd.f32 %v9016, %v9244
      %v9324 = vadd.f32 %v9017, %v9247
      %v9325 = vadd.f32 %v9018, %v9250
      %v9326 = vadd.f32 %v9019, %v9253
      %v9327 = vadd.f32 %v9020, %v9256
      %v9328 = vadd.f32 %v9021, %v9259
      %v9329 = vadd.f32 %v9022, %v9262
      %v9330 = vadd.f32 %v9023, %v9265
      %v9331 = vadd.f32 %v9024, %v9268
      %v9332 = vadd.f32 %v9025, %v9271
      %v9333 = vadd.f32 %v9026, %v9274
      %v9334 = vadd.f32 %v9027, %v9277
      %v9335 = vadd.f32 %v9028, %v9280
      %v9336 = vadd.f32 %v9029, %v9283
      %v9337 = vadd.f32 %v9030, %v9286
      %v9338 = vadd.f32 %v9031, %v9289
      %v9339 = vadd.f32 %v9032, %v9292
      %v9340 = vadd.f32 %v9033, %v9295
      %v9341 = vadd.f32 %v9034, %v9298
      %v9342 = vadd.f32 %v9035, %v9301
      %v9343 = vadd.f32 %v9036, %v9304
      %v9344 = vadd.f32 %v9037, %v9307
      %v9345 = vld [vmem:[#allocation3 + $0x24] sm:$0xff]
      %v9346 = vld [vmem:[#allocation3 + $0x2c] sm:$0xff]
      %v9347 = vld [vmem:[#allocation3 + $0x34] sm:$0xff]
      %v9348 = vld [vmem:[#allocation3 + $0x3c] sm:$0xff]
      %v9349 = vld [vmem:[#allocation3 + $0x44] sm:$0xff]
      %v9350 = vld [vmem:[#allocation3 + $0x4c] sm:$0xff]
      %v9351 = vld [vmem:[#allocation3 + $0x54] sm:$0xff]
      %v9352 = vld [vmem:[#allocation3 + $0x5c] sm:$0xff]
      %v9353 = vld [vmem:[#allocation3 + $0x64] sm:$0xff]
      %v9354 = vld [vmem:[#allocation3 + $0x6c] sm:$0xff]
      %v9355 = vld [vmem:[#allocation3 + $0x74] sm:$0xff]
      %v9356 = vld [vmem:[#allocation3 + $0x7c] sm:$0xff]
      %v9357 = vld [vmem:[#allocation3 + $0x84] sm:$0xff]
      %v9358 = vld [vmem:[#allocation3 + $0x8c] sm:$0xff]
      %v9359 = vld [vmem:[#allocation3 + $0x94] sm:$0xff]
      %v9360 = vld [vmem:[#allocation3 + $0x9c] sm:$0xff]
      %v9361 = vld [vmem:[#allocation3 + $0xa4] sm:$0xff]
      %v9362 = vld [vmem:[#allocation3 + $0xac] sm:$0xff]
      %v9363 = vld [vmem:[#allocation3 + $0xb4] sm:$0xff]
      %v9364 = vld [vmem:[#allocation3 + $0xbc] sm:$0xff]
      %v9365 = vld [vmem:[#allocation3 + $0xc4] sm:$0xff]
      %v9366 = vld [vmem:[#allocation3 + $0xcc] sm:$0xff]
      %v9367 = vld [vmem:[#allocation3 + $0xd4] sm:$0xff]
      %v9368 = vld [vmem:[#allocation3 + $0xdc] sm:$0xff]
      %v9369 = vld [vmem:[#allocation3 + $0xe4] sm:$0xff]
      %v9370 = vld [vmem:[#allocation3 + $0xec] sm:$0xff]
      %v9371 = vld [vmem:[#allocation3 + $0xf4] sm:$0xff]
      %v9372 = vld [vmem:[#allocation3 + $0xfc] sm:$0xff]
      %v9373 = vld [vmem:[#allocation3 + $0x104] sm:$0xff]
      %v9374 = vld [vmem:[#allocation3 + $0x10c] sm:$0xff]
      %v9375 = vld [vmem:[#allocation3 + $0x114] sm:$0xff]
      %v9376 = vld [vmem:[#allocation3 + $0x11c] sm:$0xff]
      %v9377 = vld [vmem:[#allocation3 + $0x124] sm:$0xff]
      %v9378 = vld [vmem:[#allocation3 + $0x12c] sm:$0xff]
      %v9379 = vld [vmem:[#allocation3 + $0x134] sm:$0xff]
      %v9380 = vld [vmem:[#allocation3 + $0x13c] sm:$0xff]
      %s9381 = scalar_lea.vmem %s5, 48
      %v9382 = vld [vmem:[%s9381] sm:$0xff]
      %v9384 = vsel %vm7351, %v9345, 0
      %v9387 = vsel %vm7351, %v9346, 0
      %v9390 = vsel %vm7351, %v9347, 0
      %v9393 = vsel %vm7351, %v9348, 0
      %v9396 = vsel %vm7351, %v9349, 0
      %v9399 = vsel %vm7351, %v9350, 0
      %v9402 = vsel %vm7351, %v9351, 0
      %v9405 = vsel %vm7351, %v9352, 0
      %v9408 = vsel %vm7351, %v9353, 0
      %v9411 = vsel %vm7351, %v9354, 0
      %v9414 = vsel %vm7351, %v9355, 0
      %v9417 = vsel %vm7351, %v9356, 0
      %v9420 = vsel %vm7351, %v9357, 0
      %v9423 = vsel %vm7351, %v9358, 0
      %v9426 = vsel %vm7351, %v9359, 0
      %v9429 = vsel %vm7351, %v9360, 0
      %v9432 = vsel %vm7351, %v9361, 0
      %v9435 = vsel %vm7351, %v9362, 0
      %v9438 = vsel %vm7351, %v9363, 0
      %v9441 = vsel %vm7351, %v9364, 0
      %v9444 = vsel %vm7351, %v9365, 0
      %v9447 = vsel %vm7351, %v9366, 0
      %v9450 = vsel %vm7351, %v9367, 0
      %v9453 = vsel %vm7351, %v9368, 0
      %v9456 = vsel %vm7351, %v9369, 0
      %v9459 = vsel %vm7351, %v9370, 0
      %v9462 = vsel %vm7351, %v9371, 0
      %v9465 = vsel %vm7351, %v9372, 0
      %v9468 = vsel %vm7351, %v9373, 0
      %v9471 = vsel %vm7351, %v9374, 0
      %v9474 = vsel %vm7351, %v9375, 0
      %v9477 = vsel %vm7351, %v9376, 0
      %v9480 = vsel %vm7351, %v9377, 0
      %v9483 = vsel %vm7351, %v9378, 0
      %v9486 = vsel %vm7351, %v9379, 0
      %v9489 = vsel %vm7351, %v9380, 0
      %9491 = vmatpush.msra.mxu0 0.0
      %9492 = vmatpush.msra.mxu0 0.0
      %9493 = vmatpush.msra.mxu0 0.0
      %9494 = vmatpush.msra.mxu0 0.0
      %9495 = vmatpush.msra.mxu0 0.0
      %9496 = vmatpush.msra.mxu0 0.0
      %9497 = vmatpush.msra.mxu0 0.0
      %9498 = vmatpush.msra.mxu0 0.0
      %9499 = vmatpush.msra.mxu0 0.0
      %9500 = vmatpush.msra.mxu0 0.0
      %9501 = vmatpush.msra.mxu0 0.0
      %9502 = vmatpush.msra.mxu0 0.0
      %9503 = vmatpush.msra.mxu0 0.0
      %9504 = vmatpush.msra.mxu0 0.0
      %9505 = vmatpush.msra.mxu0 0.0
      %9506 = vmatpush.msra.mxu0 %v9382
      %9507 = vmatmul.f32.gmra.mxu0 %v9384
      %v9508 = vpop.f32.mrf.mxu0
      %v9509 = vadd.f32 0.0, %v9508
      %9510 = vmatmul.f32.gmra.mxu0 %v9387
      %v9511 = vpop.f32.mrf.mxu0
      %v9512 = vadd.f32 0.0, %v9511
      %9513 = vmatmul.f32.gmra.mxu0 %v9390
      %v9514 = vpop.f32.mrf.mxu0
      %v9515 = vadd.f32 0.0, %v9514
      %9516 = vmatmul.f32.gmra.mxu0 %v9393
      %v9517 = vpop.f32.mrf.mxu0
      %v9518 = vadd.f32 0.0, %v9517
      %9519 = vmatmul.f32.gmra.mxu0 %v9396
      %v9520 = vpop.f32.mrf.mxu0
      %v9521 = vadd.f32 0.0, %v9520
      %9522 = vmatmul.f32.gmra.mxu0 %v9399
      %v9523 = vpop.f32.mrf.mxu0
      %v9524 = vadd.f32 0.0, %v9523
      %9525 = vmatmul.f32.gmra.mxu0 %v9402
      %v9526 = vpop.f32.mrf.mxu0
      %v9527 = vadd.f32 0.0, %v9526
      %9528 = vmatmul.f32.gmra.mxu0 %v9405
      %v9529 = vpop.f32.mrf.mxu0
      %v9530 = vadd.f32 0.0, %v9529
      %9531 = vmatmul.f32.gmra.mxu0 %v9408
      %v9532 = vpop.f32.mrf.mxu0
      %v9533 = vadd.f32 0.0, %v9532
      %9534 = vmatmul.f32.gmra.mxu0 %v9411
      %v9535 = vpop.f32.mrf.mxu0
      %v9536 = vadd.f32 0.0, %v9535
      %9537 = vmatmul.f32.gmra.mxu0 %v9414
      %v9538 = vpop.f32.mrf.mxu0
      %v9539 = vadd.f32 0.0, %v9538
      %9540 = vmatmul.f32.gmra.mxu0 %v9417
      %v9541 = vpop.f32.mrf.mxu0
      %v9542 = vadd.f32 0.0, %v9541
      %9543 = vmatmul.f32.gmra.mxu0 %v9420
      %v9544 = vpop.f32.mrf.mxu0
      %v9545 = vadd.f32 0.0, %v9544
      %9546 = vmatmul.f32.gmra.mxu0 %v9423
      %v9547 = vpop.f32.mrf.mxu0
      %v9548 = vadd.f32 0.0, %v9547
      %9549 = vmatmul.f32.gmra.mxu0 %v9426
      %v9550 = vpop.f32.mrf.mxu0
      %v9551 = vadd.f32 0.0, %v9550
      %9552 = vmatmul.f32.gmra.mxu0 %v9429
      %v9553 = vpop.f32.mrf.mxu0
      %v9554 = vadd.f32 0.0, %v9553
      %9555 = vmatmul.f32.gmra.mxu0 %v9432
      %v9556 = vpop.f32.mrf.mxu0
      %v9557 = vadd.f32 0.0, %v9556
      %9558 = vmatmul.f32.gmra.mxu0 %v9435
      %v9559 = vpop.f32.mrf.mxu0
      %v9560 = vadd.f32 0.0, %v9559
      %9561 = vmatmul.f32.gmra.mxu0 %v9438
      %v9562 = vpop.f32.mrf.mxu0
      %v9563 = vadd.f32 0.0, %v9562
      %9564 = vmatmul.f32.gmra.mxu0 %v9441
      %v9565 = vpop.f32.mrf.mxu0
      %v9566 = vadd.f32 0.0, %v9565
      %9567 = vmatmul.f32.gmra.mxu0 %v9444
      %v9568 = vpop.f32.mrf.mxu0
      %v9569 = vadd.f32 0.0, %v9568
      %9570 = vmatmul.f32.gmra.mxu0 %v9447
      %v9571 = vpop.f32.mrf.mxu0
      %v9572 = vadd.f32 0.0, %v9571
      %9573 = vmatmul.f32.gmra.mxu0 %v9450
      %v9574 = vpop.f32.mrf.mxu0
      %v9575 = vadd.f32 0.0, %v9574
      %9576 = vmatmul.f32.gmra.mxu0 %v9453
      %v9577 = vpop.f32.mrf.mxu0
      %v9578 = vadd.f32 0.0, %v9577
      %9579 = vmatmul.f32.gmra.mxu0 %v9456
      %v9580 = vpop.f32.mrf.mxu0
      %v9581 = vadd.f32 0.0, %v9580
      %9582 = vmatmul.f32.gmra.mxu0 %v9459
      %v9583 = vpop.f32.mrf.mxu0
      %v9584 = vadd.f32 0.0, %v9583
      %9585 = vmatmul.f32.gmra.mxu0 %v9462
      %v9586 = vpop.f32.mrf.mxu0
      %v9587 = vadd.f32 0.0, %v9586
      %9588 = vmatmul.f32.gmra.mxu0 %v9465
      %v9589 = vpop.f32.mrf.mxu0
      %v9590 = vadd.f32 0.0, %v9589
      %9591 = vmatmul.f32.gmra.mxu0 %v9468
      %v9592 = vpop.f32.mrf.mxu0
      %v9593 = vadd.f32 0.0, %v9592
      %9594 = vmatmul.f32.gmra.mxu0 %v9471
      %v9595 = vpop.f32.mrf.mxu0
      %v9596 = vadd.f32 0.0, %v9595
      %9597 = vmatmul.f32.gmra.mxu0 %v9474
      %v9598 = vpop.f32.mrf.mxu0
      %v9599 = vadd.f32 0.0, %v9598
      %9600 = vmatmul.f32.gmra.mxu0 %v9477
      %v9601 = vpop.f32.mrf.mxu0
      %v9602 = vadd.f32 0.0, %v9601
      %9603 = vmatmul.f32.gmra.mxu0 %v9480
      %v9604 = vpop.f32.mrf.mxu0
      %v9605 = vadd.f32 0.0, %v9604
      %9606 = vmatmul.f32.gmra.mxu0 %v9483
      %v9607 = vpop.f32.mrf.mxu0
      %v9608 = vadd.f32 0.0, %v9607
      %9609 = vmatmul.f32.gmra.mxu0 %v9486
      %v9610 = vpop.f32.mrf.mxu0
      %v9611 = vadd.f32 0.0, %v9610
      %9612 = vmatmul.f32.gmra.mxu0 %v9489
      %v9613 = vpop.f32.mrf.mxu0
      %v9614 = vadd.f32 0.0, %v9613
      %9615 = vdwg.mxu0
      %v9616 = vadd.f32 %v9309, %v9509
      %v9617 = vadd.f32 %v9310, %v9512
      %v9618 = vadd.f32 %v9311, %v9515
      %v9619 = vadd.f32 %v9312, %v9518
      %v9620 = vadd.f32 %v9313, %v9521
      %v9621 = vadd.f32 %v9314, %v9524
      %v9622 = vadd.f32 %v9315, %v9527
      %v9623 = vadd.f32 %v9316, %v9530
      %v9624 = vadd.f32 %v9317, %v9533
      %v9625 = vadd.f32 %v9318, %v9536
      %v9626 = vadd.f32 %v9319, %v9539
      %v9627 = vadd.f32 %v9320, %v9542
      %v9628 = vadd.f32 %v9321, %v9545
      %v9629 = vadd.f32 %v9322, %v9548
      %v9630 = vadd.f32 %v9323, %v9551
      %v9631 = vadd.f32 %v9324, %v9554
      %v9632 = vadd.f32 %v9325, %v9557
      %v9633 = vadd.f32 %v9326, %v9560
      %v9634 = vadd.f32 %v9327, %v9563
      %v9635 = vadd.f32 %v9328, %v9566
      %v9636 = vadd.f32 %v9329, %v9569
      %v9637 = vadd.f32 %v9330, %v9572
      %v9638 = vadd.f32 %v9331, %v9575
      %v9639 = vadd.f32 %v9332, %v9578
      %v9640 = vadd.f32 %v9333, %v9581
      %v9641 = vadd.f32 %v9334, %v9584
      %v9642 = vadd.f32 %v9335, %v9587
      %v9643 = vadd.f32 %v9336, %v9590
      %v9644 = vadd.f32 %v9337, %v9593
      %v9645 = vadd.f32 %v9338, %v9596
      %v9646 = vadd.f32 %v9339, %v9599
      %v9647 = vadd.f32 %v9340, %v9602
      %v9648 = vadd.f32 %v9341, %v9605
      %v9649 = vadd.f32 %v9342, %v9608
      %v9650 = vadd.f32 %v9343, %v9611
      %v9651 = vadd.f32 %v9344, %v9614
      %v9652 = vld [vmem:[#allocation3 + $0x25] sm:$0xff]
      %v9653 = vld [vmem:[#allocation3 + $0x2d] sm:$0xff]
      %v9654 = vld [vmem:[#allocation3 + $0x35] sm:$0xff]
      %v9655 = vld [vmem:[#allocation3 + $0x3d] sm:$0xff]
      %v9656 = vld [vmem:[#allocation3 + $0x45] sm:$0xff]
      %v9657 = vld [vmem:[#allocation3 + $0x4d] sm:$0xff]
      %v9658 = vld [vmem:[#allocation3 + $0x55] sm:$0xff]
      %v9659 = vld [vmem:[#allocation3 + $0x5d] sm:$0xff]
      %v9660 = vld [vmem:[#allocation3 + $0x65] sm:$0xff]
      %v9661 = vld [vmem:[#allocation3 + $0x6d] sm:$0xff]
      %v9662 = vld [vmem:[#allocation3 + $0x75] sm:$0xff]
      %v9663 = vld [vmem:[#allocation3 + $0x7d] sm:$0xff]
      %v9664 = vld [vmem:[#allocation3 + $0x85] sm:$0xff]
      %v9665 = vld [vmem:[#allocation3 + $0x8d] sm:$0xff]
      %v9666 = vld [vmem:[#allocation3 + $0x95] sm:$0xff]
      %v9667 = vld [vmem:[#allocation3 + $0x9d] sm:$0xff]
      %v9668 = vld [vmem:[#allocation3 + $0xa5] sm:$0xff]
      %v9669 = vld [vmem:[#allocation3 + $0xad] sm:$0xff]
      %v9670 = vld [vmem:[#allocation3 + $0xb5] sm:$0xff]
      %v9671 = vld [vmem:[#allocation3 + $0xbd] sm:$0xff]
      %v9672 = vld [vmem:[#allocation3 + $0xc5] sm:$0xff]
      %v9673 = vld [vmem:[#allocation3 + $0xcd] sm:$0xff]
      %v9674 = vld [vmem:[#allocation3 + $0xd5] sm:$0xff]
      %v9675 = vld [vmem:[#allocation3 + $0xdd] sm:$0xff]
      %v9676 = vld [vmem:[#allocation3 + $0xe5] sm:$0xff]
      %v9677 = vld [vmem:[#allocation3 + $0xed] sm:$0xff]
      %v9678 = vld [vmem:[#allocation3 + $0xf5] sm:$0xff]
      %v9679 = vld [vmem:[#allocation3 + $0xfd] sm:$0xff]
      %v9680 = vld [vmem:[#allocation3 + $0x105] sm:$0xff]
      %v9681 = vld [vmem:[#allocation3 + $0x10d] sm:$0xff]
      %v9682 = vld [vmem:[#allocation3 + $0x115] sm:$0xff]
      %v9683 = vld [vmem:[#allocation3 + $0x11d] sm:$0xff]
      %v9684 = vld [vmem:[#allocation3 + $0x125] sm:$0xff]
      %v9685 = vld [vmem:[#allocation3 + $0x12d] sm:$0xff]
      %v9686 = vld [vmem:[#allocation3 + $0x135] sm:$0xff]
      %v9687 = vld [vmem:[#allocation3 + $0x13d] sm:$0xff]
      %s9688 = scalar_lea.vmem %s5, 56
      %v9689 = vld [vmem:[%s9688] sm:$0xff]
      %v9691 = vsel %vm7351, %v9652, 0
      %v9694 = vsel %vm7351, %v9653, 0
      %v9697 = vsel %vm7351, %v9654, 0
      %v9700 = vsel %vm7351, %v9655, 0
      %v9703 = vsel %vm7351, %v9656, 0
      %v9706 = vsel %vm7351, %v9657, 0
      %v9709 = vsel %vm7351, %v9658, 0
      %v9712 = vsel %vm7351, %v9659, 0
      %v9715 = vsel %vm7351, %v9660, 0
      %v9718 = vsel %vm7351, %v9661, 0
      %v9721 = vsel %vm7351, %v9662, 0
      %v9724 = vsel %vm7351, %v9663, 0
      %v9727 = vsel %vm7351, %v9664, 0
      %v9730 = vsel %vm7351, %v9665, 0
      %v9733 = vsel %vm7351, %v9666, 0
      %v9736 = vsel %vm7351, %v9667, 0
      %v9739 = vsel %vm7351, %v9668, 0
      %v9742 = vsel %vm7351, %v9669, 0
      %v9745 = vsel %vm7351, %v9670, 0
      %v9748 = vsel %vm7351, %v9671, 0
      %v9751 = vsel %vm7351, %v9672, 0
      %v9754 = vsel %vm7351, %v9673, 0
      %v9757 = vsel %vm7351, %v9674, 0
      %v9760 = vsel %vm7351, %v9675, 0
      %v9763 = vsel %vm7351, %v9676, 0
      %v9766 = vsel %vm7351, %v9677, 0
      %v9769 = vsel %vm7351, %v9678, 0
      %v9772 = vsel %vm7351, %v9679, 0
      %v9775 = vsel %vm7351, %v9680, 0
      %v9778 = vsel %vm7351, %v9681, 0
      %v9781 = vsel %vm7351, %v9682, 0
      %v9784 = vsel %vm7351, %v9683, 0
      %v9787 = vsel %vm7351, %v9684, 0
      %v9790 = vsel %vm7351, %v9685, 0
      %v9793 = vsel %vm7351, %v9686, 0
      %v9796 = vsel %vm7351, %v9687, 0
      %9798 = vmatpush.msra.mxu0 0.0
      %9799 = vmatpush.msra.mxu0 0.0
      %9800 = vmatpush.msra.mxu0 0.0
      %9801 = vmatpush.msra.mxu0 0.0
      %9802 = vmatpush.msra.mxu0 0.0
      %9803 = vmatpush.msra.mxu0 0.0
      %9804 = vmatpush.msra.mxu0 0.0
      %9805 = vmatpush.msra.mxu0 0.0
      %9806 = vmatpush.msra.mxu0 0.0
      %9807 = vmatpush.msra.mxu0 0.0
      %9808 = vmatpush.msra.mxu0 0.0
      %9809 = vmatpush.msra.mxu0 0.0
      %9810 = vmatpush.msra.mxu0 0.0
      %9811 = vmatpush.msra.mxu0 0.0
      %9812 = vmatpush.msra.mxu0 0.0
      %9813 = vmatpush.msra.mxu0 %v9689
      %9814 = vmatmul.f32.gmra.mxu0 %v9691
      %v9815 = vpop.f32.mrf.mxu0
      %v9816 = vadd.f32 0.0, %v9815
      %9817 = vmatmul.f32.gmra.mxu0 %v9694
      %v9818 = vpop.f32.mrf.mxu0
      %v9819 = vadd.f32 0.0, %v9818
      %9820 = vmatmul.f32.gmra.mxu0 %v9697
      %v9821 = vpop.f32.mrf.mxu0
      %v9822 = vadd.f32 0.0, %v9821
      %9823 = vmatmul.f32.gmra.mxu0 %v9700
      %v9824 = vpop.f32.mrf.mxu0
      %v9825 = vadd.f32 0.0, %v9824
      %9826 = vmatmul.f32.gmra.mxu0 %v9703
      %v9827 = vpop.f32.mrf.mxu0
      %v9828 = vadd.f32 0.0, %v9827
      %9829 = vmatmul.f32.gmra.mxu0 %v9706
      %v9830 = vpop.f32.mrf.mxu0
      %v9831 = vadd.f32 0.0, %v9830
      %9832 = vmatmul.f32.gmra.mxu0 %v9709
      %v9833 = vpop.f32.mrf.mxu0
      %v9834 = vadd.f32 0.0, %v9833
      %9835 = vmatmul.f32.gmra.mxu0 %v9712
      %v9836 = vpop.f32.mrf.mxu0
      %v9837 = vadd.f32 0.0, %v9836
      %9838 = vmatmul.f32.gmra.mxu0 %v9715
      %v9839 = vpop.f32.mrf.mxu0
      %v9840 = vadd.f32 0.0, %v9839
      %9841 = vmatmul.f32.gmra.mxu0 %v9718
      %v9842 = vpop.f32.mrf.mxu0
      %v9843 = vadd.f32 0.0, %v9842
      %9844 = vmatmul.f32.gmra.mxu0 %v9721
      %v9845 = vpop.f32.mrf.mxu0
      %v9846 = vadd.f32 0.0, %v9845
      %9847 = vmatmul.f32.gmra.mxu0 %v9724
      %v9848 = vpop.f32.mrf.mxu0
      %v9849 = vadd.f32 0.0, %v9848
      %9850 = vmatmul.f32.gmra.mxu0 %v9727
      %v9851 = vpop.f32.mrf.mxu0
      %v9852 = vadd.f32 0.0, %v9851
      %9853 = vmatmul.f32.gmra.mxu0 %v9730
      %v9854 = vpop.f32.mrf.mxu0
      %v9855 = vadd.f32 0.0, %v9854
      %9856 = vmatmul.f32.gmra.mxu0 %v9733
      %v9857 = vpop.f32.mrf.mxu0
      %v9858 = vadd.f32 0.0, %v9857
      %9859 = vmatmul.f32.gmra.mxu0 %v9736
      %v9860 = vpop.f32.mrf.mxu0
      %v9861 = vadd.f32 0.0, %v9860
      %9862 = vmatmul.f32.gmra.mxu0 %v9739
      %v9863 = vpop.f32.mrf.mxu0
      %v9864 = vadd.f32 0.0, %v9863
      %9865 = vmatmul.f32.gmra.mxu0 %v9742
      %v9866 = vpop.f32.mrf.mxu0
      %v9867 = vadd.f32 0.0, %v9866
      %9868 = vmatmul.f32.gmra.mxu0 %v9745
      %v9869 = vpop.f32.mrf.mxu0
      %v9870 = vadd.f32 0.0, %v9869
      %9871 = vmatmul.f32.gmra.mxu0 %v9748
      %v9872 = vpop.f32.mrf.mxu0
      %v9873 = vadd.f32 0.0, %v9872
      %9874 = vmatmul.f32.gmra.mxu0 %v9751
      %v9875 = vpop.f32.mrf.mxu0
      %v9876 = vadd.f32 0.0, %v9875
      %9877 = vmatmul.f32.gmra.mxu0 %v9754
      %v9878 = vpop.f32.mrf.mxu0
      %v9879 = vadd.f32 0.0, %v9878
      %9880 = vmatmul.f32.gmra.mxu0 %v9757
      %v9881 = vpop.f32.mrf.mxu0
      %v9882 = vadd.f32 0.0, %v9881
      %9883 = vmatmul.f32.gmra.mxu0 %v9760
      %v9884 = vpop.f32.mrf.mxu0
      %v9885 = vadd.f32 0.0, %v9884
      %9886 = vmatmul.f32.gmra.mxu0 %v9763
      %v9887 = vpop.f32.mrf.mxu0
      %v9888 = vadd.f32 0.0, %v9887
      %9889 = vmatmul.f32.gmra.mxu0 %v9766
      %v9890 = vpop.f32.mrf.mxu0
      %v9891 = vadd.f32 0.0, %v9890
      %9892 = vmatmul.f32.gmra.mxu0 %v9769
      %v9893 = vpop.f32.mrf.mxu0
      %v9894 = vadd.f32 0.0, %v9893
      %9895 = vmatmul.f32.gmra.mxu0 %v9772
      %v9896 = vpop.f32.mrf.mxu0
      %v9897 = vadd.f32 0.0, %v9896
      %9898 = vmatmul.f32.gmra.mxu0 %v9775
      %v9899 = vpop.f32.mrf.mxu0
      %v9900 = vadd.f32 0.0, %v9899
      %9901 = vmatmul.f32.gmra.mxu0 %v9778
      %v9902 = vpop.f32.mrf.mxu0
      %v9903 = vadd.f32 0.0, %v9902
      %9904 = vmatmul.f32.gmra.mxu0 %v9781
      %v9905 = vpop.f32.mrf.mxu0
      %v9906 = vadd.f32 0.0, %v9905
      %9907 = vmatmul.f32.gmra.mxu0 %v9784
      %v9908 = vpop.f32.mrf.mxu0
      %v9909 = vadd.f32 0.0, %v9908
      %9910 = vmatmul.f32.gmra.mxu0 %v9787
      %v9911 = vpop.f32.mrf.mxu0
      %v9912 = vadd.f32 0.0, %v9911
      %9913 = vmatmul.f32.gmra.mxu0 %v9790
      %v9914 = vpop.f32.mrf.mxu0
      %v9915 = vadd.f32 0.0, %v9914
      %9916 = vmatmul.f32.gmra.mxu0 %v9793
      %v9917 = vpop.f32.mrf.mxu0
      %v9918 = vadd.f32 0.0, %v9917
      %9919 = vmatmul.f32.gmra.mxu0 %v9796
      %v9920 = vpop.f32.mrf.mxu0
      %v9921 = vadd.f32 0.0, %v9920
      %9922 = vdwg.mxu0
      %v9923 = vadd.f32 %v9616, %v9816
      %v9924 = vadd.f32 %v9617, %v9819
      %v9925 = vadd.f32 %v9618, %v9822
      %v9926 = vadd.f32 %v9619, %v9825
      %v9927 = vadd.f32 %v9620, %v9828
      %v9928 = vadd.f32 %v9621, %v9831
      %v9929 = vadd.f32 %v9622, %v9834
      %v9930 = vadd.f32 %v9623, %v9837
      %v9931 = vadd.f32 %v9624, %v9840
      %v9932 = vadd.f32 %v9625, %v9843
      %v9933 = vadd.f32 %v9626, %v9846
      %v9934 = vadd.f32 %v9627, %v9849
      %v9935 = vadd.f32 %v9628, %v9852
      %v9936 = vadd.f32 %v9629, %v9855
      %v9937 = vadd.f32 %v9630, %v9858
      %v9938 = vadd.f32 %v9631, %v9861
      %v9939 = vadd.f32 %v9632, %v9864
      %v9940 = vadd.f32 %v9633, %v9867
      %v9941 = vadd.f32 %v9634, %v9870
      %v9942 = vadd.f32 %v9635, %v9873
      %v9943 = vadd.f32 %v9636, %v9876
      %v9944 = vadd.f32 %v9637, %v9879
      %v9945 = vadd.f32 %v9638, %v9882
      %v9946 = vadd.f32 %v9639, %v9885
      %v9947 = vadd.f32 %v9640, %v9888
      %v9948 = vadd.f32 %v9641, %v9891
      %v9949 = vadd.f32 %v9642, %v9894
      %v9950 = vadd.f32 %v9643, %v9897
      %v9951 = vadd.f32 %v9644, %v9900
      %v9952 = vadd.f32 %v9645, %v9903
      %v9953 = vadd.f32 %v9646, %v9906
      %v9954 = vadd.f32 %v9647, %v9909
      %v9955 = vadd.f32 %v9648, %v9912
      %v9956 = vadd.f32 %v9649, %v9915
      %v9957 = vadd.f32 %v9650, %v9918
      %v9958 = vadd.f32 %v9651, %v9921
      %v9959 = vld [vmem:[#allocation3 + $0x26] sm:$0xff]
      %v9960 = vld [vmem:[#allocation3 + $0x2e] sm:$0xff]
      %v9961 = vld [vmem:[#allocation3 + $0x36] sm:$0xff]
      %v9962 = vld [vmem:[#allocation3 + $0x3e] sm:$0xff]
      %v9963 = vld [vmem:[#allocation3 + $0x46] sm:$0xff]
      %v9964 = vld [vmem:[#allocation3 + $0x4e] sm:$0xff]
      %v9965 = vld [vmem:[#allocation3 + $0x56] sm:$0xff]
      %v9966 = vld [vmem:[#allocation3 + $0x5e] sm:$0xff]
      %v9967 = vld [vmem:[#allocation3 + $0x66] sm:$0xff]
      %v9968 = vld [vmem:[#allocation3 + $0x6e] sm:$0xff]
      %v9969 = vld [vmem:[#allocation3 + $0x76] sm:$0xff]
      %v9970 = vld [vmem:[#allocation3 + $0x7e] sm:$0xff]
      %v9971 = vld [vmem:[#allocation3 + $0x86] sm:$0xff]
      %v9972 = vld [vmem:[#allocation3 + $0x8e] sm:$0xff]
      %v9973 = vld [vmem:[#allocation3 + $0x96] sm:$0xff]
      %v9974 = vld [vmem:[#allocation3 + $0x9e] sm:$0xff]
      %v9975 = vld [vmem:[#allocation3 + $0xa6] sm:$0xff]
      %v9976 = vld [vmem:[#allocation3 + $0xae] sm:$0xff]
      %v9977 = vld [vmem:[#allocation3 + $0xb6] sm:$0xff]
      %v9978 = vld [vmem:[#allocation3 + $0xbe] sm:$0xff]
      %v9979 = vld [vmem:[#allocation3 + $0xc6] sm:$0xff]
      %v9980 = vld [vmem:[#allocation3 + $0xce] sm:$0xff]
      %v9981 = vld [vmem:[#allocation3 + $0xd6] sm:$0xff]
      %v9982 = vld [vmem:[#allocation3 + $0xde] sm:$0xff]
      %v9983 = vld [vmem:[#allocation3 + $0xe6] sm:$0xff]
      %v9984 = vld [vmem:[#allocation3 + $0xee] sm:$0xff]
      %v9985 = vld [vmem:[#allocation3 + $0xf6] sm:$0xff]
      %v9986 = vld [vmem:[#allocation3 + $0xfe] sm:$0xff]
      %v9987 = vld [vmem:[#allocation3 + $0x106] sm:$0xff]
      %v9988 = vld [vmem:[#allocation3 + $0x10e] sm:$0xff]
      %v9989 = vld [vmem:[#allocation3 + $0x116] sm:$0xff]
      %v9990 = vld [vmem:[#allocation3 + $0x11e] sm:$0xff]
      %v9991 = vld [vmem:[#allocation3 + $0x126] sm:$0xff]
      %v9992 = vld [vmem:[#allocation3 + $0x12e] sm:$0xff]
      %v9993 = vld [vmem:[#allocation3 + $0x136] sm:$0xff]
      %v9994 = vld [vmem:[#allocation3 + $0x13e] sm:$0xff]
      %s9995 = scalar_lea.vmem %s5, 64
      %v9996 = vld [vmem:[%s9995] sm:$0xff]
      %v9998 = vsel %vm7351, %v9959, 0
      %v10001 = vsel %vm7351, %v9960, 0
      %v10004 = vsel %vm7351, %v9961, 0
      %v10007 = vsel %vm7351, %v9962, 0
      %v10010 = vsel %vm7351, %v9963, 0
      %v10013 = vsel %vm7351, %v9964, 0
      %v10016 = vsel %vm7351, %v9965, 0
      %v10019 = vsel %vm7351, %v9966, 0
      %v10022 = vsel %vm7351, %v9967, 0
      %v10025 = vsel %vm7351, %v9968, 0
      %v10028 = vsel %vm7351, %v9969, 0
      %v10031 = vsel %vm7351, %v9970, 0
      %v10034 = vsel %vm7351, %v9971, 0
      %v10037 = vsel %vm7351, %v9972, 0
      %v10040 = vsel %vm7351, %v9973, 0
      %v10043 = vsel %vm7351, %v9974, 0
      %v10046 = vsel %vm7351, %v9975, 0
      %v10049 = vsel %vm7351, %v9976, 0
      %v10052 = vsel %vm7351, %v9977, 0
      %v10055 = vsel %vm7351, %v9978, 0
      %v10058 = vsel %vm7351, %v9979, 0
      %v10061 = vsel %vm7351, %v9980, 0
      %v10064 = vsel %vm7351, %v9981, 0
      %v10067 = vsel %vm7351, %v9982, 0
      %v10070 = vsel %vm7351, %v9983, 0
      %v10073 = vsel %vm7351, %v9984, 0
      %v10076 = vsel %vm7351, %v9985, 0
      %v10079 = vsel %vm7351, %v9986, 0
      %v10082 = vsel %vm7351, %v9987, 0
      %v10085 = vsel %vm7351, %v9988, 0
      %v10088 = vsel %vm7351, %v9989, 0
      %v10091 = vsel %vm7351, %v9990, 0
      %v10094 = vsel %vm7351, %v9991, 0
      %v10097 = vsel %vm7351, %v9992, 0
      %v10100 = vsel %vm7351, %v9993, 0
      %v10103 = vsel %vm7351, %v9994, 0
      %10105 = vmatpush.msra.mxu0 0.0
      %10106 = vmatpush.msra.mxu0 0.0
      %10107 = vmatpush.msra.mxu0 0.0
      %10108 = vmatpush.msra.mxu0 0.0
      %10109 = vmatpush.msra.mxu0 0.0
      %10110 = vmatpush.msra.mxu0 0.0
      %10111 = vmatpush.msra.mxu0 0.0
      %10112 = vmatpush.msra.mxu0 0.0
      %10113 = vmatpush.msra.mxu0 0.0
      %10114 = vmatpush.msra.mxu0 0.0
      %10115 = vmatpush.msra.mxu0 0.0
      %10116 = vmatpush.msra.mxu0 0.0
      %10117 = vmatpush.msra.mxu0 0.0
      %10118 = vmatpush.msra.mxu0 0.0
      %10119 = vmatpush.msra.mxu0 0.0
      %10120 = vmatpush.msra.mxu0 %v9996
      %10121 = vmatmul.f32.gmra.mxu0 %v9998
      %v10122 = vpop.f32.mrf.mxu0
      %v10123 = vadd.f32 0.0, %v10122
      %10124 = vmatmul.f32.gmra.mxu0 %v10001
      %v10125 = vpop.f32.mrf.mxu0
      %v10126 = vadd.f32 0.0, %v10125
      %10127 = vmatmul.f32.gmra.mxu0 %v10004
      %v10128 = vpop.f32.mrf.mxu0
      %v10129 = vadd.f32 0.0, %v10128
      %10130 = vmatmul.f32.gmra.mxu0 %v10007
      %v10131 = vpop.f32.mrf.mxu0
      %v10132 = vadd.f32 0.0, %v10131
      %10133 = vmatmul.f32.gmra.mxu0 %v10010
      %v10134 = vpop.f32.mrf.mxu0
      %v10135 = vadd.f32 0.0, %v10134
      %10136 = vmatmul.f32.gmra.mxu0 %v10013
      %v10137 = vpop.f32.mrf.mxu0
      %v10138 = vadd.f32 0.0, %v10137
      %10139 = vmatmul.f32.gmra.mxu0 %v10016
      %v10140 = vpop.f32.mrf.mxu0
      %v10141 = vadd.f32 0.0, %v10140
      %10142 = vmatmul.f32.gmra.mxu0 %v10019
      %v10143 = vpop.f32.mrf.mxu0
      %v10144 = vadd.f32 0.0, %v10143
      %10145 = vmatmul.f32.gmra.mxu0 %v10022
      %v10146 = vpop.f32.mrf.mxu0
      %v10147 = vadd.f32 0.0, %v10146
      %10148 = vmatmul.f32.gmra.mxu0 %v10025
      %v10149 = vpop.f32.mrf.mxu0
      %v10150 = vadd.f32 0.0, %v10149
      %10151 = vmatmul.f32.gmra.mxu0 %v10028
      %v10152 = vpop.f32.mrf.mxu0
      %v10153 = vadd.f32 0.0, %v10152
      %10154 = vmatmul.f32.gmra.mxu0 %v10031
      %v10155 = vpop.f32.mrf.mxu0
      %v10156 = vadd.f32 0.0, %v10155
      %10157 = vmatmul.f32.gmra.mxu0 %v10034
      %v10158 = vpop.f32.mrf.mxu0
      %v10159 = vadd.f32 0.0, %v10158
      %10160 = vmatmul.f32.gmra.mxu0 %v10037
      %v10161 = vpop.f32.mrf.mxu0
      %v10162 = vadd.f32 0.0, %v10161
      %10163 = vmatmul.f32.gmra.mxu0 %v10040
      %v10164 = vpop.f32.mrf.mxu0
      %v10165 = vadd.f32 0.0, %v10164
      %10166 = vmatmul.f32.gmra.mxu0 %v10043
      %v10167 = vpop.f32.mrf.mxu0
      %v10168 = vadd.f32 0.0, %v10167
      %10169 = vmatmul.f32.gmra.mxu0 %v10046
      %v10170 = vpop.f32.mrf.mxu0
      %v10171 = vadd.f32 0.0, %v10170
      %10172 = vmatmul.f32.gmra.mxu0 %v10049
      %v10173 = vpop.f32.mrf.mxu0
      %v10174 = vadd.f32 0.0, %v10173
      %10175 = vmatmul.f32.gmra.mxu0 %v10052
      %v10176 = vpop.f32.mrf.mxu0
      %v10177 = vadd.f32 0.0, %v10176
      %10178 = vmatmul.f32.gmra.mxu0 %v10055
      %v10179 = vpop.f32.mrf.mxu0
      %v10180 = vadd.f32 0.0, %v10179
      %10181 = vmatmul.f32.gmra.mxu0 %v10058
      %v10182 = vpop.f32.mrf.mxu0
      %v10183 = vadd.f32 0.0, %v10182
      %10184 = vmatmul.f32.gmra.mxu0 %v10061
      %v10185 = vpop.f32.mrf.mxu0
      %v10186 = vadd.f32 0.0, %v10185
      %10187 = vmatmul.f32.gmra.mxu0 %v10064
      %v10188 = vpop.f32.mrf.mxu0
      %v10189 = vadd.f32 0.0, %v10188
      %10190 = vmatmul.f32.gmra.mxu0 %v10067
      %v10191 = vpop.f32.mrf.mxu0
      %v10192 = vadd.f32 0.0, %v10191
      %10193 = vmatmul.f32.gmra.mxu0 %v10070
      %v10194 = vpop.f32.mrf.mxu0
      %v10195 = vadd.f32 0.0, %v10194
      %10196 = vmatmul.f32.gmra.mxu0 %v10073
      %v10197 = vpop.f32.mrf.mxu0
      %v10198 = vadd.f32 0.0, %v10197
      %10199 = vmatmul.f32.gmra.mxu0 %v10076
      %v10200 = vpop.f32.mrf.mxu0
      %v10201 = vadd.f32 0.0, %v10200
      %10202 = vmatmul.f32.gmra.mxu0 %v10079
      %v10203 = vpop.f32.mrf.mxu0
      %v10204 = vadd.f32 0.0, %v10203
      %10205 = vmatmul.f32.gmra.mxu0 %v10082
      %v10206 = vpop.f32.mrf.mxu0
      %v10207 = vadd.f32 0.0, %v10206
      %10208 = vmatmul.f32.gmra.mxu0 %v10085
      %v10209 = vpop.f32.mrf.mxu0
      %v10210 = vadd.f32 0.0, %v10209
      %10211 = vmatmul.f32.gmra.mxu0 %v10088
      %v10212 = vpop.f32.mrf.mxu0
      %v10213 = vadd.f32 0.0, %v10212
      %10214 = vmatmul.f32.gmra.mxu0 %v10091
      %v10215 = vpop.f32.mrf.mxu0
      %v10216 = vadd.f32 0.0, %v10215
      %10217 = vmatmul.f32.gmra.mxu0 %v10094
      %v10218 = vpop.f32.mrf.mxu0
      %v10219 = vadd.f32 0.0, %v10218
      %10220 = vmatmul.f32.gmra.mxu0 %v10097
      %v10221 = vpop.f32.mrf.mxu0
      %v10222 = vadd.f32 0.0, %v10221
      %10223 = vmatmul.f32.gmra.mxu0 %v10100
      %v10224 = vpop.f32.mrf.mxu0
      %v10225 = vadd.f32 0.0, %v10224
      %10226 = vmatmul.f32.gmra.mxu0 %v10103
      %v10227 = vpop.f32.mrf.mxu0
      %v10228 = vadd.f32 0.0, %v10227
      %10229 = vdwg.mxu0
      %v10230 = vadd.f32 %v9923, %v10123
      %v10231 = vadd.f32 %v9924, %v10126
      %v10232 = vadd.f32 %v9925, %v10129
      %v10233 = vadd.f32 %v9926, %v10132
      %v10234 = vadd.f32 %v9927, %v10135
      %v10235 = vadd.f32 %v9928, %v10138
      %v10236 = vadd.f32 %v9929, %v10141
      %v10237 = vadd.f32 %v9930, %v10144
      %v10238 = vadd.f32 %v9931, %v10147
      %v10239 = vadd.f32 %v9932, %v10150
      %v10240 = vadd.f32 %v9933, %v10153
      %v10241 = vadd.f32 %v9934, %v10156
      %v10242 = vadd.f32 %v9935, %v10159
      %v10243 = vadd.f32 %v9936, %v10162
      %v10244 = vadd.f32 %v9937, %v10165
      %v10245 = vadd.f32 %v9938, %v10168
      %v10246 = vadd.f32 %v9939, %v10171
      %v10247 = vadd.f32 %v9940, %v10174
      %v10248 = vadd.f32 %v9941, %v10177
      %v10249 = vadd.f32 %v9942, %v10180
      %v10250 = vadd.f32 %v9943, %v10183
      %v10251 = vadd.f32 %v9944, %v10186
      %v10252 = vadd.f32 %v9945, %v10189
      %v10253 = vadd.f32 %v9946, %v10192
      %v10254 = vadd.f32 %v9947, %v10195
      %v10255 = vadd.f32 %v9948, %v10198
      %v10256 = vadd.f32 %v9949, %v10201
      %v10257 = vadd.f32 %v9950, %v10204
      %v10258 = vadd.f32 %v9951, %v10207
      %v10259 = vadd.f32 %v9952, %v10210
      %v10260 = vadd.f32 %v9953, %v10213
      %v10261 = vadd.f32 %v9954, %v10216
      %v10262 = vadd.f32 %v9955, %v10219
      %v10263 = vadd.f32 %v9956, %v10222
      %v10264 = vadd.f32 %v9957, %v10225
      %v10265 = vadd.f32 %v9958, %v10228
      %v10266 = vld [vmem:[%s6] sm:$0x1]
      %v10268 = vperm.slane %v10266, 0
      %v10270 = vadd.f32 %v10230, %v10268
      %v10271 = vadd.f32 %v10231, %v10268
      %v10272 = vadd.f32 %v10232, %v10268
      %v10273 = vadd.f32 %v10233, %v10268
      %v10274 = vadd.f32 %v10234, %v10268
      %v10275 = vadd.f32 %v10235, %v10268
      %v10276 = vadd.f32 %v10236, %v10268
      %v10277 = vadd.f32 %v10237, %v10268
      %v10278 = vadd.f32 %v10238, %v10268
      %v10279 = vadd.f32 %v10239, %v10268
      %v10280 = vadd.f32 %v10240, %v10268
      %v10281 = vadd.f32 %v10241, %v10268
      %v10282 = vadd.f32 %v10242, %v10268
      %v10283 = vadd.f32 %v10243, %v10268
      %v10284 = vadd.f32 %v10244, %v10268
      %v10285 = vadd.f32 %v10245, %v10268
      %v10286 = vadd.f32 %v10246, %v10268
      %v10287 = vadd.f32 %v10247, %v10268
      %v10288 = vadd.f32 %v10248, %v10268
      %v10289 = vadd.f32 %v10249, %v10268
      %v10290 = vadd.f32 %v10250, %v10268
      %v10291 = vadd.f32 %v10251, %v10268
      %v10292 = vadd.f32 %v10252, %v10268
      %v10293 = vadd.f32 %v10253, %v10268
      %v10294 = vadd.f32 %v10254, %v10268
      %v10295 = vadd.f32 %v10255, %v10268
      %v10296 = vadd.f32 %v10256, %v10268
      %v10297 = vadd.f32 %v10257, %v10268
      %v10298 = vadd.f32 %v10258, %v10268
      %v10299 = vadd.f32 %v10259, %v10268
      %v10300 = vadd.f32 %v10260, %v10268
      %v10301 = vadd.f32 %v10261, %v10268
      %v10302 = vadd.f32 %v10262, %v10268
      %v10303 = vadd.f32 %v10263, %v10268
      %v10304 = vadd.f32 %v10264, %v10268
      %v10305 = vadd.f32 %v10265, %v10268
      %10342 = vrot.lane.b32.xlu0 %v7315, 16
      %v10343 = vpop.permute.xlu0 %10342
      %10344 = vrot.lane.b32.xlu0 %v7316, 16
      %v10345 = vpop.permute.xlu0 %10344
      %10346 = vrot.lane.b32.xlu0 %v7317, 16
      %v10347 = vpop.permute.xlu0 %10346
      %10348 = vrot.lane.b32.xlu0 %v7318, 16
      %v10349 = vpop.permute.xlu0 %10348
      %10350 = vrot.lane.b32.xlu0 %v7319, 16
      %v10351 = vpop.permute.xlu0 %10350
      %10352 = vrot.lane.b32.xlu0 %v7320, 16
      %v10353 = vpop.permute.xlu0 %10352
      %10354 = vrot.lane.b32.xlu0 %v7321, 16
      %v10355 = vpop.permute.xlu0 %10354
      %10356 = vrot.lane.b32.xlu0 %v7322, 16
      %v10357 = vpop.permute.xlu0 %10356
      %10358 = vrot.lane.b32.xlu0 %v7323, 16
      %v10359 = vpop.permute.xlu0 %10358
      %10360 = vrot.lane.b32.xlu0 %v7324, 16
      %v10361 = vpop.permute.xlu0 %10360
      %10362 = vrot.lane.b32.xlu0 %v7325, 16
      %v10363 = vpop.permute.xlu0 %10362
      %10364 = vrot.lane.b32.xlu0 %v7326, 16
      %v10365 = vpop.permute.xlu0 %10364
      %10366 = vrot.lane.b32.xlu0 %v7327, 16
      %v10367 = vpop.permute.xlu0 %10366
      %10368 = vrot.lane.b32.xlu0 %v7328, 16
      %v10369 = vpop.permute.xlu0 %10368
      %10370 = vrot.lane.b32.xlu0 %v7329, 16
      %v10371 = vpop.permute.xlu0 %10370
      %10372 = vrot.lane.b32.xlu0 %v7330, 16
      %v10373 = vpop.permute.xlu0 %10372
      %10374 = vrot.lane.b32.xlu0 %v7331, 16
      %v10375 = vpop.permute.xlu0 %10374
      %10376 = vrot.lane.b32.xlu0 %v7332, 16
      %v10377 = vpop.permute.xlu0 %10376
      %10378 = vrot.lane.b32.xlu0 %v7333, 16
      %v10379 = vpop.permute.xlu0 %10378
      %10380 = vrot.lane.b32.xlu0 %v7334, 16
      %v10381 = vpop.permute.xlu0 %10380
      %10382 = vrot.lane.b32.xlu0 %v7335, 16
      %v10383 = vpop.permute.xlu0 %10382
      %10384 = vrot.lane.b32.xlu0 %v7336, 16
      %v10385 = vpop.permute.xlu0 %10384
      %10386 = vrot.lane.b32.xlu0 %v7337, 16
      %v10387 = vpop.permute.xlu0 %10386
      %10388 = vrot.lane.b32.xlu0 %v7338, 16
      %v10389 = vpop.permute.xlu0 %10388
      %10390 = vrot.lane.b32.xlu0 %v7339, 16
      %v10391 = vpop.permute.xlu0 %10390
      %10392 = vrot.lane.b32.xlu0 %v7340, 16
      %v10393 = vpop.permute.xlu0 %10392
      %10394 = vrot.lane.b32.xlu0 %v7341, 16
      %v10395 = vpop.permute.xlu0 %10394
      %10396 = vrot.lane.b32.xlu0 %v7342, 16
      %v10397 = vpop.permute.xlu0 %10396
      %10398 = vrot.lane.b32.xlu0 %v7343, 16
      %v10399 = vpop.permute.xlu0 %10398
      %10400 = vrot.lane.b32.xlu0 %v7344, 16
      %v10401 = vpop.permute.xlu0 %10400
      %10402 = vrot.lane.b32.xlu0 %v7345, 16
      %v10403 = vpop.permute.xlu0 %10402
      %10404 = vrot.lane.b32.xlu0 %v7346, 16
      %v10405 = vpop.permute.xlu0 %10404
      %10406 = vrot.lane.b32.xlu0 %v7347, 16
      %v10407 = vpop.permute.xlu0 %10406
      %10408 = vrot.lane.b32.xlu0 %v7348, 16
      %v10409 = vpop.permute.xlu0 %10408
      %10410 = vrot.lane.b32.xlu0 %v7349, 16
      %v10411 = vpop.permute.xlu0 %10410
      %10412 = vrot.lane.b32.xlu0 %v7350, 16
      %v10413 = vpop.permute.xlu0 %10412
      %10486 = vrot.lane.b32.xlu0 %v10270, 24
      %v10487 = vpop.permute.xlu0 %10486
      %10488 = vrot.lane.b32.xlu0 %v10271, 24
      %v10489 = vpop.permute.xlu0 %10488
      %10490 = vrot.lane.b32.xlu0 %v10272, 24
      %v10491 = vpop.permute.xlu0 %10490
      %10492 = vrot.lane.b32.xlu0 %v10273, 24
      %v10493 = vpop.permute.xlu0 %10492
      %10494 = vrot.lane.b32.xlu0 %v10274, 24
      %v10495 = vpop.permute.xlu0 %10494
      %10496 = vrot.lane.b32.xlu0 %v10275, 24
      %v10497 = vpop.permute.xlu0 %10496
      %10498 = vrot.lane.b32.xlu0 %v10276, 24
      %v10499 = vpop.permute.xlu0 %10498
      %10500 = vrot.lane.b32.xlu0 %v10277, 24
      %v10501 = vpop.permute.xlu0 %10500
      %10502 = vrot.lane.b32.xlu0 %v10278, 24
      %v10503 = vpop.permute.xlu0 %10502
      %10504 = vrot.lane.b32.xlu0 %v10279, 24
      %v10505 = vpop.permute.xlu0 %10504
      %10506 = vrot.lane.b32.xlu0 %v10280, 24
      %v10507 = vpop.permute.xlu0 %10506
      %10508 = vrot.lane.b32.xlu0 %v10281, 24
      %v10509 = vpop.permute.xlu0 %10508
      %10510 = vrot.lane.b32.xlu0 %v10282, 24
      %v10511 = vpop.permute.xlu0 %10510
      %10512 = vrot.lane.b32.xlu0 %v10283, 24
      %v10513 = vpop.permute.xlu0 %10512
      %10514 = vrot.lane.b32.xlu0 %v10284, 24
      %v10515 = vpop.permute.xlu0 %10514
      %10516 = vrot.lane.b32.xlu0 %v10285, 24
      %v10517 = vpop.permute.xlu0 %10516
      %10518 = vrot.lane.b32.xlu0 %v10286, 24
      %v10519 = vpop.permute.xlu0 %10518
      %10520 = vrot.lane.b32.xlu0 %v10287, 24
      %v10521 = vpop.permute.xlu0 %10520
      %10522 = vrot.lane.b32.xlu0 %v10288, 24
      %v10523 = vpop.permute.xlu0 %10522
      %10524 = vrot.lane.b32.xlu0 %v10289, 24
      %v10525 = vpop.permute.xlu0 %10524
      %10526 = vrot.lane.b32.xlu0 %v10290, 24
      %v10527 = vpop.permute.xlu0 %10526
      %10528 = vrot.lane.b32.xlu0 %v10291, 24
      %v10529 = vpop.permute.xlu0 %10528
      %10530 = vrot.lane.b32.xlu0 %v10292, 24
      %v10531 = vpop.permute.xlu0 %10530
      %10532 = vrot.lane.b32.xlu0 %v10293, 24
      %v10533 = vpop.permute.xlu0 %10532
      %10534 = vrot.lane.b32.xlu0 %v10294, 24
      %v10535 = vpop.permute.xlu0 %10534
      %10536 = vrot.lane.b32.xlu0 %v10295, 24
      %v10537 = vpop.permute.xlu0 %10536
      %10538 = vrot.lane.b32.xlu0 %v10296, 24
      %v10539 = vpop.permute.xlu0 %10538
      %10540 = vrot.lane.b32.xlu0 %v10297, 24
      %v10541 = vpop.permute.xlu0 %10540
      %10542 = vrot.lane.b32.xlu0 %v10298, 24
      %v10543 = vpop.permute.xlu0 %10542
      %10544 = vrot.lane.b32.xlu0 %v10299, 24
      %v10545 = vpop.permute.xlu0 %10544
      %10546 = vrot.lane.b32.xlu0 %v10300, 24
      %v10547 = vpop.permute.xlu0 %10546
      %10548 = vrot.lane.b32.xlu0 %v10301, 24
      %v10549 = vpop.permute.xlu0 %10548
      %10550 = vrot.lane.b32.xlu0 %v10302, 24
      %v10551 = vpop.permute.xlu0 %10550
      %10552 = vrot.lane.b32.xlu0 %v10303, 24
      %v10553 = vpop.permute.xlu0 %10552
      %10554 = vrot.lane.b32.xlu0 %v10304, 24
      %v10555 = vpop.permute.xlu0 %10554
      %10556 = vrot.lane.b32.xlu0 %v10305, 24
      %v10557 = vpop.permute.xlu0 %10556
      %v10594 = vsel %vm1653, %v4280, %v10343
      %v10595 = vsel %vm1653, %v4281, %v10345
      %v10596 = vsel %vm1653, %v4282, %v10347
      %v10597 = vsel %vm1653, %v4283, %v10349
      %v10598 = vsel %vm1653, %v4284, %v10351
      %v10599 = vsel %vm1653, %v4285, %v10353
      %v10600 = vsel %vm1653, %v4286, %v10355
      %v10601 = vsel %vm1653, %v4287, %v10357
      %v10602 = vsel %vm1653, %v4288, %v10359
      %v10603 = vsel %vm1653, %v4289, %v10361
      %v10604 = vsel %vm1653, %v4290, %v10363
      %v10605 = vsel %vm1653, %v4291, %v10365
      %v10606 = vsel %vm1653, %v4292, %v10367
      %v10607 = vsel %vm1653, %v4293, %v10369
      %v10608 = vsel %vm1653, %v4294, %v10371
      %v10609 = vsel %vm1653, %v4295, %v10373
      %v10610 = vsel %vm1653, %v4296, %v10375
      %v10611 = vsel %vm1653, %v4297, %v10377
      %v10612 = vsel %vm1653, %v4298, %v10379
      %v10613 = vsel %vm1653, %v4299, %v10381
      %v10614 = vsel %vm1653, %v4300, %v10383
      %v10615 = vsel %vm1653, %v4301, %v10385
      %v10616 = vsel %vm1653, %v4302, %v10387
      %v10617 = vsel %vm1653, %v4303, %v10389
      %v10618 = vsel %vm1653, %v4304, %v10391
      %v10619 = vsel %vm1653, %v4305, %v10393
      %v10620 = vsel %vm1653, %v4306, %v10395
      %v10621 = vsel %vm1653, %v4307, %v10397
      %v10622 = vsel %vm1653, %v4308, %v10399
      %v10623 = vsel %vm1653, %v4309, %v10401
      %v10624 = vsel %vm1653, %v4310, %v10403
      %v10625 = vsel %vm1653, %v4311, %v10405
      %v10626 = vsel %vm1653, %v4312, %v10407
      %v10627 = vsel %vm1653, %v4313, %v10409
      %v10628 = vsel %vm1653, %v4314, %v10411
      %v10629 = vsel %vm1653, %v4315, %v10413
      %vm10630 = vcmask 195584
      %v10631 = vsel %vm10630, %v10594, %v10487
      %v10632 = vsel %vm10630, %v10595, %v10489
      %v10633 = vsel %vm10630, %v10596, %v10491
      %v10634 = vsel %vm10630, %v10597, %v10493
      %v10635 = vsel %vm10630, %v10598, %v10495
      %v10636 = vsel %vm10630, %v10599, %v10497
      %v10637 = vsel %vm10630, %v10600, %v10499
      %v10638 = vsel %vm10630, %v10601, %v10501
      %v10639 = vsel %vm10630, %v10602, %v10503
      %v10640 = vsel %vm10630, %v10603, %v10505
      %v10641 = vsel %vm10630, %v10604, %v10507
      %v10642 = vsel %vm10630, %v10605, %v10509
      %v10643 = vsel %vm10630, %v10606, %v10511
      %v10644 = vsel %vm10630, %v10607, %v10513
      %v10645 = vsel %vm10630, %v10608, %v10515
      %v10646 = vsel %vm10630, %v10609, %v10517
      %v10647 = vsel %vm10630, %v10610, %v10519
      %v10648 = vsel %vm10630, %v10611, %v10521
      %v10649 = vsel %vm10630, %v10612, %v10523
      %v10650 = vsel %vm10630, %v10613, %v10525
      %v10651 = vsel %vm10630, %v10614, %v10527
      %v10652 = vsel %vm10630, %v10615, %v10529
      %v10653 = vsel %vm10630, %v10616, %v10531
      %v10654 = vsel %vm10630, %v10617, %v10533
      %v10655 = vsel %vm10630, %v10618, %v10535
      %v10656 = vsel %vm10630, %v10619, %v10537
      %v10657 = vsel %vm10630, %v10620, %v10539
      %v10658 = vsel %vm10630, %v10621, %v10541
      %v10659 = vsel %vm10630, %v10622, %v10543
      %v10660 = vsel %vm10630, %v10623, %v10545
      %v10661 = vsel %vm10630, %v10624, %v10547
      %v10662 = vsel %vm10630, %v10625, %v10549
      %v10663 = vsel %vm10630, %v10626, %v10551
      %v10664 = vsel %vm10630, %v10627, %v10553
      %v10665 = vsel %vm10630, %v10628, %v10555
      %v10666 = vsel %vm10630, %v10629, %v10557
      %v10703 = vrot.slane %v10631, 2
      %v10704 = vrot.slane %v10631, 4
      %v10705 = vrot.slane %v10631, 6
      %v10706 = vrot.slane %v10632, 2
      %v10707 = vrot.slane %v10632, 4
      %v10708 = vrot.slane %v10632, 6
      %v10709 = vrot.slane %v10633, 2
      %v10710 = vrot.slane %v10633, 4
      %v10711 = vrot.slane %v10633, 6
      %v10712 = vrot.slane %v10634, 2
      %v10713 = vrot.slane %v10634, 4
      %v10714 = vrot.slane %v10634, 6
      %v10715 = vrot.slane %v10635, 4
      %v10716 = vrot.slane %v10635, 6
      %v10717 = vrot.slane %v10636, 2
      %v10718 = vrot.slane %v10636, 4
      %v10719 = vrot.slane %v10636, 6
      %v10720 = vrot.slane %v10637, 2
      %v10721 = vrot.slane %v10637, 6
      %v10722 = vrot.slane %v10638, 2
      %v10723 = vrot.slane %v10638, 4
      %v10724 = vrot.slane %v10638, 6
      %v10725 = vrot.slane %v10639, 2
      %v10726 = vrot.slane %v10639, 4
      %v10727 = vrot.slane %v10640, 2
      %v10728 = vrot.slane %v10640, 4
      %v10729 = vrot.slane %v10640, 6
      %v10730 = vrot.slane %v10641, 2
      %v10731 = vrot.slane %v10641, 4
      %v10732 = vrot.slane %v10641, 6
      %v10733 = vrot.slane %v10642, 2
      %v10734 = vrot.slane %v10642, 4
      %v10735 = vrot.slane %v10642, 6
      %v10736 = vrot.slane %v10643, 2
      %v10737 = vrot.slane %v10643, 4
      %v10738 = vrot.slane %v10643, 6
      %v10739 = vrot.slane %v10644, 4
      %v10740 = vrot.slane %v10644, 6
      %v10741 = vrot.slane %v10645, 2
      %v10742 = vrot.slane %v10645, 4
      %v10743 = vrot.slane %v10645, 6
      %v10744 = vrot.slane %v10646, 2
      %v10745 = vrot.slane %v10646, 6
      %v10746 = vrot.slane %v10647, 2
      %v10747 = vrot.slane %v10647, 4
      %v10748 = vrot.slane %v10647, 6
      %v10749 = vrot.slane %v10648, 2
      %v10750 = vrot.slane %v10648, 4
      %v10751 = vrot.slane %v10649, 2
      %v10752 = vrot.slane %v10649, 4
      %v10753 = vrot.slane %v10649, 6
      %v10754 = vrot.slane %v10650, 2
      %v10755 = vrot.slane %v10650, 4
      %v10756 = vrot.slane %v10650, 6
      %v10757 = vrot.slane %v10651, 2
      %v10758 = vrot.slane %v10651, 4
      %v10759 = vrot.slane %v10651, 6
      %v10760 = vrot.slane %v10652, 2
      %v10761 = vrot.slane %v10652, 4
      %v10762 = vrot.slane %v10652, 6
      %v10763 = vrot.slane %v10653, 4
      %v10764 = vrot.slane %v10653, 6
      %v10765 = vrot.slane %v10654, 2
      %v10766 = vrot.slane %v10654, 4
      %v10767 = vrot.slane %v10654, 6
      %v10768 = vrot.slane %v10655, 2
      %v10769 = vrot.slane %v10655, 6
      %v10770 = vrot.slane %v10656, 2
      %v10771 = vrot.slane %v10656, 4
      %v10772 = vrot.slane %v10656, 6
      %v10773 = vrot.slane %v10657, 2
      %v10774 = vrot.slane %v10657, 4
      %v10775 = vrot.slane %v10658, 2
      %v10776 = vrot.slane %v10658, 4
      %v10777 = vrot.slane %v10658, 6
      %v10778 = vrot.slane %v10659, 2
      %v10779 = vrot.slane %v10659, 4
      %v10780 = vrot.slane %v10659, 6
      %v10781 = vrot.slane %v10660, 2
      %v10782 = vrot.slane %v10660, 4
      %v10783 = vrot.slane %v10660, 6
      %v10784 = vrot.slane %v10661, 2
      %v10785 = vrot.slane %v10661, 4
      %v10786 = vrot.slane %v10661, 6
      %v10787 = vrot.slane %v10662, 4
      %v10788 = vrot.slane %v10662, 6
      %v10789 = vrot.slane %v10663, 2
      %v10790 = vrot.slane %v10663, 4
      %v10791 = vrot.slane %v10663, 6
      %v10792 = vrot.slane %v10664, 2
      %v10793 = vrot.slane %v10664, 6
      %v10794 = vrot.slane %v10665, 2
      %v10795 = vrot.slane %v10665, 4
      %v10796 = vrot.slane %v10665, 6
      %v10797 = vrot.slane %v10666, 2
      %v10798 = vrot.slane %v10666, 4
      %10799 = vst [vmem:[#allocation1] ss:$4 sm:$0xff] %v10631
      %s10800 = scalar_lea.vmem [#allocation1], 1
      %10801 = vst [vmem:[%s10800] ss:$4 sm:$0xff] %v10703
      %s10802 = scalar_lea.vmem [#allocation1], 2
      %10803 = vst [vmem:[%s10802] ss:$4 sm:$0xff] %v10704
      %s10804 = scalar_lea.vmem [#allocation1], 3
      %10805 = vst [vmem:[%s10804] ss:$4 sm:$0xff] %v10705
      %s10806 = scalar_lea.vmem [#allocation1], 32
      %10807 = vst [vmem:[%s10806] ss:$4 sm:$0xff] %v10632
      %s10808 = scalar_lea.vmem [#allocation1], 33
      %10809 = vst [vmem:[%s10808] ss:$4 sm:$0xff] %v10706
      %s10810 = scalar_lea.vmem [#allocation1], 34
      %10811 = vst [vmem:[%s10810] ss:$4 sm:$0xff] %v10707
      %s10812 = scalar_lea.vmem [#allocation1], 35
      %10813 = vst [vmem:[%s10812] ss:$4 sm:$0xff] %v10708
      %v10814 = vld.sshfl [vmem:[#allocation1] sm:$0xff pattern:$0x73625140]
      %v10815 = vld.sshfl [vmem:[#allocation1 + $0x20] sm:$0xff pattern:$0x73625140]
      %10816 = vst [vmem:[#allocation1] ss:$4 sm:$0xff] %v10709
      %10817 = vst [vmem:[%s10800] ss:$4 sm:$0xff] %v10710
      %10818 = vst [vmem:[%s10802] ss:$4 sm:$0xff] %v10711
      %10819 = vst [vmem:[%s10804] ss:$4 sm:$0xff] %v10634
      %10820 = vst [vmem:[%s10806] ss:$4 sm:$0xff] %v10712
      %10821 = vst [vmem:[%s10808] ss:$4 sm:$0xff] %v10713
      %10822 = vst [vmem:[%s10810] ss:$4 sm:$0xff] %v10714
      %10823 = vst [vmem:[%s10812] ss:$4 sm:$0xff] %v10635
      %v10824 = vld.sshfl [vmem:[#allocation1] sm:$0xff pattern:$0x73625140]
      %v10825 = vld.sshfl [vmem:[#allocation1 + $0x20] sm:$0xff pattern:$0x73625140]
      %10826 = vst [vmem:[#allocation1] ss:$4 sm:$0xff] %v10715
      %10827 = vst [vmem:[%s10800] ss:$4 sm:$0xff] %v10716
      %10828 = vst [vmem:[%s10802] ss:$4 sm:$0xff] %v10636
      %10829 = vst [vmem:[%s10804] ss:$4 sm:$0xff] %v10717
      %10830 = vst [vmem:[%s10806] ss:$4 sm:$0xff] %v10718
      %10831 = vst [vmem:[%s10808] ss:$4 sm:$0xff] %v10719
      %10832 = vst [vmem:[%s10810] ss:$4 sm:$0xff] %v10637
      %10833 = vst [vmem:[%s10812] ss:$4 sm:$0xff] %v10720
      %v10834 = vld.sshfl [vmem:[#allocation1] sm:$0xff pattern:$0x73625140]
      %v10835 = vld.sshfl [vmem:[#allocation1 + $0x20] sm:$0xff pattern:$0x73625140]
      %10836 = vst [vmem:[#allocation1] ss:$4 sm:$0xff] %v10721
      %10837 = vst [vmem:[%s10800] ss:$4 sm:$0xff] %v10638
      %10838 = vst [vmem:[%s10802] ss:$4 sm:$0xff] %v10722
      %10839 = vst [vmem:[%s10804] ss:$4 sm:$0xff] %v10723
      %10840 = vst [vmem:[%s10806] ss:$4 sm:$0xff] %v10724
      %10841 = vst [vmem:[%s10808] ss:$4 sm:$0xff] %v10639
      %10842 = vst [vmem:[%s10810] ss:$4 sm:$0xff] %v10725
      %10843 = vst [vmem:[%s10812] ss:$4 sm:$0xff] %v10726
      %v10844 = vld.sshfl [vmem:[#allocation1] sm:$0xff pattern:$0x73625140]
      %v10845 = vld.sshfl [vmem:[#allocation1 + $0x20] sm:$0xff pattern:$0x73625140]
      %10846 = vst [vmem:[#allocation1] ss:$4 sm:$0xff] %v10640
      %10847 = vst [vmem:[%s10800] ss:$4 sm:$0xff] %v10727
      %10848 = vst [vmem:[%s10802] ss:$4 sm:$0xff] %v10728
      %10849 = vst [vmem:[%s10804] ss:$4 sm:$0xff] %v10729
      %10850 = vst [vmem:[%s10806] ss:$4 sm:$0xff] %v10641
      %10851 = vst [vmem:[%s10808] ss:$4 sm:$0xff] %v10730
      %10852 = vst [vmem:[%s10810] ss:$4 sm:$0xff] %v10731
      %10853 = vst [vmem:[%s10812] ss:$4 sm:$0xff] %v10732
      %v10854 = vld.sshfl [vmem:[#allocation1] sm:$0xff pattern:$0x73625140]
      %v10855 = vld.sshfl [vmem:[#allocation1 + $0x20] sm:$0xff pattern:$0x73625140]
      %10856 = vst [vmem:[#allocation1] ss:$4 sm:$0xff] %v10733
      %10857 = vst [vmem:[%s10800] ss:$4 sm:$0xff] %v10734
      %10858 = vst [vmem:[%s10802] ss:$4 sm:$0xff] %v10735
      %10859 = vst [vmem:[%s10804] ss:$4 sm:$0xff] %v10643
      %10860 = vst [vmem:[%s10806] ss:$4 sm:$0xff] %v10736
      %10861 = vst [vmem:[%s10808] ss:$4 sm:$0xff] %v10737
      %10862 = vst [vmem:[%s10810] ss:$4 sm:$0xff] %v10738
      %10863 = vst [vmem:[%s10812] ss:$4 sm:$0xff] %v10644
      %v10864 = vld.sshfl [vmem:[#allocation1] sm:$0xff pattern:$0x73625140]
      %v10865 = vld.sshfl [vmem:[#allocation1 + $0x20] sm:$0xff pattern:$0x73625140]
      %10866 = vst [vmem:[#allocation1] ss:$4 sm:$0xff] %v10739
      %10867 = vst [vmem:[%s10800] ss:$4 sm:$0xff] %v10740
      %10868 = vst [vmem:[%s10802] ss:$4 sm:$0xff] %v10645
      %10869 = vst [vmem:[%s10804] ss:$4 sm:$0xff] %v10741
      %10870 = vst [vmem:[%s10806] ss:$4 sm:$0xff] %v10742
      %10871 = vst [vmem:[%s10808] ss:$4 sm:$0xff] %v10743
      %10872 = vst [vmem:[%s10810] ss:$4 sm:$0xff] %v10646
      %10873 = vst [vmem:[%s10812] ss:$4 sm:$0xff] %v10744
      %v10874 = vld.sshfl [vmem:[#allocation1] sm:$0xff pattern:$0x73625140]
      %v10875 = vld.sshfl [vmem:[#allocation1 + $0x20] sm:$0xff pattern:$0x73625140]
      %10876 = vst [vmem:[#allocation1] ss:$4 sm:$0xff] %v10745
      %10877 = vst [vmem:[%s10800] ss:$4 sm:$0xff] %v10647
      %10878 = vst [vmem:[%s10802] ss:$4 sm:$0xff] %v10746
      %10879 = vst [vmem:[%s10804] ss:$4 sm:$0xff] %v10747
      %10880 = vst [vmem:[%s10806] ss:$4 sm:$0xff] %v10748
      %10881 = vst [vmem:[%s10808] ss:$4 sm:$0xff] %v10648
      %10882 = vst [vmem:[%s10810] ss:$4 sm:$0xff] %v10749
      %10883 = vst [vmem:[%s10812] ss:$4 sm:$0xff] %v10750
      %v10884 = vld.sshfl [vmem:[#allocation1] sm:$0xff pattern:$0x73625140]
      %v10885 = vld.sshfl [vmem:[#allocation1 + $0x20] sm:$0xff pattern:$0x73625140]
      %10886 = vst [vmem:[#allocation1] ss:$4 sm:$0xff] %v10649
      %10887 = vst [vmem:[%s10800] ss:$4 sm:$0xff] %v10751
      %10888 = vst [vmem:[%s10802] ss:$4 sm:$0xff] %v10752
      %10889 = vst [vmem:[%s10804] ss:$4 sm:$0xff] %v10753
      %10890 = vst [vmem:[%s10806] ss:$4 sm:$0xff] %v10650
      %10891 = vst [vmem:[%s10808] ss:$4 sm:$0xff] %v10754
      %10892 = vst [vmem:[%s10810] ss:$4 sm:$0xff] %v10755
      %10893 = vst [vmem:[%s10812] ss:$4 sm:$0xff] %v10756
      %v10894 = vld.sshfl [vmem:[#allocation1] sm:$0xff pattern:$0x73625140]
      %v10895 = vld.sshfl [vmem:[#allocation1 + $0x20] sm:$0xff pattern:$0x73625140]
      %10896 = vst [vmem:[#allocation1] ss:$4 sm:$0xff] %v10757
      %10897 = vst [vmem:[%s10800] ss:$4 sm:$0xff] %v10758
      %10898 = vst [vmem:[%s10802] ss:$4 sm:$0xff] %v10759
      %10899 = vst [vmem:[%s10804] ss:$4 sm:$0xff] %v10652
      %10900 = vst [vmem:[%s10806] ss:$4 sm:$0xff] %v10760
      %10901 = vst [vmem:[%s10808] ss:$4 sm:$0xff] %v10761
      %10902 = vst [vmem:[%s10810] ss:$4 sm:$0xff] %v10762
      %10903 = vst [vmem:[%s10812] ss:$4 sm:$0xff] %v10653
      %v10904 = vld.sshfl [vmem:[#allocation1] sm:$0xff pattern:$0x73625140]
      %v10905 = vld.sshfl [vmem:[#allocation1 + $0x20] sm:$0xff pattern:$0x73625140]
      %10906 = vst [vmem:[#allocation1] ss:$4 sm:$0xff] %v10763
      %10907 = vst [vmem:[%s10800] ss:$4 sm:$0xff] %v10764
      %10908 = vst [vmem:[%s10802] ss:$4 sm:$0xff] %v10654
      %10909 = vst [vmem:[%s10804] ss:$4 sm:$0xff] %v10765
      %10910 = vst [vmem:[%s10806] ss:$4 sm:$0xff] %v10766
      %10911 = vst [vmem:[%s10808] ss:$4 sm:$0xff] %v10767
      %10912 = vst [vmem:[%s10810] ss:$4 sm:$0xff] %v10655
      %10913 = vst [vmem:[%s10812] ss:$4 sm:$0xff] %v10768
      %v10914 = vld.sshfl [vmem:[#allocation1] sm:$0xff pattern:$0x73625140]
      %v10915 = vld.sshfl [vmem:[#allocation1 + $0x20] sm:$0xff pattern:$0x73625140]
      %10916 = vst [vmem:[#allocation1] ss:$4 sm:$0xff] %v10769
      %10917 = vst [vmem:[%s10800] ss:$4 sm:$0xff] %v10656
      %10918 = vst [vmem:[%s10802] ss:$4 sm:$0xff] %v10770
      %10919 = vst [vmem:[%s10804] ss:$4 sm:$0xff] %v10771
      %10920 = vst [vmem:[%s10806] ss:$4 sm:$0xff] %v10772
      %10921 = vst [vmem:[%s10808] ss:$4 sm:$0xff] %v10657
      %10922 = vst [vmem:[%s10810] ss:$4 sm:$0xff] %v10773
      %10923 = vst [vmem:[%s10812] ss:$4 sm:$0xff] %v10774
      %v10924 = vld.sshfl [vmem:[#allocation1] sm:$0xff pattern:$0x73625140]
      %v10925 = vld.sshfl [vmem:[#allocation1 + $0x20] sm:$0xff pattern:$0x73625140]
      %10926 = vst [vmem:[#allocation1] ss:$4 sm:$0xff] %v10658
      %10927 = vst [vmem:[%s10800] ss:$4 sm:$0xff] %v10775
      %10928 = vst [vmem:[%s10802] ss:$4 sm:$0xff] %v10776
      %10929 = vst [vmem:[%s10804] ss:$4 sm:$0xff] %v10777
      %10930 = vst [vmem:[%s10806] ss:$4 sm:$0xff] %v10659
      %10931 = vst [vmem:[%s10808] ss:$4 sm:$0xff] %v10778
      %10932 = vst [vmem:[%s10810] ss:$4 sm:$0xff] %v10779
      %10933 = vst [vmem:[%s10812] ss:$4 sm:$0xff] %v10780
      %v10934 = vld.sshfl [vmem:[#allocation1] sm:$0xff pattern:$0x73625140]
      %v10935 = vld.sshfl [vmem:[#allocation1 + $0x20] sm:$0xff pattern:$0x73625140]
      %10936 = vst [vmem:[#allocation1] ss:$4 sm:$0xff] %v10781
      %10937 = vst [vmem:[%s10800] ss:$4 sm:$0xff] %v10782
      %10938 = vst [vmem:[%s10802] ss:$4 sm:$0xff] %v10783
      %10939 = vst [vmem:[%s10804] ss:$4 sm:$0xff] %v10661
      %10940 = vst [vmem:[%s10806] ss:$4 sm:$0xff] %v10784
      %10941 = vst [vmem:[%s10808] ss:$4 sm:$0xff] %v10785
      %10942 = vst [vmem:[%s10810] ss:$4 sm:$0xff] %v10786
      %10943 = vst [vmem:[%s10812] ss:$4 sm:$0xff] %v10662
      %v10944 = vld.sshfl [vmem:[#allocation1] sm:$0xff pattern:$0x73625140]
      %v10945 = vld.sshfl [vmem:[#allocation1 + $0x20] sm:$0xff pattern:$0x73625140]
      %10946 = vst [vmem:[#allocation1] ss:$4 sm:$0xff] %v10787
      %10947 = vst [vmem:[%s10800] ss:$4 sm:$0xff] %v10788
      %10948 = vst [vmem:[%s10802] ss:$4 sm:$0xff] %v10663
      %10949 = vst [vmem:[%s10804] ss:$4 sm:$0xff] %v10789
      %10950 = vst [vmem:[%s10806] ss:$4 sm:$0xff] %v10790
      %10951 = vst [vmem:[%s10808] ss:$4 sm:$0xff] %v10791
      %10952 = vst [vmem:[%s10810] ss:$4 sm:$0xff] %v10664
      %10953 = vst [vmem:[%s10812] ss:$4 sm:$0xff] %v10792
      %v10954 = vld.sshfl [vmem:[#allocation1] sm:$0xff pattern:$0x73625140]
      %v10955 = vld.sshfl [vmem:[#allocation1 + $0x20] sm:$0xff pattern:$0x73625140]
      %10956 = vst [vmem:[#allocation1] ss:$4 sm:$0xff] %v10793
      %10957 = vst [vmem:[%s10800] ss:$4 sm:$0xff] %v10665
      %10958 = vst [vmem:[%s10802] ss:$4 sm:$0xff] %v10794
      %10959 = vst [vmem:[%s10804] ss:$4 sm:$0xff] %v10795
      %10960 = vst [vmem:[%s10806] ss:$4 sm:$0xff] %v10796
      %10961 = vst [vmem:[%s10808] ss:$4 sm:$0xff] %v10666
      %10962 = vst [vmem:[%s10810] ss:$4 sm:$0xff] %v10797
      %10963 = vst [vmem:[%s10812] ss:$4 sm:$0xff] %v10798
      %v10964 = vld.sshfl [vmem:[#allocation1] sm:$0xff pattern:$0x73625140]
      %v10965 = vld.sshfl [vmem:[#allocation1 + $0x20] sm:$0xff pattern:$0x73625140]
      %vm10998 = vcmask 261120
      %10999 = vst.msk [vmem:[%s278] sm:$0xff] %vm10998, %v10814
      %11000 = vst.msk [vmem:[%s278 + $0x8] sm:$0xff] %vm10998, %v10815
      %11001 = vst.msk [vmem:[%s278 + $0x10] sm:$0xff] %vm10998, %v10824
      %11002 = vst.msk [vmem:[%s278 + $0x18] sm:$0xff] %vm10998, %v10825
      %11003 = vst.msk [vmem:[%s278 + $0x20] sm:$0xff] %vm10998, %v10834
      %11004 = vst.msk [vmem:[%s278 + $0x28] sm:$0xff] %vm10998, %v10835
      %11005 = vst.msk [vmem:[%s278 + $0x30] sm:$0xff] %vm10998, %v10844
      %11006 = vst.msk [vmem:[%s278 + $0x38] sm:$0xff] %vm10998, %v10845
      %11007 = vst.msk [vmem:[%s278 + $0x40] sm:$0xff] %vm10998, %v10854
      %11008 = vst.msk [vmem:[%s278 + $0x48] sm:$0xff] %vm10998, %v10855
      %11009 = vst.msk [vmem:[%s278 + $0x50] sm:$0xff] %vm10998, %v10864
      %11010 = vst.msk [vmem:[%s278 + $0x58] sm:$0xff] %vm10998, %v10865
      %11011 = vst.msk [vmem:[%s278 + $0x60] sm:$0xff] %vm10998, %v10874
      %11012 = vst.msk [vmem:[%s278 + $0x68] sm:$0xff] %vm10998, %v10875
      %11013 = vst.msk [vmem:[%s278 + $0x70] sm:$0xff] %vm10998, %v10884
      %11014 = vst.msk [vmem:[%s278 + $0x78] sm:$0xff] %vm10998, %v10885
      %11015 = vst.msk [vmem:[%s278 + $0x80] sm:$0xff] %vm10998, %v10894
      %11016 = vst.msk [vmem:[%s278 + $0x88] sm:$0xff] %vm10998, %v10895
      %11017 = vst.msk [vmem:[%s278 + $0x90] sm:$0xff] %vm10998, %v10904
      %11018 = vst.msk [vmem:[%s278 + $0x98] sm:$0xff] %vm10998, %v10905
      %11019 = vst.msk [vmem:[%s278 + $0xa0] sm:$0xff] %vm10998, %v10914
      %11020 = vst.msk [vmem:[%s278 + $0xa8] sm:$0xff] %vm10998, %v10915
      %11021 = vst.msk [vmem:[%s278 + $0xb0] sm:$0xff] %vm10998, %v10924
      %11022 = vst.msk [vmem:[%s278 + $0xb8] sm:$0xff] %vm10998, %v10925
      %11023 = vst.msk [vmem:[%s278 + $0xc0] sm:$0xff] %vm10998, %v10934
      %11024 = vst.msk [vmem:[%s278 + $0xc8] sm:$0xff] %vm10998, %v10935
      %11025 = vst.msk [vmem:[%s278 + $0xd0] sm:$0xff] %vm10998, %v10944
      %11026 = vst.msk [vmem:[%s278 + $0xd8] sm:$0xff] %vm10998, %v10945
      %11027 = vst.msk [vmem:[%s278 + $0xe0] sm:$0xff] %vm10998, %v10954
      %11028 = vst.msk [vmem:[%s278 + $0xe8] sm:$0xff] %vm10998, %v10955
      %11029 = vst.msk [vmem:[%s278 + $0xf0] sm:$0xff] %vm10998, %v10964
      %11030 = vst.msk [vmem:[%s278 + $0xf8] sm:$0xff] %vm10998, %v10965
      %p11031 = scmp.lt.s32.totalorder %s18, 1
      %s11032 = scalar_select %p11031, %s18, 1
      %s11033 = smul.addr %s11032, 32
      %s11034 = smul.addr %s11033, 8
      %s11035 = scalar_lea.vmem %s7, %s11034
      // Predicated region
      $region49: #{tpu_custom_call.1} parent=47 // pred_check
        %p11036 = pneg %p188
      $region50: #{tpu_custom_call.1} parent=47 // pred_check_branch
        %11038 = sbr.rel (%p11036) target = $region52
      $region51: #{tpu_custom_call.1} parent=47 // pred_region
        _
      $region52: #{tpu_custom_call.1} parent=47 // pred_fallthru
        _
    $region48: #{tpu_custom_call.1} parent=5 // pred_fallthru
      _
    %p11039 = scmp.le.s32.totalorder 2, %s13
    // Predicated region
    $region53: #{tpu_custom_call.1} parent=5 // pred_check
      %p11040 = pneg %p11039
    $region54: #{tpu_custom_call.1} parent=5 // pred_check_branch
      %11042 = sbr.rel (%p11040) target = $region56
    $region55: #{tpu_custom_call.1} parent=5 // pred_region
      %s11043 = ssub.s32 %s13, 2
      // Predicated region
      $region57: #{tpu_custom_call.1} parent=55 // pred_check
        %p11044 = pneg %p194
      $region58: #{tpu_custom_call.1} parent=55 // pred_check_branch
        %11046 = sbr.rel (%p11044) target = $region60
      $region59: #{tpu_custom_call.1} parent=55 // pred_region
        %p11047 = scmp.lt.s32.totalorder %s19, 1
        %s11048 = scalar_select %p11047, %s19, 1
        %s11049 = smul.addr %s11048, 32
        %s11050 = smul.addr %s11049, 8
        %s11051 = scalar_lea.vmem %s7, %s11050
      $region60: #{tpu_custom_call.1} parent=55 // pred_fallthru
        _
    $region56: #{tpu_custom_call.1} parent=5 // pred_fallthru
      _
  $region6: #{tpu_custom_call.1} parent=0 // loop_footer
    %s17 = sadd.s32 1, %s13
  $region7: #{tpu_custom_call.1} parent=0 // loop_footer_branch
    %12 = sbr.rel target = $region3
  $region8: #{tpu_custom_call.1} parent=0 // loop_exit
    _

</llo_original>
